<compile_context>
chip_gen: v7x
topology: tpu7x:2x2x1
jax: 0.10.0
libtpu: 0.0.40
codegen_flags: <defaults>
</compile_context>

<pallas_src>
import jax
import jax.numpy as jnp
from jax.experimental import pallas as pl
from jax.experimental.pallas import tpu as pltpu


def _basic_block_kernel(x_ref, w1_ref, w2_ref, s1_ref, b1_ref, s2_ref, b2_ref,
                        out_ref, pad_ref):
    """Fused BasicBlock forward for one batch element (NHWC tiles).

    x_ref   : (H, W, C)      input tile (batch dim squeezed by BlockSpec)
    w1_ref  : (3, 3, C, C)   conv1 weights, HWIO
    w2_ref  : (3, 3, C, C)   conv2 weights, HWIO
    s*_ref  : (1, C)  f32    folded BN scale
    b*_ref  : (1, C)  f32    folded BN bias
    out_ref : (H, W, C)      output tile
    pad_ref : (H+2, W+2, C)  f32 VMEM scratch: zero-padded activation of the
                             current conv stage (intermediate never hits HBM).
    """
    H, W, C = out_ref.shape

    def conv3x3(w_ref):
        # 3x3 conv (stride 1, pad 1) as 9 shifted (H*W, C) @ (C, C) MXU
        # matmuls over the padded activation held in VMEM.
        # TODO(synk): for large C, fold the kw taps into the contraction dim
        # (K = 3*C) and feed bf16 operands to better utilise the MXU width.
        acc = jnp.zeros((H * W, C), jnp.float32)
        for kh in range(3):
            for kw in range(3):
                patch = pad_ref[kh:kh + H, kw:kw + W, :].reshape(H * W, C)
                acc = acc + jnp.dot(patch, w_ref[kh, kw],
                                    preferred_element_type=jnp.float32)
        return acc

    x = x_ref[...].astype(jnp.float32)                      # (H, W, C)

    # Zero the halo once; both conv stages reuse the zero border.
    pad_ref[...] = jnp.zeros(pad_ref.shape, jnp.float32)

    # ---- stage 1: conv1 -> bn1 -> relu (stays in VMEM) ----
    pad_ref[1:H + 1, 1:W + 1, :] = x
    y = conv3x3(w1_ref) * s1_ref[...] + b1_ref[...]
    y = jnp.maximum(y, 0.0)

    # ---- stage 2: conv2 -> bn2 -> +residual -> relu ----
    pad_ref[1:H + 1, 1:W + 1, :] = y.reshape(H, W, C)
    y = conv3x3(w2_ref) * s2_ref[...] + b2_ref[...]
    y = y + x.reshape(H * W, C)
    y = jnp.maximum(y, 0.0)

    out_ref[...] = y.reshape(H, W, C).astype(out_ref.dtype)


def basic_block_nhwc(x_nhwc, w1_hwio, w2_hwio, s1, b1, s2, b2):
    """Fused BasicBlock forward; activations NHWC, weights HWIO."""
    N, H, W, C = x_nhwc.shape
    assert w1_hwio.shape == (3, 3, C, C) and w2_hwio.shape == (3, 3, C, C), (
        "stride=1, downsample=None BasicBlock requires inplanes == planes")

    s1 = s1.reshape(1, C).astype(jnp.float32)
    b1 = b1.reshape(1, C).astype(jnp.float32)
    s2 = s2.reshape(1, C).astype(jnp.float32)
    b2 = b2.reshape(1, C).astype(jnp.float32)

    # VMEM budget: double-buffered per-image in/out tiles + padded scratch +
    # weights, with headroom for im2col temporaries.
    tile_bytes = H * W * C * 4
    scratch_bytes = (H + 2) * (W + 2) * C * 4
    w_bytes = 2 * 9 * C * C * 4
    vmem_limit = int(min(max(6 * (4 * tile_bytes + scratch_bytes + w_bytes),
                             16 * 1024 * 1024),
                         48 * 1024 * 1024))

    def batch_spec(shape):
        nd = len(shape)
        return pl.BlockSpec((None,) + tuple(shape[1:]),
                            lambda n, nd=nd: (n,) + (0,) * (nd - 1))

    def full_spec(shape):
        nd = len(shape)
        return pl.BlockSpec(tuple(shape), lambda n, nd=nd: (0,) * nd)

    # TODO(synk): for large H*W (where a full image exceeds VMEM) add an
    # H-tile grid axis with a 2-row halo recompute for the fused second conv.
    return pl.pallas_call(
        _basic_block_kernel,
        out_shape=jax.ShapeDtypeStruct((N, H, W, C), x_nhwc.dtype),
        grid=(N,),
        in_specs=[
            batch_spec((N, H, W, C)),            # x (also the residual)
            full_spec(w1_hwio.shape),            # conv1 weights
            full_spec(w2_hwio.shape),            # conv2 weights
            full_spec((1, C)), full_spec((1, C)),  # bn1 scale / bias
            full_spec((1, C)), full_spec((1, C)),  # bn2 scale / bias
        ],
        out_specs=batch_spec((N, H, W, C)),
        scratch_shapes=[pltpu.VMEM((H + 2, W + 2, C), jnp.float32)],
        compiler_params=pltpu.CompilerParams(
            dimension_semantics=("parallel",),
            vmem_limit_bytes=vmem_limit),
    )(x_nhwc, w1_hwio, w2_hwio, s1, b1, s2, b2)


def _fold_bn(gamma, beta, running_mean, running_var, eps=1e-5):
    scale = gamma / jnp.sqrt(running_var + eps)
    bias = beta - running_mean * scale
    return scale, bias


def basic_block_forward(x_nchw, params):
    """BasicBlock forward (stride=1, downsample=None). Input/Output: NCHW.

    The NCHW<->NHWC transposes live here only because the PyTorch spec is
    NCHW; in a full network keep activations NHWC end-to-end and pre-transpose
    weights once at parameter load time.
    """
    x = jnp.transpose(x_nchw, (0, 2, 3, 1))                  # NCHW -> NHWC
    w1 = jnp.transpose(params["conv1_w"], (2, 3, 1, 0))      # OIHW -> HWIO
    w2 = jnp.transpose(params["conv2_w"], (2, 3, 1, 0))
    s1, b1 = _fold_bn(*params["bn1"])
    s2, b2 = _fold_bn(*params["bn2"])

    out = basic_block_nhwc(x, w1, w2, s1, b1, s2, b2)
    return jnp.transpose(out, (0, 3, 1, 2))                  # NHWC -> NCHW


def _reference_block(x_nchw, params, eps=1e-5):
    """Pure-JAX reference (eval-mode BN), NCHW throughout."""
    def conv(x, w):
        return jax.lax.conv_general_dilated(
            x, w, window_strides=(1, 1), padding=((1, 1), (1, 1)),
            dimension_numbers=("NCHW", "OIHW", "NCHW"))

    def bn(y, stats):
        g, b, m, v = stats
        g = g[None, :, None, None]
        b = b[None, :, None, None]
        m = m[None, :, None, None]
        v = v[None, :, None, None]
        return (y - m) / jnp.sqrt(v + eps) * g + b

    out = jax.nn.relu(bn(conv(x_nchw, params["conv1_w"]), params["bn1"]))
    out = bn(conv(out, params["conv2_w"]), params["bn2"]) + x_nchw
    return jax.nn.relu(out)


if __name__ == "__main__":
    # inplanes = planes = 4, stride = 1, downsample = None
    N, C, H, W = 2, 4, 16, 16
    key = jax.random.PRNGKey(0)
    ks = jax.random.split(key, 11)

    x = jax.random.normal(ks[0], (N, C, H, W), jnp.float32)

    params = {
        "conv1_w": jax.random.normal(ks[1], (C, C, 3, 3), jnp.float32) * 0.2,
        "conv2_w": jax.random.normal(ks[2], (C, C, 3, 3), jnp.float32) * 0.2,
        "bn1": (
            jax.random.uniform(ks[3], (C,), minval=0.5, maxval=1.5),   # gamma
            jax.random.normal(ks[4], (C,)) * 0.1,                      # beta
            jax.random.normal(ks[5], (C,)) * 0.1,                      # running_mean
            jax.random.uniform(ks[6], (C,), minval=0.5, maxval=1.5),   # running_var
        ),
        "bn2": (
            jax.random.uniform(ks[7], (C,), minval=0.5, maxval=1.5),
            jax.random.normal(ks[8], (C,)) * 0.1,
            jax.random.normal(ks[9], (C,)) * 0.1,
            jax.random.uniform(ks[10], (C,), minval=0.5, maxval=1.5),
        ),
    }

    out = jax.block_until_ready(basic_block_forward(x, params))
    ref = jax.block_until_ready(_reference_block(x, params))

    assert out.shape == (N, C, H, W)
    assert jnp.allclose(out, ref, atol=1e-4, rtol=1e-4), (
        float(jnp.max(jnp.abs(out - ref))))

    print("KERNEL_OK")
</pallas_src>

<mosaic_0001>
module attributes {stable_mosaic.version = 11 : i64} {
  func.func @_basic_block_kernel(%arg0: i32, %arg1: memref<1x16x16x4xf32, #tpu.memory_space<vmem>>, %arg2: memref<3x3x4x4xf32, #tpu.memory_space<vmem>>, %arg3: memref<3x3x4x4xf32, #tpu.memory_space<vmem>>, %arg4: memref<1x4xf32, #tpu.memory_space<vmem>>, %arg5: memref<1x4xf32, #tpu.memory_space<vmem>>, %arg6: memref<1x4xf32, #tpu.memory_space<vmem>>, %arg7: memref<1x4xf32, #tpu.memory_space<vmem>>, %arg8: memref<1x16x16x4xf32, #tpu.memory_space<vmem>>, %arg9: memref<18x18x4xf32, #tpu.memory_space<vmem>>) attributes {dimension_semantics = [#tpu.dimension_semantics<parallel>], iteration_bounds = array<i64: 2>, scalar_prefetch = 0 : i64, scratch_operands = 1 : i64, tpu.core_type = #tpu.core_type<tc>, window_params = [{transform_indices = @transform_0, window_bounds = array<i64: 1, 16, 16, 4>}, {pipeline_mode = #tpu.pipeline_mode<synchronous>, transform_indices = @transform_1, window_bounds = array<i64: 3, 3, 4, 4>}, {pipeline_mode = #tpu.pipeline_mode<synchronous>, transform_indices = @transform_2, window_bounds = array<i64: 3, 3, 4, 4>}, {pipeline_mode = #tpu.pipeline_mode<synchronous>, transform_indices = @transform_3, window_bounds = array<i64: 1, 4>}, {pipeline_mode = #tpu.pipeline_mode<synchronous>, transform_indices = @transform_4, window_bounds = array<i64: 1, 4>}, {pipeline_mode = #tpu.pipeline_mode<synchronous>, transform_indices = @transform_5, window_bounds = array<i64: 1, 4>}, {pipeline_mode = #tpu.pipeline_mode<synchronous>, transform_indices = @transform_6, window_bounds = array<i64: 1, 4>}, {transform_indices = @transform_7, window_bounds = array<i64: 1, 16, 16, 4>}]} {
    %c0 = arith.constant 0 : index
    %c0_0 = arith.constant 0 : index
    %c0_1 = arith.constant 0 : index
    %c0_2 = arith.constant 0 : index
    %0 = vector.load %arg1[%c0, %c0_0, %c0_1, %c0_2] : memref<1x16x16x4xf32, #tpu.memory_space<vmem>>, vector<1x16x16x4xf32>
    %1 = vector.shape_cast %0 : vector<1x16x16x4xf32> to vector<16x16x4xf32>
    %cst = arith.constant 0.000000e+00 : f32
    %2 = vector.broadcast %cst : f32 to vector<18x18x4xf32>
    %c0_3 = arith.constant 0 : index
    %c0_4 = arith.constant 0 : index
    %c0_5 = arith.constant 0 : index
    %3 = vector.load %arg9[%c0_3, %c0_4, %c0_5] : memref<18x18x4xf32, #tpu.memory_space<vmem>>, vector<18x18x4xf32>
    tpu.vector_store %arg9[%c0_3, %c0_4, %c0_5], %2 {strides = array<i32>} : memref<18x18x4xf32, #tpu.memory_space<vmem>>, vector<18x18x4xf32>,
    %c1 = arith.constant 1 : index
    %c1_6 = arith.constant 1 : index
    %c0_7 = arith.constant 0 : index
    %4 = vector.load %arg9[%c1, %c1_6, %c0_7] : memref<18x18x4xf32, #tpu.memory_space<vmem>>, vector<16x16x4xf32>
    tpu.vector_store %arg9[%c1, %c1_6, %c0_7], %1 {strides = array<i32>} : memref<18x18x4xf32, #tpu.memory_space<vmem>>, vector<16x16x4xf32>,
    %cst_8 = arith.constant 0.000000e+00 : f32
    %5 = vector.broadcast %cst_8 : f32 to vector<256x4xf32>
    %c0_9 = arith.constant 0 : index
    %c0_10 = arith.constant 0 : index
    %c0_11 = arith.constant 0 : index
    %6 = vector.load %arg9[%c0_9, %c0_10, %c0_11] : memref<18x18x4xf32, #tpu.memory_space<vmem>>, vector<16x16x4xf32>
    %7 = vector.shape_cast %6 : vector<16x16x4xf32> to vector<256x4xf32>
    %c0_12 = arith.constant 0 : index
    %c0_13 = arith.constant 0 : index
    %c0_14 = arith.constant 0 : index
    %c0_15 = arith.constant 0 : index
    %8 = vector.load %arg2[%c0_12, %c0_13, %c0_14, %c0_15] : memref<3x3x4x4xf32, #tpu.memory_space<vmem>>, vector<1x1x4x4xf32>
    %9 = vector.shape_cast %8 : vector<1x1x4x4xf32> to vector<4x4xf32>
    %cst_16 = arith.constant dense<0.000000e+00> : vector<256x4xf32>
    %10 = tpu.matmul %7, %9, %cst_16 {dimension_numbers = #tpu.dot_dimension_numbers<[1], [0], [0], [1], [0, 0, 1, 1], [], []>} : vector<256x4xf32>, vector<4x4xf32>, vector<256x4xf32> -> vector<256x4xf32>
    %11 = arith.addf %5, %10 : vector<256x4xf32>
    %c0_17 = arith.constant 0 : index
    %c1_18 = arith.constant 1 : index
    %c0_19 = arith.constant 0 : index
    %12 = vector.load %arg9[%c0_17, %c1_18, %c0_19] : memref<18x18x4xf32, #tpu.memory_space<vmem>>, vector<16x16x4xf32>
    %13 = vector.shape_cast %12 : vector<16x16x4xf32> to vector<256x4xf32>
    %c0_20 = arith.constant 0 : index
    %c1_21 = arith.constant 1 : index
    %c0_22 = arith.constant 0 : index
    %c0_23 = arith.constant 0 : index
    %14 = vector.load %arg2[%c0_20, %c1_21, %c0_22, %c0_23] : memref<3x3x4x4xf32, #tpu.memory_space<vmem>>, vector<1x1x4x4xf32>
    %15 = vector.shape_cast %14 : vector<1x1x4x4xf32> to vector<4x4xf32>
    %cst_24 = arith.constant dense<0.000000e+00> : vector<256x4xf32>
    %16 = tpu.matmul %13, %15, %cst_24 {dimension_numbers = #tpu.dot_dimension_numbers<[1], [0], [0], [1], [0, 0, 1, 1], [], []>} : vector<256x4xf32>, vector<4x4xf32>, vector<256x4xf32> -> vector<256x4xf32>
    %17 = arith.addf %11, %16 : vector<256x4xf32>
    %c0_25 = arith.constant 0 : index
    %c2 = arith.constant 2 : index
    %c0_26 = arith.constant 0 : index
    %18 = vector.load %arg9[%c0_25, %c2, %c0_26] : memref<18x18x4xf32, #tpu.memory_space<vmem>>, vector<16x16x4xf32>
    %19 = vector.shape_cast %18 : vector<16x16x4xf32> to vector<256x4xf32>
    %c0_27 = arith.constant 0 : index
    %c2_28 = arith.constant 2 : index
    %c0_29 = arith.constant 0 : index
    %c0_30 = arith.constant 0 : index
    %20 = vector.load %arg2[%c0_27, %c2_28, %c0_29, %c0_30] : memref<3x3x4x4xf32, #tpu.memory_space<vmem>>, vector<1x1x4x4xf32>
    %21 = vector.shape_cast %20 : vector<1x1x4x4xf32> to vector<4x4xf32>
    %cst_31 = arith.constant dense<0.000000e+00> : vector<256x4xf32>
    %22 = tpu.matmul %19, %21, %cst_31 {dimension_numbers = #tpu.dot_dimension_numbers<[1], [0], [0], [1], [0, 0, 1, 1], [], []>} : vector<256x4xf32>, vector<4x4xf32>, vector<256x4xf32> -> vector<256x4xf32>
    %23 = arith.addf %17, %22 : vector<256x4xf32>
    %c1_32 = arith.constant 1 : index
    %c0_33 = arith.constant 0 : index
    %c0_34 = arith.constant 0 : index
    %24 = vector.load %arg9[%c1_32, %c0_33, %c0_34] : memref<18x18x4xf32, #tpu.memory_space<vmem>>, vector<16x16x4xf32>
    %25 = vector.shape_cast %24 : vector<16x16x4xf32> to vector<256x4xf32>
    %c1_35 = arith.constant 1 : index
    %c0_36 = arith.constant 0 : index
    %c0_37 = arith.constant 0 : index
    %c0_38 = arith.constant 0 : index
    %26 = vector.load %arg2[%c1_35, %c0_36, %c0_37, %c0_38] : memref<3x3x4x4xf32, #tpu.memory_space<vmem>>, vector<1x1x4x4xf32>
    %27 = vector.shape_cast %26 : vector<1x1x4x4xf32> to vector<4x4xf32>
    %cst_39 = arith.constant dense<0.000000e+00> : vector<256x4xf32>
    %28 = tpu.matmul %25, %27, %cst_39 {dimension_numbers = #tpu.dot_dimension_numbers<[1], [0], [0], [1], [0, 0, 1, 1], [], []>} : vector<256x4xf32>, vector<4x4xf32>, vector<256x4xf32> -> vector<256x4xf32>
    %29 = arith.addf %23, %28 : vector<256x4xf32>
    %c1_40 = arith.constant 1 : index
    %c1_41 = arith.constant 1 : index
    %c0_42 = arith.constant 0 : index
    %30 = vector.load %arg9[%c1_40, %c1_41, %c0_42] : memref<18x18x4xf32, #tpu.memory_space<vmem>>, vector<16x16x4xf32>
    %31 = vector.shape_cast %30 : vector<16x16x4xf32> to vector<256x4xf32>
    %c1_43 = arith.constant 1 : index
    %c1_44 = arith.constant 1 : index
    %c0_45 = arith.constant 0 : index
    %c0_46 = arith.constant 0 : index
    %32 = vector.load %arg2[%c1_43, %c1_44, %c0_45, %c0_46] : memref<3x3x4x4xf32, #tpu.memory_space<vmem>>, vector<1x1x4x4xf32>
    %33 = vector.shape_cast %32 : vector<1x1x4x4xf32> to vector<4x4xf32>
    %cst_47 = arith.constant dense<0.000000e+00> : vector<256x4xf32>
    %34 = tpu.matmul %31, %33, %cst_47 {dimension_numbers = #tpu.dot_dimension_numbers<[1], [0], [0], [1], [0, 0, 1, 1], [], []>} : vector<256x4xf32>, vector<4x4xf32>, vector<256x4xf32> -> vector<256x4xf32>
    %35 = arith.addf %29, %34 : vector<256x4xf32>
    %c1_48 = arith.constant 1 : index
    %c2_49 = arith.constant 2 : index
    %c0_50 = arith.constant 0 : index
    %36 = vector.load %arg9[%c1_48, %c2_49, %c0_50] : memref<18x18x4xf32, #tpu.memory_space<vmem>>, vector<16x16x4xf32>
    %37 = vector.shape_cast %36 : vector<16x16x4xf32> to vector<256x4xf32>
    %c1_51 = arith.constant 1 : index
    %c2_52 = arith.constant 2 : index
    %c0_53 = arith.constant 0 : index
    %c0_54 = arith.constant 0 : index
    %38 = vector.load %arg2[%c1_51, %c2_52, %c0_53, %c0_54] : memref<3x3x4x4xf32, #tpu.memory_space<vmem>>, vector<1x1x4x4xf32>
    %39 = vector.shape_cast %38 : vector<1x1x4x4xf32> to vector<4x4xf32>
    %cst_55 = arith.constant dense<0.000000e+00> : vector<256x4xf32>
    %40 = tpu.matmul %37, %39, %cst_55 {dimension_numbers = #tpu.dot_dimension_numbers<[1], [0], [0], [1], [0, 0, 1, 1], [], []>} : vector<256x4xf32>, vector<4x4xf32>, vector<256x4xf32> -> vector<256x4xf32>
    %41 = arith.addf %35, %40 : vector<256x4xf32>
    %c2_56 = arith.constant 2 : index
    %c0_57 = arith.constant 0 : index
    %c0_58 = arith.constant 0 : index
    %42 = vector.load %arg9[%c2_56, %c0_57, %c0_58] : memref<18x18x4xf32, #tpu.memory_space<vmem>>, vector<16x16x4xf32>
    %43 = vector.shape_cast %42 : vector<16x16x4xf32> to vector<256x4xf32>
    %c2_59 = arith.constant 2 : index
    %c0_60 = arith.constant 0 : index
    %c0_61 = arith.constant 0 : index
    %c0_62 = arith.constant 0 : index
    %44 = vector.load %arg2[%c2_59, %c0_60, %c0_61, %c0_62] : memref<3x3x4x4xf32, #tpu.memory_space<vmem>>, vector<1x1x4x4xf32>
    %45 = vector.shape_cast %44 : vector<1x1x4x4xf32> to vector<4x4xf32>
    %cst_63 = arith.constant dense<0.000000e+00> : vector<256x4xf32>
    %46 = tpu.matmul %43, %45, %cst_63 {dimension_numbers = #tpu.dot_dimension_numbers<[1], [0], [0], [1], [0, 0, 1, 1], [], []>} : vector<256x4xf32>, vector<4x4xf32>, vector<256x4xf32> -> vector<256x4xf32>
    %47 = arith.addf %41, %46 : vector<256x4xf32>
    %c2_64 = arith.constant 2 : index
    %c1_65 = arith.constant 1 : index
    %c0_66 = arith.constant 0 : index
    %48 = vector.load %arg9[%c2_64, %c1_65, %c0_66] : memref<18x18x4xf32, #tpu.memory_space<vmem>>, vector<16x16x4xf32>
    %49 = vector.shape_cast %48 : vector<16x16x4xf32> to vector<256x4xf32>
    %c2_67 = arith.constant 2 : index
    %c1_68 = arith.constant 1 : index
    %c0_69 = arith.constant 0 : index
    %c0_70 = arith.constant 0 : index
    %50 = vector.load %arg2[%c2_67, %c1_68, %c0_69, %c0_70] : memref<3x3x4x4xf32, #tpu.memory_space<vmem>>, vector<1x1x4x4xf32>
    %51 = vector.shape_cast %50 : vector<1x1x4x4xf32> to vector<4x4xf32>
    %cst_71 = arith.constant dense<0.000000e+00> : vector<256x4xf32>
    %52 = tpu.matmul %49, %51, %cst_71 {dimension_numbers = #tpu.dot_dimension_numbers<[1], [0], [0], [1], [0, 0, 1, 1], [], []>} : vector<256x4xf32>, vector<4x4xf32>, vector<256x4xf32> -> vector<256x4xf32>
    %53 = arith.addf %47, %52 : vector<256x4xf32>
    %c2_72 = arith.constant 2 : index
    %c2_73 = arith.constant 2 : index
    %c0_74 = arith.constant 0 : index
    %54 = vector.load %arg9[%c2_72, %c2_73, %c0_74] : memref<18x18x4xf32, #tpu.memory_space<vmem>>, vector<16x16x4xf32>
    %55 = vector.shape_cast %54 : vector<16x16x4xf32> to vector<256x4xf32>
    %c2_75 = arith.constant 2 : index
    %c2_76 = arith.constant 2 : index
    %c0_77 = arith.constant 0 : index
    %c0_78 = arith.constant 0 : index
    %56 = vector.load %arg2[%c2_75, %c2_76, %c0_77, %c0_78] : memref<3x3x4x4xf32, #tpu.memory_space<vmem>>, vector<1x1x4x4xf32>
    %57 = vector.shape_cast %56 : vector<1x1x4x4xf32> to vector<4x4xf32>
    %cst_79 = arith.constant dense<0.000000e+00> : vector<256x4xf32>
    %58 = tpu.matmul %55, %57, %cst_79 {dimension_numbers = #tpu.dot_dimension_numbers<[1], [0], [0], [1], [0, 0, 1, 1], [], []>} : vector<256x4xf32>, vector<4x4xf32>, vector<256x4xf32> -> vector<256x4xf32>
    %59 = arith.addf %53, %58 : vector<256x4xf32>
    %c0_80 = arith.constant 0 : index
    %c0_81 = arith.constant 0 : index
    %60 = vector.load %arg4[%c0_80, %c0_81] : memref<1x4xf32, #tpu.memory_space<vmem>>, vector<1x4xf32>
    %61 = vector.broadcast %60 : vector<1x4xf32> to vector<256x4xf32>
    %62 = arith.mulf %59, %61 : vector<256x4xf32>
    %c0_82 = arith.constant 0 : index
    %c0_83 = arith.constant 0 : index
    %63 = vector.load %arg5[%c0_82, %c0_83] : memref<1x4xf32, #tpu.memory_space<vmem>>, vector<1x4xf32>
    %64 = vector.broadcast %63 : vector<1x4xf32> to vector<256x4xf32>
    %65 = arith.addf %62, %64 : vector<256x4xf32>
    %cst_84 = arith.constant 0.000000e+00 : f32
    %66 = vector.broadcast %cst_84 : f32 to vector<256x4xf32>
    %67 = arith.maximumf %65, %66 : vector<256x4xf32>
    %68 = vector.shape_cast %67 : vector<256x4xf32> to vector<16x16x4xf32>
    %c1_85 = arith.constant 1 : index
    %c1_86 = arith.constant 1 : index
    %c0_87 = arith.constant 0 : index
    %69 = vector.load %arg9[%c1_85, %c1_86, %c0_87] : memref<18x18x4xf32, #tpu.memory_space<vmem>>, vector<16x16x4xf32>
    tpu.vector_store %arg9[%c1_85, %c1_86, %c0_87], %68 {strides = array<i32>} : memref<18x18x4xf32, #tpu.memory_space<vmem>>, vector<16x16x4xf32>,
    %cst_88 = arith.constant 0.000000e+00 : f32
    %70 = vector.broadcast %cst_88 : f32 to vector<256x4xf32>
    %c0_89 = arith.constant 0 : index
    %c0_90 = arith.constant 0 : index
    %c0_91 = arith.constant 0 : index
    %71 = vector.load %arg9[%c0_89, %c0_90, %c0_91] : memref<18x18x4xf32, #tpu.memory_space<vmem>>, vector<16x16x4xf32>
    %72 = vector.shape_cast %71 : vector<16x16x4xf32> to vector<256x4xf32>
    %c0_92 = arith.constant 0 : index
    %c0_93 = arith.constant 0 : index
    %c0_94 = arith.constant 0 : index
    %c0_95 = arith.constant 0 : index
    %73 = vector.load %arg3[%c0_92, %c0_93, %c0_94, %c0_95] : memref<3x3x4x4xf32, #tpu.memory_space<vmem>>, vector<1x1x4x4xf32>
    %74 = vector.shape_cast %73 : vector<1x1x4x4xf32> to vector<4x4xf32>
    %cst_96 = arith.constant dense<0.000000e+00> : vector<256x4xf32>
    %75 = tpu.matmul %72, %74, %cst_96 {dimension_numbers = #tpu.dot_dimension_numbers<[1], [0], [0], [1], [0, 0, 1, 1], [], []>} : vector<256x4xf32>, vector<4x4xf32>, vector<256x4xf32> -> vector<256x4xf32>
    %76 = arith.addf %70, %75 : vector<256x4xf32>
    %c0_97 = arith.constant 0 : index
    %c1_98 = arith.constant 1 : index
    %c0_99 = arith.constant 0 : index
    %77 = vector.load %arg9[%c0_97, %c1_98, %c0_99] : memref<18x18x4xf32, #tpu.memory_space<vmem>>, vector<16x16x4xf32>
    %78 = vector.shape_cast %77 : vector<16x16x4xf32> to vector<256x4xf32>
    %c0_100 = arith.constant 0 : index
    %c1_101 = arith.constant 1 : index
    %c0_102 = arith.constant 0 : index
    %c0_103 = arith.constant 0 : index
    %79 = vector.load %arg3[%c0_100, %c1_101, %c0_102, %c0_103] : memref<3x3x4x4xf32, #tpu.memory_space<vmem>>, vector<1x1x4x4xf32>
    %80 = vector.shape_cast %79 : vector<1x1x4x4xf32> to vector<4x4xf32>
    %cst_104 = arith.constant dense<0.000000e+00> : vector<256x4xf32>
    %81 = tpu.matmul %78, %80, %cst_104 {dimension_numbers = #tpu.dot_dimension_numbers<[1], [0], [0], [1], [0, 0, 1, 1], [], []>} : vector<256x4xf32>, vector<4x4xf32>, vector<256x4xf32> -> vector<256x4xf32>
    %82 = arith.addf %76, %81 : vector<256x4xf32>
    %c0_105 = arith.constant 0 : index
    %c2_106 = arith.constant 2 : index
    %c0_107 = arith.constant 0 : index
    %83 = vector.load %arg9[%c0_105, %c2_106, %c0_107] : memref<18x18x4xf32, #tpu.memory_space<vmem>>, vector<16x16x4xf32>
    %84 = vector.shape_cast %83 : vector<16x16x4xf32> to vector<256x4xf32>
    %c0_108 = arith.constant 0 : index
    %c2_109 = arith.constant 2 : index
    %c0_110 = arith.constant 0 : index
    %c0_111 = arith.constant 0 : index
    %85 = vector.load %arg3[%c0_108, %c2_109, %c0_110, %c0_111] : memref<3x3x4x4xf32, #tpu.memory_space<vmem>>, vector<1x1x4x4xf32>
    %86 = vector.shape_cast %85 : vector<1x1x4x4xf32> to vector<4x4xf32>
    %cst_112 = arith.constant dense<0.000000e+00> : vector<256x4xf32>
    %87 = tpu.matmul %84, %86, %cst_112 {dimension_numbers = #tpu.dot_dimension_numbers<[1], [0], [0], [1], [0, 0, 1, 1], [], []>} : vector<256x4xf32>, vector<4x4xf32>, vector<256x4xf32> -> vector<256x4xf32>
    %88 = arith.addf %82, %87 : vector<256x4xf32>
    %c1_113 = arith.constant 1 : index
    %c0_114 = arith.constant 0 : index
    %c0_115 = arith.constant 0 : index
    %89 = vector.load %arg9[%c1_113, %c0_114, %c0_115] : memref<18x18x4xf32, #tpu.memory_space<vmem>>, vector<16x16x4xf32>
    %90 = vector.shape_cast %89 : vector<16x16x4xf32> to vector<256x4xf32>
    %c1_116 = arith.constant 1 : index
    %c0_117 = arith.constant 0 : index
    %c0_118 = arith.constant 0 : index
    %c0_119 = arith.constant 0 : index
    %91 = vector.load %arg3[%c1_116, %c0_117, %c0_118, %c0_119] : memref<3x3x4x4xf32, #tpu.memory_space<vmem>>, vector<1x1x4x4xf32>
    %92 = vector.shape_cast %91 : vector<1x1x4x4xf32> to vector<4x4xf32>
    %cst_120 = arith.constant dense<0.000000e+00> : vector<256x4xf32>
    %93 = tpu.matmul %90, %92, %cst_120 {dimension_numbers = #tpu.dot_dimension_numbers<[1], [0], [0], [1], [0, 0, 1, 1], [], []>} : vector<256x4xf32>, vector<4x4xf32>, vector<256x4xf32> -> vector<256x4xf32>
    %94 = arith.addf %88, %93 : vector<256x4xf32>
    %c1_121 = arith.constant 1 : index
    %c1_122 = arith.constant 1 : index
    %c0_123 = arith.constant 0 : index
    %95 = vector.load %arg9[%c1_121, %c1_122, %c0_123] : memref<18x18x4xf32, #tpu.memory_space<vmem>>, vector<16x16x4xf32>
    %96 = vector.shape_cast %95 : vector<16x16x4xf32> to vector<256x4xf32>
    %c1_124 = arith.constant 1 : index
    %c1_125 = arith.constant 1 : index
    %c0_126 = arith.constant 0 : index
    %c0_127 = arith.constant 0 : index
    %97 = vector.load %arg3[%c1_124, %c1_125, %c0_126, %c0_127] : memref<3x3x4x4xf32, #tpu.memory_space<vmem>>, vector<1x1x4x4xf32>
    %98 = vector.shape_cast %97 : vector<1x1x4x4xf32> to vector<4x4xf32>
    %cst_128 = arith.constant dense<0.000000e+00> : vector<256x4xf32>
    %99 = tpu.matmul %96, %98, %cst_128 {dimension_numbers = #tpu.dot_dimension_numbers<[1], [0], [0], [1], [0, 0, 1, 1], [], []>} : vector<256x4xf32>, vector<4x4xf32>, vector<256x4xf32> -> vector<256x4xf32>
    %100 = arith.addf %94, %99 : vector<256x4xf32>
    %c1_129 = arith.constant 1 : index
    %c2_130 = arith.constant 2 : index
    %c0_131 = arith.constant 0 : index
    %101 = vector.load %arg9[%c1_129, %c2_130, %c0_131] : memref<18x18x4xf32, #tpu.memory_space<vmem>>, vector<16x16x4xf32>
    %102 = vector.shape_cast %101 : vector<16x16x4xf32> to vector<256x4xf32>
    %c1_132 = arith.constant 1 : index
    %c2_133 = arith.constant 2 : index
    %c0_134 = arith.constant 0 : index
    %c0_135 = arith.constant 0 : index
    %103 = vector.load %arg3[%c1_132, %c2_133, %c0_134, %c0_135] : memref<3x3x4x4xf32, #tpu.memory_space<vmem>>, vector<1x1x4x4xf32>
    %104 = vector.shape_cast %103 : vector<1x1x4x4xf32> to vector<4x4xf32>
    %cst_136 = arith.constant dense<0.000000e+00> : vector<256x4xf32>
    %105 = tpu.matmul %102, %104, %cst_136 {dimension_numbers = #tpu.dot_dimension_numbers<[1], [0], [0], [1], [0, 0, 1, 1], [], []>} : vector<256x4xf32>, vector<4x4xf32>, vector<256x4xf32> -> vector<256x4xf32>
    %106 = arith.addf %100, %105 : vector<256x4xf32>
    %c2_137 = arith.constant 2 : index
    %c0_138 = arith.constant 0 : index
    %c0_139 = arith.constant 0 : index
    %107 = vector.load %arg9[%c2_137, %c0_138, %c0_139] : memref<18x18x4xf32, #tpu.memory_space<vmem>>, vector<16x16x4xf32>
    %108 = vector.shape_cast %107 : vector<16x16x4xf32> to vector<256x4xf32>
    %c2_140 = arith.constant 2 : index
    %c0_141 = arith.constant 0 : index
    %c0_142 = arith.constant 0 : index
    %c0_143 = arith.constant 0 : index
    %109 = vector.load %arg3[%c2_140, %c0_141, %c0_142, %c0_143] : memref<3x3x4x4xf32, #tpu.memory_space<vmem>>, vector<1x1x4x4xf32>
    %110 = vector.shape_cast %109 : vector<1x1x4x4xf32> to vector<4x4xf32>
    %cst_144 = arith.constant dense<0.000000e+00> : vector<256x4xf32>
    %111 = tpu.matmul %108, %110, %cst_144 {dimension_numbers = #tpu.dot_dimension_numbers<[1], [0], [0], [1], [0, 0, 1, 1], [], []>} : vector<256x4xf32>, vector<4x4xf32>, vector<256x4xf32> -> vector<256x4xf32>
    %112 = arith.addf %106, %111 : vector<256x4xf32>
    %c2_145 = arith.constant 2 : index
    %c1_146 = arith.constant 1 : index
    %c0_147 = arith.constant 0 : index
    %113 = vector.load %arg9[%c2_145, %c1_146, %c0_147] : memref<18x18x4xf32, #tpu.memory_space<vmem>>, vector<16x16x4xf32>
    %114 = vector.shape_cast %113 : vector<16x16x4xf32> to vector<256x4xf32>
    %c2_148 = arith.constant 2 : index
    %c1_149 = arith.constant 1 : index
    %c0_150 = arith.constant 0 : index
    %c0_151 = arith.constant 0 : index
    %115 = vector.load %arg3[%c2_148, %c1_149, %c0_150, %c0_151] : memref<3x3x4x4xf32, #tpu.memory_space<vmem>>, vector<1x1x4x4xf32>
    %116 = vector.shape_cast %115 : vector<1x1x4x4xf32> to vector<4x4xf32>
    %cst_152 = arith.constant dense<0.000000e+00> : vector<256x4xf32>
    %117 = tpu.matmul %114, %116, %cst_152 {dimension_numbers = #tpu.dot_dimension_numbers<[1], [0], [0], [1], [0, 0, 1, 1], [], []>} : vector<256x4xf32>, vector<4x4xf32>, vector<256x4xf32> -> vector<256x4xf32>
    %118 = arith.addf %112, %117 : vector<256x4xf32>
    %c2_153 = arith.constant 2 : index
    %c2_154 = arith.constant 2 : index
    %c0_155 = arith.constant 0 : index
    %119 = vector.load %arg9[%c2_153, %c2_154, %c0_155] : memref<18x18x4xf32, #tpu.memory_space<vmem>>, vector<16x16x4xf32>
    %120 = vector.shape_cast %119 : vector<16x16x4xf32> to vector<256x4xf32>
    %c2_156 = arith.constant 2 : index
    %c2_157 = arith.constant 2 : index
    %c0_158 = arith.constant 0 : index
    %c0_159 = arith.constant 0 : index
    %121 = vector.load %arg3[%c2_156, %c2_157, %c0_158, %c0_159] : memref<3x3x4x4xf32, #tpu.memory_space<vmem>>, vector<1x1x4x4xf32>
    %122 = vector.shape_cast %121 : vector<1x1x4x4xf32> to vector<4x4xf32>
    %cst_160 = arith.constant dense<0.000000e+00> : vector<256x4xf32>
    %123 = tpu.matmul %120, %122, %cst_160 {dimension_numbers = #tpu.dot_dimension_numbers<[1], [0], [0], [1], [0, 0, 1, 1], [], []>} : vector<256x4xf32>, vector<4x4xf32>, vector<256x4xf32> -> vector<256x4xf32>
    %124 = arith.addf %118, %123 : vector<256x4xf32>
    %c0_161 = arith.constant 0 : index
    %c0_162 = arith.constant 0 : index
    %125 = vector.load %arg6[%c0_161, %c0_162] : memref<1x4xf32, #tpu.memory_space<vmem>>, vector<1x4xf32>
    %126 = vector.broadcast %125 : vector<1x4xf32> to vector<256x4xf32>
    %127 = arith.mulf %124, %126 : vector<256x4xf32>
    %c0_163 = arith.constant 0 : index
    %c0_164 = arith.constant 0 : index
    %128 = vector.load %arg7[%c0_163, %c0_164] : memref<1x4xf32, #tpu.memory_space<vmem>>, vector<1x4xf32>
    %129 = vector.broadcast %128 : vector<1x4xf32> to vector<256x4xf32>
    %130 = arith.addf %127, %129 : vector<256x4xf32>
    %131 = vector.shape_cast %1 : vector<16x16x4xf32> to vector<256x4xf32>
    %132 = arith.addf %130, %131 : vector<256x4xf32>
    %cst_165 = arith.constant 0.000000e+00 : f32
    %133 = vector.broadcast %cst_165 : f32 to vector<256x4xf32>
    %134 = arith.maximumf %132, %133 : vector<256x4xf32>
    %135 = vector.shape_cast %134 : vector<256x4xf32> to vector<16x16x4xf32>
    %c0_166 = arith.constant 0 : index
    %c0_167 = arith.constant 0 : index
    %c0_168 = arith.constant 0 : index
    %c0_169 = arith.constant 0 : index
    %136 = vector.load %arg8[%c0_166, %c0_167, %c0_168, %c0_169] : memref<1x16x16x4xf32, #tpu.memory_space<vmem>>, vector<1x16x16x4xf32>
    %137 = vector.shape_cast %136 : vector<1x16x16x4xf32> to vector<16x16x4xf32>
    %138 = vector.shape_cast %135 : vector<16x16x4xf32> to vector<1x16x16x4xf32>
    tpu.vector_store %arg8[%c0_166, %c0_167, %c0_168, %c0_169], %138 {strides = array<i32>} : memref<1x16x16x4xf32, #tpu.memory_space<vmem>>, vector<1x16x16x4xf32>,
    return
  }
  func.func @transform_0(%arg0: i32) -> (i32, i32, i32, i32) {
    %c0_i32 = arith.constant 0 : i32
    %c0_i32_0 = arith.constant 0 : i32
    %c0_i32_1 = arith.constant 0 : i32
    %c0_i32_2 = arith.constant 0 : i32
    return %arg0, %c0_i32, %c0_i32_0, %c0_i32_1 : i32, i32, i32, i32
  }
  func.func @transform_1(%arg0: i32) -> (i32, i32, i32, i32) {
    %c0_i32 = arith.constant 0 : i32
    %c0_i32_0 = arith.constant 0 : i32
    %c0_i32_1 = arith.constant 0 : i32
    %c0_i32_2 = arith.constant 0 : i32
    %c0_i32_3 = arith.constant 0 : i32
    return %c0_i32, %c0_i32_0, %c0_i32_1, %c0_i32_2 : i32, i32, i32, i32
  }
  func.func @transform_2(%arg0: i32) -> (i32, i32, i32, i32) {
    %c0_i32 = arith.constant 0 : i32
    %c0_i32_0 = arith.constant 0 : i32
    %c0_i32_1 = arith.constant 0 : i32
    %c0_i32_2 = arith.constant 0 : i32
    %c0_i32_3 = arith.constant 0 : i32
    return %c0_i32, %c0_i32_0, %c0_i32_1, %c0_i32_2 : i32, i32, i32, i32
  }
  func.func @transform_3(%arg0: i32) -> (i32, i32) {
    %c0_i32 = arith.constant 0 : i32
    %c0_i32_0 = arith.constant 0 : i32
    %c0_i32_1 = arith.constant 0 : i32
    return %c0_i32, %c0_i32_0 : i32, i32
  }
  func.func @transform_4(%arg0: i32) -> (i32, i32) {
    %c0_i32 = arith.constant 0 : i32
    %c0_i32_0 = arith.constant 0 : i32
    %c0_i32_1 = arith.constant 0 : i32
    return %c0_i32, %c0_i32_0 : i32, i32
  }
  func.func @transform_5(%arg0: i32) -> (i32, i32) {
    %c0_i32 = arith.constant 0 : i32
    %c0_i32_0 = arith.constant 0 : i32
    %c0_i32_1 = arith.constant 0 : i32
    return %c0_i32, %c0_i32_0 : i32, i32
  }
  func.func @transform_6(%arg0: i32) -> (i32, i32) {
    %c0_i32 = arith.constant 0 : i32
    %c0_i32_0 = arith.constant 0 : i32
    %c0_i32_1 = arith.constant 0 : i32
    return %c0_i32, %c0_i32_0 : i32, i32
  }
  func.func @transform_7(%arg0: i32) -> (i32, i32, i32, i32) {
    %c0_i32 = arith.constant 0 : i32
    %c0_i32_0 = arith.constant 0 : i32
    %c0_i32_1 = arith.constant 0 : i32
    %c0_i32_2 = arith.constant 0 : i32
    return %arg0, %c0_i32, %c0_i32_0, %c0_i32_1 : i32, i32, i32, i32
  }
}

</mosaic_0001>

<llo_original>
// kernel: tpu_custom_call.1
$region0: #{tpu_custom_call.1}
  #allocation0 [shape = 'u32[]', space=smem, size = 0x4, offset = 0x4, fixed_abs, tag = 'smem constant byte address 0x4 - core index']
  #allocation1 [shape = 'u32[144,128]{1,0:T(1,128)}', space=vmem, size = 0x12000, scoped, tag = 'internal scratch']
  #allocation2 [shape = 'f32[18,18,4]{2,1,0:T(8,128)}', space=vmem, size = 0x36000, scoped, tag = 'scratch operand']
  %s0 = inlined_call_operand.vmem [shape: f32[2,16,16,4], index: 0, kind: input, shape index: {}]
  %s1 = inlined_call_operand.vmem [shape: f32[3,3,4,4], index: 1, kind: input, shape index: {}]
  %s2 = inlined_call_operand.vmem [shape: f32[3,3,4,4], index: 2, kind: input, shape index: {}]
  %s3 = inlined_call_operand.vmem [shape: f32[1,4], index: 3, kind: input, shape index: {}]
  %s4 = inlined_call_operand.vmem [shape: f32[1,4], index: 4, kind: input, shape index: {}]
  %s5 = inlined_call_operand.vmem [shape: f32[1,4], index: 5, kind: input, shape index: {}]
  %s6 = inlined_call_operand.vmem [shape: f32[1,4], index: 6, kind: input, shape index: {}]
  %s7 = inlined_call_operand.vmem [shape: f32[2,16,16,4], index: 7, kind: output, shape index: {}]
  %s8 = sld [smem:[#allocation0]]
  $region61: #{tpu_custom_call.1} parent=0
    _
  %s10 = ssub.s32 1, %s8
  %s11 = scalar_select 0, %s10, %s8
  loop: start=0, step=1, limit=4
  $region2: #{tpu_custom_call.1} parent=0 // loop_pre_header
    _
  $region3: #{tpu_custom_call.1} parent=0 // loop_header
    %s13 = sphi 0, %s17
    %p14 = scmp.ge.s32.totalorder %s13, 4
    %s23 = sphi 0, %s25
    %s26 = sphi 0, %s23
    %s27 = sphi 0, %s26
    %s43 = sphi 0, %s27
    %s47 = sphi 0, %s47
    %s49 = sphi 0, %s47
    %s50 = sphi 0, %s49
    %s64 = sphi 0, %s50
    %s68 = sphi 0, %s68
    %s70 = sphi 0, %s68
    %s71 = sphi 0, %s70
    %s85 = sphi 0, %s71
    %s89 = sphi 0, %s89
    %s91 = sphi 0, %s89
    %s92 = sphi 0, %s91
    %s106 = sphi 0, %s92
    %s110 = sphi 0, %s110
    %s112 = sphi 0, %s110
    %s113 = sphi 0, %s112
    %s127 = sphi 0, %s113
    %s131 = sphi 0, %s131
    %s133 = sphi 0, %s131
    %s134 = sphi 0, %s133
    %s148 = sphi 0, %s134
    %s152 = sphi 0, %s152
    %s154 = sphi 0, %s152
    %s155 = sphi 0, %s154
    %s169 = sphi 0, %s155
    %s175 = sphi 0, %s177
    %s178 = sphi 0, %s175
    %s179 = sphi 0, %s178
    %s195 = sphi 0, %s179
  $region4: #{tpu_custom_call.1} parent=0 // loop_header_branch
    %16 = sbr.rel (%p14) target = $region8
  $region5: #{tpu_custom_call.1} parent=0 // loop_body
    %s18 = ssub.s32 %s13, 1
    %s19 = ssub.s32 %s13, 2
    %s20 = sadd.s32 %s13, 1
    %s21 = ssub.s32 %s13, %s20
    %p22 = scmp.eq.s32.totalorder %s21, 0
    %s24 = sadd.s32 %s23, 1
    %s25 = scalar_select %p22, %s23, %s24
    %p28 = pneg %p22
    %p29 = scmp.eq.s32.totalorder %s13, 1
    %p30 = por %p28, %p29
    %p31 = scmp.ne.s32.totalorder %s23, %s26
    %p32 = scmp.eq.s32.totalorder %s13, 0
    %p33 = por %p31, %p32
    %p34 = scmp.ne.s32.totalorder %s23, %s26
    %p35 = scmp.eq.s32.totalorder %s18, 1
    %p36 = por %p34, %p35
    %p37 = scmp.ne.s32.totalorder %s26, %s27
    %p38 = scmp.eq.s32.totalorder %s18, 0
    %p39 = por %p37, %p38
    %p40 = scmp.ne.s32.totalorder %s26, %s27
    %p41 = scmp.eq.s32.totalorder %s19, 1
    %p42 = por %p40, %p41
    %p44 = scmp.ne.s32.totalorder %s27, %s43
    %p45 = scmp.eq.s32.totalorder %s19, 0
    %p46 = por %p44, %p45
    %s48 = sadd.s32 %s47, 1
    %p51 = scmp.eq.s32.totalorder %s13, 1
    %p52 = scmp.ne.s32.totalorder %s47, %s49
    %p53 = scmp.eq.s32.totalorder %s13, 0
    %p54 = por %p52, %p53
    %p55 = scmp.ne.s32.totalorder %s47, %s49
    %p56 = scmp.eq.s32.totalorder %s18, 1
    %p57 = por %p55, %p56
    %p58 = scmp.ne.s32.totalorder %s49, %s50
    %p59 = scmp.eq.s32.totalorder %s18, 0
    %p60 = por %p58, %p59
    %p61 = scmp.ne.s32.totalorder %s49, %s50
    %p62 = scmp.eq.s32.totalorder %s19, 1
    %p63 = por %p61, %p62
    %p65 = scmp.ne.s32.totalorder %s50, %s64
    %p66 = scmp.eq.s32.totalorder %s19, 0
    %p67 = por %p65, %p66
    %s69 = sadd.s32 %s68, 1
    %p72 = scmp.eq.s32.totalorder %s13, 1
    %p73 = scmp.ne.s32.totalorder %s68, %s70
    %p74 = scmp.eq.s32.totalorder %s13, 0
    %p75 = por %p73, %p74
    %p76 = scmp.ne.s32.totalorder %s68, %s70
    %p77 = scmp.eq.s32.totalorder %s18, 1
    %p78 = por %p76, %p77
    %p79 = scmp.ne.s32.totalorder %s70, %s71
    %p80 = scmp.eq.s32.totalorder %s18, 0
    %p81 = por %p79, %p80
    %p82 = scmp.ne.s32.totalorder %s70, %s71
    %p83 = scmp.eq.s32.totalorder %s19, 1
    %p84 = por %p82, %p83
    %p86 = scmp.ne.s32.totalorder %s71, %s85
    %p87 = scmp.eq.s32.totalorder %s19, 0
    %p88 = por %p86, %p87
    %s90 = sadd.s32 %s89, 1
    %p93 = scmp.eq.s32.totalorder %s13, 1
    %p94 = scmp.ne.s32.totalorder %s89, %s91
    %p95 = scmp.eq.s32.totalorder %s13, 0
    %p96 = por %p94, %p95
    %p97 = scmp.ne.s32.totalorder %s89, %s91
    %p98 = scmp.eq.s32.totalorder %s18, 1
    %p99 = por %p97, %p98
    %p100 = scmp.ne.s32.totalorder %s91, %s92
    %p101 = scmp.eq.s32.totalorder %s18, 0
    %p102 = por %p100, %p101
    %p103 = scmp.ne.s32.totalorder %s91, %s92
    %p104 = scmp.eq.s32.totalorder %s19, 1
    %p105 = por %p103, %p104
    %p107 = scmp.ne.s32.totalorder %s92, %s106
    %p108 = scmp.eq.s32.totalorder %s19, 0
    %p109 = por %p107, %p108
    %s111 = sadd.s32 %s110, 1
    %p114 = scmp.eq.s32.totalorder %s13, 1
    %p115 = scmp.ne.s32.totalorder %s110, %s112
    %p116 = scmp.eq.s32.totalorder %s13, 0
    %p117 = por %p115, %p116
    %p118 = scmp.ne.s32.totalorder %s110, %s112
    %p119 = scmp.eq.s32.totalorder %s18, 1
    %p120 = por %p118, %p119
    %p121 = scmp.ne.s32.totalorder %s112, %s113
    %p122 = scmp.eq.s32.totalorder %s18, 0
    %p123 = por %p121, %p122
    %p124 = scmp.ne.s32.totalorder %s112, %s113
    %p125 = scmp.eq.s32.totalorder %s19, 1
    %p126 = por %p124, %p125
    %p128 = scmp.ne.s32.totalorder %s113, %s127
    %p129 = scmp.eq.s32.totalorder %s19, 0
    %p130 = por %p128, %p129
    %s132 = sadd.s32 %s131, 1
    %p135 = scmp.eq.s32.totalorder %s13, 1
    %p136 = scmp.ne.s32.totalorder %s131, %s133
    %p137 = scmp.eq.s32.totalorder %s13, 0
    %p138 = por %p136, %p137
    %p139 = scmp.ne.s32.totalorder %s131, %s133
    %p140 = scmp.eq.s32.totalorder %s18, 1
    %p141 = por %p139, %p140
    %p142 = scmp.ne.s32.totalorder %s133, %s134
    %p143 = scmp.eq.s32.totalorder %s18, 0
    %p144 = por %p142, %p143
    %p145 = scmp.ne.s32.totalorder %s133, %s134
    %p146 = scmp.eq.s32.totalorder %s19, 1
    %p147 = por %p145, %p146
    %p149 = scmp.ne.s32.totalorder %s134, %s148
    %p150 = scmp.eq.s32.totalorder %s19, 0
    %p151 = por %p149, %p150
    %s153 = sadd.s32 %s152, 1
    %p156 = scmp.eq.s32.totalorder %s13, 1
    %p157 = scmp.ne.s32.totalorder %s152, %s154
    %p158 = scmp.eq.s32.totalorder %s13, 0
    %p159 = por %p157, %p158
    %p160 = scmp.ne.s32.totalorder %s152, %s154
    %p161 = scmp.eq.s32.totalorder %s18, 1
    %p162 = por %p160, %p161
    %p163 = scmp.ne.s32.totalorder %s154, %s155
    %p164 = scmp.eq.s32.totalorder %s18, 0
    %p165 = por %p163, %p164
    %p166 = scmp.ne.s32.totalorder %s154, %s155
    %p167 = scmp.eq.s32.totalorder %s19, 1
    %p168 = por %p166, %p167
    %p170 = scmp.ne.s32.totalorder %s155, %s169
    %p171 = scmp.eq.s32.totalorder %s19, 0
    %p172 = por %p170, %p171
    %s173 = ssub.s32 %s13, %s20
    %p174 = scmp.eq.s32.totalorder %s173, 0
    %s176 = sadd.s32 %s175, 1
    %s177 = scalar_select %p174, %s175, %s176
    %p180 = pneg %p174
    %p181 = scmp.eq.s32.totalorder %s13, 1
    %p182 = por %p180, %p181
    %p183 = scmp.ne.s32.totalorder %s175, %s178
    %p184 = scmp.eq.s32.totalorder %s13, 0
    %p185 = por %p183, %p184
    %p186 = scmp.ne.s32.totalorder %s175, %s178
    %p187 = scmp.eq.s32.totalorder %s18, 1
    %p188 = por %p186, %p187
    %p189 = scmp.ne.s32.totalorder %s178, %s179
    %p190 = scmp.eq.s32.totalorder %s18, 0
    %p191 = por %p189, %p190
    %p192 = scmp.ne.s32.totalorder %s178, %s179
    %p193 = scmp.eq.s32.totalorder %s19, 1
    %p194 = por %p192, %p193
    %p196 = scmp.ne.s32.totalorder %s179, %s195
    %p197 = scmp.eq.s32.totalorder %s19, 0
    %p198 = por %p196, %p197
    %p199 = scmp.le.s32.totalorder 1, %s13
    %p200 = scmp.lt.s32.totalorder %s13, 3
    %p201 = pnand %p199, %p200
    %p202 = pneg %p201
    // Predicated region
    $region9: #{tpu_custom_call.1} parent=5 // pred_check
      _
    $region10: #{tpu_custom_call.1} parent=5 // pred_check_branch
      %204 = sbr.rel (%p201) target = $region12
    $region11: #{tpu_custom_call.1} parent=5 // pred_region
      %s205 = ssub.s32 %s13, 1
      // Predicated region
      $region13: #{tpu_custom_call.1} parent=11 // pred_check
        %p206 = pneg %p60
      $region14: #{tpu_custom_call.1} parent=11 // pred_check_branch
        %208 = sbr.rel (%p206) target = $region16
      $region15: #{tpu_custom_call.1} parent=11 // pred_region
        _
      $region16: #{tpu_custom_call.1} parent=11 // pred_fallthru
        _
      // Predicated region
      $region17: #{tpu_custom_call.1} parent=11 // pred_check
        %p209 = pneg %p81
      $region18: #{tpu_custom_call.1} parent=11 // pred_check_branch
        %211 = sbr.rel (%p209) target = $region20
      $region19: #{tpu_custom_call.1} parent=11 // pred_region
        _
      $region20: #{tpu_custom_call.1} parent=11 // pred_fallthru
        _
      // Predicated region
      $region21: #{tpu_custom_call.1} parent=11 // pred_check
        %p212 = pneg %p102
      $region22: #{tpu_custom_call.1} parent=11 // pred_check_branch
        %214 = sbr.rel (%p212) target = $region24
      $region23: #{tpu_custom_call.1} parent=11 // pred_region
        _
      $region24: #{tpu_custom_call.1} parent=11 // pred_fallthru
        _
      // Predicated region
      $region25: #{tpu_custom_call.1} parent=11 // pred_check
        %p215 = pneg %p123
      $region26: #{tpu_custom_call.1} parent=11 // pred_check_branch
        %217 = sbr.rel (%p215) target = $region28
      $region27: #{tpu_custom_call.1} parent=11 // pred_region
        _
      $region28: #{tpu_custom_call.1} parent=11 // pred_fallthru
        _
      // Predicated region
      $region29: #{tpu_custom_call.1} parent=11 // pred_check
        %p218 = pneg %p144
      $region30: #{tpu_custom_call.1} parent=11 // pred_check_branch
        %220 = sbr.rel (%p218) target = $region32
      $region31: #{tpu_custom_call.1} parent=11 // pred_region
        _
      $region32: #{tpu_custom_call.1} parent=11 // pred_fallthru
        _
      // Predicated region
      $region33: #{tpu_custom_call.1} parent=11 // pred_check
        %p221 = pneg %p165
      $region34: #{tpu_custom_call.1} parent=11 // pred_check_branch
        %223 = sbr.rel (%p221) target = $region36
      $region35: #{tpu_custom_call.1} parent=11 // pred_region
        _
      $region36: #{tpu_custom_call.1} parent=11 // pred_fallthru
        _
    $region12: #{tpu_custom_call.1} parent=5 // pred_fallthru
      _
    %p224 = scmp.lt.s32.totalorder %s13, 2
    // Predicated region
    $region37: #{tpu_custom_call.1} parent=5 // pred_check
      %p225 = pneg %p224
    $region38: #{tpu_custom_call.1} parent=5 // pred_check_branch
      %227 = sbr.rel (%p225) target = $region40
    $region39: #{tpu_custom_call.1} parent=5 // pred_region
      // Predicated region
      $region41: #{tpu_custom_call.1} parent=39 // pred_check
        %p228 = pneg %p33
      $region42: #{tpu_custom_call.1} parent=39 // pred_check_branch
        %230 = sbr.rel (%p228) target = $region44
      $region43: #{tpu_custom_call.1} parent=39 // pred_region
        %p231 = scmp.lt.s32.totalorder %s13, 1
        %s232 = scalar_select %p231, %s13, 1
        %s233 = smul.addr %s232, 32
        %s234 = smul.addr %s233, 8
        %s235 = scalar_lea.vmem %s0, %s234
      $region44: #{tpu_custom_call.1} parent=39 // pred_fallthru
        _
    $region40: #{tpu_custom_call.1} parent=5 // pred_fallthru
      _
    %p236 = scmp.le.s32.totalorder 1, %s13
    %p237 = scmp.lt.s32.totalorder %s13, 3
    %p238 = pnand %p236, %p237
    %p239 = pneg %p238
    // Predicated region
    $region45: #{tpu_custom_call.1} parent=5 // pred_check
      _
    $region46: #{tpu_custom_call.1} parent=5 // pred_check_branch
      %241 = sbr.rel (%p238) target = $region48
    $region47: #{tpu_custom_call.1} parent=5 // pred_region
      %s242 = ssub.s32 %s13, 1
      %p243 = scmp.lt.s32.totalorder %s18, 1
      %s244 = scalar_select %p243, %s18, 1
      %s245 = smul.addr %s244, 32
      %s246 = smul.addr %s245, 8
      %s247 = scalar_lea.vmem %s0, %s246
      %p248 = pneg %p39
      %p249 = pneg %p36
      %p250 = pneg %p60
      %p251 = pneg %p57
      %p252 = pneg %p81
      %p253 = pneg %p78
      %p254 = pneg %p102
      %p255 = pneg %p99
      %p256 = pneg %p123
      %p257 = pneg %p120
      %p258 = pneg %p144
      %p259 = pneg %p141
      %p260 = pneg %p165
      %p261 = pneg %p162
      %p262 = pneg %p191
      %p263 = pneg %p188
      %p264 = scmp.lt.s32.totalorder %s18, 1
      %s265 = scalar_select %p264, %s18, 1
      %s266 = smul.addr %s265, 32
      %s267 = smul.addr %s266, 8
      %s268 = scalar_lea.vmem %s7, %s267
      %p269 = scmp.lt.s32.totalorder %s18, 1
      %s270 = scalar_select %p269, %s18, 1
      %s271 = smul.addr %s270, 32
      %s272 = smul.addr %s271, 8
      %s273 = scalar_lea.vmem %s0, %s272
      %p274 = scmp.lt.s32.totalorder %s18, 1
      %s275 = scalar_select %p274, %s18, 1
      %s276 = smul.addr %s275, 32
      %s277 = smul.addr %s276, 8
      %s278 = scalar_lea.vmem %s7, %s277
      %v279 = vld [vmem:[%s273] sm:$0xff]
      %v280 = vld [vmem:[%s273 + $0x8] sm:$0xff]
      %v281 = vld [vmem:[%s273 + $0x10] sm:$0xff]
      %v282 = vld [vmem:[%s273 + $0x18] sm:$0xff]
      %v283 = vld [vmem:[%s273 + $0x20] sm:$0xff]
      %v284 = vld [vmem:[%s273 + $0x28] sm:$0xff]
      %v285 = vld [vmem:[%s273 + $0x30] sm:$0xff]
      %v286 = vld [vmem:[%s273 + $0x38] sm:$0xff]
      %v287 = vld [vmem:[%s273 + $0x40] sm:$0xff]
      %v288 = vld [vmem:[%s273 + $0x48] sm:$0xff]
      %v289 = vld [vmem:[%s273 + $0x50] sm:$0xff]
      %v290 = vld [vmem:[%s273 + $0x58] sm:$0xff]
      %v291 = vld [vmem:[%s273 + $0x60] sm:$0xff]
      %v292 = vld [vmem:[%s273 + $0x68] sm:$0xff]
      %v293 = vld [vmem:[%s273 + $0x70] sm:$0xff]
      %v294 = vld [vmem:[%s273 + $0x78] sm:$0xff]
      %v295 = vld [vmem:[%s273 + $0x80] sm:$0xff]
      %v296 = vld [vmem:[%s273 + $0x88] sm:$0xff]
      %v297 = vld [vmem:[%s273 + $0x90] sm:$0xff]
      %v298 = vld [vmem:[%s273 + $0x98] sm:$0xff]
      %v299 = vld [vmem:[%s273 + $0xa0] sm:$0xff]
      %v300 = vld [vmem:[%s273 + $0xa8] sm:$0xff]
      %v301 = vld [vmem:[%s273 + $0xb0] sm:$0xff]
      %v302 = vld [vmem:[%s273 + $0xb8] sm:$0xff]
      %v303 = vld [vmem:[%s273 + $0xc0] sm:$0xff]
      %v304 = vld [vmem:[%s273 + $0xc8] sm:$0xff]
      %v305 = vld [vmem:[%s273 + $0xd0] sm:$0xff]
      %v306 = vld [vmem:[%s273 + $0xd8] sm:$0xff]
      %v307 = vld [vmem:[%s273 + $0xe0] sm:$0xff]
      %v308 = vld [vmem:[%s273 + $0xe8] sm:$0xff]
      %v309 = vld [vmem:[%s273 + $0xf0] sm:$0xff]
      %v310 = vld [vmem:[%s273 + $0xf8] sm:$0xff]
      %vm311 = vcmask 31744
      %312 = vst.msk [vmem:[#allocation2] sm:$0xff] %vm311, 0.0
      %313 = vst.msk [vmem:[#allocation2 + $0x8] sm:$0xff] %vm311, 0.0
      %vm314 = vcmask 25600
      %315 = vst.msk [vmem:[#allocation2 + $0x10] sm:$0x3] %vm314, 0.0
      %316 = vst.msk [vmem:[#allocation2 + $0x18] sm:$0xff] %vm311, 0.0
      %317 = vst.msk [vmem:[#allocation2 + $0x20] sm:$0xff] %vm311, 0.0
      %318 = vst.msk [vmem:[#allocation2 + $0x28] sm:$0x3] %vm314, 0.0
      %319 = vst.msk [vmem:[#allocation2 + $0x30] sm:$0xff] %vm311, 0.0
      %320 = vst.msk [vmem:[#allocation2 + $0x38] sm:$0xff] %vm311, 0.0
      %321 = vst.msk [vmem:[#allocation2 + $0x40] sm:$0x3] %vm314, 0.0
      %322 = vst.msk [vmem:[#allocation2 + $0x48] sm:$0xff] %vm311, 0.0
      %323 = vst.msk [vmem:[#allocation2 + $0x50] sm:$0xff] %vm311, 0.0
      %324 = vst.msk [vmem:[#allocation2 + $0x58] sm:$0x3] %vm314, 0.0
      %325 = vst.msk [vmem:[#allocation2 + $0x60] sm:$0xff] %vm311, 0.0
      %326 = vst.msk [vmem:[#allocation2 + $0x68] sm:$0xff] %vm311, 0.0
      %327 = vst.msk [vmem:[#allocation2 + $0x70] sm:$0x3] %vm314, 0.0
      %328 = vst.msk [vmem:[#allocation2 + $0x78] sm:$0xff] %vm311, 0.0
      %329 = vst.msk [vmem:[#allocation2 + $0x80] sm:$0xff] %vm311, 0.0
      %330 = vst.msk [vmem:[#allocation2 + $0x88] sm:$0x3] %vm314, 0.0
      %331 = vst.msk [vmem:[#allocation2 + $0x90] sm:$0xff] %vm311, 0.0
      %332 = vst.msk [vmem:[#allocation2 + $0x98] sm:$0xff] %vm311, 0.0
      %333 = vst.msk [vmem:[#allocation2 + $0xa0] sm:$0x3] %vm314, 0.0
      %334 = vst.msk [vmem:[#allocation2 + $0xa8] sm:$0xff] %vm311, 0.0
      %335 = vst.msk [vmem:[#allocation2 + $0xb0] sm:$0xff] %vm311, 0.0
      %336 = vst.msk [vmem:[#allocation2 + $0xb8] sm:$0x3] %vm314, 0.0
      %337 = vst.msk [vmem:[#allocation2 + $0xc0] sm:$0xff] %vm311, 0.0
      %338 = vst.msk [vmem:[#allocation2 + $0xc8] sm:$0xff] %vm311, 0.0
      %339 = vst.msk [vmem:[#allocation2 + $0xd0] sm:$0x3] %vm314, 0.0
      %340 = vst.msk [vmem:[#allocation2 + $0xd8] sm:$0xff] %vm311, 0.0
      %341 = vst.msk [vmem:[#allocation2 + $0xe0] sm:$0xff] %vm311, 0.0
      %342 = vst.msk [vmem:[#allocation2 + $0xe8] sm:$0x3] %vm314, 0.0
      %343 = vst.msk [vmem:[#allocation2 + $0xf0] sm:$0xff] %vm311, 0.0
      %344 = vst.msk [vmem:[#allocation2 + $0xf8] sm:$0xff] %vm311, 0.0
      %345 = vst.msk [vmem:[#allocation2 + $0x100] sm:$0x3] %vm314, 0.0
      %346 = vst.msk [vmem:[#allocation2 + $0x108] sm:$0xff] %vm311, 0.0
      %347 = vst.msk [vmem:[#allocation2 + $0x110] sm:$0xff] %vm311, 0.0
      %348 = vst.msk [vmem:[#allocation2 + $0x118] sm:$0x3] %vm314, 0.0
      %349 = vst.msk [vmem:[#allocation2 + $0x120] sm:$0xff] %vm311, 0.0
      %350 = vst.msk [vmem:[#allocation2 + $0x128] sm:$0xff] %vm311, 0.0
      %351 = vst.msk [vmem:[#allocation2 + $0x130] sm:$0x3] %vm314, 0.0
      %352 = vst.msk [vmem:[#allocation2 + $0x138] sm:$0xff] %vm311, 0.0
      %353 = vst.msk [vmem:[#allocation2 + $0x140] sm:$0xff] %vm311, 0.0
      %354 = vst.msk [vmem:[#allocation2 + $0x148] sm:$0x3] %vm314, 0.0
      %355 = vst.msk [vmem:[#allocation2 + $0x150] sm:$0xff] %vm311, 0.0
      %356 = vst.msk [vmem:[#allocation2 + $0x158] sm:$0xff] %vm311, 0.0
      %357 = vst.msk [vmem:[#allocation2 + $0x160] sm:$0x3] %vm314, 0.0
      %358 = vst.msk [vmem:[#allocation2 + $0x168] sm:$0xff] %vm311, 0.0
      %359 = vst.msk [vmem:[#allocation2 + $0x170] sm:$0xff] %vm311, 0.0
      %360 = vst.msk [vmem:[#allocation2 + $0x178] sm:$0x3] %vm314, 0.0
      %361 = vst.msk [vmem:[#allocation2 + $0x180] sm:$0xff] %vm311, 0.0
      %362 = vst.msk [vmem:[#allocation2 + $0x188] sm:$0xff] %vm311, 0.0
      %363 = vst.msk [vmem:[#allocation2 + $0x190] sm:$0x3] %vm314, 0.0
      %364 = vst.msk [vmem:[#allocation2 + $0x198] sm:$0xff] %vm311, 0.0
      %365 = vst.msk [vmem:[#allocation2 + $0x1a0] sm:$0xff] %vm311, 0.0
      %366 = vst.msk [vmem:[#allocation2 + $0x1a8] sm:$0x3] %vm314, 0.0
      %s367 = scalar_lea.vmem [#allocation2], 24
      %368 = vst.msk [vmem:[%s367 + $0x1] sm:$0xff] %vm311, %v279
      %369 = vst.msk [vmem:[%s367 + $0x9] sm:$0xff] %vm311, %v280
      %370 = vst.msk [vmem:[%s367 + $0x19] sm:$0xff] %vm311, %v281
      %371 = vst.msk [vmem:[%s367 + $0x21] sm:$0xff] %vm311, %v282
      %372 = vst.msk [vmem:[%s367 + $0x31] sm:$0xff] %vm311, %v283
      %373 = vst.msk [vmem:[%s367 + $0x39] sm:$0xff] %vm311, %v284
      %374 = vst.msk [vmem:[%s367 + $0x49] sm:$0xff] %vm311, %v285
      %375 = vst.msk [vmem:[%s367 + $0x51] sm:$0xff] %vm311, %v286
      %376 = vst.msk [vmem:[%s367 + $0x61] sm:$0xff] %vm311, %v287
      %377 = vst.msk [vmem:[%s367 + $0x69] sm:$0xff] %vm311, %v288
      %378 = vst.msk [vmem:[%s367 + $0x79] sm:$0xff] %vm311, %v289
      %379 = vst.msk [vmem:[%s367 + $0x81] sm:$0xff] %vm311, %v290
      %380 = vst.msk [vmem:[%s367 + $0x91] sm:$0xff] %vm311, %v291
      %381 = vst.msk [vmem:[%s367 + $0x99] sm:$0xff] %vm311, %v292
      %382 = vst.msk [vmem:[%s367 + $0xa9] sm:$0xff] %vm311, %v293
      %383 = vst.msk [vmem:[%s367 + $0xb1] sm:$0xff] %vm311, %v294
      %384 = vst.msk [vmem:[%s367 + $0xc1] sm:$0xff] %vm311, %v295
      %385 = vst.msk [vmem:[%s367 + $0xc9] sm:$0xff] %vm311, %v296
      %386 = vst.msk [vmem:[%s367 + $0xd9] sm:$0xff] %vm311, %v297
      %387 = vst.msk [vmem:[%s367 + $0xe1] sm:$0xff] %vm311, %v298
      %388 = vst.msk [vmem:[%s367 + $0xf1] sm:$0xff] %vm311, %v299
      %389 = vst.msk [vmem:[%s367 + $0xf9] sm:$0xff] %vm311, %v300
      %390 = vst.msk [vmem:[%s367 + $0x109] sm:$0xff] %vm311, %v301
      %391 = vst.msk [vmem:[%s367 + $0x111] sm:$0xff] %vm311, %v302
      %392 = vst.msk [vmem:[%s367 + $0x121] sm:$0xff] %vm311, %v303
      %393 = vst.msk [vmem:[%s367 + $0x129] sm:$0xff] %vm311, %v304
      %394 = vst.msk [vmem:[%s367 + $0x139] sm:$0xff] %vm311, %v305
      %395 = vst.msk [vmem:[%s367 + $0x141] sm:$0xff] %vm311, %v306
      %396 = vst.msk [vmem:[%s367 + $0x151] sm:$0xff] %vm311, %v307
      %397 = vst.msk [vmem:[%s367 + $0x159] sm:$0xff] %vm311, %v308
      %398 = vst.msk [vmem:[%s367 + $0x169] sm:$0xff] %vm311, %v309
      %399 = vst.msk [vmem:[%s367 + $0x171] sm:$0xff] %vm311, %v310
      %v400 = vld [vmem:[#allocation2] sm:$0xff]
      %v401 = vld [vmem:[#allocation2 + $0x8] sm:$0xff]
      %v402 = vld [vmem:[#allocation2 + $0x18] sm:$0xff]
      %v403 = vld [vmem:[#allocation2 + $0x20] sm:$0xff]
      %v404 = vld [vmem:[#allocation2 + $0x30] sm:$0xff]
      %v405 = vld [vmem:[#allocation2 + $0x38] sm:$0xff]
      %v406 = vld [vmem:[#allocation2 + $0x48] sm:$0xff]
      %v407 = vld [vmem:[#allocation2 + $0x50] sm:$0xff]
      %v408 = vld [vmem:[#allocation2 + $0x60] sm:$0xff]
      %v409 = vld [vmem:[#allocation2 + $0x68] sm:$0xff]
      %v410 = vld [vmem:[#allocation2 + $0x78] sm:$0xff]
      %v411 = vld [vmem:[#allocation2 + $0x80] sm:$0xff]
      %v412 = vld [vmem:[#allocation2 + $0x90] sm:$0xff]
      %v413 = vld [vmem:[#allocation2 + $0x98] sm:$0xff]
      %v414 = vld [vmem:[#allocation2 + $0xa8] sm:$0xff]
      %v415 = vld [vmem:[#allocation2 + $0xb0] sm:$0xff]
      %v416 = vld [vmem:[#allocation2 + $0xc0] sm:$0xff]
      %v417 = vld [vmem:[#allocation2 + $0xc8] sm:$0xff]
      %v418 = vld [vmem:[#allocation2 + $0xd8] sm:$0xff]
      %v419 = vld [vmem:[#allocation2 + $0xe0] sm:$0xff]
      %v420 = vld [vmem:[#allocation2 + $0xf0] sm:$0xff]
      %v421 = vld [vmem:[#allocation2 + $0xf8] sm:$0xff]
      %v422 = vld [vmem:[#allocation2 + $0x108] sm:$0xff]
      %v423 = vld [vmem:[#allocation2 + $0x110] sm:$0xff]
      %v424 = vld [vmem:[#allocation2 + $0x120] sm:$0xff]
      %v425 = vld [vmem:[#allocation2 + $0x128] sm:$0xff]
      %v426 = vld [vmem:[#allocation2 + $0x138] sm:$0xff]
      %v427 = vld [vmem:[#allocation2 + $0x140] sm:$0xff]
      %v428 = vld [vmem:[#allocation2 + $0x150] sm:$0xff]
      %v429 = vld [vmem:[#allocation2 + $0x158] sm:$0xff]
      %v430 = vld [vmem:[#allocation2 + $0x168] sm:$0xff]
      %v431 = vld [vmem:[#allocation2 + $0x170] sm:$0xff]
      %v432 = vld [vmem:[%s1] sm:$0xf]
      %v433 = vld [vmem:[#allocation2 + $0x1] sm:$0xff]
      %v434 = vld [vmem:[#allocation2 + $0x9] sm:$0xff]
      %v435 = vld [vmem:[#allocation2 + $0x19] sm:$0xff]
      %v436 = vld [vmem:[#allocation2 + $0x21] sm:$0xff]
      %v437 = vld [vmem:[#allocation2 + $0x31] sm:$0xff]
      %v438 = vld [vmem:[#allocation2 + $0x39] sm:$0xff]
      %v439 = vld [vmem:[#allocation2 + $0x49] sm:$0xff]
      %v440 = vld [vmem:[#allocation2 + $0x51] sm:$0xff]
      %v441 = vld [vmem:[#allocation2 + $0x61] sm:$0xff]
      %v442 = vld [vmem:[#allocation2 + $0x69] sm:$0xff]
      %v443 = vld [vmem:[#allocation2 + $0x79] sm:$0xff]
      %v444 = vld [vmem:[#allocation2 + $0x81] sm:$0xff]
      %v445 = vld [vmem:[#allocation2 + $0x91] sm:$0xff]
      %v446 = vld [vmem:[#allocation2 + $0x99] sm:$0xff]
      %v447 = vld [vmem:[#allocation2 + $0xa9] sm:$0xff]
      %v448 = vld [vmem:[#allocation2 + $0xb1] sm:$0xff]
      %v449 = vld [vmem:[#allocation2 + $0xc1] sm:$0xff]
      %v450 = vld [vmem:[#allocation2 + $0xc9] sm:$0xff]
      %v451 = vld [vmem:[#allocation2 + $0xd9] sm:$0xff]
      %v452 = vld [vmem:[#allocation2 + $0xe1] sm:$0xff]
      %v453 = vld [vmem:[#allocation2 + $0xf1] sm:$0xff]
      %v454 = vld [vmem:[#allocation2 + $0xf9] sm:$0xff]
      %v455 = vld [vmem:[#allocation2 + $0x109] sm:$0xff]
      %v456 = vld [vmem:[#allocation2 + $0x111] sm:$0xff]
      %v457 = vld [vmem:[#allocation2 + $0x121] sm:$0xff]
      %v458 = vld [vmem:[#allocation2 + $0x129] sm:$0xff]
      %v459 = vld [vmem:[#allocation2 + $0x139] sm:$0xff]
      %v460 = vld [vmem:[#allocation2 + $0x141] sm:$0xff]
      %v461 = vld [vmem:[#allocation2 + $0x151] sm:$0xff]
      %v462 = vld [vmem:[#allocation2 + $0x159] sm:$0xff]
      %v463 = vld [vmem:[#allocation2 + $0x169] sm:$0xff]
      %v464 = vld [vmem:[#allocation2 + $0x171] sm:$0xff]
      %s465 = scalar_lea.vmem %s1, 4
      %v466 = vld [vmem:[%s465] sm:$0xf]
      %v468 = vsel %vm311, %v433, 0
      %v471 = vsel %vm311, %v434, 0
      %v474 = vsel %vm311, %v435, 0
      %v477 = vsel %vm311, %v436, 0
      %v480 = vsel %vm311, %v437, 0
      %v483 = vsel %vm311, %v438, 0
      %v486 = vsel %vm311, %v439, 0
      %v489 = vsel %vm311, %v440, 0
      %v492 = vsel %vm311, %v441, 0
      %v495 = vsel %vm311, %v442, 0
      %v498 = vsel %vm311, %v443, 0
      %v501 = vsel %vm311, %v444, 0
      %v504 = vsel %vm311, %v445, 0
      %v507 = vsel %vm311, %v446, 0
      %v510 = vsel %vm311, %v447, 0
      %v513 = vsel %vm311, %v448, 0
      %v516 = vsel %vm311, %v449, 0
      %v519 = vsel %vm311, %v450, 0
      %v522 = vsel %vm311, %v451, 0
      %v525 = vsel %vm311, %v452, 0
      %v528 = vsel %vm311, %v453, 0
      %v531 = vsel %vm311, %v454, 0
      %v534 = vsel %vm311, %v455, 0
      %v537 = vsel %vm311, %v456, 0
      %v540 = vsel %vm311, %v457, 0
      %v543 = vsel %vm311, %v458, 0
      %v546 = vsel %vm311, %v459, 0
      %v549 = vsel %vm311, %v460, 0
      %v552 = vsel %vm311, %v461, 0
      %v555 = vsel %vm311, %v462, 0
      %v558 = vsel %vm311, %v463, 0
      %v561 = vsel %vm311, %v464, 0
      %vm563 = vcmask 1043456
      %v565 = vsel %vm563, %v466, 0
      %567 = vmatprep.subr.mxu0 0.0
      %568 = vmatpush1.msra.mxu0 %v565
      %569 = vmatprep.subr.mxu0 0.0
      %570 = vmatpush1.msra.mxu0 0.0
      %571 = vmatprep.subr.mxu0 0.0
      %572 = vmatpush1.msra.mxu0 0.0
      %573 = vmatprep.subr.mxu0 0.0
      %574 = vmatpush1.msra.mxu0 0.0
      %575 = vmatprep.subr.mxu0 0.0
      %576 = vmatpush1.msra.mxu0 0.0
      %577 = vmatprep.subr.mxu0 0.0
      %578 = vmatpush1.msra.mxu0 0.0
      %579 = vmatprep.subr.mxu0 0.0
      %580 = vmatpush1.msra.mxu0 0.0
      %581 = vmatprep.subr.mxu0 0.0
      %582 = vmatpush1.msra.mxu0 0.0
      %583 = vmatprep.subr.mxu0 0.0
      %584 = vmatpush1.msra.mxu0 0.0
      %585 = vmatprep.subr.mxu0 0.0
      %586 = vmatpush1.msra.mxu0 0.0
      %587 = vmatprep.subr.mxu0 0.0
      %588 = vmatpush1.msra.mxu0 0.0
      %589 = vmatprep.subr.mxu0 0.0
      %590 = vmatpush1.msra.mxu0 0.0
      %591 = vmatprep.subr.mxu0 0.0
      %592 = vmatpush1.msra.mxu0 0.0
      %593 = vmatprep.subr.mxu0 0.0
      %594 = vmatpush1.msra.mxu0 0.0
      %595 = vmatprep.subr.mxu0 0.0
      %596 = vmatpush1.msra.mxu0 0.0
      %597 = vmatprep.subr.mxu0 0.0
      %598 = vmatpush1.msra.mxu0 0.0
      %599 = vmatprep.subr.mxu0 0.0
      %600 = vmatpush1.msra.mxu0 0.0
      %601 = vmatprep.subr.mxu0 0.0
      %602 = vmatpush1.msra.mxu0 0.0
      %603 = vmatprep.subr.mxu0 0.0
      %604 = vmatpush1.msra.mxu0 0.0
      %605 = vmatprep.subr.mxu0 0.0
      %606 = vmatpush1.msra.mxu0 0.0
      %607 = vmatprep.subr.mxu0 0.0
      %608 = vmatpush1.msra.mxu0 0.0
      %609 = vmatprep.subr.mxu0 0.0
      %610 = vmatpush1.msra.mxu0 0.0
      %611 = vmatprep.subr.mxu0 0.0
      %612 = vmatpush1.msra.mxu0 0.0
      %613 = vmatprep.subr.mxu0 0.0
      %614 = vmatpush1.msra.mxu0 0.0
      %615 = vmatprep.subr.mxu0 0.0
      %616 = vmatpush1.msra.mxu0 0.0
      %617 = vmatprep.subr.mxu0 0.0
      %618 = vmatpush1.msra.mxu0 0.0
      %619 = vmatprep.subr.mxu0 0.0
      %620 = vmatpush1.msra.mxu0 0.0
      %621 = vmatprep.subr.mxu0 0.0
      %622 = vmatpush1.msra.mxu0 0.0
      %623 = vmatprep.subr.mxu0 0.0
      %624 = vmatpush1.msra.mxu0 0.0
      %625 = vmatprep.subr.mxu0 0.0
      %626 = vmatpush1.msra.mxu0 0.0
      %627 = vmatprep.subr.mxu0 0.0
      %628 = vmatpush1.msra.mxu0 0.0
      %629 = vmatprep.subr.mxu0 0.0
      %630 = vmatpush1.msra.mxu0 0.0
      %631 = vmatprep.mubr.f32.mxu0 0.0
      %632 = vmatmul.mubr.f32.gmra.mrb[0].mxu0 %v468
      %v633 = vpop.f32.mrb[0].mxu0
      %v634 = vadd.f32 0.0, %v633
      %v635 = vpop.f32.mrb[0].mxu0
      %636 = vmatprep.mubr.f32.mxu0 0.0
      %637 = vmatmul.mubr.f32.gmra.mrb[0].mxu0 %v471
      %v638 = vpop.f32.mrb[0].mxu0
      %v639 = vadd.f32 0.0, %v638
      %v640 = vpop.f32.mrb[0].mxu0
      %641 = vmatprep.mubr.f32.mxu0 0.0
      %642 = vmatmul.mubr.f32.gmra.mrb[0].mxu0 %v474
      %v643 = vpop.f32.mrb[0].mxu0
      %v644 = vadd.f32 0.0, %v643
      %v645 = vpop.f32.mrb[0].mxu0
      %646 = vmatprep.mubr.f32.mxu0 0.0
      %647 = vmatmul.mubr.f32.gmra.mrb[0].mxu0 %v477
      %v648 = vpop.f32.mrb[0].mxu0
      %v649 = vadd.f32 0.0, %v648
      %v650 = vpop.f32.mrb[0].mxu0
      %651 = vmatprep.mubr.f32.mxu0 0.0
      %652 = vmatmul.mubr.f32.gmra.mrb[0].mxu0 %v480
      %v653 = vpop.f32.mrb[0].mxu0
      %v654 = vadd.f32 0.0, %v653
      %v655 = vpop.f32.mrb[0].mxu0
      %656 = vmatprep.mubr.f32.mxu0 0.0
      %657 = vmatmul.mubr.f32.gmra.mrb[0].mxu0 %v483
      %v658 = vpop.f32.mrb[0].mxu0
      %v659 = vadd.f32 0.0, %v658
      %v660 = vpop.f32.mrb[0].mxu0
      %661 = vmatprep.mubr.f32.mxu0 0.0
      %662 = vmatmul.mubr.f32.gmra.mrb[0].mxu0 %v486
      %v663 = vpop.f32.mrb[0].mxu0
      %v664 = vadd.f32 0.0, %v663
      %v665 = vpop.f32.mrb[0].mxu0
      %666 = vmatprep.mubr.f32.mxu0 0.0
      %667 = vmatmul.mubr.f32.gmra.mrb[0].mxu0 %v489
      %v668 = vpop.f32.mrb[0].mxu0
      %v669 = vadd.f32 0.0, %v668
      %v670 = vpop.f32.mrb[0].mxu0
      %671 = vmatprep.mubr.f32.mxu0 0.0
      %672 = vmatmul.mubr.f32.gmra.mrb[0].mxu0 %v492
      %v673 = vpop.f32.mrb[0].mxu0
      %v674 = vadd.f32 0.0, %v673
      %v675 = vpop.f32.mrb[0].mxu0
      %676 = vmatprep.mubr.f32.mxu0 0.0
      %677 = vmatmul.mubr.f32.gmra.mrb[0].mxu0 %v495
      %v678 = vpop.f32.mrb[0].mxu0
      %v679 = vadd.f32 0.0, %v678
      %v680 = vpop.f32.mrb[0].mxu0
      %681 = vmatprep.mubr.f32.mxu0 0.0
      %682 = vmatmul.mubr.f32.gmra.mrb[0].mxu0 %v498
      %v683 = vpop.f32.mrb[0].mxu0
      %v684 = vadd.f32 0.0, %v683
      %v685 = vpop.f32.mrb[0].mxu0
      %686 = vmatprep.mubr.f32.mxu0 0.0
      %687 = vmatmul.mubr.f32.gmra.mrb[0].mxu0 %v501
      %v688 = vpop.f32.mrb[0].mxu0
      %v689 = vadd.f32 0.0, %v688
      %v690 = vpop.f32.mrb[0].mxu0
      %691 = vmatprep.mubr.f32.mxu0 0.0
      %692 = vmatmul.mubr.f32.gmra.mrb[0].mxu0 %v504
      %v693 = vpop.f32.mrb[0].mxu0
      %v694 = vadd.f32 0.0, %v693
      %v695 = vpop.f32.mrb[0].mxu0
      %696 = vmatprep.mubr.f32.mxu0 0.0
      %697 = vmatmul.mubr.f32.gmra.mrb[0].mxu0 %v507
      %v698 = vpop.f32.mrb[0].mxu0
      %v699 = vadd.f32 0.0, %v698
      %v700 = vpop.f32.mrb[0].mxu0
      %701 = vmatprep.mubr.f32.mxu0 0.0
      %702 = vmatmul.mubr.f32.gmra.mrb[0].mxu0 %v510
      %v703 = vpop.f32.mrb[0].mxu0
      %v704 = vadd.f32 0.0, %v703
      %v705 = vpop.f32.mrb[0].mxu0
      %706 = vmatprep.mubr.f32.mxu0 0.0
      %707 = vmatmul.mubr.f32.gmra.mrb[0].mxu0 %v513
      %v708 = vpop.f32.mrb[0].mxu0
      %v709 = vadd.f32 0.0, %v708
      %v710 = vpop.f32.mrb[0].mxu0
      %711 = vmatprep.mubr.f32.mxu0 0.0
      %712 = vmatmul.mubr.f32.gmra.mrb[0].mxu0 %v516
      %v713 = vpop.f32.mrb[0].mxu0
      %v714 = vadd.f32 0.0, %v713
      %v715 = vpop.f32.mrb[0].mxu0
      %716 = vmatprep.mubr.f32.mxu0 0.0
      %717 = vmatmul.mubr.f32.gmra.mrb[0].mxu0 %v519
      %v718 = vpop.f32.mrb[0].mxu0
      %v719 = vadd.f32 0.0, %v718
      %v720 = vpop.f32.mrb[0].mxu0
      %721 = vmatprep.mubr.f32.mxu0 0.0
      %722 = vmatmul.mubr.f32.gmra.mrb[0].mxu0 %v522
      %v723 = vpop.f32.mrb[0].mxu0
      %v724 = vadd.f32 0.0, %v723
      %v725 = vpop.f32.mrb[0].mxu0
      %726 = vmatprep.mubr.f32.mxu0 0.0
      %727 = vmatmul.mubr.f32.gmra.mrb[0].mxu0 %v525
      %v728 = vpop.f32.mrb[0].mxu0
      %v729 = vadd.f32 0.0, %v728
      %v730 = vpop.f32.mrb[0].mxu0
      %731 = vmatprep.mubr.f32.mxu0 0.0
      %732 = vmatmul.mubr.f32.gmra.mrb[0].mxu0 %v528
      %v733 = vpop.f32.mrb[0].mxu0
      %v734 = vadd.f32 0.0, %v733
      %v735 = vpop.f32.mrb[0].mxu0
      %736 = vmatprep.mubr.f32.mxu0 0.0
      %737 = vmatmul.mubr.f32.gmra.mrb[0].mxu0 %v531
      %v738 = vpop.f32.mrb[0].mxu0
      %v739 = vadd.f32 0.0, %v738
      %v740 = vpop.f32.mrb[0].mxu0
      %741 = vmatprep.mubr.f32.mxu0 0.0
      %742 = vmatmul.mubr.f32.gmra.mrb[0].mxu0 %v534
      %v743 = vpop.f32.mrb[0].mxu0
      %v744 = vadd.f32 0.0, %v743
      %v745 = vpop.f32.mrb[0].mxu0
      %746 = vmatprep.mubr.f32.mxu0 0.0
      %747 = vmatmul.mubr.f32.gmra.mrb[0].mxu0 %v537
      %v748 = vpop.f32.mrb[0].mxu0
      %v749 = vadd.f32 0.0, %v748
      %v750 = vpop.f32.mrb[0].mxu0
      %751 = vmatprep.mubr.f32.mxu0 0.0
      %752 = vmatmul.mubr.f32.gmra.mrb[0].mxu0 %v540
      %v753 = vpop.f32.mrb[0].mxu0
      %v754 = vadd.f32 0.0, %v753
      %v755 = vpop.f32.mrb[0].mxu0
      %756 = vmatprep.mubr.f32.mxu0 0.0
      %757 = vmatmul.mubr.f32.gmra.mrb[0].mxu0 %v543
      %v758 = vpop.f32.mrb[0].mxu0
      %v759 = vadd.f32 0.0, %v758
      %v760 = vpop.f32.mrb[0].mxu0
      %761 = vmatprep.mubr.f32.mxu0 0.0
      %762 = vmatmul.mubr.f32.gmra.mrb[0].mxu0 %v546
      %v763 = vpop.f32.mrb[0].mxu0
      %v764 = vadd.f32 0.0, %v763
      %v765 = vpop.f32.mrb[0].mxu0
      %766 = vmatprep.mubr.f32.mxu0 0.0
      %767 = vmatmul.mubr.f32.gmra.mrb[0].mxu0 %v549
      %v768 = vpop.f32.mrb[0].mxu0
      %v769 = vadd.f32 0.0, %v768
      %v770 = vpop.f32.mrb[0].mxu0
      %771 = vmatprep.mubr.f32.mxu0 0.0
      %772 = vmatmul.mubr.f32.gmra.mrb[0].mxu0 %v552
      %v773 = vpop.f32.mrb[0].mxu0
      %v774 = vadd.f32 0.0, %v773
      %v775 = vpop.f32.mrb[0].mxu0
      %776 = vmatprep.mubr.f32.mxu0 0.0
      %777 = vmatmul.mubr.f32.gmra.mrb[0].mxu0 %v555
      %v778 = vpop.f32.mrb[0].mxu0
      %v779 = vadd.f32 0.0, %v778
      %v780 = vpop.f32.mrb[0].mxu0
      %781 = vmatprep.mubr.f32.mxu0 0.0
      %782 = vmatmul.mubr.f32.gmra.mrb[0].mxu0 %v558
      %v783 = vpop.f32.mrb[0].mxu0
      %v784 = vadd.f32 0.0, %v783
      %v785 = vpop.f32.mrb[0].mxu0
      %786 = vmatprep.mubr.f32.mxu0 0.0
      %787 = vmatmul.mubr.f32.gmra.mrb[0].mxu0 %v561
      %v788 = vpop.f32.mrb[0].mxu0
      %v789 = vadd.f32 0.0, %v788
      %v790 = vpop.f32.mrb[0].mxu0
      %791 = vdwg.mxu0
      %v793 = vsel %vm311, %v400, 0
      %v796 = vsel %vm311, %v401, 0
      %v799 = vsel %vm311, %v402, 0
      %v802 = vsel %vm311, %v403, 0
      %v805 = vsel %vm311, %v404, 0
      %v808 = vsel %vm311, %v405, 0
      %v811 = vsel %vm311, %v406, 0
      %v814 = vsel %vm311, %v407, 0
      %v817 = vsel %vm311, %v408, 0
      %v820 = vsel %vm311, %v409, 0
      %v823 = vsel %vm311, %v410, 0
      %v826 = vsel %vm311, %v411, 0
      %v829 = vsel %vm311, %v412, 0
      %v832 = vsel %vm311, %v413, 0
      %v835 = vsel %vm311, %v414, 0
      %v838 = vsel %vm311, %v415, 0
      %v841 = vsel %vm311, %v416, 0
      %v844 = vsel %vm311, %v417, 0
      %v847 = vsel %vm311, %v418, 0
      %v850 = vsel %vm311, %v419, 0
      %v853 = vsel %vm311, %v420, 0
      %v856 = vsel %vm311, %v421, 0
      %v859 = vsel %vm311, %v422, 0
      %v862 = vsel %vm311, %v423, 0
      %v865 = vsel %vm311, %v424, 0
      %v868 = vsel %vm311, %v425, 0
      %v871 = vsel %vm311, %v426, 0
      %v874 = vsel %vm311, %v427, 0
      %v877 = vsel %vm311, %v428, 0
      %v880 = vsel %vm311, %v429, 0
      %v883 = vsel %vm311, %v430, 0
      %v886 = vsel %vm311, %v431, 0
      %v889 = vsel %vm563, %v432, 0
      %891 = vmatprep.subr.mxu0 0.0
      %892 = vmatpush1.msra.mxu0 %v889
      %893 = vmatprep.subr.mxu0 0.0
      %894 = vmatpush1.msra.mxu0 0.0
      %895 = vmatprep.subr.mxu0 0.0
      %896 = vmatpush1.msra.mxu0 0.0
      %897 = vmatprep.subr.mxu0 0.0
      %898 = vmatpush1.msra.mxu0 0.0
      %899 = vmatprep.subr.mxu0 0.0
      %900 = vmatpush1.msra.mxu0 0.0
      %901 = vmatprep.subr.mxu0 0.0
      %902 = vmatpush1.msra.mxu0 0.0
      %903 = vmatprep.subr.mxu0 0.0
      %904 = vmatpush1.msra.mxu0 0.0
      %905 = vmatprep.subr.mxu0 0.0
      %906 = vmatpush1.msra.mxu0 0.0
      %907 = vmatprep.subr.mxu0 0.0
      %908 = vmatpush1.msra.mxu0 0.0
      %909 = vmatprep.subr.mxu0 0.0
      %910 = vmatpush1.msra.mxu0 0.0
      %911 = vmatprep.subr.mxu0 0.0
      %912 = vmatpush1.msra.mxu0 0.0
      %913 = vmatprep.subr.mxu0 0.0
      %914 = vmatpush1.msra.mxu0 0.0
      %915 = vmatprep.subr.mxu0 0.0
      %916 = vmatpush1.msra.mxu0 0.0
      %917 = vmatprep.subr.mxu0 0.0
      %918 = vmatpush1.msra.mxu0 0.0
      %919 = vmatprep.subr.mxu0 0.0
      %920 = vmatpush1.msra.mxu0 0.0
      %921 = vmatprep.subr.mxu0 0.0
      %922 = vmatpush1.msra.mxu0 0.0
      %923 = vmatprep.subr.mxu0 0.0
      %924 = vmatpush1.msra.mxu0 0.0
      %925 = vmatprep.subr.mxu0 0.0
      %926 = vmatpush1.msra.mxu0 0.0
      %927 = vmatprep.subr.mxu0 0.0
      %928 = vmatpush1.msra.mxu0 0.0
      %929 = vmatprep.subr.mxu0 0.0
      %930 = vmatpush1.msra.mxu0 0.0
      %931 = vmatprep.subr.mxu0 0.0
      %932 = vmatpush1.msra.mxu0 0.0
      %933 = vmatprep.subr.mxu0 0.0
      %934 = vmatpush1.msra.mxu0 0.0
      %935 = vmatprep.subr.mxu0 0.0
      %936 = vmatpush1.msra.mxu0 0.0
      %937 = vmatprep.subr.mxu0 0.0
      %938 = vmatpush1.msra.mxu0 0.0
      %939 = vmatprep.subr.mxu0 0.0
      %940 = vmatpush1.msra.mxu0 0.0
      %941 = vmatprep.subr.mxu0 0.0
      %942 = vmatpush1.msra.mxu0 0.0
      %943 = vmatprep.subr.mxu0 0.0
      %944 = vmatpush1.msra.mxu0 0.0
      %945 = vmatprep.subr.mxu0 0.0
      %946 = vmatpush1.msra.mxu0 0.0
      %947 = vmatprep.subr.mxu0 0.0
      %948 = vmatpush1.msra.mxu0 0.0
      %949 = vmatprep.subr.mxu0 0.0
      %950 = vmatpush1.msra.mxu0 0.0
      %951 = vmatprep.subr.mxu0 0.0
      %952 = vmatpush1.msra.mxu0 0.0
      %953 = vmatprep.subr.mxu0 0.0
      %954 = vmatpush1.msra.mxu0 0.0
      %955 = vmatprep.mubr.f32.mxu0 0.0
      %956 = vmatmul.mubr.f32.gmra.mrb[0].mxu0 %v793
      %v957 = vpop.f32.mrb[0].mxu0
      %v958 = vadd.f32 %v634, %v957
      %v959 = vpop.f32.mrb[0].mxu0
      %960 = vmatprep.mubr.f32.mxu0 0.0
      %961 = vmatmul.mubr.f32.gmra.mrb[0].mxu0 %v796
      %v962 = vpop.f32.mrb[0].mxu0
      %v963 = vadd.f32 %v639, %v962
      %v964 = vpop.f32.mrb[0].mxu0
      %965 = vmatprep.mubr.f32.mxu0 0.0
      %966 = vmatmul.mubr.f32.gmra.mrb[0].mxu0 %v799
      %v967 = vpop.f32.mrb[0].mxu0
      %v968 = vadd.f32 %v644, %v967
      %v969 = vpop.f32.mrb[0].mxu0
      %970 = vmatprep.mubr.f32.mxu0 0.0
      %971 = vmatmul.mubr.f32.gmra.mrb[0].mxu0 %v802
      %v972 = vpop.f32.mrb[0].mxu0
      %v973 = vadd.f32 %v649, %v972
      %v974 = vpop.f32.mrb[0].mxu0
      %975 = vmatprep.mubr.f32.mxu0 0.0
      %976 = vmatmul.mubr.f32.gmra.mrb[0].mxu0 %v805
      %v977 = vpop.f32.mrb[0].mxu0
      %v978 = vadd.f32 %v654, %v977
      %v979 = vpop.f32.mrb[0].mxu0
      %980 = vmatprep.mubr.f32.mxu0 0.0
      %981 = vmatmul.mubr.f32.gmra.mrb[0].mxu0 %v808
      %v982 = vpop.f32.mrb[0].mxu0
      %v983 = vadd.f32 %v659, %v982
      %v984 = vpop.f32.mrb[0].mxu0
      %985 = vmatprep.mubr.f32.mxu0 0.0
      %986 = vmatmul.mubr.f32.gmra.mrb[0].mxu0 %v811
      %v987 = vpop.f32.mrb[0].mxu0
      %v988 = vadd.f32 %v664, %v987
      %v989 = vpop.f32.mrb[0].mxu0
      %990 = vmatprep.mubr.f32.mxu0 0.0
      %991 = vmatmul.mubr.f32.gmra.mrb[0].mxu0 %v814
      %v992 = vpop.f32.mrb[0].mxu0
      %v993 = vadd.f32 %v669, %v992
      %v994 = vpop.f32.mrb[0].mxu0
      %995 = vmatprep.mubr.f32.mxu0 0.0
      %996 = vmatmul.mubr.f32.gmra.mrb[0].mxu0 %v817
      %v997 = vpop.f32.mrb[0].mxu0
      %v998 = vadd.f32 %v674, %v997
      %v999 = vpop.f32.mrb[0].mxu0
      %1000 = vmatprep.mubr.f32.mxu0 0.0
      %1001 = vmatmul.mubr.f32.gmra.mrb[0].mxu0 %v820
      %v1002 = vpop.f32.mrb[0].mxu0
      %v1003 = vadd.f32 %v679, %v1002
      %v1004 = vpop.f32.mrb[0].mxu0
      %1005 = vmatprep.mubr.f32.mxu0 0.0
      %1006 = vmatmul.mubr.f32.gmra.mrb[0].mxu0 %v823
      %v1007 = vpop.f32.mrb[0].mxu0
      %v1008 = vadd.f32 %v684, %v1007
      %v1009 = vpop.f32.mrb[0].mxu0
      %1010 = vmatprep.mubr.f32.mxu0 0.0
      %1011 = vmatmul.mubr.f32.gmra.mrb[0].mxu0 %v826
      %v1012 = vpop.f32.mrb[0].mxu0
      %v1013 = vadd.f32 %v689, %v1012
      %v1014 = vpop.f32.mrb[0].mxu0
      %1015 = vmatprep.mubr.f32.mxu0 0.0
      %1016 = vmatmul.mubr.f32.gmra.mrb[0].mxu0 %v829
      %v1017 = vpop.f32.mrb[0].mxu0
      %v1018 = vadd.f32 %v694, %v1017
      %v1019 = vpop.f32.mrb[0].mxu0
      %1020 = vmatprep.mubr.f32.mxu0 0.0
      %1021 = vmatmul.mubr.f32.gmra.mrb[0].mxu0 %v832
      %v1022 = vpop.f32.mrb[0].mxu0
      %v1023 = vadd.f32 %v699, %v1022
      %v1024 = vpop.f32.mrb[0].mxu0
      %1025 = vmatprep.mubr.f32.mxu0 0.0
      %1026 = vmatmul.mubr.f32.gmra.mrb[0].mxu0 %v835
      %v1027 = vpop.f32.mrb[0].mxu0
      %v1028 = vadd.f32 %v704, %v1027
      %v1029 = vpop.f32.mrb[0].mxu0
      %1030 = vmatprep.mubr.f32.mxu0 0.0
      %1031 = vmatmul.mubr.f32.gmra.mrb[0].mxu0 %v838
      %v1032 = vpop.f32.mrb[0].mxu0
      %v1033 = vadd.f32 %v709, %v1032
      %v1034 = vpop.f32.mrb[0].mxu0
      %1035 = vmatprep.mubr.f32.mxu0 0.0
      %1036 = vmatmul.mubr.f32.gmra.mrb[0].mxu0 %v841
      %v1037 = vpop.f32.mrb[0].mxu0
      %v1038 = vadd.f32 %v714, %v1037
      %v1039 = vpop.f32.mrb[0].mxu0
      %1040 = vmatprep.mubr.f32.mxu0 0.0
      %1041 = vmatmul.mubr.f32.gmra.mrb[0].mxu0 %v844
      %v1042 = vpop.f32.mrb[0].mxu0
      %v1043 = vadd.f32 %v719, %v1042
      %v1044 = vpop.f32.mrb[0].mxu0
      %1045 = vmatprep.mubr.f32.mxu0 0.0
      %1046 = vmatmul.mubr.f32.gmra.mrb[0].mxu0 %v847
      %v1047 = vpop.f32.mrb[0].mxu0
      %v1048 = vadd.f32 %v724, %v1047
      %v1049 = vpop.f32.mrb[0].mxu0
      %1050 = vmatprep.mubr.f32.mxu0 0.0
      %1051 = vmatmul.mubr.f32.gmra.mrb[0].mxu0 %v850
      %v1052 = vpop.f32.mrb[0].mxu0
      %v1053 = vadd.f32 %v729, %v1052
      %v1054 = vpop.f32.mrb[0].mxu0
      %1055 = vmatprep.mubr.f32.mxu0 0.0
      %1056 = vmatmul.mubr.f32.gmra.mrb[0].mxu0 %v853
      %v1057 = vpop.f32.mrb[0].mxu0
      %v1058 = vadd.f32 %v734, %v1057
      %v1059 = vpop.f32.mrb[0].mxu0
      %1060 = vmatprep.mubr.f32.mxu0 0.0
      %1061 = vmatmul.mubr.f32.gmra.mrb[0].mxu0 %v856
      %v1062 = vpop.f32.mrb[0].mxu0
      %v1063 = vadd.f32 %v739, %v1062
      %v1064 = vpop.f32.mrb[0].mxu0
      %1065 = vmatprep.mubr.f32.mxu0 0.0
      %1066 = vmatmul.mubr.f32.gmra.mrb[0].mxu0 %v859
      %v1067 = vpop.f32.mrb[0].mxu0
      %v1068 = vadd.f32 %v744, %v1067
      %v1069 = vpop.f32.mrb[0].mxu0
      %1070 = vmatprep.mubr.f32.mxu0 0.0
      %1071 = vmatmul.mubr.f32.gmra.mrb[0].mxu0 %v862
      %v1072 = vpop.f32.mrb[0].mxu0
      %v1073 = vadd.f32 %v749, %v1072
      %v1074 = vpop.f32.mrb[0].mxu0
      %1075 = vmatprep.mubr.f32.mxu0 0.0
      %1076 = vmatmul.mubr.f32.gmra.mrb[0].mxu0 %v865
      %v1077 = vpop.f32.mrb[0].mxu0
      %v1078 = vadd.f32 %v754, %v1077
      %v1079 = vpop.f32.mrb[0].mxu0
      %1080 = vmatprep.mubr.f32.mxu0 0.0
      %1081 = vmatmul.mubr.f32.gmra.mrb[0].mxu0 %v868
      %v1082 = vpop.f32.mrb[0].mxu0
      %v1083 = vadd.f32 %v759, %v1082
      %v1084 = vpop.f32.mrb[0].mxu0
      %1085 = vmatprep.mubr.f32.mxu0 0.0
      %1086 = vmatmul.mubr.f32.gmra.mrb[0].mxu0 %v871
      %v1087 = vpop.f32.mrb[0].mxu0
      %v1088 = vadd.f32 %v764, %v1087
      %v1089 = vpop.f32.mrb[0].mxu0
      %1090 = vmatprep.mubr.f32.mxu0 0.0
      %1091 = vmatmul.mubr.f32.gmra.mrb[0].mxu0 %v874
      %v1092 = vpop.f32.mrb[0].mxu0
      %v1093 = vadd.f32 %v769, %v1092
      %v1094 = vpop.f32.mrb[0].mxu0
      %1095 = vmatprep.mubr.f32.mxu0 0.0
      %1096 = vmatmul.mubr.f32.gmra.mrb[0].mxu0 %v877
      %v1097 = vpop.f32.mrb[0].mxu0
      %v1098 = vadd.f32 %v774, %v1097
      %v1099 = vpop.f32.mrb[0].mxu0
      %1100 = vmatprep.mubr.f32.mxu0 0.0
      %1101 = vmatmul.mubr.f32.gmra.mrb[0].mxu0 %v880
      %v1102 = vpop.f32.mrb[0].mxu0
      %v1103 = vadd.f32 %v779, %v1102
      %v1104 = vpop.f32.mrb[0].mxu0
      %1105 = vmatprep.mubr.f32.mxu0 0.0
      %1106 = vmatmul.mubr.f32.gmra.mrb[0].mxu0 %v883
      %v1107 = vpop.f32.mrb[0].mxu0
      %v1108 = vadd.f32 %v784, %v1107
      %v1109 = vpop.f32.mrb[0].mxu0
      %1110 = vmatprep.mubr.f32.mxu0 0.0
      %1111 = vmatmul.mubr.f32.gmra.mrb[0].mxu0 %v886
      %v1112 = vpop.f32.mrb[0].mxu0
      %v1113 = vadd.f32 %v789, %v1112
      %v1114 = vpop.f32.mrb[0].mxu0
      %1115 = vdwg.mxu0
      %v1116 = vld [vmem:[#allocation2 + $0x2] sm:$0xff]
      %v1117 = vld [vmem:[#allocation2 + $0xa] sm:$0xff]
      %v1118 = vld [vmem:[#allocation2 + $0x1a] sm:$0xff]
      %v1119 = vld [vmem:[#allocation2 + $0x22] sm:$0xff]
      %v1120 = vld [vmem:[#allocation2 + $0x32] sm:$0xff]
      %v1121 = vld [vmem:[#allocation2 + $0x3a] sm:$0xff]
      %v1122 = vld [vmem:[#allocation2 + $0x4a] sm:$0xff]
      %v1123 = vld [vmem:[#allocation2 + $0x52] sm:$0xff]
      %v1124 = vld [vmem:[#allocation2 + $0x62] sm:$0xff]
      %v1125 = vld [vmem:[#allocation2 + $0x6a] sm:$0xff]
      %v1126 = vld [vmem:[#allocation2 + $0x7a] sm:$0xff]
      %v1127 = vld [vmem:[#allocation2 + $0x82] sm:$0xff]
      %v1128 = vld [vmem:[#allocation2 + $0x92] sm:$0xff]
      %v1129 = vld [vmem:[#allocation2 + $0x9a] sm:$0xff]
      %v1130 = vld [vmem:[#allocation2 + $0xaa] sm:$0xff]
      %v1131 = vld [vmem:[#allocation2 + $0xb2] sm:$0xff]
      %v1132 = vld [vmem:[#allocation2 + $0xc2] sm:$0xff]
      %v1133 = vld [vmem:[#allocation2 + $0xca] sm:$0xff]
      %v1134 = vld [vmem:[#allocation2 + $0xda] sm:$0xff]
      %v1135 = vld [vmem:[#allocation2 + $0xe2] sm:$0xff]
      %v1136 = vld [vmem:[#allocation2 + $0xf2] sm:$0xff]
      %v1137 = vld [vmem:[#allocation2 + $0xfa] sm:$0xff]
      %v1138 = vld [vmem:[#allocation2 + $0x10a] sm:$0xff]
      %v1139 = vld [vmem:[#allocation2 + $0x112] sm:$0xff]
      %v1140 = vld [vmem:[#allocation2 + $0x122] sm:$0xff]
      %v1141 = vld [vmem:[#allocation2 + $0x12a] sm:$0xff]
      %v1142 = vld [vmem:[#allocation2 + $0x13a] sm:$0xff]
      %v1143 = vld [vmem:[#allocation2 + $0x142] sm:$0xff]
      %v1144 = vld [vmem:[#allocation2 + $0x152] sm:$0xff]
      %v1145 = vld [vmem:[#allocation2 + $0x15a] sm:$0xff]
      %v1146 = vld [vmem:[#allocation2 + $0x16a] sm:$0xff]
      %v1147 = vld [vmem:[#allocation2 + $0x172] sm:$0xff]
      %s1148 = scalar_lea.vmem %s1, 8
      %v1149 = vld [vmem:[%s1148] sm:$0xf]
      %v1151 = vsel %vm311, %v1116, 0
      %v1154 = vsel %vm311, %v1117, 0
      %v1157 = vsel %vm311, %v1118, 0
      %v1160 = vsel %vm311, %v1119, 0
      %v1163 = vsel %vm311, %v1120, 0
      %v1166 = vsel %vm311, %v1121, 0
      %v1169 = vsel %vm311, %v1122, 0
      %v1172 = vsel %vm311, %v1123, 0
      %v1175 = vsel %vm311, %v1124, 0
      %v1178 = vsel %vm311, %v1125, 0
      %v1181 = vsel %vm311, %v1126, 0
      %v1184 = vsel %vm311, %v1127, 0
      %v1187 = vsel %vm311, %v1128, 0
      %v1190 = vsel %vm311, %v1129, 0
      %v1193 = vsel %vm311, %v1130, 0
      %v1196 = vsel %vm311, %v1131, 0
      %v1199 = vsel %vm311, %v1132, 0
      %v1202 = vsel %vm311, %v1133, 0
      %v1205 = vsel %vm311, %v1134, 0
      %v1208 = vsel %vm311, %v1135, 0
      %v1211 = vsel %vm311, %v1136, 0
      %v1214 = vsel %vm311, %v1137, 0
      %v1217 = vsel %vm311, %v1138, 0
      %v1220 = vsel %vm311, %v1139, 0
      %v1223 = vsel %vm311, %v1140, 0
      %v1226 = vsel %vm311, %v1141, 0
      %v1229 = vsel %vm311, %v1142, 0
      %v1232 = vsel %vm311, %v1143, 0
      %v1235 = vsel %vm311, %v1144, 0
      %v1238 = vsel %vm311, %v1145, 0
      %v1241 = vsel %vm311, %v1146, 0
      %v1244 = vsel %vm311, %v1147, 0
      %v1247 = vsel %vm563, %v1149, 0
      %1249 = vmatprep.subr.mxu0 0.0
      %1250 = vmatpush1.msra.mxu0 %v1247
      %1251 = vmatprep.subr.mxu0 0.0
      %1252 = vmatpush1.msra.mxu0 0.0
      %1253 = vmatprep.subr.mxu0 0.0
      %1254 = vmatpush1.msra.mxu0 0.0
      %1255 = vmatprep.subr.mxu0 0.0
      %1256 = vmatpush1.msra.mxu0 0.0
      %1257 = vmatprep.subr.mxu0 0.0
      %1258 = vmatpush1.msra.mxu0 0.0
      %1259 = vmatprep.subr.mxu0 0.0
      %1260 = vmatpush1.msra.mxu0 0.0
      %1261 = vmatprep.subr.mxu0 0.0
      %1262 = vmatpush1.msra.mxu0 0.0
      %1263 = vmatprep.subr.mxu0 0.0
      %1264 = vmatpush1.msra.mxu0 0.0
      %1265 = vmatprep.subr.mxu0 0.0
      %1266 = vmatpush1.msra.mxu0 0.0
      %1267 = vmatprep.subr.mxu0 0.0
      %1268 = vmatpush1.msra.mxu0 0.0
      %1269 = vmatprep.subr.mxu0 0.0
      %1270 = vmatpush1.msra.mxu0 0.0
      %1271 = vmatprep.subr.mxu0 0.0
      %1272 = vmatpush1.msra.mxu0 0.0
      %1273 = vmatprep.subr.mxu0 0.0
      %1274 = vmatpush1.msra.mxu0 0.0
      %1275 = vmatprep.subr.mxu0 0.0
      %1276 = vmatpush1.msra.mxu0 0.0
      %1277 = vmatprep.subr.mxu0 0.0
      %1278 = vmatpush1.msra.mxu0 0.0
      %1279 = vmatprep.subr.mxu0 0.0
      %1280 = vmatpush1.msra.mxu0 0.0
      %1281 = vmatprep.subr.mxu0 0.0
      %1282 = vmatpush1.msra.mxu0 0.0
      %1283 = vmatprep.subr.mxu0 0.0
      %1284 = vmatpush1.msra.mxu0 0.0
      %1285 = vmatprep.subr.mxu0 0.0
      %1286 = vmatpush1.msra.mxu0 0.0
      %1287 = vmatprep.subr.mxu0 0.0
      %1288 = vmatpush1.msra.mxu0 0.0
      %1289 = vmatprep.subr.mxu0 0.0
      %1290 = vmatpush1.msra.mxu0 0.0
      %1291 = vmatprep.subr.mxu0 0.0
      %1292 = vmatpush1.msra.mxu0 0.0
      %1293 = vmatprep.subr.mxu0 0.0
      %1294 = vmatpush1.msra.mxu0 0.0
      %1295 = vmatprep.subr.mxu0 0.0
      %1296 = vmatpush1.msra.mxu0 0.0
      %1297 = vmatprep.subr.mxu0 0.0
      %1298 = vmatpush1.msra.mxu0 0.0
      %1299 = vmatprep.subr.mxu0 0.0
      %1300 = vmatpush1.msra.mxu0 0.0
      %1301 = vmatprep.subr.mxu0 0.0
      %1302 = vmatpush1.msra.mxu0 0.0
      %1303 = vmatprep.subr.mxu0 0.0
      %1304 = vmatpush1.msra.mxu0 0.0
      %1305 = vmatprep.subr.mxu0 0.0
      %1306 = vmatpush1.msra.mxu0 0.0
      %1307 = vmatprep.subr.mxu0 0.0
      %1308 = vmatpush1.msra.mxu0 0.0
      %1309 = vmatprep.subr.mxu0 0.0
      %1310 = vmatpush1.msra.mxu0 0.0
      %1311 = vmatprep.subr.mxu0 0.0
      %1312 = vmatpush1.msra.mxu0 0.0
      %1313 = vmatprep.mubr.f32.mxu0 0.0
      %1314 = vmatmul.mubr.f32.gmra.mrb[0].mxu0 %v1151
      %v1315 = vpop.f32.mrb[0].mxu0
      %v1316 = vadd.f32 0.0, %v1315
      %v1317 = vpop.f32.mrb[0].mxu0
      %1318 = vmatprep.mubr.f32.mxu0 0.0
      %1319 = vmatmul.mubr.f32.gmra.mrb[0].mxu0 %v1154
      %v1320 = vpop.f32.mrb[0].mxu0
      %v1321 = vadd.f32 0.0, %v1320
      %v1322 = vpop.f32.mrb[0].mxu0
      %1323 = vmatprep.mubr.f32.mxu0 0.0
      %1324 = vmatmul.mubr.f32.gmra.mrb[0].mxu0 %v1157
      %v1325 = vpop.f32.mrb[0].mxu0
      %v1326 = vadd.f32 0.0, %v1325
      %v1327 = vpop.f32.mrb[0].mxu0
      %1328 = vmatprep.mubr.f32.mxu0 0.0
      %1329 = vmatmul.mubr.f32.gmra.mrb[0].mxu0 %v1160
      %v1330 = vpop.f32.mrb[0].mxu0
      %v1331 = vadd.f32 0.0, %v1330
      %v1332 = vpop.f32.mrb[0].mxu0
      %1333 = vmatprep.mubr.f32.mxu0 0.0
      %1334 = vmatmul.mubr.f32.gmra.mrb[0].mxu0 %v1163
      %v1335 = vpop.f32.mrb[0].mxu0
      %v1336 = vadd.f32 0.0, %v1335
      %v1337 = vpop.f32.mrb[0].mxu0
      %1338 = vmatprep.mubr.f32.mxu0 0.0
      %1339 = vmatmul.mubr.f32.gmra.mrb[0].mxu0 %v1166
      %v1340 = vpop.f32.mrb[0].mxu0
      %v1341 = vadd.f32 0.0, %v1340
      %v1342 = vpop.f32.mrb[0].mxu0
      %1343 = vmatprep.mubr.f32.mxu0 0.0
      %1344 = vmatmul.mubr.f32.gmra.mrb[0].mxu0 %v1169
      %v1345 = vpop.f32.mrb[0].mxu0
      %v1346 = vadd.f32 0.0, %v1345
      %v1347 = vpop.f32.mrb[0].mxu0
      %1348 = vmatprep.mubr.f32.mxu0 0.0
      %1349 = vmatmul.mubr.f32.gmra.mrb[0].mxu0 %v1172
      %v1350 = vpop.f32.mrb[0].mxu0
      %v1351 = vadd.f32 0.0, %v1350
      %v1352 = vpop.f32.mrb[0].mxu0
      %1353 = vmatprep.mubr.f32.mxu0 0.0
      %1354 = vmatmul.mubr.f32.gmra.mrb[0].mxu0 %v1175
      %v1355 = vpop.f32.mrb[0].mxu0
      %v1356 = vadd.f32 0.0, %v1355
      %v1357 = vpop.f32.mrb[0].mxu0
      %1358 = vmatprep.mubr.f32.mxu0 0.0
      %1359 = vmatmul.mubr.f32.gmra.mrb[0].mxu0 %v1178
      %v1360 = vpop.f32.mrb[0].mxu0
      %v1361 = vadd.f32 0.0, %v1360
      %v1362 = vpop.f32.mrb[0].mxu0
      %1363 = vmatprep.mubr.f32.mxu0 0.0
      %1364 = vmatmul.mubr.f32.gmra.mrb[0].mxu0 %v1181
      %v1365 = vpop.f32.mrb[0].mxu0
      %v1366 = vadd.f32 0.0, %v1365
      %v1367 = vpop.f32.mrb[0].mxu0
      %1368 = vmatprep.mubr.f32.mxu0 0.0
      %1369 = vmatmul.mubr.f32.gmra.mrb[0].mxu0 %v1184
      %v1370 = vpop.f32.mrb[0].mxu0
      %v1371 = vadd.f32 0.0, %v1370
      %v1372 = vpop.f32.mrb[0].mxu0
      %1373 = vmatprep.mubr.f32.mxu0 0.0
      %1374 = vmatmul.mubr.f32.gmra.mrb[0].mxu0 %v1187
      %v1375 = vpop.f32.mrb[0].mxu0
      %v1376 = vadd.f32 0.0, %v1375
      %v1377 = vpop.f32.mrb[0].mxu0
      %1378 = vmatprep.mubr.f32.mxu0 0.0
      %1379 = vmatmul.mubr.f32.gmra.mrb[0].mxu0 %v1190
      %v1380 = vpop.f32.mrb[0].mxu0
      %v1381 = vadd.f32 0.0, %v1380
      %v1382 = vpop.f32.mrb[0].mxu0
      %1383 = vmatprep.mubr.f32.mxu0 0.0
      %1384 = vmatmul.mubr.f32.gmra.mrb[0].mxu0 %v1193
      %v1385 = vpop.f32.mrb[0].mxu0
      %v1386 = vadd.f32 0.0, %v1385
      %v1387 = vpop.f32.mrb[0].mxu0
      %1388 = vmatprep.mubr.f32.mxu0 0.0
      %1389 = vmatmul.mubr.f32.gmra.mrb[0].mxu0 %v1196
      %v1390 = vpop.f32.mrb[0].mxu0
      %v1391 = vadd.f32 0.0, %v1390
      %v1392 = vpop.f32.mrb[0].mxu0
      %1393 = vmatprep.mubr.f32.mxu0 0.0
      %1394 = vmatmul.mubr.f32.gmra.mrb[0].mxu0 %v1199
      %v1395 = vpop.f32.mrb[0].mxu0
      %v1396 = vadd.f32 0.0, %v1395
      %v1397 = vpop.f32.mrb[0].mxu0
      %1398 = vmatprep.mubr.f32.mxu0 0.0
      %1399 = vmatmul.mubr.f32.gmra.mrb[0].mxu0 %v1202
      %v1400 = vpop.f32.mrb[0].mxu0
      %v1401 = vadd.f32 0.0, %v1400
      %v1402 = vpop.f32.mrb[0].mxu0
      %1403 = vmatprep.mubr.f32.mxu0 0.0
      %1404 = vmatmul.mubr.f32.gmra.mrb[0].mxu0 %v1205
      %v1405 = vpop.f32.mrb[0].mxu0
      %v1406 = vadd.f32 0.0, %v1405
      %v1407 = vpop.f32.mrb[0].mxu0
      %1408 = vmatprep.mubr.f32.mxu0 0.0
      %1409 = vmatmul.mubr.f32.gmra.mrb[0].mxu0 %v1208
      %v1410 = vpop.f32.mrb[0].mxu0
      %v1411 = vadd.f32 0.0, %v1410
      %v1412 = vpop.f32.mrb[0].mxu0
      %1413 = vmatprep.mubr.f32.mxu0 0.0
      %1414 = vmatmul.mubr.f32.gmra.mrb[0].mxu0 %v1211
      %v1415 = vpop.f32.mrb[0].mxu0
      %v1416 = vadd.f32 0.0, %v1415
      %v1417 = vpop.f32.mrb[0].mxu0
      %1418 = vmatprep.mubr.f32.mxu0 0.0
      %1419 = vmatmul.mubr.f32.gmra.mrb[0].mxu0 %v1214
      %v1420 = vpop.f32.mrb[0].mxu0
      %v1421 = vadd.f32 0.0, %v1420
      %v1422 = vpop.f32.mrb[0].mxu0
      %1423 = vmatprep.mubr.f32.mxu0 0.0
      %1424 = vmatmul.mubr.f32.gmra.mrb[0].mxu0 %v1217
      %v1425 = vpop.f32.mrb[0].mxu0
      %v1426 = vadd.f32 0.0, %v1425
      %v1427 = vpop.f32.mrb[0].mxu0
      %1428 = vmatprep.mubr.f32.mxu0 0.0
      %1429 = vmatmul.mubr.f32.gmra.mrb[0].mxu0 %v1220
      %v1430 = vpop.f32.mrb[0].mxu0
      %v1431 = vadd.f32 0.0, %v1430
      %v1432 = vpop.f32.mrb[0].mxu0
      %1433 = vmatprep.mubr.f32.mxu0 0.0
      %1434 = vmatmul.mubr.f32.gmra.mrb[0].mxu0 %v1223
      %v1435 = vpop.f32.mrb[0].mxu0
      %v1436 = vadd.f32 0.0, %v1435
      %v1437 = vpop.f32.mrb[0].mxu0
      %1438 = vmatprep.mubr.f32.mxu0 0.0
      %1439 = vmatmul.mubr.f32.gmra.mrb[0].mxu0 %v1226
      %v1440 = vpop.f32.mrb[0].mxu0
      %v1441 = vadd.f32 0.0, %v1440
      %v1442 = vpop.f32.mrb[0].mxu0
      %1443 = vmatprep.mubr.f32.mxu0 0.0
      %1444 = vmatmul.mubr.f32.gmra.mrb[0].mxu0 %v1229
      %v1445 = vpop.f32.mrb[0].mxu0
      %v1446 = vadd.f32 0.0, %v1445
      %v1447 = vpop.f32.mrb[0].mxu0
      %1448 = vmatprep.mubr.f32.mxu0 0.0
      %1449 = vmatmul.mubr.f32.gmra.mrb[0].mxu0 %v1232
      %v1450 = vpop.f32.mrb[0].mxu0
      %v1451 = vadd.f32 0.0, %v1450
      %v1452 = vpop.f32.mrb[0].mxu0
      %1453 = vmatprep.mubr.f32.mxu0 0.0
      %1454 = vmatmul.mubr.f32.gmra.mrb[0].mxu0 %v1235
      %v1455 = vpop.f32.mrb[0].mxu0
      %v1456 = vadd.f32 0.0, %v1455
      %v1457 = vpop.f32.mrb[0].mxu0
      %1458 = vmatprep.mubr.f32.mxu0 0.0
      %1459 = vmatmul.mubr.f32.gmra.mrb[0].mxu0 %v1238
      %v1460 = vpop.f32.mrb[0].mxu0
      %v1461 = vadd.f32 0.0, %v1460
      %v1462 = vpop.f32.mrb[0].mxu0
      %1463 = vmatprep.mubr.f32.mxu0 0.0
      %1464 = vmatmul.mubr.f32.gmra.mrb[0].mxu0 %v1241
      %v1465 = vpop.f32.mrb[0].mxu0
      %v1466 = vadd.f32 0.0, %v1465
      %v1467 = vpop.f32.mrb[0].mxu0
      %1468 = vmatprep.mubr.f32.mxu0 0.0
      %1469 = vmatmul.mubr.f32.gmra.mrb[0].mxu0 %v1244
      %v1470 = vpop.f32.mrb[0].mxu0
      %v1471 = vadd.f32 0.0, %v1470
      %v1472 = vpop.f32.mrb[0].mxu0
      %1473 = vdwg.mxu0
      %v1474 = vadd.f32 %v958, %v1316
      %v1475 = vadd.f32 %v963, %v1321
      %v1476 = vadd.f32 %v968, %v1326
      %v1477 = vadd.f32 %v973, %v1331
      %v1478 = vadd.f32 %v978, %v1336
      %v1479 = vadd.f32 %v983, %v1341
      %v1480 = vadd.f32 %v988, %v1346
      %v1481 = vadd.f32 %v993, %v1351
      %v1482 = vadd.f32 %v998, %v1356
      %v1483 = vadd.f32 %v1003, %v1361
      %v1484 = vadd.f32 %v1008, %v1366
      %v1485 = vadd.f32 %v1013, %v1371
      %v1486 = vadd.f32 %v1018, %v1376
      %v1487 = vadd.f32 %v1023, %v1381
      %v1488 = vadd.f32 %v1028, %v1386
      %v1489 = vadd.f32 %v1033, %v1391
      %v1490 = vadd.f32 %v1038, %v1396
      %v1491 = vadd.f32 %v1043, %v1401
      %v1492 = vadd.f32 %v1048, %v1406
      %v1493 = vadd.f32 %v1053, %v1411
      %v1494 = vadd.f32 %v1058, %v1416
      %v1495 = vadd.f32 %v1063, %v1421
      %v1496 = vadd.f32 %v1068, %v1426
      %v1497 = vadd.f32 %v1073, %v1431
      %v1498 = vadd.f32 %v1078, %v1436
      %v1499 = vadd.f32 %v1083, %v1441
      %v1500 = vadd.f32 %v1088, %v1446
      %v1501 = vadd.f32 %v1093, %v1451
      %v1502 = vadd.f32 %v1098, %v1456
      %v1503 = vadd.f32 %v1103, %v1461
      %v1504 = vadd.f32 %v1108, %v1466
      %v1505 = vadd.f32 %v1113, %v1471
      %v1506 = vld [vmem:[%s367] sm:$0xff]
      %v1507 = vld [vmem:[%s367 + $0x8] sm:$0xff]
      %v1508 = vld [vmem:[%s367 + $0x18] sm:$0xff]
      %v1509 = vld [vmem:[%s367 + $0x20] sm:$0xff]
      %v1510 = vld [vmem:[%s367 + $0x30] sm:$0xff]
      %v1511 = vld [vmem:[%s367 + $0x38] sm:$0xff]
      %v1512 = vld [vmem:[%s367 + $0x48] sm:$0xff]
      %v1513 = vld [vmem:[%s367 + $0x50] sm:$0xff]
      %v1514 = vld [vmem:[%s367 + $0x60] sm:$0xff]
      %v1515 = vld [vmem:[%s367 + $0x68] sm:$0xff]
      %v1516 = vld [vmem:[%s367 + $0x78] sm:$0xff]
      %v1517 = vld [vmem:[%s367 + $0x80] sm:$0xff]
      %v1518 = vld [vmem:[%s367 + $0x90] sm:$0xff]
      %v1519 = vld [vmem:[%s367 + $0x98] sm:$0xff]
      %v1520 = vld [vmem:[%s367 + $0xa8] sm:$0xff]
      %v1521 = vld [vmem:[%s367 + $0xb0] sm:$0xff]
      %v1522 = vld [vmem:[%s367 + $0xc0] sm:$0xff]
      %v1523 = vld [vmem:[%s367 + $0xc8] sm:$0xff]
      %v1524 = vld [vmem:[%s367 + $0xd8] sm:$0xff]
      %v1525 = vld [vmem:[%s367 + $0xe0] sm:$0xff]
      %v1526 = vld [vmem:[%s367 + $0xf0] sm:$0xff]
      %v1527 = vld [vmem:[%s367 + $0xf8] sm:$0xff]
      %v1528 = vld [vmem:[%s367 + $0x108] sm:$0xff]
      %v1529 = vld [vmem:[%s367 + $0x110] sm:$0xff]
      %v1530 = vld [vmem:[%s367 + $0x120] sm:$0xff]
      %v1531 = vld [vmem:[%s367 + $0x128] sm:$0xff]
      %v1532 = vld [vmem:[%s367 + $0x138] sm:$0xff]
      %v1533 = vld [vmem:[%s367 + $0x140] sm:$0xff]
      %v1534 = vld [vmem:[%s367 + $0x150] sm:$0xff]
      %v1535 = vld [vmem:[%s367 + $0x158] sm:$0xff]
      %v1536 = vld [vmem:[%s367 + $0x168] sm:$0xff]
      %v1537 = vld [vmem:[%s367 + $0x170] sm:$0xff]
      %s1538 = scalar_lea.vmem %s1, 12
      %v1539 = vld [vmem:[%s1538] sm:$0xf]
      %v1541 = vsel %vm311, %v1506, 0
      %v1544 = vsel %vm311, %v1507, 0
      %v1547 = vsel %vm311, %v1508, 0
      %v1550 = vsel %vm311, %v1509, 0
      %v1553 = vsel %vm311, %v1510, 0
      %v1556 = vsel %vm311, %v1511, 0
      %v1559 = vsel %vm311, %v1512, 0
      %v1562 = vsel %vm311, %v1513, 0
      %v1565 = vsel %vm311, %v1514, 0
      %v1568 = vsel %vm311, %v1515, 0
      %v1571 = vsel %vm311, %v1516, 0
      %v1574 = vsel %vm311, %v1517, 0
      %v1577 = vsel %vm311, %v1518, 0
      %v1580 = vsel %vm311, %v1519, 0
      %v1583 = vsel %vm311, %v1520, 0
      %v1586 = vsel %vm311, %v1521, 0
      %v1589 = vsel %vm311, %v1522, 0
      %v1592 = vsel %vm311, %v1523, 0
      %v1595 = vsel %vm311, %v1524, 0
      %v1598 = vsel %vm311, %v1525, 0
      %v1601 = vsel %vm311, %v1526, 0
      %v1604 = vsel %vm311, %v1527, 0
      %v1607 = vsel %vm311, %v1528, 0
      %v1610 = vsel %vm311, %v1529, 0
      %v1613 = vsel %vm311, %v1530, 0
      %v1616 = vsel %vm311, %v1531, 0
      %v1619 = vsel %vm311, %v1532, 0
      %v1622 = vsel %vm311, %v1533, 0
      %v1625 = vsel %vm311, %v1534, 0
      %v1628 = vsel %vm311, %v1535, 0
      %v1631 = vsel %vm311, %v1536, 0
      %v1634 = vsel %vm311, %v1537, 0
      %v1637 = vsel %vm563, %v1539, 0
      %1639 = vmatprep.subr.mxu0 0.0
      %1640 = vmatpush1.msra.mxu0 %v1637
      %1641 = vmatprep.subr.mxu0 0.0
      %1642 = vmatpush1.msra.mxu0 0.0
      %1643 = vmatprep.subr.mxu0 0.0
      %1644 = vmatpush1.msra.mxu0 0.0
      %1645 = vmatprep.subr.mxu0 0.0
      %1646 = vmatpush1.msra.mxu0 0.0
      %1647 = vmatprep.subr.mxu0 0.0
      %1648 = vmatpush1.msra.mxu0 0.0
      %1649 = vmatprep.subr.mxu0 0.0
      %1650 = vmatpush1.msra.mxu0 0.0
      %1651 = vmatprep.subr.mxu0 0.0
      %1652 = vmatpush1.msra.mxu0 0.0
      %1653 = vmatprep.subr.mxu0 0.0
      %1654 = vmatpush1.msra.mxu0 0.0
      %1655 = vmatprep.subr.mxu0 0.0
      %1656 = vmatpush1.msra.mxu0 0.0
      %1657 = vmatprep.subr.mxu0 0.0
      %1658 = vmatpush1.msra.mxu0 0.0
      %1659 = vmatprep.subr.mxu0 0.0
      %1660 = vmatpush1.msra.mxu0 0.0
      %1661 = vmatprep.subr.mxu0 0.0
      %1662 = vmatpush1.msra.mxu0 0.0
      %1663 = vmatprep.subr.mxu0 0.0
      %1664 = vmatpush1.msra.mxu0 0.0
      %1665 = vmatprep.subr.mxu0 0.0
      %1666 = vmatpush1.msra.mxu0 0.0
      %1667 = vmatprep.subr.mxu0 0.0
      %1668 = vmatpush1.msra.mxu0 0.0
      %1669 = vmatprep.subr.mxu0 0.0
      %1670 = vmatpush1.msra.mxu0 0.0
      %1671 = vmatprep.subr.mxu0 0.0
      %1672 = vmatpush1.msra.mxu0 0.0
      %1673 = vmatprep.subr.mxu0 0.0
      %1674 = vmatpush1.msra.mxu0 0.0
      %1675 = vmatprep.subr.mxu0 0.0
      %1676 = vmatpush1.msra.mxu0 0.0
      %1677 = vmatprep.subr.mxu0 0.0
      %1678 = vmatpush1.msra.mxu0 0.0
      %1679 = vmatprep.subr.mxu0 0.0
      %1680 = vmatpush1.msra.mxu0 0.0
      %1681 = vmatprep.subr.mxu0 0.0
      %1682 = vmatpush1.msra.mxu0 0.0
      %1683 = vmatprep.subr.mxu0 0.0
      %1684 = vmatpush1.msra.mxu0 0.0
      %1685 = vmatprep.subr.mxu0 0.0
      %1686 = vmatpush1.msra.mxu0 0.0
      %1687 = vmatprep.subr.mxu0 0.0
      %1688 = vmatpush1.msra.mxu0 0.0
      %1689 = vmatprep.subr.mxu0 0.0
      %1690 = vmatpush1.msra.mxu0 0.0
      %1691 = vmatprep.subr.mxu0 0.0
      %1692 = vmatpush1.msra.mxu0 0.0
      %1693 = vmatprep.subr.mxu0 0.0
      %1694 = vmatpush1.msra.mxu0 0.0
      %1695 = vmatprep.subr.mxu0 0.0
      %1696 = vmatpush1.msra.mxu0 0.0
      %1697 = vmatprep.subr.mxu0 0.0
      %1698 = vmatpush1.msra.mxu0 0.0
      %1699 = vmatprep.subr.mxu0 0.0
      %1700 = vmatpush1.msra.mxu0 0.0
      %1701 = vmatprep.subr.mxu0 0.0
      %1702 = vmatpush1.msra.mxu0 0.0
      %1703 = vmatprep.mubr.f32.mxu0 0.0
      %1704 = vmatmul.mubr.f32.gmra.mrb[0].mxu0 %v1541
      %v1705 = vpop.f32.mrb[0].mxu0
      %v1706 = vadd.f32 0.0, %v1705
      %v1707 = vpop.f32.mrb[0].mxu0
      %1708 = vmatprep.mubr.f32.mxu0 0.0
      %1709 = vmatmul.mubr.f32.gmra.mrb[0].mxu0 %v1544
      %v1710 = vpop.f32.mrb[0].mxu0
      %v1711 = vadd.f32 0.0, %v1710
      %v1712 = vpop.f32.mrb[0].mxu0
      %1713 = vmatprep.mubr.f32.mxu0 0.0
      %1714 = vmatmul.mubr.f32.gmra.mrb[0].mxu0 %v1547
      %v1715 = vpop.f32.mrb[0].mxu0
      %v1716 = vadd.f32 0.0, %v1715
      %v1717 = vpop.f32.mrb[0].mxu0
      %1718 = vmatprep.mubr.f32.mxu0 0.0
      %1719 = vmatmul.mubr.f32.gmra.mrb[0].mxu0 %v1550
      %v1720 = vpop.f32.mrb[0].mxu0
      %v1721 = vadd.f32 0.0, %v1720
      %v1722 = vpop.f32.mrb[0].mxu0
      %1723 = vmatprep.mubr.f32.mxu0 0.0
      %1724 = vmatmul.mubr.f32.gmra.mrb[0].mxu0 %v1553
      %v1725 = vpop.f32.mrb[0].mxu0
      %v1726 = vadd.f32 0.0, %v1725
      %v1727 = vpop.f32.mrb[0].mxu0
      %1728 = vmatprep.mubr.f32.mxu0 0.0
      %1729 = vmatmul.mubr.f32.gmra.mrb[0].mxu0 %v1556
      %v1730 = vpop.f32.mrb[0].mxu0
      %v1731 = vadd.f32 0.0, %v1730
      %v1732 = vpop.f32.mrb[0].mxu0
      %1733 = vmatprep.mubr.f32.mxu0 0.0
      %1734 = vmatmul.mubr.f32.gmra.mrb[0].mxu0 %v1559
      %v1735 = vpop.f32.mrb[0].mxu0
      %v1736 = vadd.f32 0.0, %v1735
      %v1737 = vpop.f32.mrb[0].mxu0
      %1738 = vmatprep.mubr.f32.mxu0 0.0
      %1739 = vmatmul.mubr.f32.gmra.mrb[0].mxu0 %v1562
      %v1740 = vpop.f32.mrb[0].mxu0
      %v1741 = vadd.f32 0.0, %v1740
      %v1742 = vpop.f32.mrb[0].mxu0
      %1743 = vmatprep.mubr.f32.mxu0 0.0
      %1744 = vmatmul.mubr.f32.gmra.mrb[0].mxu0 %v1565
      %v1745 = vpop.f32.mrb[0].mxu0
      %v1746 = vadd.f32 0.0, %v1745
      %v1747 = vpop.f32.mrb[0].mxu0
      %1748 = vmatprep.mubr.f32.mxu0 0.0
      %1749 = vmatmul.mubr.f32.gmra.mrb[0].mxu0 %v1568
      %v1750 = vpop.f32.mrb[0].mxu0
      %v1751 = vadd.f32 0.0, %v1750
      %v1752 = vpop.f32.mrb[0].mxu0
      %1753 = vmatprep.mubr.f32.mxu0 0.0
      %1754 = vmatmul.mubr.f32.gmra.mrb[0].mxu0 %v1571
      %v1755 = vpop.f32.mrb[0].mxu0
      %v1756 = vadd.f32 0.0, %v1755
      %v1757 = vpop.f32.mrb[0].mxu0
      %1758 = vmatprep.mubr.f32.mxu0 0.0
      %1759 = vmatmul.mubr.f32.gmra.mrb[0].mxu0 %v1574
      %v1760 = vpop.f32.mrb[0].mxu0
      %v1761 = vadd.f32 0.0, %v1760
      %v1762 = vpop.f32.mrb[0].mxu0
      %1763 = vmatprep.mubr.f32.mxu0 0.0
      %1764 = vmatmul.mubr.f32.gmra.mrb[0].mxu0 %v1577
      %v1765 = vpop.f32.mrb[0].mxu0
      %v1766 = vadd.f32 0.0, %v1765
      %v1767 = vpop.f32.mrb[0].mxu0
      %1768 = vmatprep.mubr.f32.mxu0 0.0
      %1769 = vmatmul.mubr.f32.gmra.mrb[0].mxu0 %v1580
      %v1770 = vpop.f32.mrb[0].mxu0
      %v1771 = vadd.f32 0.0, %v1770
      %v1772 = vpop.f32.mrb[0].mxu0
      %1773 = vmatprep.mubr.f32.mxu0 0.0
      %1774 = vmatmul.mubr.f32.gmra.mrb[0].mxu0 %v1583
      %v1775 = vpop.f32.mrb[0].mxu0
      %v1776 = vadd.f32 0.0, %v1775
      %v1777 = vpop.f32.mrb[0].mxu0
      %1778 = vmatprep.mubr.f32.mxu0 0.0
      %1779 = vmatmul.mubr.f32.gmra.mrb[0].mxu0 %v1586
      %v1780 = vpop.f32.mrb[0].mxu0
      %v1781 = vadd.f32 0.0, %v1780
      %v1782 = vpop.f32.mrb[0].mxu0
      %1783 = vmatprep.mubr.f32.mxu0 0.0
      %1784 = vmatmul.mubr.f32.gmra.mrb[0].mxu0 %v1589
      %v1785 = vpop.f32.mrb[0].mxu0
      %v1786 = vadd.f32 0.0, %v1785
      %v1787 = vpop.f32.mrb[0].mxu0
      %1788 = vmatprep.mubr.f32.mxu0 0.0
      %1789 = vmatmul.mubr.f32.gmra.mrb[0].mxu0 %v1592
      %v1790 = vpop.f32.mrb[0].mxu0
      %v1791 = vadd.f32 0.0, %v1790
      %v1792 = vpop.f32.mrb[0].mxu0
      %1793 = vmatprep.mubr.f32.mxu0 0.0
      %1794 = vmatmul.mubr.f32.gmra.mrb[0].mxu0 %v1595
      %v1795 = vpop.f32.mrb[0].mxu0
      %v1796 = vadd.f32 0.0, %v1795
      %v1797 = vpop.f32.mrb[0].mxu0
      %1798 = vmatprep.mubr.f32.mxu0 0.0
      %1799 = vmatmul.mubr.f32.gmra.mrb[0].mxu0 %v1598
      %v1800 = vpop.f32.mrb[0].mxu0
      %v1801 = vadd.f32 0.0, %v1800
      %v1802 = vpop.f32.mrb[0].mxu0
      %1803 = vmatprep.mubr.f32.mxu0 0.0
      %1804 = vmatmul.mubr.f32.gmra.mrb[0].mxu0 %v1601
      %v1805 = vpop.f32.mrb[0].mxu0
      %v1806 = vadd.f32 0.0, %v1805
      %v1807 = vpop.f32.mrb[0].mxu0
      %1808 = vmatprep.mubr.f32.mxu0 0.0
      %1809 = vmatmul.mubr.f32.gmra.mrb[0].mxu0 %v1604
      %v1810 = vpop.f32.mrb[0].mxu0
      %v1811 = vadd.f32 0.0, %v1810
      %v1812 = vpop.f32.mrb[0].mxu0
      %1813 = vmatprep.mubr.f32.mxu0 0.0
      %1814 = vmatmul.mubr.f32.gmra.mrb[0].mxu0 %v1607
      %v1815 = vpop.f32.mrb[0].mxu0
      %v1816 = vadd.f32 0.0, %v1815
      %v1817 = vpop.f32.mrb[0].mxu0
      %1818 = vmatprep.mubr.f32.mxu0 0.0
      %1819 = vmatmul.mubr.f32.gmra.mrb[0].mxu0 %v1610
      %v1820 = vpop.f32.mrb[0].mxu0
      %v1821 = vadd.f32 0.0, %v1820
      %v1822 = vpop.f32.mrb[0].mxu0
      %1823 = vmatprep.mubr.f32.mxu0 0.0
      %1824 = vmatmul.mubr.f32.gmra.mrb[0].mxu0 %v1613
      %v1825 = vpop.f32.mrb[0].mxu0
      %v1826 = vadd.f32 0.0, %v1825
      %v1827 = vpop.f32.mrb[0].mxu0
      %1828 = vmatprep.mubr.f32.mxu0 0.0
      %1829 = vmatmul.mubr.f32.gmra.mrb[0].mxu0 %v1616
      %v1830 = vpop.f32.mrb[0].mxu0
      %v1831 = vadd.f32 0.0, %v1830
      %v1832 = vpop.f32.mrb[0].mxu0
      %1833 = vmatprep.mubr.f32.mxu0 0.0
      %1834 = vmatmul.mubr.f32.gmra.mrb[0].mxu0 %v1619
      %v1835 = vpop.f32.mrb[0].mxu0
      %v1836 = vadd.f32 0.0, %v1835
      %v1837 = vpop.f32.mrb[0].mxu0
      %1838 = vmatprep.mubr.f32.mxu0 0.0
      %1839 = vmatmul.mubr.f32.gmra.mrb[0].mxu0 %v1622
      %v1840 = vpop.f32.mrb[0].mxu0
      %v1841 = vadd.f32 0.0, %v1840
      %v1842 = vpop.f32.mrb[0].mxu0
      %1843 = vmatprep.mubr.f32.mxu0 0.0
      %1844 = vmatmul.mubr.f32.gmra.mrb[0].mxu0 %v1625
      %v1845 = vpop.f32.mrb[0].mxu0
      %v1846 = vadd.f32 0.0, %v1845
      %v1847 = vpop.f32.mrb[0].mxu0
      %1848 = vmatprep.mubr.f32.mxu0 0.0
      %1849 = vmatmul.mubr.f32.gmra.mrb[0].mxu0 %v1628
      %v1850 = vpop.f32.mrb[0].mxu0
      %v1851 = vadd.f32 0.0, %v1850
      %v1852 = vpop.f32.mrb[0].mxu0
      %1853 = vmatprep.mubr.f32.mxu0 0.0
      %1854 = vmatmul.mubr.f32.gmra.mrb[0].mxu0 %v1631
      %v1855 = vpop.f32.mrb[0].mxu0
      %v1856 = vadd.f32 0.0, %v1855
      %v1857 = vpop.f32.mrb[0].mxu0
      %1858 = vmatprep.mubr.f32.mxu0 0.0
      %1859 = vmatmul.mubr.f32.gmra.mrb[0].mxu0 %v1634
      %v1860 = vpop.f32.mrb[0].mxu0
      %v1861 = vadd.f32 0.0, %v1860
      %v1862 = vpop.f32.mrb[0].mxu0
      %1863 = vdwg.mxu0
      %v1864 = vadd.f32 %v1474, %v1706
      %v1865 = vadd.f32 %v1475, %v1711
      %v1866 = vadd.f32 %v1476, %v1716
      %v1867 = vadd.f32 %v1477, %v1721
      %v1868 = vadd.f32 %v1478, %v1726
      %v1869 = vadd.f32 %v1479, %v1731
      %v1870 = vadd.f32 %v1480, %v1736
      %v1871 = vadd.f32 %v1481, %v1741
      %v1872 = vadd.f32 %v1482, %v1746
      %v1873 = vadd.f32 %v1483, %v1751
      %v1874 = vadd.f32 %v1484, %v1756
      %v1875 = vadd.f32 %v1485, %v1761
      %v1876 = vadd.f32 %v1486, %v1766
      %v1877 = vadd.f32 %v1487, %v1771
      %v1878 = vadd.f32 %v1488, %v1776
      %v1879 = vadd.f32 %v1489, %v1781
      %v1880 = vadd.f32 %v1490, %v1786
      %v1881 = vadd.f32 %v1491, %v1791
      %v1882 = vadd.f32 %v1492, %v1796
      %v1883 = vadd.f32 %v1493, %v1801
      %v1884 = vadd.f32 %v1494, %v1806
      %v1885 = vadd.f32 %v1495, %v1811
      %v1886 = vadd.f32 %v1496, %v1816
      %v1887 = vadd.f32 %v1497, %v1821
      %v1888 = vadd.f32 %v1498, %v1826
      %v1889 = vadd.f32 %v1499, %v1831
      %v1890 = vadd.f32 %v1500, %v1836
      %v1891 = vadd.f32 %v1501, %v1841
      %v1892 = vadd.f32 %v1502, %v1846
      %v1893 = vadd.f32 %v1503, %v1851
      %v1894 = vadd.f32 %v1504, %v1856
      %v1895 = vadd.f32 %v1505, %v1861
      %v1896 = vld [vmem:[%s367 + $0x1] sm:$0xff]
      %v1897 = vld [vmem:[%s367 + $0x9] sm:$0xff]
      %v1898 = vld [vmem:[%s367 + $0x19] sm:$0xff]
      %v1899 = vld [vmem:[%s367 + $0x21] sm:$0xff]
      %v1900 = vld [vmem:[%s367 + $0x31] sm:$0xff]
      %v1901 = vld [vmem:[%s367 + $0x39] sm:$0xff]
      %v1902 = vld [vmem:[%s367 + $0x49] sm:$0xff]
      %v1903 = vld [vmem:[%s367 + $0x51] sm:$0xff]
      %v1904 = vld [vmem:[%s367 + $0x61] sm:$0xff]
      %v1905 = vld [vmem:[%s367 + $0x69] sm:$0xff]
      %v1906 = vld [vmem:[%s367 + $0x79] sm:$0xff]
      %v1907 = vld [vmem:[%s367 + $0x81] sm:$0xff]
      %v1908 = vld [vmem:[%s367 + $0x91] sm:$0xff]
      %v1909 = vld [vmem:[%s367 + $0x99] sm:$0xff]
      %v1910 = vld [vmem:[%s367 + $0xa9] sm:$0xff]
      %v1911 = vld [vmem:[%s367 + $0xb1] sm:$0xff]
      %v1912 = vld [vmem:[%s367 + $0xc1] sm:$0xff]
      %v1913 = vld [vmem:[%s367 + $0xc9] sm:$0xff]
      %v1914 = vld [vmem:[%s367 + $0xd9] sm:$0xff]
      %v1915 = vld [vmem:[%s367 + $0xe1] sm:$0xff]
      %v1916 = vld [vmem:[%s367 + $0xf1] sm:$0xff]
      %v1917 = vld [vmem:[%s367 + $0xf9] sm:$0xff]
      %v1918 = vld [vmem:[%s367 + $0x109] sm:$0xff]
      %v1919 = vld [vmem:[%s367 + $0x111] sm:$0xff]
      %v1920 = vld [vmem:[%s367 + $0x121] sm:$0xff]
      %v1921 = vld [vmem:[%s367 + $0x129] sm:$0xff]
      %v1922 = vld [vmem:[%s367 + $0x139] sm:$0xff]
      %v1923 = vld [vmem:[%s367 + $0x141] sm:$0xff]
      %v1924 = vld [vmem:[%s367 + $0x151] sm:$0xff]
      %v1925 = vld [vmem:[%s367 + $0x159] sm:$0xff]
      %v1926 = vld [vmem:[%s367 + $0x169] sm:$0xff]
      %v1927 = vld [vmem:[%s367 + $0x171] sm:$0xff]
      %s1928 = scalar_lea.vmem %s1, 16
      %v1929 = vld [vmem:[%s1928] sm:$0xf]
      %v1931 = vsel %vm311, %v1896, 0
      %v1934 = vsel %vm311, %v1897, 0
      %v1937 = vsel %vm311, %v1898, 0
      %v1940 = vsel %vm311, %v1899, 0
      %v1943 = vsel %vm311, %v1900, 0
      %v1946 = vsel %vm311, %v1901, 0
      %v1949 = vsel %vm311, %v1902, 0
      %v1952 = vsel %vm311, %v1903, 0
      %v1955 = vsel %vm311, %v1904, 0
      %v1958 = vsel %vm311, %v1905, 0
      %v1961 = vsel %vm311, %v1906, 0
      %v1964 = vsel %vm311, %v1907, 0
      %v1967 = vsel %vm311, %v1908, 0
      %v1970 = vsel %vm311, %v1909, 0
      %v1973 = vsel %vm311, %v1910, 0
      %v1976 = vsel %vm311, %v1911, 0
      %v1979 = vsel %vm311, %v1912, 0
      %v1982 = vsel %vm311, %v1913, 0
      %v1985 = vsel %vm311, %v1914, 0
      %v1988 = vsel %vm311, %v1915, 0
      %v1991 = vsel %vm311, %v1916, 0
      %v1994 = vsel %vm311, %v1917, 0
      %v1997 = vsel %vm311, %v1918, 0
      %v2000 = vsel %vm311, %v1919, 0
      %v2003 = vsel %vm311, %v1920, 0
      %v2006 = vsel %vm311, %v1921, 0
      %v2009 = vsel %vm311, %v1922, 0
      %v2012 = vsel %vm311, %v1923, 0
      %v2015 = vsel %vm311, %v1924, 0
      %v2018 = vsel %vm311, %v1925, 0
      %v2021 = vsel %vm311, %v1926, 0
      %v2024 = vsel %vm311, %v1927, 0
      %v2027 = vsel %vm563, %v1929, 0
      %2029 = vmatprep.subr.mxu0 0.0
      %2030 = vmatpush1.msra.mxu0 %v2027
      %2031 = vmatprep.subr.mxu0 0.0
      %2032 = vmatpush1.msra.mxu0 0.0
      %2033 = vmatprep.subr.mxu0 0.0
      %2034 = vmatpush1.msra.mxu0 0.0
      %2035 = vmatprep.subr.mxu0 0.0
      %2036 = vmatpush1.msra.mxu0 0.0
      %2037 = vmatprep.subr.mxu0 0.0
      %2038 = vmatpush1.msra.mxu0 0.0
      %2039 = vmatprep.subr.mxu0 0.0
      %2040 = vmatpush1.msra.mxu0 0.0
      %2041 = vmatprep.subr.mxu0 0.0
      %2042 = vmatpush1.msra.mxu0 0.0
      %2043 = vmatprep.subr.mxu0 0.0
      %2044 = vmatpush1.msra.mxu0 0.0
      %2045 = vmatprep.subr.mxu0 0.0
      %2046 = vmatpush1.msra.mxu0 0.0
      %2047 = vmatprep.subr.mxu0 0.0
      %2048 = vmatpush1.msra.mxu0 0.0
      %2049 = vmatprep.subr.mxu0 0.0
      %2050 = vmatpush1.msra.mxu0 0.0
      %2051 = vmatprep.subr.mxu0 0.0
      %2052 = vmatpush1.msra.mxu0 0.0
      %2053 = vmatprep.subr.mxu0 0.0
      %2054 = vmatpush1.msra.mxu0 0.0
      %2055 = vmatprep.subr.mxu0 0.0
      %2056 = vmatpush1.msra.mxu0 0.0
      %2057 = vmatprep.subr.mxu0 0.0
      %2058 = vmatpush1.msra.mxu0 0.0
      %2059 = vmatprep.subr.mxu0 0.0
      %2060 = vmatpush1.msra.mxu0 0.0
      %2061 = vmatprep.subr.mxu0 0.0
      %2062 = vmatpush1.msra.mxu0 0.0
      %2063 = vmatprep.subr.mxu0 0.0
      %2064 = vmatpush1.msra.mxu0 0.0
      %2065 = vmatprep.subr.mxu0 0.0
      %2066 = vmatpush1.msra.mxu0 0.0
      %2067 = vmatprep.subr.mxu0 0.0
      %2068 = vmatpush1.msra.mxu0 0.0
      %2069 = vmatprep.subr.mxu0 0.0
      %2070 = vmatpush1.msra.mxu0 0.0
      %2071 = vmatprep.subr.mxu0 0.0
      %2072 = vmatpush1.msra.mxu0 0.0
      %2073 = vmatprep.subr.mxu0 0.0
      %2074 = vmatpush1.msra.mxu0 0.0
      %2075 = vmatprep.subr.mxu0 0.0
      %2076 = vmatpush1.msra.mxu0 0.0
      %2077 = vmatprep.subr.mxu0 0.0
      %2078 = vmatpush1.msra.mxu0 0.0
      %2079 = vmatprep.subr.mxu0 0.0
      %2080 = vmatpush1.msra.mxu0 0.0
      %2081 = vmatprep.subr.mxu0 0.0
      %2082 = vmatpush1.msra.mxu0 0.0
      %2083 = vmatprep.subr.mxu0 0.0
      %2084 = vmatpush1.msra.mxu0 0.0
      %2085 = vmatprep.subr.mxu0 0.0
      %2086 = vmatpush1.msra.mxu0 0.0
      %2087 = vmatprep.subr.mxu0 0.0
      %2088 = vmatpush1.msra.mxu0 0.0
      %2089 = vmatprep.subr.mxu0 0.0
      %2090 = vmatpush1.msra.mxu0 0.0
      %2091 = vmatprep.subr.mxu0 0.0
      %2092 = vmatpush1.msra.mxu0 0.0
      %2093 = vmatprep.mubr.f32.mxu0 0.0
      %2094 = vmatmul.mubr.f32.gmra.mrb[0].mxu0 %v1931
      %v2095 = vpop.f32.mrb[0].mxu0
      %v2096 = vadd.f32 0.0, %v2095
      %v2097 = vpop.f32.mrb[0].mxu0
      %2098 = vmatprep.mubr.f32.mxu0 0.0
      %2099 = vmatmul.mubr.f32.gmra.mrb[0].mxu0 %v1934
      %v2100 = vpop.f32.mrb[0].mxu0
      %v2101 = vadd.f32 0.0, %v2100
      %v2102 = vpop.f32.mrb[0].mxu0
      %2103 = vmatprep.mubr.f32.mxu0 0.0
      %2104 = vmatmul.mubr.f32.gmra.mrb[0].mxu0 %v1937
      %v2105 = vpop.f32.mrb[0].mxu0
      %v2106 = vadd.f32 0.0, %v2105
      %v2107 = vpop.f32.mrb[0].mxu0
      %2108 = vmatprep.mubr.f32.mxu0 0.0
      %2109 = vmatmul.mubr.f32.gmra.mrb[0].mxu0 %v1940
      %v2110 = vpop.f32.mrb[0].mxu0
      %v2111 = vadd.f32 0.0, %v2110
      %v2112 = vpop.f32.mrb[0].mxu0
      %2113 = vmatprep.mubr.f32.mxu0 0.0
      %2114 = vmatmul.mubr.f32.gmra.mrb[0].mxu0 %v1943
      %v2115 = vpop.f32.mrb[0].mxu0
      %v2116 = vadd.f32 0.0, %v2115
      %v2117 = vpop.f32.mrb[0].mxu0
      %2118 = vmatprep.mubr.f32.mxu0 0.0
      %2119 = vmatmul.mubr.f32.gmra.mrb[0].mxu0 %v1946
      %v2120 = vpop.f32.mrb[0].mxu0
      %v2121 = vadd.f32 0.0, %v2120
      %v2122 = vpop.f32.mrb[0].mxu0
      %2123 = vmatprep.mubr.f32.mxu0 0.0
      %2124 = vmatmul.mubr.f32.gmra.mrb[0].mxu0 %v1949
      %v2125 = vpop.f32.mrb[0].mxu0
      %v2126 = vadd.f32 0.0, %v2125
      %v2127 = vpop.f32.mrb[0].mxu0
      %2128 = vmatprep.mubr.f32.mxu0 0.0
      %2129 = vmatmul.mubr.f32.gmra.mrb[0].mxu0 %v1952
      %v2130 = vpop.f32.mrb[0].mxu0
      %v2131 = vadd.f32 0.0, %v2130
      %v2132 = vpop.f32.mrb[0].mxu0
      %2133 = vmatprep.mubr.f32.mxu0 0.0
      %2134 = vmatmul.mubr.f32.gmra.mrb[0].mxu0 %v1955
      %v2135 = vpop.f32.mrb[0].mxu0
      %v2136 = vadd.f32 0.0, %v2135
      %v2137 = vpop.f32.mrb[0].mxu0
      %2138 = vmatprep.mubr.f32.mxu0 0.0
      %2139 = vmatmul.mubr.f32.gmra.mrb[0].mxu0 %v1958
      %v2140 = vpop.f32.mrb[0].mxu0
      %v2141 = vadd.f32 0.0, %v2140
      %v2142 = vpop.f32.mrb[0].mxu0
      %2143 = vmatprep.mubr.f32.mxu0 0.0
      %2144 = vmatmul.mubr.f32.gmra.mrb[0].mxu0 %v1961
      %v2145 = vpop.f32.mrb[0].mxu0
      %v2146 = vadd.f32 0.0, %v2145
      %v2147 = vpop.f32.mrb[0].mxu0
      %2148 = vmatprep.mubr.f32.mxu0 0.0
      %2149 = vmatmul.mubr.f32.gmra.mrb[0].mxu0 %v1964
      %v2150 = vpop.f32.mrb[0].mxu0
      %v2151 = vadd.f32 0.0, %v2150
      %v2152 = vpop.f32.mrb[0].mxu0
      %2153 = vmatprep.mubr.f32.mxu0 0.0
      %2154 = vmatmul.mubr.f32.gmra.mrb[0].mxu0 %v1967
      %v2155 = vpop.f32.mrb[0].mxu0
      %v2156 = vadd.f32 0.0, %v2155
      %v2157 = vpop.f32.mrb[0].mxu0
      %2158 = vmatprep.mubr.f32.mxu0 0.0
      %2159 = vmatmul.mubr.f32.gmra.mrb[0].mxu0 %v1970
      %v2160 = vpop.f32.mrb[0].mxu0
      %v2161 = vadd.f32 0.0, %v2160
      %v2162 = vpop.f32.mrb[0].mxu0
      %2163 = vmatprep.mubr.f32.mxu0 0.0
      %2164 = vmatmul.mubr.f32.gmra.mrb[0].mxu0 %v1973
      %v2165 = vpop.f32.mrb[0].mxu0
      %v2166 = vadd.f32 0.0, %v2165
      %v2167 = vpop.f32.mrb[0].mxu0
      %2168 = vmatprep.mubr.f32.mxu0 0.0
      %2169 = vmatmul.mubr.f32.gmra.mrb[0].mxu0 %v1976
      %v2170 = vpop.f32.mrb[0].mxu0
      %v2171 = vadd.f32 0.0, %v2170
      %v2172 = vpop.f32.mrb[0].mxu0
      %2173 = vmatprep.mubr.f32.mxu0 0.0
      %2174 = vmatmul.mubr.f32.gmra.mrb[0].mxu0 %v1979
      %v2175 = vpop.f32.mrb[0].mxu0
      %v2176 = vadd.f32 0.0, %v2175
      %v2177 = vpop.f32.mrb[0].mxu0
      %2178 = vmatprep.mubr.f32.mxu0 0.0
      %2179 = vmatmul.mubr.f32.gmra.mrb[0].mxu0 %v1982
      %v2180 = vpop.f32.mrb[0].mxu0
      %v2181 = vadd.f32 0.0, %v2180
      %v2182 = vpop.f32.mrb[0].mxu0
      %2183 = vmatprep.mubr.f32.mxu0 0.0
      %2184 = vmatmul.mubr.f32.gmra.mrb[0].mxu0 %v1985
      %v2185 = vpop.f32.mrb[0].mxu0
      %v2186 = vadd.f32 0.0, %v2185
      %v2187 = vpop.f32.mrb[0].mxu0
      %2188 = vmatprep.mubr.f32.mxu0 0.0
      %2189 = vmatmul.mubr.f32.gmra.mrb[0].mxu0 %v1988
      %v2190 = vpop.f32.mrb[0].mxu0
      %v2191 = vadd.f32 0.0, %v2190
      %v2192 = vpop.f32.mrb[0].mxu0
      %2193 = vmatprep.mubr.f32.mxu0 0.0
      %2194 = vmatmul.mubr.f32.gmra.mrb[0].mxu0 %v1991
      %v2195 = vpop.f32.mrb[0].mxu0
      %v2196 = vadd.f32 0.0, %v2195
      %v2197 = vpop.f32.mrb[0].mxu0
      %2198 = vmatprep.mubr.f32.mxu0 0.0
      %2199 = vmatmul.mubr.f32.gmra.mrb[0].mxu0 %v1994
      %v2200 = vpop.f32.mrb[0].mxu0
      %v2201 = vadd.f32 0.0, %v2200
      %v2202 = vpop.f32.mrb[0].mxu0
      %2203 = vmatprep.mubr.f32.mxu0 0.0
      %2204 = vmatmul.mubr.f32.gmra.mrb[0].mxu0 %v1997
      %v2205 = vpop.f32.mrb[0].mxu0
      %v2206 = vadd.f32 0.0, %v2205
      %v2207 = vpop.f32.mrb[0].mxu0
      %2208 = vmatprep.mubr.f32.mxu0 0.0
      %2209 = vmatmul.mubr.f32.gmra.mrb[0].mxu0 %v2000
      %v2210 = vpop.f32.mrb[0].mxu0
      %v2211 = vadd.f32 0.0, %v2210
      %v2212 = vpop.f32.mrb[0].mxu0
      %2213 = vmatprep.mubr.f32.mxu0 0.0
      %2214 = vmatmul.mubr.f32.gmra.mrb[0].mxu0 %v2003
      %v2215 = vpop.f32.mrb[0].mxu0
      %v2216 = vadd.f32 0.0, %v2215
      %v2217 = vpop.f32.mrb[0].mxu0
      %2218 = vmatprep.mubr.f32.mxu0 0.0
      %2219 = vmatmul.mubr.f32.gmra.mrb[0].mxu0 %v2006
      %v2220 = vpop.f32.mrb[0].mxu0
      %v2221 = vadd.f32 0.0, %v2220
      %v2222 = vpop.f32.mrb[0].mxu0
      %2223 = vmatprep.mubr.f32.mxu0 0.0
      %2224 = vmatmul.mubr.f32.gmra.mrb[0].mxu0 %v2009
      %v2225 = vpop.f32.mrb[0].mxu0
      %v2226 = vadd.f32 0.0, %v2225
      %v2227 = vpop.f32.mrb[0].mxu0
      %2228 = vmatprep.mubr.f32.mxu0 0.0
      %2229 = vmatmul.mubr.f32.gmra.mrb[0].mxu0 %v2012
      %v2230 = vpop.f32.mrb[0].mxu0
      %v2231 = vadd.f32 0.0, %v2230
      %v2232 = vpop.f32.mrb[0].mxu0
      %2233 = vmatprep.mubr.f32.mxu0 0.0
      %2234 = vmatmul.mubr.f32.gmra.mrb[0].mxu0 %v2015
      %v2235 = vpop.f32.mrb[0].mxu0
      %v2236 = vadd.f32 0.0, %v2235
      %v2237 = vpop.f32.mrb[0].mxu0
      %2238 = vmatprep.mubr.f32.mxu0 0.0
      %2239 = vmatmul.mubr.f32.gmra.mrb[0].mxu0 %v2018
      %v2240 = vpop.f32.mrb[0].mxu0
      %v2241 = vadd.f32 0.0, %v2240
      %v2242 = vpop.f32.mrb[0].mxu0
      %2243 = vmatprep.mubr.f32.mxu0 0.0
      %2244 = vmatmul.mubr.f32.gmra.mrb[0].mxu0 %v2021
      %v2245 = vpop.f32.mrb[0].mxu0
      %v2246 = vadd.f32 0.0, %v2245
      %v2247 = vpop.f32.mrb[0].mxu0
      %2248 = vmatprep.mubr.f32.mxu0 0.0
      %2249 = vmatmul.mubr.f32.gmra.mrb[0].mxu0 %v2024
      %v2250 = vpop.f32.mrb[0].mxu0
      %v2251 = vadd.f32 0.0, %v2250
      %v2252 = vpop.f32.mrb[0].mxu0
      %2253 = vdwg.mxu0
      %v2254 = vadd.f32 %v1864, %v2096
      %v2255 = vadd.f32 %v1865, %v2101
      %v2256 = vadd.f32 %v1866, %v2106
      %v2257 = vadd.f32 %v1867, %v2111
      %v2258 = vadd.f32 %v1868, %v2116
      %v2259 = vadd.f32 %v1869, %v2121
      %v2260 = vadd.f32 %v1870, %v2126
      %v2261 = vadd.f32 %v1871, %v2131
      %v2262 = vadd.f32 %v1872, %v2136
      %v2263 = vadd.f32 %v1873, %v2141
      %v2264 = vadd.f32 %v1874, %v2146
      %v2265 = vadd.f32 %v1875, %v2151
      %v2266 = vadd.f32 %v1876, %v2156
      %v2267 = vadd.f32 %v1877, %v2161
      %v2268 = vadd.f32 %v1878, %v2166
      %v2269 = vadd.f32 %v1879, %v2171
      %v2270 = vadd.f32 %v1880, %v2176
      %v2271 = vadd.f32 %v1881, %v2181
      %v2272 = vadd.f32 %v1882, %v2186
      %v2273 = vadd.f32 %v1883, %v2191
      %v2274 = vadd.f32 %v1884, %v2196
      %v2275 = vadd.f32 %v1885, %v2201
      %v2276 = vadd.f32 %v1886, %v2206
      %v2277 = vadd.f32 %v1887, %v2211
      %v2278 = vadd.f32 %v1888, %v2216
      %v2279 = vadd.f32 %v1889, %v2221
      %v2280 = vadd.f32 %v1890, %v2226
      %v2281 = vadd.f32 %v1891, %v2231
      %v2282 = vadd.f32 %v1892, %v2236
      %v2283 = vadd.f32 %v1893, %v2241
      %v2284 = vadd.f32 %v1894, %v2246
      %v2285 = vadd.f32 %v1895, %v2251
      %v2286 = vld [vmem:[%s367 + $0x2] sm:$0xff]
      %v2287 = vld [vmem:[%s367 + $0xa] sm:$0xff]
      %v2288 = vld [vmem:[%s367 + $0x1a] sm:$0xff]
      %v2289 = vld [vmem:[%s367 + $0x22] sm:$0xff]
      %v2290 = vld [vmem:[%s367 + $0x32] sm:$0xff]
      %v2291 = vld [vmem:[%s367 + $0x3a] sm:$0xff]
      %v2292 = vld [vmem:[%s367 + $0x4a] sm:$0xff]
      %v2293 = vld [vmem:[%s367 + $0x52] sm:$0xff]
      %v2294 = vld [vmem:[%s367 + $0x62] sm:$0xff]
      %v2295 = vld [vmem:[%s367 + $0x6a] sm:$0xff]
      %v2296 = vld [vmem:[%s367 + $0x7a] sm:$0xff]
      %v2297 = vld [vmem:[%s367 + $0x82] sm:$0xff]
      %v2298 = vld [vmem:[%s367 + $0x92] sm:$0xff]
      %v2299 = vld [vmem:[%s367 + $0x9a] sm:$0xff]
      %v2300 = vld [vmem:[%s367 + $0xaa] sm:$0xff]
      %v2301 = vld [vmem:[%s367 + $0xb2] sm:$0xff]
      %v2302 = vld [vmem:[%s367 + $0xc2] sm:$0xff]
      %v2303 = vld [vmem:[%s367 + $0xca] sm:$0xff]
      %v2304 = vld [vmem:[%s367 + $0xda] sm:$0xff]
      %v2305 = vld [vmem:[%s367 + $0xe2] sm:$0xff]
      %v2306 = vld [vmem:[%s367 + $0xf2] sm:$0xff]
      %v2307 = vld [vmem:[%s367 + $0xfa] sm:$0xff]
      %v2308 = vld [vmem:[%s367 + $0x10a] sm:$0xff]
      %v2309 = vld [vmem:[%s367 + $0x112] sm:$0xff]
      %v2310 = vld [vmem:[%s367 + $0x122] sm:$0xff]
      %v2311 = vld [vmem:[%s367 + $0x12a] sm:$0xff]
      %v2312 = vld [vmem:[%s367 + $0x13a] sm:$0xff]
      %v2313 = vld [vmem:[%s367 + $0x142] sm:$0xff]
      %v2314 = vld [vmem:[%s367 + $0x152] sm:$0xff]
      %v2315 = vld [vmem:[%s367 + $0x15a] sm:$0xff]
      %v2316 = vld [vmem:[%s367 + $0x16a] sm:$0xff]
      %v2317 = vld [vmem:[%s367 + $0x172] sm:$0xff]
      %s2318 = scalar_lea.vmem %s1, 20
      %v2319 = vld [vmem:[%s2318] sm:$0xf]
      %v2321 = vsel %vm311, %v2286, 0
      %v2324 = vsel %vm311, %v2287, 0
      %v2327 = vsel %vm311, %v2288, 0
      %v2330 = vsel %vm311, %v2289, 0
      %v2333 = vsel %vm311, %v2290, 0
      %v2336 = vsel %vm311, %v2291, 0
      %v2339 = vsel %vm311, %v2292, 0
      %v2342 = vsel %vm311, %v2293, 0
      %v2345 = vsel %vm311, %v2294, 0
      %v2348 = vsel %vm311, %v2295, 0
      %v2351 = vsel %vm311, %v2296, 0
      %v2354 = vsel %vm311, %v2297, 0
      %v2357 = vsel %vm311, %v2298, 0
      %v2360 = vsel %vm311, %v2299, 0
      %v2363 = vsel %vm311, %v2300, 0
      %v2366 = vsel %vm311, %v2301, 0
      %v2369 = vsel %vm311, %v2302, 0
      %v2372 = vsel %vm311, %v2303, 0
      %v2375 = vsel %vm311, %v2304, 0
      %v2378 = vsel %vm311, %v2305, 0
      %v2381 = vsel %vm311, %v2306, 0
      %v2384 = vsel %vm311, %v2307, 0
      %v2387 = vsel %vm311, %v2308, 0
      %v2390 = vsel %vm311, %v2309, 0
      %v2393 = vsel %vm311, %v2310, 0
      %v2396 = vsel %vm311, %v2311, 0
      %v2399 = vsel %vm311, %v2312, 0
      %v2402 = vsel %vm311, %v2313, 0
      %v2405 = vsel %vm311, %v2314, 0
      %v2408 = vsel %vm311, %v2315, 0
      %v2411 = vsel %vm311, %v2316, 0
      %v2414 = vsel %vm311, %v2317, 0
      %v2417 = vsel %vm563, %v2319, 0
      %2419 = vmatprep.subr.mxu0 0.0
      %2420 = vmatpush1.msra.mxu0 %v2417
      %2421 = vmatprep.subr.mxu0 0.0
      %2422 = vmatpush1.msra.mxu0 0.0
      %2423 = vmatprep.subr.mxu0 0.0
      %2424 = vmatpush1.msra.mxu0 0.0
      %2425 = vmatprep.subr.mxu0 0.0
      %2426 = vmatpush1.msra.mxu0 0.0
      %2427 = vmatprep.subr.mxu0 0.0
      %2428 = vmatpush1.msra.mxu0 0.0
      %2429 = vmatprep.subr.mxu0 0.0
      %2430 = vmatpush1.msra.mxu0 0.0
      %2431 = vmatprep.subr.mxu0 0.0
      %2432 = vmatpush1.msra.mxu0 0.0
      %2433 = vmatprep.subr.mxu0 0.0
      %2434 = vmatpush1.msra.mxu0 0.0
      %2435 = vmatprep.subr.mxu0 0.0
      %2436 = vmatpush1.msra.mxu0 0.0
      %2437 = vmatprep.subr.mxu0 0.0
      %2438 = vmatpush1.msra.mxu0 0.0
      %2439 = vmatprep.subr.mxu0 0.0
      %2440 = vmatpush1.msra.mxu0 0.0
      %2441 = vmatprep.subr.mxu0 0.0
      %2442 = vmatpush1.msra.mxu0 0.0
      %2443 = vmatprep.subr.mxu0 0.0
      %2444 = vmatpush1.msra.mxu0 0.0
      %2445 = vmatprep.subr.mxu0 0.0
      %2446 = vmatpush1.msra.mxu0 0.0
      %2447 = vmatprep.subr.mxu0 0.0
      %2448 = vmatpush1.msra.mxu0 0.0
      %2449 = vmatprep.subr.mxu0 0.0
      %2450 = vmatpush1.msra.mxu0 0.0
      %2451 = vmatprep.subr.mxu0 0.0
      %2452 = vmatpush1.msra.mxu0 0.0
      %2453 = vmatprep.subr.mxu0 0.0
      %2454 = vmatpush1.msra.mxu0 0.0
      %2455 = vmatprep.subr.mxu0 0.0
      %2456 = vmatpush1.msra.mxu0 0.0
      %2457 = vmatprep.subr.mxu0 0.0
      %2458 = vmatpush1.msra.mxu0 0.0
      %2459 = vmatprep.subr.mxu0 0.0
      %2460 = vmatpush1.msra.mxu0 0.0
      %2461 = vmatprep.subr.mxu0 0.0
      %2462 = vmatpush1.msra.mxu0 0.0
      %2463 = vmatprep.subr.mxu0 0.0
      %2464 = vmatpush1.msra.mxu0 0.0
      %2465 = vmatprep.subr.mxu0 0.0
      %2466 = vmatpush1.msra.mxu0 0.0
      %2467 = vmatprep.subr.mxu0 0.0
      %2468 = vmatpush1.msra.mxu0 0.0
      %2469 = vmatprep.subr.mxu0 0.0
      %2470 = vmatpush1.msra.mxu0 0.0
      %2471 = vmatprep.subr.mxu0 0.0
      %2472 = vmatpush1.msra.mxu0 0.0
      %2473 = vmatprep.subr.mxu0 0.0
      %2474 = vmatpush1.msra.mxu0 0.0
      %2475 = vmatprep.subr.mxu0 0.0
      %2476 = vmatpush1.msra.mxu0 0.0
      %2477 = vmatprep.subr.mxu0 0.0
      %2478 = vmatpush1.msra.mxu0 0.0
      %2479 = vmatprep.subr.mxu0 0.0
      %2480 = vmatpush1.msra.mxu0 0.0
      %2481 = vmatprep.subr.mxu0 0.0
      %2482 = vmatpush1.msra.mxu0 0.0
      %2483 = vmatprep.mubr.f32.mxu0 0.0
      %2484 = vmatmul.mubr.f32.gmra.mrb[0].mxu0 %v2321
      %v2485 = vpop.f32.mrb[0].mxu0
      %v2486 = vadd.f32 0.0, %v2485
      %v2487 = vpop.f32.mrb[0].mxu0
      %2488 = vmatprep.mubr.f32.mxu0 0.0
      %2489 = vmatmul.mubr.f32.gmra.mrb[0].mxu0 %v2324
      %v2490 = vpop.f32.mrb[0].mxu0
      %v2491 = vadd.f32 0.0, %v2490
      %v2492 = vpop.f32.mrb[0].mxu0
      %2493 = vmatprep.mubr.f32.mxu0 0.0
      %2494 = vmatmul.mubr.f32.gmra.mrb[0].mxu0 %v2327
      %v2495 = vpop.f32.mrb[0].mxu0
      %v2496 = vadd.f32 0.0, %v2495
      %v2497 = vpop.f32.mrb[0].mxu0
      %2498 = vmatprep.mubr.f32.mxu0 0.0
      %2499 = vmatmul.mubr.f32.gmra.mrb[0].mxu0 %v2330
      %v2500 = vpop.f32.mrb[0].mxu0
      %v2501 = vadd.f32 0.0, %v2500
      %v2502 = vpop.f32.mrb[0].mxu0
      %2503 = vmatprep.mubr.f32.mxu0 0.0
      %2504 = vmatmul.mubr.f32.gmra.mrb[0].mxu0 %v2333
      %v2505 = vpop.f32.mrb[0].mxu0
      %v2506 = vadd.f32 0.0, %v2505
      %v2507 = vpop.f32.mrb[0].mxu0
      %2508 = vmatprep.mubr.f32.mxu0 0.0
      %2509 = vmatmul.mubr.f32.gmra.mrb[0].mxu0 %v2336
      %v2510 = vpop.f32.mrb[0].mxu0
      %v2511 = vadd.f32 0.0, %v2510
      %v2512 = vpop.f32.mrb[0].mxu0
      %2513 = vmatprep.mubr.f32.mxu0 0.0
      %2514 = vmatmul.mubr.f32.gmra.mrb[0].mxu0 %v2339
      %v2515 = vpop.f32.mrb[0].mxu0
      %v2516 = vadd.f32 0.0, %v2515
      %v2517 = vpop.f32.mrb[0].mxu0
      %2518 = vmatprep.mubr.f32.mxu0 0.0
      %2519 = vmatmul.mubr.f32.gmra.mrb[0].mxu0 %v2342
      %v2520 = vpop.f32.mrb[0].mxu0
      %v2521 = vadd.f32 0.0, %v2520
      %v2522 = vpop.f32.mrb[0].mxu0
      %2523 = vmatprep.mubr.f32.mxu0 0.0
      %2524 = vmatmul.mubr.f32.gmra.mrb[0].mxu0 %v2345
      %v2525 = vpop.f32.mrb[0].mxu0
      %v2526 = vadd.f32 0.0, %v2525
      %v2527 = vpop.f32.mrb[0].mxu0
      %2528 = vmatprep.mubr.f32.mxu0 0.0
      %2529 = vmatmul.mubr.f32.gmra.mrb[0].mxu0 %v2348
      %v2530 = vpop.f32.mrb[0].mxu0
      %v2531 = vadd.f32 0.0, %v2530
      %v2532 = vpop.f32.mrb[0].mxu0
      %2533 = vmatprep.mubr.f32.mxu0 0.0
      %2534 = vmatmul.mubr.f32.gmra.mrb[0].mxu0 %v2351
      %v2535 = vpop.f32.mrb[0].mxu0
      %v2536 = vadd.f32 0.0, %v2535
      %v2537 = vpop.f32.mrb[0].mxu0
      %2538 = vmatprep.mubr.f32.mxu0 0.0
      %2539 = vmatmul.mubr.f32.gmra.mrb[0].mxu0 %v2354
      %v2540 = vpop.f32.mrb[0].mxu0
      %v2541 = vadd.f32 0.0, %v2540
      %v2542 = vpop.f32.mrb[0].mxu0
      %2543 = vmatprep.mubr.f32.mxu0 0.0
      %2544 = vmatmul.mubr.f32.gmra.mrb[0].mxu0 %v2357
      %v2545 = vpop.f32.mrb[0].mxu0
      %v2546 = vadd.f32 0.0, %v2545
      %v2547 = vpop.f32.mrb[0].mxu0
      %2548 = vmatprep.mubr.f32.mxu0 0.0
      %2549 = vmatmul.mubr.f32.gmra.mrb[0].mxu0 %v2360
      %v2550 = vpop.f32.mrb[0].mxu0
      %v2551 = vadd.f32 0.0, %v2550
      %v2552 = vpop.f32.mrb[0].mxu0
      %2553 = vmatprep.mubr.f32.mxu0 0.0
      %2554 = vmatmul.mubr.f32.gmra.mrb[0].mxu0 %v2363
      %v2555 = vpop.f32.mrb[0].mxu0
      %v2556 = vadd.f32 0.0, %v2555
      %v2557 = vpop.f32.mrb[0].mxu0
      %2558 = vmatprep.mubr.f32.mxu0 0.0
      %2559 = vmatmul.mubr.f32.gmra.mrb[0].mxu0 %v2366
      %v2560 = vpop.f32.mrb[0].mxu0
      %v2561 = vadd.f32 0.0, %v2560
      %v2562 = vpop.f32.mrb[0].mxu0
      %2563 = vmatprep.mubr.f32.mxu0 0.0
      %2564 = vmatmul.mubr.f32.gmra.mrb[0].mxu0 %v2369
      %v2565 = vpop.f32.mrb[0].mxu0
      %v2566 = vadd.f32 0.0, %v2565
      %v2567 = vpop.f32.mrb[0].mxu0
      %2568 = vmatprep.mubr.f32.mxu0 0.0
      %2569 = vmatmul.mubr.f32.gmra.mrb[0].mxu0 %v2372
      %v2570 = vpop.f32.mrb[0].mxu0
      %v2571 = vadd.f32 0.0, %v2570
      %v2572 = vpop.f32.mrb[0].mxu0
      %2573 = vmatprep.mubr.f32.mxu0 0.0
      %2574 = vmatmul.mubr.f32.gmra.mrb[0].mxu0 %v2375
      %v2575 = vpop.f32.mrb[0].mxu0
      %v2576 = vadd.f32 0.0, %v2575
      %v2577 = vpop.f32.mrb[0].mxu0
      %2578 = vmatprep.mubr.f32.mxu0 0.0
      %2579 = vmatmul.mubr.f32.gmra.mrb[0].mxu0 %v2378
      %v2580 = vpop.f32.mrb[0].mxu0
      %v2581 = vadd.f32 0.0, %v2580
      %v2582 = vpop.f32.mrb[0].mxu0
      %2583 = vmatprep.mubr.f32.mxu0 0.0
      %2584 = vmatmul.mubr.f32.gmra.mrb[0].mxu0 %v2381
      %v2585 = vpop.f32.mrb[0].mxu0
      %v2586 = vadd.f32 0.0, %v2585
      %v2587 = vpop.f32.mrb[0].mxu0
      %2588 = vmatprep.mubr.f32.mxu0 0.0
      %2589 = vmatmul.mubr.f32.gmra.mrb[0].mxu0 %v2384
      %v2590 = vpop.f32.mrb[0].mxu0
      %v2591 = vadd.f32 0.0, %v2590
      %v2592 = vpop.f32.mrb[0].mxu0
      %2593 = vmatprep.mubr.f32.mxu0 0.0
      %2594 = vmatmul.mubr.f32.gmra.mrb[0].mxu0 %v2387
      %v2595 = vpop.f32.mrb[0].mxu0
      %v2596 = vadd.f32 0.0, %v2595
      %v2597 = vpop.f32.mrb[0].mxu0
      %2598 = vmatprep.mubr.f32.mxu0 0.0
      %2599 = vmatmul.mubr.f32.gmra.mrb[0].mxu0 %v2390
      %v2600 = vpop.f32.mrb[0].mxu0
      %v2601 = vadd.f32 0.0, %v2600
      %v2602 = vpop.f32.mrb[0].mxu0
      %2603 = vmatprep.mubr.f32.mxu0 0.0
      %2604 = vmatmul.mubr.f32.gmra.mrb[0].mxu0 %v2393
      %v2605 = vpop.f32.mrb[0].mxu0
      %v2606 = vadd.f32 0.0, %v2605
      %v2607 = vpop.f32.mrb[0].mxu0
      %2608 = vmatprep.mubr.f32.mxu0 0.0
      %2609 = vmatmul.mubr.f32.gmra.mrb[0].mxu0 %v2396
      %v2610 = vpop.f32.mrb[0].mxu0
      %v2611 = vadd.f32 0.0, %v2610
      %v2612 = vpop.f32.mrb[0].mxu0
      %2613 = vmatprep.mubr.f32.mxu0 0.0
      %2614 = vmatmul.mubr.f32.gmra.mrb[0].mxu0 %v2399
      %v2615 = vpop.f32.mrb[0].mxu0
      %v2616 = vadd.f32 0.0, %v2615
      %v2617 = vpop.f32.mrb[0].mxu0
      %2618 = vmatprep.mubr.f32.mxu0 0.0
      %2619 = vmatmul.mubr.f32.gmra.mrb[0].mxu0 %v2402
      %v2620 = vpop.f32.mrb[0].mxu0
      %v2621 = vadd.f32 0.0, %v2620
      %v2622 = vpop.f32.mrb[0].mxu0
      %2623 = vmatprep.mubr.f32.mxu0 0.0
      %2624 = vmatmul.mubr.f32.gmra.mrb[0].mxu0 %v2405
      %v2625 = vpop.f32.mrb[0].mxu0
      %v2626 = vadd.f32 0.0, %v2625
      %v2627 = vpop.f32.mrb[0].mxu0
      %2628 = vmatprep.mubr.f32.mxu0 0.0
      %2629 = vmatmul.mubr.f32.gmra.mrb[0].mxu0 %v2408
      %v2630 = vpop.f32.mrb[0].mxu0
      %v2631 = vadd.f32 0.0, %v2630
      %v2632 = vpop.f32.mrb[0].mxu0
      %2633 = vmatprep.mubr.f32.mxu0 0.0
      %2634 = vmatmul.mubr.f32.gmra.mrb[0].mxu0 %v2411
      %v2635 = vpop.f32.mrb[0].mxu0
      %v2636 = vadd.f32 0.0, %v2635
      %v2637 = vpop.f32.mrb[0].mxu0
      %2638 = vmatprep.mubr.f32.mxu0 0.0
      %2639 = vmatmul.mubr.f32.gmra.mrb[0].mxu0 %v2414
      %v2640 = vpop.f32.mrb[0].mxu0
      %v2641 = vadd.f32 0.0, %v2640
      %v2642 = vpop.f32.mrb[0].mxu0
      %2643 = vdwg.mxu0
      %v2644 = vadd.f32 %v2254, %v2486
      %v2645 = vadd.f32 %v2255, %v2491
      %v2646 = vadd.f32 %v2256, %v2496
      %v2647 = vadd.f32 %v2257, %v2501
      %v2648 = vadd.f32 %v2258, %v2506
      %v2649 = vadd.f32 %v2259, %v2511
      %v2650 = vadd.f32 %v2260, %v2516
      %v2651 = vadd.f32 %v2261, %v2521
      %v2652 = vadd.f32 %v2262, %v2526
      %v2653 = vadd.f32 %v2263, %v2531
      %v2654 = vadd.f32 %v2264, %v2536
      %v2655 = vadd.f32 %v2265, %v2541
      %v2656 = vadd.f32 %v2266, %v2546
      %v2657 = vadd.f32 %v2267, %v2551
      %v2658 = vadd.f32 %v2268, %v2556
      %v2659 = vadd.f32 %v2269, %v2561
      %v2660 = vadd.f32 %v2270, %v2566
      %v2661 = vadd.f32 %v2271, %v2571
      %v2662 = vadd.f32 %v2272, %v2576
      %v2663 = vadd.f32 %v2273, %v2581
      %v2664 = vadd.f32 %v2274, %v2586
      %v2665 = vadd.f32 %v2275, %v2591
      %v2666 = vadd.f32 %v2276, %v2596
      %v2667 = vadd.f32 %v2277, %v2601
      %v2668 = vadd.f32 %v2278, %v2606
      %v2669 = vadd.f32 %v2279, %v2611
      %v2670 = vadd.f32 %v2280, %v2616
      %v2671 = vadd.f32 %v2281, %v2621
      %v2672 = vadd.f32 %v2282, %v2626
      %v2673 = vadd.f32 %v2283, %v2631
      %v2674 = vadd.f32 %v2284, %v2636
      %v2675 = vadd.f32 %v2285, %v2641
      %s2676 = scalar_lea.vmem [#allocation2], 48
      %v2677 = vld [vmem:[%s2676] sm:$0xff]
      %v2678 = vld [vmem:[%s2676 + $0x8] sm:$0xff]
      %v2679 = vld [vmem:[%s2676 + $0x18] sm:$0xff]
      %v2680 = vld [vmem:[%s2676 + $0x20] sm:$0xff]
      %v2681 = vld [vmem:[%s2676 + $0x30] sm:$0xff]
      %v2682 = vld [vmem:[%s2676 + $0x38] sm:$0xff]
      %v2683 = vld [vmem:[%s2676 + $0x48] sm:$0xff]
      %v2684 = vld [vmem:[%s2676 + $0x50] sm:$0xff]
      %v2685 = vld [vmem:[%s2676 + $0x60] sm:$0xff]
      %v2686 = vld [vmem:[%s2676 + $0x68] sm:$0xff]
      %v2687 = vld [vmem:[%s2676 + $0x78] sm:$0xff]
      %v2688 = vld [vmem:[%s2676 + $0x80] sm:$0xff]
      %v2689 = vld [vmem:[%s2676 + $0x90] sm:$0xff]
      %v2690 = vld [vmem:[%s2676 + $0x98] sm:$0xff]
      %v2691 = vld [vmem:[%s2676 + $0xa8] sm:$0xff]
      %v2692 = vld [vmem:[%s2676 + $0xb0] sm:$0xff]
      %v2693 = vld [vmem:[%s2676 + $0xc0] sm:$0xff]
      %v2694 = vld [vmem:[%s2676 + $0xc8] sm:$0xff]
      %v2695 = vld [vmem:[%s2676 + $0xd8] sm:$0xff]
      %v2696 = vld [vmem:[%s2676 + $0xe0] sm:$0xff]
      %v2697 = vld [vmem:[%s2676 + $0xf0] sm:$0xff]
      %v2698 = vld [vmem:[%s2676 + $0xf8] sm:$0xff]
      %v2699 = vld [vmem:[%s2676 + $0x108] sm:$0xff]
      %v2700 = vld [vmem:[%s2676 + $0x110] sm:$0xff]
      %v2701 = vld [vmem:[%s2676 + $0x120] sm:$0xff]
      %v2702 = vld [vmem:[%s2676 + $0x128] sm:$0xff]
      %v2703 = vld [vmem:[%s2676 + $0x138] sm:$0xff]
      %v2704 = vld [vmem:[%s2676 + $0x140] sm:$0xff]
      %v2705 = vld [vmem:[%s2676 + $0x150] sm:$0xff]
      %v2706 = vld [vmem:[%s2676 + $0x158] sm:$0xff]
      %v2707 = vld [vmem:[%s2676 + $0x168] sm:$0xff]
      %v2708 = vld [vmem:[%s2676 + $0x170] sm:$0xff]
      %s2709 = scalar_lea.vmem %s1, 24
      %v2710 = vld [vmem:[%s2709] sm:$0xf]
      %v2712 = vsel %vm311, %v2677, 0
      %v2715 = vsel %vm311, %v2678, 0
      %v2718 = vsel %vm311, %v2679, 0
      %v2721 = vsel %vm311, %v2680, 0
      %v2724 = vsel %vm311, %v2681, 0
      %v2727 = vsel %vm311, %v2682, 0
      %v2730 = vsel %vm311, %v2683, 0
      %v2733 = vsel %vm311, %v2684, 0
      %v2736 = vsel %vm311, %v2685, 0
      %v2739 = vsel %vm311, %v2686, 0
      %v2742 = vsel %vm311, %v2687, 0
      %v2745 = vsel %vm311, %v2688, 0
      %v2748 = vsel %vm311, %v2689, 0
      %v2751 = vsel %vm311, %v2690, 0
      %v2754 = vsel %vm311, %v2691, 0
      %v2757 = vsel %vm311, %v2692, 0
      %v2760 = vsel %vm311, %v2693, 0
      %v2763 = vsel %vm311, %v2694, 0
      %v2766 = vsel %vm311, %v2695, 0
      %v2769 = vsel %vm311, %v2696, 0
      %v2772 = vsel %vm311, %v2697, 0
      %v2775 = vsel %vm311, %v2698, 0
      %v2778 = vsel %vm311, %v2699, 0
      %v2781 = vsel %vm311, %v2700, 0
      %v2784 = vsel %vm311, %v2701, 0
      %v2787 = vsel %vm311, %v2702, 0
      %v2790 = vsel %vm311, %v2703, 0
      %v2793 = vsel %vm311, %v2704, 0
      %v2796 = vsel %vm311, %v2705, 0
      %v2799 = vsel %vm311, %v2706, 0
      %v2802 = vsel %vm311, %v2707, 0
      %v2805 = vsel %vm311, %v2708, 0
      %v2808 = vsel %vm563, %v2710, 0
      %2810 = vmatprep.subr.mxu0 0.0
      %2811 = vmatpush1.msra.mxu0 %v2808
      %2812 = vmatprep.subr.mxu0 0.0
      %2813 = vmatpush1.msra.mxu0 0.0
      %2814 = vmatprep.subr.mxu0 0.0
      %2815 = vmatpush1.msra.mxu0 0.0
      %2816 = vmatprep.subr.mxu0 0.0
      %2817 = vmatpush1.msra.mxu0 0.0
      %2818 = vmatprep.subr.mxu0 0.0
      %2819 = vmatpush1.msra.mxu0 0.0
      %2820 = vmatprep.subr.mxu0 0.0
      %2821 = vmatpush1.msra.mxu0 0.0
      %2822 = vmatprep.subr.mxu0 0.0
      %2823 = vmatpush1.msra.mxu0 0.0
      %2824 = vmatprep.subr.mxu0 0.0
      %2825 = vmatpush1.msra.mxu0 0.0
      %2826 = vmatprep.subr.mxu0 0.0
      %2827 = vmatpush1.msra.mxu0 0.0
      %2828 = vmatprep.subr.mxu0 0.0
      %2829 = vmatpush1.msra.mxu0 0.0
      %2830 = vmatprep.subr.mxu0 0.0
      %2831 = vmatpush1.msra.mxu0 0.0
      %2832 = vmatprep.subr.mxu0 0.0
      %2833 = vmatpush1.msra.mxu0 0.0
      %2834 = vmatprep.subr.mxu0 0.0
      %2835 = vmatpush1.msra.mxu0 0.0
      %2836 = vmatprep.subr.mxu0 0.0
      %2837 = vmatpush1.msra.mxu0 0.0
      %2838 = vmatprep.subr.mxu0 0.0
      %2839 = vmatpush1.msra.mxu0 0.0
      %2840 = vmatprep.subr.mxu0 0.0
      %2841 = vmatpush1.msra.mxu0 0.0
      %2842 = vmatprep.subr.mxu0 0.0
      %2843 = vmatpush1.msra.mxu0 0.0
      %2844 = vmatprep.subr.mxu0 0.0
      %2845 = vmatpush1.msra.mxu0 0.0
      %2846 = vmatprep.subr.mxu0 0.0
      %2847 = vmatpush1.msra.mxu0 0.0
      %2848 = vmatprep.subr.mxu0 0.0
      %2849 = vmatpush1.msra.mxu0 0.0
      %2850 = vmatprep.subr.mxu0 0.0
      %2851 = vmatpush1.msra.mxu0 0.0
      %2852 = vmatprep.subr.mxu0 0.0
      %2853 = vmatpush1.msra.mxu0 0.0
      %2854 = vmatprep.subr.mxu0 0.0
      %2855 = vmatpush1.msra.mxu0 0.0
      %2856 = vmatprep.subr.mxu0 0.0
      %2857 = vmatpush1.msra.mxu0 0.0
      %2858 = vmatprep.subr.mxu0 0.0
      %2859 = vmatpush1.msra.mxu0 0.0
      %2860 = vmatprep.subr.mxu0 0.0
      %2861 = vmatpush1.msra.mxu0 0.0
      %2862 = vmatprep.subr.mxu0 0.0
      %2863 = vmatpush1.msra.mxu0 0.0
      %2864 = vmatprep.subr.mxu0 0.0
      %2865 = vmatpush1.msra.mxu0 0.0
      %2866 = vmatprep.subr.mxu0 0.0
      %2867 = vmatpush1.msra.mxu0 0.0
      %2868 = vmatprep.subr.mxu0 0.0
      %2869 = vmatpush1.msra.mxu0 0.0
      %2870 = vmatprep.subr.mxu0 0.0
      %2871 = vmatpush1.msra.mxu0 0.0
      %2872 = vmatprep.subr.mxu0 0.0
      %2873 = vmatpush1.msra.mxu0 0.0
      %2874 = vmatprep.mubr.f32.mxu0 0.0
      %2875 = vmatmul.mubr.f32.gmra.mrb[0].mxu0 %v2712
      %v2876 = vpop.f32.mrb[0].mxu0
      %v2877 = vadd.f32 0.0, %v2876
      %v2878 = vpop.f32.mrb[0].mxu0
      %2879 = vmatprep.mubr.f32.mxu0 0.0
      %2880 = vmatmul.mubr.f32.gmra.mrb[0].mxu0 %v2715
      %v2881 = vpop.f32.mrb[0].mxu0
      %v2882 = vadd.f32 0.0, %v2881
      %v2883 = vpop.f32.mrb[0].mxu0
      %2884 = vmatprep.mubr.f32.mxu0 0.0
      %2885 = vmatmul.mubr.f32.gmra.mrb[0].mxu0 %v2718
      %v2886 = vpop.f32.mrb[0].mxu0
      %v2887 = vadd.f32 0.0, %v2886
      %v2888 = vpop.f32.mrb[0].mxu0
      %2889 = vmatprep.mubr.f32.mxu0 0.0
      %2890 = vmatmul.mubr.f32.gmra.mrb[0].mxu0 %v2721
      %v2891 = vpop.f32.mrb[0].mxu0
      %v2892 = vadd.f32 0.0, %v2891
      %v2893 = vpop.f32.mrb[0].mxu0
      %2894 = vmatprep.mubr.f32.mxu0 0.0
      %2895 = vmatmul.mubr.f32.gmra.mrb[0].mxu0 %v2724
      %v2896 = vpop.f32.mrb[0].mxu0
      %v2897 = vadd.f32 0.0, %v2896
      %v2898 = vpop.f32.mrb[0].mxu0
      %2899 = vmatprep.mubr.f32.mxu0 0.0
      %2900 = vmatmul.mubr.f32.gmra.mrb[0].mxu0 %v2727
      %v2901 = vpop.f32.mrb[0].mxu0
      %v2902 = vadd.f32 0.0, %v2901
      %v2903 = vpop.f32.mrb[0].mxu0
      %2904 = vmatprep.mubr.f32.mxu0 0.0
      %2905 = vmatmul.mubr.f32.gmra.mrb[0].mxu0 %v2730
      %v2906 = vpop.f32.mrb[0].mxu0
      %v2907 = vadd.f32 0.0, %v2906
      %v2908 = vpop.f32.mrb[0].mxu0
      %2909 = vmatprep.mubr.f32.mxu0 0.0
      %2910 = vmatmul.mubr.f32.gmra.mrb[0].mxu0 %v2733
      %v2911 = vpop.f32.mrb[0].mxu0
      %v2912 = vadd.f32 0.0, %v2911
      %v2913 = vpop.f32.mrb[0].mxu0
      %2914 = vmatprep.mubr.f32.mxu0 0.0
      %2915 = vmatmul.mubr.f32.gmra.mrb[0].mxu0 %v2736
      %v2916 = vpop.f32.mrb[0].mxu0
      %v2917 = vadd.f32 0.0, %v2916
      %v2918 = vpop.f32.mrb[0].mxu0
      %2919 = vmatprep.mubr.f32.mxu0 0.0
      %2920 = vmatmul.mubr.f32.gmra.mrb[0].mxu0 %v2739
      %v2921 = vpop.f32.mrb[0].mxu0
      %v2922 = vadd.f32 0.0, %v2921
      %v2923 = vpop.f32.mrb[0].mxu0
      %2924 = vmatprep.mubr.f32.mxu0 0.0
      %2925 = vmatmul.mubr.f32.gmra.mrb[0].mxu0 %v2742
      %v2926 = vpop.f32.mrb[0].mxu0
      %v2927 = vadd.f32 0.0, %v2926
      %v2928 = vpop.f32.mrb[0].mxu0
      %2929 = vmatprep.mubr.f32.mxu0 0.0
      %2930 = vmatmul.mubr.f32.gmra.mrb[0].mxu0 %v2745
      %v2931 = vpop.f32.mrb[0].mxu0
      %v2932 = vadd.f32 0.0, %v2931
      %v2933 = vpop.f32.mrb[0].mxu0
      %2934 = vmatprep.mubr.f32.mxu0 0.0
      %2935 = vmatmul.mubr.f32.gmra.mrb[0].mxu0 %v2748
      %v2936 = vpop.f32.mrb[0].mxu0
      %v2937 = vadd.f32 0.0, %v2936
      %v2938 = vpop.f32.mrb[0].mxu0
      %2939 = vmatprep.mubr.f32.mxu0 0.0
      %2940 = vmatmul.mubr.f32.gmra.mrb[0].mxu0 %v2751
      %v2941 = vpop.f32.mrb[0].mxu0
      %v2942 = vadd.f32 0.0, %v2941
      %v2943 = vpop.f32.mrb[0].mxu0
      %2944 = vmatprep.mubr.f32.mxu0 0.0
      %2945 = vmatmul.mubr.f32.gmra.mrb[0].mxu0 %v2754
      %v2946 = vpop.f32.mrb[0].mxu0
      %v2947 = vadd.f32 0.0, %v2946
      %v2948 = vpop.f32.mrb[0].mxu0
      %2949 = vmatprep.mubr.f32.mxu0 0.0
      %2950 = vmatmul.mubr.f32.gmra.mrb[0].mxu0 %v2757
      %v2951 = vpop.f32.mrb[0].mxu0
      %v2952 = vadd.f32 0.0, %v2951
      %v2953 = vpop.f32.mrb[0].mxu0
      %2954 = vmatprep.mubr.f32.mxu0 0.0
      %2955 = vmatmul.mubr.f32.gmra.mrb[0].mxu0 %v2760
      %v2956 = vpop.f32.mrb[0].mxu0
      %v2957 = vadd.f32 0.0, %v2956
      %v2958 = vpop.f32.mrb[0].mxu0
      %2959 = vmatprep.mubr.f32.mxu0 0.0
      %2960 = vmatmul.mubr.f32.gmra.mrb[0].mxu0 %v2763
      %v2961 = vpop.f32.mrb[0].mxu0
      %v2962 = vadd.f32 0.0, %v2961
      %v2963 = vpop.f32.mrb[0].mxu0
      %2964 = vmatprep.mubr.f32.mxu0 0.0
      %2965 = vmatmul.mubr.f32.gmra.mrb[0].mxu0 %v2766
      %v2966 = vpop.f32.mrb[0].mxu0
      %v2967 = vadd.f32 0.0, %v2966
      %v2968 = vpop.f32.mrb[0].mxu0
      %2969 = vmatprep.mubr.f32.mxu0 0.0
      %2970 = vmatmul.mubr.f32.gmra.mrb[0].mxu0 %v2769
      %v2971 = vpop.f32.mrb[0].mxu0
      %v2972 = vadd.f32 0.0, %v2971
      %v2973 = vpop.f32.mrb[0].mxu0
      %2974 = vmatprep.mubr.f32.mxu0 0.0
      %2975 = vmatmul.mubr.f32.gmra.mrb[0].mxu0 %v2772
      %v2976 = vpop.f32.mrb[0].mxu0
      %v2977 = vadd.f32 0.0, %v2976
      %v2978 = vpop.f32.mrb[0].mxu0
      %2979 = vmatprep.mubr.f32.mxu0 0.0
      %2980 = vmatmul.mubr.f32.gmra.mrb[0].mxu0 %v2775
      %v2981 = vpop.f32.mrb[0].mxu0
      %v2982 = vadd.f32 0.0, %v2981
      %v2983 = vpop.f32.mrb[0].mxu0
      %2984 = vmatprep.mubr.f32.mxu0 0.0
      %2985 = vmatmul.mubr.f32.gmra.mrb[0].mxu0 %v2778
      %v2986 = vpop.f32.mrb[0].mxu0
      %v2987 = vadd.f32 0.0, %v2986
      %v2988 = vpop.f32.mrb[0].mxu0
      %2989 = vmatprep.mubr.f32.mxu0 0.0
      %2990 = vmatmul.mubr.f32.gmra.mrb[0].mxu0 %v2781
      %v2991 = vpop.f32.mrb[0].mxu0
      %v2992 = vadd.f32 0.0, %v2991
      %v2993 = vpop.f32.mrb[0].mxu0
      %2994 = vmatprep.mubr.f32.mxu0 0.0
      %2995 = vmatmul.mubr.f32.gmra.mrb[0].mxu0 %v2784
      %v2996 = vpop.f32.mrb[0].mxu0
      %v2997 = vadd.f32 0.0, %v2996
      %v2998 = vpop.f32.mrb[0].mxu0
      %2999 = vmatprep.mubr.f32.mxu0 0.0
      %3000 = vmatmul.mubr.f32.gmra.mrb[0].mxu0 %v2787
      %v3001 = vpop.f32.mrb[0].mxu0
      %v3002 = vadd.f32 0.0, %v3001
      %v3003 = vpop.f32.mrb[0].mxu0
      %3004 = vmatprep.mubr.f32.mxu0 0.0
      %3005 = vmatmul.mubr.f32.gmra.mrb[0].mxu0 %v2790
      %v3006 = vpop.f32.mrb[0].mxu0
      %v3007 = vadd.f32 0.0, %v3006
      %v3008 = vpop.f32.mrb[0].mxu0
      %3009 = vmatprep.mubr.f32.mxu0 0.0
      %3010 = vmatmul.mubr.f32.gmra.mrb[0].mxu0 %v2793
      %v3011 = vpop.f32.mrb[0].mxu0
      %v3012 = vadd.f32 0.0, %v3011
      %v3013 = vpop.f32.mrb[0].mxu0
      %3014 = vmatprep.mubr.f32.mxu0 0.0
      %3015 = vmatmul.mubr.f32.gmra.mrb[0].mxu0 %v2796
      %v3016 = vpop.f32.mrb[0].mxu0
      %v3017 = vadd.f32 0.0, %v3016
      %v3018 = vpop.f32.mrb[0].mxu0
      %3019 = vmatprep.mubr.f32.mxu0 0.0
      %3020 = vmatmul.mubr.f32.gmra.mrb[0].mxu0 %v2799
      %v3021 = vpop.f32.mrb[0].mxu0
      %v3022 = vadd.f32 0.0, %v3021
      %v3023 = vpop.f32.mrb[0].mxu0
      %3024 = vmatprep.mubr.f32.mxu0 0.0
      %3025 = vmatmul.mubr.f32.gmra.mrb[0].mxu0 %v2802
      %v3026 = vpop.f32.mrb[0].mxu0
      %v3027 = vadd.f32 0.0, %v3026
      %v3028 = vpop.f32.mrb[0].mxu0
      %3029 = vmatprep.mubr.f32.mxu0 0.0
      %3030 = vmatmul.mubr.f32.gmra.mrb[0].mxu0 %v2805
      %v3031 = vpop.f32.mrb[0].mxu0
      %v3032 = vadd.f32 0.0, %v3031
      %v3033 = vpop.f32.mrb[0].mxu0
      %3034 = vdwg.mxu0
      %v3035 = vadd.f32 %v2644, %v2877
      %v3036 = vadd.f32 %v2645, %v2882
      %v3037 = vadd.f32 %v2646, %v2887
      %v3038 = vadd.f32 %v2647, %v2892
      %v3039 = vadd.f32 %v2648, %v2897
      %v3040 = vadd.f32 %v2649, %v2902
      %v3041 = vadd.f32 %v2650, %v2907
      %v3042 = vadd.f32 %v2651, %v2912
      %v3043 = vadd.f32 %v2652, %v2917
      %v3044 = vadd.f32 %v2653, %v2922
      %v3045 = vadd.f32 %v2654, %v2927
      %v3046 = vadd.f32 %v2655, %v2932
      %v3047 = vadd.f32 %v2656, %v2937
      %v3048 = vadd.f32 %v2657, %v2942
      %v3049 = vadd.f32 %v2658, %v2947
      %v3050 = vadd.f32 %v2659, %v2952
      %v3051 = vadd.f32 %v2660, %v2957
      %v3052 = vadd.f32 %v2661, %v2962
      %v3053 = vadd.f32 %v2662, %v2967
      %v3054 = vadd.f32 %v2663, %v2972
      %v3055 = vadd.f32 %v2664, %v2977
      %v3056 = vadd.f32 %v2665, %v2982
      %v3057 = vadd.f32 %v2666, %v2987
      %v3058 = vadd.f32 %v2667, %v2992
      %v3059 = vadd.f32 %v2668, %v2997
      %v3060 = vadd.f32 %v2669, %v3002
      %v3061 = vadd.f32 %v2670, %v3007
      %v3062 = vadd.f32 %v2671, %v3012
      %v3063 = vadd.f32 %v2672, %v3017
      %v3064 = vadd.f32 %v2673, %v3022
      %v3065 = vadd.f32 %v2674, %v3027
      %v3066 = vadd.f32 %v2675, %v3032
      %v3067 = vld [vmem:[%s2676 + $0x1] sm:$0xff]
      %v3068 = vld [vmem:[%s2676 + $0x9] sm:$0xff]
      %v3069 = vld [vmem:[%s2676 + $0x19] sm:$0xff]
      %v3070 = vld [vmem:[%s2676 + $0x21] sm:$0xff]
      %v3071 = vld [vmem:[%s2676 + $0x31] sm:$0xff]
      %v3072 = vld [vmem:[%s2676 + $0x39] sm:$0xff]
      %v3073 = vld [vmem:[%s2676 + $0x49] sm:$0xff]
      %v3074 = vld [vmem:[%s2676 + $0x51] sm:$0xff]
      %v3075 = vld [vmem:[%s2676 + $0x61] sm:$0xff]
      %v3076 = vld [vmem:[%s2676 + $0x69] sm:$0xff]
      %v3077 = vld [vmem:[%s2676 + $0x79] sm:$0xff]
      %v3078 = vld [vmem:[%s2676 + $0x81] sm:$0xff]
      %v3079 = vld [vmem:[%s2676 + $0x91] sm:$0xff]
      %v3080 = vld [vmem:[%s2676 + $0x99] sm:$0xff]
      %v3081 = vld [vmem:[%s2676 + $0xa9] sm:$0xff]
      %v3082 = vld [vmem:[%s2676 + $0xb1] sm:$0xff]
      %v3083 = vld [vmem:[%s2676 + $0xc1] sm:$0xff]
      %v3084 = vld [vmem:[%s2676 + $0xc9] sm:$0xff]
      %v3085 = vld [vmem:[%s2676 + $0xd9] sm:$0xff]
      %v3086 = vld [vmem:[%s2676 + $0xe1] sm:$0xff]
      %v3087 = vld [vmem:[%s2676 + $0xf1] sm:$0xff]
      %v3088 = vld [vmem:[%s2676 + $0xf9] sm:$0xff]
      %v3089 = vld [vmem:[%s2676 + $0x109] sm:$0xff]
      %v3090 = vld [vmem:[%s2676 + $0x111] sm:$0xff]
      %v3091 = vld [vmem:[%s2676 + $0x121] sm:$0xff]
      %v3092 = vld [vmem:[%s2676 + $0x129] sm:$0xff]
      %v3093 = vld [vmem:[%s2676 + $0x139] sm:$0xff]
      %v3094 = vld [vmem:[%s2676 + $0x141] sm:$0xff]
      %v3095 = vld [vmem:[%s2676 + $0x151] sm:$0xff]
      %v3096 = vld [vmem:[%s2676 + $0x159] sm:$0xff]
      %v3097 = vld [vmem:[%s2676 + $0x169] sm:$0xff]
      %v3098 = vld [vmem:[%s2676 + $0x171] sm:$0xff]
      %s3099 = scalar_lea.vmem %s1, 28
      %v3100 = vld [vmem:[%s3099] sm:$0xf]
      %v3102 = vsel %vm311, %v3067, 0
      %v3105 = vsel %vm311, %v3068, 0
      %v3108 = vsel %vm311, %v3069, 0
      %v3111 = vsel %vm311, %v3070, 0
      %v3114 = vsel %vm311, %v3071, 0
      %v3117 = vsel %vm311, %v3072, 0
      %v3120 = vsel %vm311, %v3073, 0
      %v3123 = vsel %vm311, %v3074, 0
      %v3126 = vsel %vm311, %v3075, 0
      %v3129 = vsel %vm311, %v3076, 0
      %v3132 = vsel %vm311, %v3077, 0
      %v3135 = vsel %vm311, %v3078, 0
      %v3138 = vsel %vm311, %v3079, 0
      %v3141 = vsel %vm311, %v3080, 0
      %v3144 = vsel %vm311, %v3081, 0
      %v3147 = vsel %vm311, %v3082, 0
      %v3150 = vsel %vm311, %v3083, 0
      %v3153 = vsel %vm311, %v3084, 0
      %v3156 = vsel %vm311, %v3085, 0
      %v3159 = vsel %vm311, %v3086, 0
      %v3162 = vsel %vm311, %v3087, 0
      %v3165 = vsel %vm311, %v3088, 0
      %v3168 = vsel %vm311, %v3089, 0
      %v3171 = vsel %vm311, %v3090, 0
      %v3174 = vsel %vm311, %v3091, 0
      %v3177 = vsel %vm311, %v3092, 0
      %v3180 = vsel %vm311, %v3093, 0
      %v3183 = vsel %vm311, %v3094, 0
      %v3186 = vsel %vm311, %v3095, 0
      %v3189 = vsel %vm311, %v3096, 0
      %v3192 = vsel %vm311, %v3097, 0
      %v3195 = vsel %vm311, %v3098, 0
      %v3198 = vsel %vm563, %v3100, 0
      %3200 = vmatprep.subr.mxu0 0.0
      %3201 = vmatpush1.msra.mxu0 %v3198
      %3202 = vmatprep.subr.mxu0 0.0
      %3203 = vmatpush1.msra.mxu0 0.0
      %3204 = vmatprep.subr.mxu0 0.0
      %3205 = vmatpush1.msra.mxu0 0.0
      %3206 = vmatprep.subr.mxu0 0.0
      %3207 = vmatpush1.msra.mxu0 0.0
      %3208 = vmatprep.subr.mxu0 0.0
      %3209 = vmatpush1.msra.mxu0 0.0
      %3210 = vmatprep.subr.mxu0 0.0
      %3211 = vmatpush1.msra.mxu0 0.0
      %3212 = vmatprep.subr.mxu0 0.0
      %3213 = vmatpush1.msra.mxu0 0.0
      %3214 = vmatprep.subr.mxu0 0.0
      %3215 = vmatpush1.msra.mxu0 0.0
      %3216 = vmatprep.subr.mxu0 0.0
      %3217 = vmatpush1.msra.mxu0 0.0
      %3218 = vmatprep.subr.mxu0 0.0
      %3219 = vmatpush1.msra.mxu0 0.0
      %3220 = vmatprep.subr.mxu0 0.0
      %3221 = vmatpush1.msra.mxu0 0.0
      %3222 = vmatprep.subr.mxu0 0.0
      %3223 = vmatpush1.msra.mxu0 0.0
      %3224 = vmatprep.subr.mxu0 0.0
      %3225 = vmatpush1.msra.mxu0 0.0
      %3226 = vmatprep.subr.mxu0 0.0
      %3227 = vmatpush1.msra.mxu0 0.0
      %3228 = vmatprep.subr.mxu0 0.0
      %3229 = vmatpush1.msra.mxu0 0.0
      %3230 = vmatprep.subr.mxu0 0.0
      %3231 = vmatpush1.msra.mxu0 0.0
      %3232 = vmatprep.subr.mxu0 0.0
      %3233 = vmatpush1.msra.mxu0 0.0
      %3234 = vmatprep.subr.mxu0 0.0
      %3235 = vmatpush1.msra.mxu0 0.0
      %3236 = vmatprep.subr.mxu0 0.0
      %3237 = vmatpush1.msra.mxu0 0.0
      %3238 = vmatprep.subr.mxu0 0.0
      %3239 = vmatpush1.msra.mxu0 0.0
      %3240 = vmatprep.subr.mxu0 0.0
      %3241 = vmatpush1.msra.mxu0 0.0
      %3242 = vmatprep.subr.mxu0 0.0
      %3243 = vmatpush1.msra.mxu0 0.0
      %3244 = vmatprep.subr.mxu0 0.0
      %3245 = vmatpush1.msra.mxu0 0.0
      %3246 = vmatprep.subr.mxu0 0.0
      %3247 = vmatpush1.msra.mxu0 0.0
      %3248 = vmatprep.subr.mxu0 0.0
      %3249 = vmatpush1.msra.mxu0 0.0
      %3250 = vmatprep.subr.mxu0 0.0
      %3251 = vmatpush1.msra.mxu0 0.0
      %3252 = vmatprep.subr.mxu0 0.0
      %3253 = vmatpush1.msra.mxu0 0.0
      %3254 = vmatprep.subr.mxu0 0.0
      %3255 = vmatpush1.msra.mxu0 0.0
      %3256 = vmatprep.subr.mxu0 0.0
      %3257 = vmatpush1.msra.mxu0 0.0
      %3258 = vmatprep.subr.mxu0 0.0
      %3259 = vmatpush1.msra.mxu0 0.0
      %3260 = vmatprep.subr.mxu0 0.0
      %3261 = vmatpush1.msra.mxu0 0.0
      %3262 = vmatprep.subr.mxu0 0.0
      %3263 = vmatpush1.msra.mxu0 0.0
      %3264 = vmatprep.mubr.f32.mxu0 0.0
      %3265 = vmatmul.mubr.f32.gmra.mrb[0].mxu0 %v3102
      %v3266 = vpop.f32.mrb[0].mxu0
      %v3267 = vadd.f32 0.0, %v3266
      %v3268 = vpop.f32.mrb[0].mxu0
      %3269 = vmatprep.mubr.f32.mxu0 0.0
      %3270 = vmatmul.mubr.f32.gmra.mrb[0].mxu0 %v3105
      %v3271 = vpop.f32.mrb[0].mxu0
      %v3272 = vadd.f32 0.0, %v3271
      %v3273 = vpop.f32.mrb[0].mxu0
      %3274 = vmatprep.mubr.f32.mxu0 0.0
      %3275 = vmatmul.mubr.f32.gmra.mrb[0].mxu0 %v3108
      %v3276 = vpop.f32.mrb[0].mxu0
      %v3277 = vadd.f32 0.0, %v3276
      %v3278 = vpop.f32.mrb[0].mxu0
      %3279 = vmatprep.mubr.f32.mxu0 0.0
      %3280 = vmatmul.mubr.f32.gmra.mrb[0].mxu0 %v3111
      %v3281 = vpop.f32.mrb[0].mxu0
      %v3282 = vadd.f32 0.0, %v3281
      %v3283 = vpop.f32.mrb[0].mxu0
      %3284 = vmatprep.mubr.f32.mxu0 0.0
      %3285 = vmatmul.mubr.f32.gmra.mrb[0].mxu0 %v3114
      %v3286 = vpop.f32.mrb[0].mxu0
      %v3287 = vadd.f32 0.0, %v3286
      %v3288 = vpop.f32.mrb[0].mxu0
      %3289 = vmatprep.mubr.f32.mxu0 0.0
      %3290 = vmatmul.mubr.f32.gmra.mrb[0].mxu0 %v3117
      %v3291 = vpop.f32.mrb[0].mxu0
      %v3292 = vadd.f32 0.0, %v3291
      %v3293 = vpop.f32.mrb[0].mxu0
      %3294 = vmatprep.mubr.f32.mxu0 0.0
      %3295 = vmatmul.mubr.f32.gmra.mrb[0].mxu0 %v3120
      %v3296 = vpop.f32.mrb[0].mxu0
      %v3297 = vadd.f32 0.0, %v3296
      %v3298 = vpop.f32.mrb[0].mxu0
      %3299 = vmatprep.mubr.f32.mxu0 0.0
      %3300 = vmatmul.mubr.f32.gmra.mrb[0].mxu0 %v3123
      %v3301 = vpop.f32.mrb[0].mxu0
      %v3302 = vadd.f32 0.0, %v3301
      %v3303 = vpop.f32.mrb[0].mxu0
      %3304 = vmatprep.mubr.f32.mxu0 0.0
      %3305 = vmatmul.mubr.f32.gmra.mrb[0].mxu0 %v3126
      %v3306 = vpop.f32.mrb[0].mxu0
      %v3307 = vadd.f32 0.0, %v3306
      %v3308 = vpop.f32.mrb[0].mxu0
      %3309 = vmatprep.mubr.f32.mxu0 0.0
      %3310 = vmatmul.mubr.f32.gmra.mrb[0].mxu0 %v3129
      %v3311 = vpop.f32.mrb[0].mxu0
      %v3312 = vadd.f32 0.0, %v3311
      %v3313 = vpop.f32.mrb[0].mxu0
      %3314 = vmatprep.mubr.f32.mxu0 0.0
      %3315 = vmatmul.mubr.f32.gmra.mrb[0].mxu0 %v3132
      %v3316 = vpop.f32.mrb[0].mxu0
      %v3317 = vadd.f32 0.0, %v3316
      %v3318 = vpop.f32.mrb[0].mxu0
      %3319 = vmatprep.mubr.f32.mxu0 0.0
      %3320 = vmatmul.mubr.f32.gmra.mrb[0].mxu0 %v3135
      %v3321 = vpop.f32.mrb[0].mxu0
      %v3322 = vadd.f32 0.0, %v3321
      %v3323 = vpop.f32.mrb[0].mxu0
      %3324 = vmatprep.mubr.f32.mxu0 0.0
      %3325 = vmatmul.mubr.f32.gmra.mrb[0].mxu0 %v3138
      %v3326 = vpop.f32.mrb[0].mxu0
      %v3327 = vadd.f32 0.0, %v3326
      %v3328 = vpop.f32.mrb[0].mxu0
      %3329 = vmatprep.mubr.f32.mxu0 0.0
      %3330 = vmatmul.mubr.f32.gmra.mrb[0].mxu0 %v3141
      %v3331 = vpop.f32.mrb[0].mxu0
      %v3332 = vadd.f32 0.0, %v3331
      %v3333 = vpop.f32.mrb[0].mxu0
      %3334 = vmatprep.mubr.f32.mxu0 0.0
      %3335 = vmatmul.mubr.f32.gmra.mrb[0].mxu0 %v3144
      %v3336 = vpop.f32.mrb[0].mxu0
      %v3337 = vadd.f32 0.0, %v3336
      %v3338 = vpop.f32.mrb[0].mxu0
      %3339 = vmatprep.mubr.f32.mxu0 0.0
      %3340 = vmatmul.mubr.f32.gmra.mrb[0].mxu0 %v3147
      %v3341 = vpop.f32.mrb[0].mxu0
      %v3342 = vadd.f32 0.0, %v3341
      %v3343 = vpop.f32.mrb[0].mxu0
      %3344 = vmatprep.mubr.f32.mxu0 0.0
      %3345 = vmatmul.mubr.f32.gmra.mrb[0].mxu0 %v3150
      %v3346 = vpop.f32.mrb[0].mxu0
      %v3347 = vadd.f32 0.0, %v3346
      %v3348 = vpop.f32.mrb[0].mxu0
      %3349 = vmatprep.mubr.f32.mxu0 0.0
      %3350 = vmatmul.mubr.f32.gmra.mrb[0].mxu0 %v3153
      %v3351 = vpop.f32.mrb[0].mxu0
      %v3352 = vadd.f32 0.0, %v3351
      %v3353 = vpop.f32.mrb[0].mxu0
      %3354 = vmatprep.mubr.f32.mxu0 0.0
      %3355 = vmatmul.mubr.f32.gmra.mrb[0].mxu0 %v3156
      %v3356 = vpop.f32.mrb[0].mxu0
      %v3357 = vadd.f32 0.0, %v3356
      %v3358 = vpop.f32.mrb[0].mxu0
      %3359 = vmatprep.mubr.f32.mxu0 0.0
      %3360 = vmatmul.mubr.f32.gmra.mrb[0].mxu0 %v3159
      %v3361 = vpop.f32.mrb[0].mxu0
      %v3362 = vadd.f32 0.0, %v3361
      %v3363 = vpop.f32.mrb[0].mxu0
      %3364 = vmatprep.mubr.f32.mxu0 0.0
      %3365 = vmatmul.mubr.f32.gmra.mrb[0].mxu0 %v3162
      %v3366 = vpop.f32.mrb[0].mxu0
      %v3367 = vadd.f32 0.0, %v3366
      %v3368 = vpop.f32.mrb[0].mxu0
      %3369 = vmatprep.mubr.f32.mxu0 0.0
      %3370 = vmatmul.mubr.f32.gmra.mrb[0].mxu0 %v3165
      %v3371 = vpop.f32.mrb[0].mxu0
      %v3372 = vadd.f32 0.0, %v3371
      %v3373 = vpop.f32.mrb[0].mxu0
      %3374 = vmatprep.mubr.f32.mxu0 0.0
      %3375 = vmatmul.mubr.f32.gmra.mrb[0].mxu0 %v3168
      %v3376 = vpop.f32.mrb[0].mxu0
      %v3377 = vadd.f32 0.0, %v3376
      %v3378 = vpop.f32.mrb[0].mxu0
      %3379 = vmatprep.mubr.f32.mxu0 0.0
      %3380 = vmatmul.mubr.f32.gmra.mrb[0].mxu0 %v3171
      %v3381 = vpop.f32.mrb[0].mxu0
      %v3382 = vadd.f32 0.0, %v3381
      %v3383 = vpop.f32.mrb[0].mxu0
      %3384 = vmatprep.mubr.f32.mxu0 0.0
      %3385 = vmatmul.mubr.f32.gmra.mrb[0].mxu0 %v3174
      %v3386 = vpop.f32.mrb[0].mxu0
      %v3387 = vadd.f32 0.0, %v3386
      %v3388 = vpop.f32.mrb[0].mxu0
      %3389 = vmatprep.mubr.f32.mxu0 0.0
      %3390 = vmatmul.mubr.f32.gmra.mrb[0].mxu0 %v3177
      %v3391 = vpop.f32.mrb[0].mxu0
      %v3392 = vadd.f32 0.0, %v3391
      %v3393 = vpop.f32.mrb[0].mxu0
      %3394 = vmatprep.mubr.f32.mxu0 0.0
      %3395 = vmatmul.mubr.f32.gmra.mrb[0].mxu0 %v3180
      %v3396 = vpop.f32.mrb[0].mxu0
      %v3397 = vadd.f32 0.0, %v3396
      %v3398 = vpop.f32.mrb[0].mxu0
      %3399 = vmatprep.mubr.f32.mxu0 0.0
      %3400 = vmatmul.mubr.f32.gmra.mrb[0].mxu0 %v3183
      %v3401 = vpop.f32.mrb[0].mxu0
      %v3402 = vadd.f32 0.0, %v3401
      %v3403 = vpop.f32.mrb[0].mxu0
      %3404 = vmatprep.mubr.f32.mxu0 0.0
      %3405 = vmatmul.mubr.f32.gmra.mrb[0].mxu0 %v3186
      %v3406 = vpop.f32.mrb[0].mxu0
      %v3407 = vadd.f32 0.0, %v3406
      %v3408 = vpop.f32.mrb[0].mxu0
      %3409 = vmatprep.mubr.f32.mxu0 0.0
      %3410 = vmatmul.mubr.f32.gmra.mrb[0].mxu0 %v3189
      %v3411 = vpop.f32.mrb[0].mxu0
      %v3412 = vadd.f32 0.0, %v3411
      %v3413 = vpop.f32.mrb[0].mxu0
      %3414 = vmatprep.mubr.f32.mxu0 0.0
      %3415 = vmatmul.mubr.f32.gmra.mrb[0].mxu0 %v3192
      %v3416 = vpop.f32.mrb[0].mxu0
      %v3417 = vadd.f32 0.0, %v3416
      %v3418 = vpop.f32.mrb[0].mxu0
      %3419 = vmatprep.mubr.f32.mxu0 0.0
      %3420 = vmatmul.mubr.f32.gmra.mrb[0].mxu0 %v3195
      %v3421 = vpop.f32.mrb[0].mxu0
      %v3422 = vadd.f32 0.0, %v3421
      %v3423 = vpop.f32.mrb[0].mxu0
      %3424 = vdwg.mxu0
      %v3425 = vadd.f32 %v3035, %v3267
      %v3426 = vadd.f32 %v3036, %v3272
      %v3427 = vadd.f32 %v3037, %v3277
      %v3428 = vadd.f32 %v3038, %v3282
      %v3429 = vadd.f32 %v3039, %v3287
      %v3430 = vadd.f32 %v3040, %v3292
      %v3431 = vadd.f32 %v3041, %v3297
      %v3432 = vadd.f32 %v3042, %v3302
      %v3433 = vadd.f32 %v3043, %v3307
      %v3434 = vadd.f32 %v3044, %v3312
      %v3435 = vadd.f32 %v3045, %v3317
      %v3436 = vadd.f32 %v3046, %v3322
      %v3437 = vadd.f32 %v3047, %v3327
      %v3438 = vadd.f32 %v3048, %v3332
      %v3439 = vadd.f32 %v3049, %v3337
      %v3440 = vadd.f32 %v3050, %v3342
      %v3441 = vadd.f32 %v3051, %v3347
      %v3442 = vadd.f32 %v3052, %v3352
      %v3443 = vadd.f32 %v3053, %v3357
      %v3444 = vadd.f32 %v3054, %v3362
      %v3445 = vadd.f32 %v3055, %v3367
      %v3446 = vadd.f32 %v3056, %v3372
      %v3447 = vadd.f32 %v3057, %v3377
      %v3448 = vadd.f32 %v3058, %v3382
      %v3449 = vadd.f32 %v3059, %v3387
      %v3450 = vadd.f32 %v3060, %v3392
      %v3451 = vadd.f32 %v3061, %v3397
      %v3452 = vadd.f32 %v3062, %v3402
      %v3453 = vadd.f32 %v3063, %v3407
      %v3454 = vadd.f32 %v3064, %v3412
      %v3455 = vadd.f32 %v3065, %v3417
      %v3456 = vadd.f32 %v3066, %v3422
      %v3457 = vld [vmem:[%s2676 + $0x2] sm:$0xff]
      %v3458 = vld [vmem:[%s2676 + $0xa] sm:$0xff]
      %v3459 = vld [vmem:[%s2676 + $0x1a] sm:$0xff]
      %v3460 = vld [vmem:[%s2676 + $0x22] sm:$0xff]
      %v3461 = vld [vmem:[%s2676 + $0x32] sm:$0xff]
      %v3462 = vld [vmem:[%s2676 + $0x3a] sm:$0xff]
      %v3463 = vld [vmem:[%s2676 + $0x4a] sm:$0xff]
      %v3464 = vld [vmem:[%s2676 + $0x52] sm:$0xff]
      %v3465 = vld [vmem:[%s2676 + $0x62] sm:$0xff]
      %v3466 = vld [vmem:[%s2676 + $0x6a] sm:$0xff]
      %v3467 = vld [vmem:[%s2676 + $0x7a] sm:$0xff]
      %v3468 = vld [vmem:[%s2676 + $0x82] sm:$0xff]
      %v3469 = vld [vmem:[%s2676 + $0x92] sm:$0xff]
      %v3470 = vld [vmem:[%s2676 + $0x9a] sm:$0xff]
      %v3471 = vld [vmem:[%s2676 + $0xaa] sm:$0xff]
      %v3472 = vld [vmem:[%s2676 + $0xb2] sm:$0xff]
      %v3473 = vld [vmem:[%s2676 + $0xc2] sm:$0xff]
      %v3474 = vld [vmem:[%s2676 + $0xca] sm:$0xff]
      %v3475 = vld [vmem:[%s2676 + $0xda] sm:$0xff]
      %v3476 = vld [vmem:[%s2676 + $0xe2] sm:$0xff]
      %v3477 = vld [vmem:[%s2676 + $0xf2] sm:$0xff]
      %v3478 = vld [vmem:[%s2676 + $0xfa] sm:$0xff]
      %v3479 = vld [vmem:[%s2676 + $0x10a] sm:$0xff]
      %v3480 = vld [vmem:[%s2676 + $0x112] sm:$0xff]
      %v3481 = vld [vmem:[%s2676 + $0x122] sm:$0xff]
      %v3482 = vld [vmem:[%s2676 + $0x12a] sm:$0xff]
      %v3483 = vld [vmem:[%s2676 + $0x13a] sm:$0xff]
      %v3484 = vld [vmem:[%s2676 + $0x142] sm:$0xff]
      %v3485 = vld [vmem:[%s2676 + $0x152] sm:$0xff]
      %v3486 = vld [vmem:[%s2676 + $0x15a] sm:$0xff]
      %v3487 = vld [vmem:[%s2676 + $0x16a] sm:$0xff]
      %v3488 = vld [vmem:[%s2676 + $0x172] sm:$0xff]
      %s3489 = scalar_lea.vmem %s1, 32
      %v3490 = vld [vmem:[%s3489] sm:$0xf]
      %v3492 = vsel %vm311, %v3457, 0
      %v3495 = vsel %vm311, %v3458, 0
      %v3498 = vsel %vm311, %v3459, 0
      %v3501 = vsel %vm311, %v3460, 0
      %v3504 = vsel %vm311, %v3461, 0
      %v3507 = vsel %vm311, %v3462, 0
      %v3510 = vsel %vm311, %v3463, 0
      %v3513 = vsel %vm311, %v3464, 0
      %v3516 = vsel %vm311, %v3465, 0
      %v3519 = vsel %vm311, %v3466, 0
      %v3522 = vsel %vm311, %v3467, 0
      %v3525 = vsel %vm311, %v3468, 0
      %v3528 = vsel %vm311, %v3469, 0
      %v3531 = vsel %vm311, %v3470, 0
      %v3534 = vsel %vm311, %v3471, 0
      %v3537 = vsel %vm311, %v3472, 0
      %v3540 = vsel %vm311, %v3473, 0
      %v3543 = vsel %vm311, %v3474, 0
      %v3546 = vsel %vm311, %v3475, 0
      %v3549 = vsel %vm311, %v3476, 0
      %v3552 = vsel %vm311, %v3477, 0
      %v3555 = vsel %vm311, %v3478, 0
      %v3558 = vsel %vm311, %v3479, 0
      %v3561 = vsel %vm311, %v3480, 0
      %v3564 = vsel %vm311, %v3481, 0
      %v3567 = vsel %vm311, %v3482, 0
      %v3570 = vsel %vm311, %v3483, 0
      %v3573 = vsel %vm311, %v3484, 0
      %v3576 = vsel %vm311, %v3485, 0
      %v3579 = vsel %vm311, %v3486, 0
      %v3582 = vsel %vm311, %v3487, 0
      %v3585 = vsel %vm311, %v3488, 0
      %v3588 = vsel %vm563, %v3490, 0
      %3590 = vmatprep.subr.mxu0 0.0
      %3591 = vmatpush1.msra.mxu0 %v3588
      %3592 = vmatprep.subr.mxu0 0.0
      %3593 = vmatpush1.msra.mxu0 0.0
      %3594 = vmatprep.subr.mxu0 0.0
      %3595 = vmatpush1.msra.mxu0 0.0
      %3596 = vmatprep.subr.mxu0 0.0
      %3597 = vmatpush1.msra.mxu0 0.0
      %3598 = vmatprep.subr.mxu0 0.0
      %3599 = vmatpush1.msra.mxu0 0.0
      %3600 = vmatprep.subr.mxu0 0.0
      %3601 = vmatpush1.msra.mxu0 0.0
      %3602 = vmatprep.subr.mxu0 0.0
      %3603 = vmatpush1.msra.mxu0 0.0
      %3604 = vmatprep.subr.mxu0 0.0
      %3605 = vmatpush1.msra.mxu0 0.0
      %3606 = vmatprep.subr.mxu0 0.0
      %3607 = vmatpush1.msra.mxu0 0.0
      %3608 = vmatprep.subr.mxu0 0.0
      %3609 = vmatpush1.msra.mxu0 0.0
      %3610 = vmatprep.subr.mxu0 0.0
      %3611 = vmatpush1.msra.mxu0 0.0
      %3612 = vmatprep.subr.mxu0 0.0
      %3613 = vmatpush1.msra.mxu0 0.0
      %3614 = vmatprep.subr.mxu0 0.0
      %3615 = vmatpush1.msra.mxu0 0.0
      %3616 = vmatprep.subr.mxu0 0.0
      %3617 = vmatpush1.msra.mxu0 0.0
      %3618 = vmatprep.subr.mxu0 0.0
      %3619 = vmatpush1.msra.mxu0 0.0
      %3620 = vmatprep.subr.mxu0 0.0
      %3621 = vmatpush1.msra.mxu0 0.0
      %3622 = vmatprep.subr.mxu0 0.0
      %3623 = vmatpush1.msra.mxu0 0.0
      %3624 = vmatprep.subr.mxu0 0.0
      %3625 = vmatpush1.msra.mxu0 0.0
      %3626 = vmatprep.subr.mxu0 0.0
      %3627 = vmatpush1.msra.mxu0 0.0
      %3628 = vmatprep.subr.mxu0 0.0
      %3629 = vmatpush1.msra.mxu0 0.0
      %3630 = vmatprep.subr.mxu0 0.0
      %3631 = vmatpush1.msra.mxu0 0.0
      %3632 = vmatprep.subr.mxu0 0.0
      %3633 = vmatpush1.msra.mxu0 0.0
      %3634 = vmatprep.subr.mxu0 0.0
      %3635 = vmatpush1.msra.mxu0 0.0
      %3636 = vmatprep.subr.mxu0 0.0
      %3637 = vmatpush1.msra.mxu0 0.0
      %3638 = vmatprep.subr.mxu0 0.0
      %3639 = vmatpush1.msra.mxu0 0.0
      %3640 = vmatprep.subr.mxu0 0.0
      %3641 = vmatpush1.msra.mxu0 0.0
      %3642 = vmatprep.subr.mxu0 0.0
      %3643 = vmatpush1.msra.mxu0 0.0
      %3644 = vmatprep.subr.mxu0 0.0
      %3645 = vmatpush1.msra.mxu0 0.0
      %3646 = vmatprep.subr.mxu0 0.0
      %3647 = vmatpush1.msra.mxu0 0.0
      %3648 = vmatprep.subr.mxu0 0.0
      %3649 = vmatpush1.msra.mxu0 0.0
      %3650 = vmatprep.subr.mxu0 0.0
      %3651 = vmatpush1.msra.mxu0 0.0
      %3652 = vmatprep.subr.mxu0 0.0
      %3653 = vmatpush1.msra.mxu0 0.0
      %3654 = vmatprep.mubr.f32.mxu0 0.0
      %3655 = vmatmul.mubr.f32.gmra.mrb[0].mxu0 %v3492
      %v3656 = vpop.f32.mrb[0].mxu0
      %v3657 = vadd.f32 0.0, %v3656
      %v3658 = vpop.f32.mrb[0].mxu0
      %3659 = vmatprep.mubr.f32.mxu0 0.0
      %3660 = vmatmul.mubr.f32.gmra.mrb[0].mxu0 %v3495
      %v3661 = vpop.f32.mrb[0].mxu0
      %v3662 = vadd.f32 0.0, %v3661
      %v3663 = vpop.f32.mrb[0].mxu0
      %3664 = vmatprep.mubr.f32.mxu0 0.0
      %3665 = vmatmul.mubr.f32.gmra.mrb[0].mxu0 %v3498
      %v3666 = vpop.f32.mrb[0].mxu0
      %v3667 = vadd.f32 0.0, %v3666
      %v3668 = vpop.f32.mrb[0].mxu0
      %3669 = vmatprep.mubr.f32.mxu0 0.0
      %3670 = vmatmul.mubr.f32.gmra.mrb[0].mxu0 %v3501
      %v3671 = vpop.f32.mrb[0].mxu0
      %v3672 = vadd.f32 0.0, %v3671
      %v3673 = vpop.f32.mrb[0].mxu0
      %3674 = vmatprep.mubr.f32.mxu0 0.0
      %3675 = vmatmul.mubr.f32.gmra.mrb[0].mxu0 %v3504
      %v3676 = vpop.f32.mrb[0].mxu0
      %v3677 = vadd.f32 0.0, %v3676
      %v3678 = vpop.f32.mrb[0].mxu0
      %3679 = vmatprep.mubr.f32.mxu0 0.0
      %3680 = vmatmul.mubr.f32.gmra.mrb[0].mxu0 %v3507
      %v3681 = vpop.f32.mrb[0].mxu0
      %v3682 = vadd.f32 0.0, %v3681
      %v3683 = vpop.f32.mrb[0].mxu0
      %3684 = vmatprep.mubr.f32.mxu0 0.0
      %3685 = vmatmul.mubr.f32.gmra.mrb[0].mxu0 %v3510
      %v3686 = vpop.f32.mrb[0].mxu0
      %v3687 = vadd.f32 0.0, %v3686
      %v3688 = vpop.f32.mrb[0].mxu0
      %3689 = vmatprep.mubr.f32.mxu0 0.0
      %3690 = vmatmul.mubr.f32.gmra.mrb[0].mxu0 %v3513
      %v3691 = vpop.f32.mrb[0].mxu0
      %v3692 = vadd.f32 0.0, %v3691
      %v3693 = vpop.f32.mrb[0].mxu0
      %3694 = vmatprep.mubr.f32.mxu0 0.0
      %3695 = vmatmul.mubr.f32.gmra.mrb[0].mxu0 %v3516
      %v3696 = vpop.f32.mrb[0].mxu0
      %v3697 = vadd.f32 0.0, %v3696
      %v3698 = vpop.f32.mrb[0].mxu0
      %3699 = vmatprep.mubr.f32.mxu0 0.0
      %3700 = vmatmul.mubr.f32.gmra.mrb[0].mxu0 %v3519
      %v3701 = vpop.f32.mrb[0].mxu0
      %v3702 = vadd.f32 0.0, %v3701
      %v3703 = vpop.f32.mrb[0].mxu0
      %3704 = vmatprep.mubr.f32.mxu0 0.0
      %3705 = vmatmul.mubr.f32.gmra.mrb[0].mxu0 %v3522
      %v3706 = vpop.f32.mrb[0].mxu0
      %v3707 = vadd.f32 0.0, %v3706
      %v3708 = vpop.f32.mrb[0].mxu0
      %3709 = vmatprep.mubr.f32.mxu0 0.0
      %3710 = vmatmul.mubr.f32.gmra.mrb[0].mxu0 %v3525
      %v3711 = vpop.f32.mrb[0].mxu0
      %v3712 = vadd.f32 0.0, %v3711
      %v3713 = vpop.f32.mrb[0].mxu0
      %3714 = vmatprep.mubr.f32.mxu0 0.0
      %3715 = vmatmul.mubr.f32.gmra.mrb[0].mxu0 %v3528
      %v3716 = vpop.f32.mrb[0].mxu0
      %v3717 = vadd.f32 0.0, %v3716
      %v3718 = vpop.f32.mrb[0].mxu0
      %3719 = vmatprep.mubr.f32.mxu0 0.0
      %3720 = vmatmul.mubr.f32.gmra.mrb[0].mxu0 %v3531
      %v3721 = vpop.f32.mrb[0].mxu0
      %v3722 = vadd.f32 0.0, %v3721
      %v3723 = vpop.f32.mrb[0].mxu0
      %3724 = vmatprep.mubr.f32.mxu0 0.0
      %3725 = vmatmul.mubr.f32.gmra.mrb[0].mxu0 %v3534
      %v3726 = vpop.f32.mrb[0].mxu0
      %v3727 = vadd.f32 0.0, %v3726
      %v3728 = vpop.f32.mrb[0].mxu0
      %3729 = vmatprep.mubr.f32.mxu0 0.0
      %3730 = vmatmul.mubr.f32.gmra.mrb[0].mxu0 %v3537
      %v3731 = vpop.f32.mrb[0].mxu0
      %v3732 = vadd.f32 0.0, %v3731
      %v3733 = vpop.f32.mrb[0].mxu0
      %3734 = vmatprep.mubr.f32.mxu0 0.0
      %3735 = vmatmul.mubr.f32.gmra.mrb[0].mxu0 %v3540
      %v3736 = vpop.f32.mrb[0].mxu0
      %v3737 = vadd.f32 0.0, %v3736
      %v3738 = vpop.f32.mrb[0].mxu0
      %3739 = vmatprep.mubr.f32.mxu0 0.0
      %3740 = vmatmul.mubr.f32.gmra.mrb[0].mxu0 %v3543
      %v3741 = vpop.f32.mrb[0].mxu0
      %v3742 = vadd.f32 0.0, %v3741
      %v3743 = vpop.f32.mrb[0].mxu0
      %3744 = vmatprep.mubr.f32.mxu0 0.0
      %3745 = vmatmul.mubr.f32.gmra.mrb[0].mxu0 %v3546
      %v3746 = vpop.f32.mrb[0].mxu0
      %v3747 = vadd.f32 0.0, %v3746
      %v3748 = vpop.f32.mrb[0].mxu0
      %3749 = vmatprep.mubr.f32.mxu0 0.0
      %3750 = vmatmul.mubr.f32.gmra.mrb[0].mxu0 %v3549
      %v3751 = vpop.f32.mrb[0].mxu0
      %v3752 = vadd.f32 0.0, %v3751
      %v3753 = vpop.f32.mrb[0].mxu0
      %3754 = vmatprep.mubr.f32.mxu0 0.0
      %3755 = vmatmul.mubr.f32.gmra.mrb[0].mxu0 %v3552
      %v3756 = vpop.f32.mrb[0].mxu0
      %v3757 = vadd.f32 0.0, %v3756
      %v3758 = vpop.f32.mrb[0].mxu0
      %3759 = vmatprep.mubr.f32.mxu0 0.0
      %3760 = vmatmul.mubr.f32.gmra.mrb[0].mxu0 %v3555
      %v3761 = vpop.f32.mrb[0].mxu0
      %v3762 = vadd.f32 0.0, %v3761
      %v3763 = vpop.f32.mrb[0].mxu0
      %3764 = vmatprep.mubr.f32.mxu0 0.0
      %3765 = vmatmul.mubr.f32.gmra.mrb[0].mxu0 %v3558
      %v3766 = vpop.f32.mrb[0].mxu0
      %v3767 = vadd.f32 0.0, %v3766
      %v3768 = vpop.f32.mrb[0].mxu0
      %3769 = vmatprep.mubr.f32.mxu0 0.0
      %3770 = vmatmul.mubr.f32.gmra.mrb[0].mxu0 %v3561
      %v3771 = vpop.f32.mrb[0].mxu0
      %v3772 = vadd.f32 0.0, %v3771
      %v3773 = vpop.f32.mrb[0].mxu0
      %3774 = vmatprep.mubr.f32.mxu0 0.0
      %3775 = vmatmul.mubr.f32.gmra.mrb[0].mxu0 %v3564
      %v3776 = vpop.f32.mrb[0].mxu0
      %v3777 = vadd.f32 0.0, %v3776
      %v3778 = vpop.f32.mrb[0].mxu0
      %3779 = vmatprep.mubr.f32.mxu0 0.0
      %3780 = vmatmul.mubr.f32.gmra.mrb[0].mxu0 %v3567
      %v3781 = vpop.f32.mrb[0].mxu0
      %v3782 = vadd.f32 0.0, %v3781
      %v3783 = vpop.f32.mrb[0].mxu0
      %3784 = vmatprep.mubr.f32.mxu0 0.0
      %3785 = vmatmul.mubr.f32.gmra.mrb[0].mxu0 %v3570
      %v3786 = vpop.f32.mrb[0].mxu0
      %v3787 = vadd.f32 0.0, %v3786
      %v3788 = vpop.f32.mrb[0].mxu0
      %3789 = vmatprep.mubr.f32.mxu0 0.0
      %3790 = vmatmul.mubr.f32.gmra.mrb[0].mxu0 %v3573
      %v3791 = vpop.f32.mrb[0].mxu0
      %v3792 = vadd.f32 0.0, %v3791
      %v3793 = vpop.f32.mrb[0].mxu0
      %3794 = vmatprep.mubr.f32.mxu0 0.0
      %3795 = vmatmul.mubr.f32.gmra.mrb[0].mxu0 %v3576
      %v3796 = vpop.f32.mrb[0].mxu0
      %v3797 = vadd.f32 0.0, %v3796
      %v3798 = vpop.f32.mrb[0].mxu0
      %3799 = vmatprep.mubr.f32.mxu0 0.0
      %3800 = vmatmul.mubr.f32.gmra.mrb[0].mxu0 %v3579
      %v3801 = vpop.f32.mrb[0].mxu0
      %v3802 = vadd.f32 0.0, %v3801
      %v3803 = vpop.f32.mrb[0].mxu0
      %3804 = vmatprep.mubr.f32.mxu0 0.0
      %3805 = vmatmul.mubr.f32.gmra.mrb[0].mxu0 %v3582
      %v3806 = vpop.f32.mrb[0].mxu0
      %v3807 = vadd.f32 0.0, %v3806
      %v3808 = vpop.f32.mrb[0].mxu0
      %3809 = vmatprep.mubr.f32.mxu0 0.0
      %3810 = vmatmul.mubr.f32.gmra.mrb[0].mxu0 %v3585
      %v3811 = vpop.f32.mrb[0].mxu0
      %v3812 = vadd.f32 0.0, %v3811
      %v3813 = vpop.f32.mrb[0].mxu0
      %3814 = vdwg.mxu0
      %v3815 = vadd.f32 %v3425, %v3657
      %v3816 = vadd.f32 %v3426, %v3662
      %v3817 = vadd.f32 %v3427, %v3667
      %v3818 = vadd.f32 %v3428, %v3672
      %v3819 = vadd.f32 %v3429, %v3677
      %v3820 = vadd.f32 %v3430, %v3682
      %v3821 = vadd.f32 %v3431, %v3687
      %v3822 = vadd.f32 %v3432, %v3692
      %v3823 = vadd.f32 %v3433, %v3697
      %v3824 = vadd.f32 %v3434, %v3702
      %v3825 = vadd.f32 %v3435, %v3707
      %v3826 = vadd.f32 %v3436, %v3712
      %v3827 = vadd.f32 %v3437, %v3717
      %v3828 = vadd.f32 %v3438, %v3722
      %v3829 = vadd.f32 %v3439, %v3727
      %v3830 = vadd.f32 %v3440, %v3732
      %v3831 = vadd.f32 %v3441, %v3737
      %v3832 = vadd.f32 %v3442, %v3742
      %v3833 = vadd.f32 %v3443, %v3747
      %v3834 = vadd.f32 %v3444, %v3752
      %v3835 = vadd.f32 %v3445, %v3757
      %v3836 = vadd.f32 %v3446, %v3762
      %v3837 = vadd.f32 %v3447, %v3767
      %v3838 = vadd.f32 %v3448, %v3772
      %v3839 = vadd.f32 %v3449, %v3777
      %v3840 = vadd.f32 %v3450, %v3782
      %v3841 = vadd.f32 %v3451, %v3787
      %v3842 = vadd.f32 %v3452, %v3792
      %v3843 = vadd.f32 %v3453, %v3797
      %v3844 = vadd.f32 %v3454, %v3802
      %v3845 = vadd.f32 %v3455, %v3807
      %v3846 = vadd.f32 %v3456, %v3812
      %v3847 = vld [vmem:[%s3] sm:$0x1]
      %v3849 = vlaneseq
      %v3850 = vshrl.u32 %v3849, 7
      %v3851 = vsub.s32 0, %v3850
      %v3852 = vrot.slane %v3847, %v3851
      %v3854 = vmul.f32 %v3815, %v3852
      %v3855 = vmul.f32 %v3816, %v3852
      %v3856 = vmul.f32 %v3817, %v3852
      %v3857 = vmul.f32 %v3818, %v3852
      %v3858 = vmul.f32 %v3819, %v3852
      %v3859 = vmul.f32 %v3820, %v3852
      %v3860 = vmul.f32 %v3821, %v3852
      %v3861 = vmul.f32 %v3822, %v3852
      %v3862 = vmul.f32 %v3823, %v3852
      %v3863 = vmul.f32 %v3824, %v3852
      %v3864 = vmul.f32 %v3825, %v3852
      %v3865 = vmul.f32 %v3826, %v3852
      %v3866 = vmul.f32 %v3827, %v3852
      %v3867 = vmul.f32 %v3828, %v3852
      %v3868 = vmul.f32 %v3829, %v3852
      %v3869 = vmul.f32 %v3830, %v3852
      %v3870 = vmul.f32 %v3831, %v3852
      %v3871 = vmul.f32 %v3832, %v3852
      %v3872 = vmul.f32 %v3833, %v3852
      %v3873 = vmul.f32 %v3834, %v3852
      %v3874 = vmul.f32 %v3835, %v3852
      %v3875 = vmul.f32 %v3836, %v3852
      %v3876 = vmul.f32 %v3837, %v3852
      %v3877 = vmul.f32 %v3838, %v3852
      %v3878 = vmul.f32 %v3839, %v3852
      %v3879 = vmul.f32 %v3840, %v3852
      %v3880 = vmul.f32 %v3841, %v3852
      %v3881 = vmul.f32 %v3842, %v3852
      %v3882 = vmul.f32 %v3843, %v3852
      %v3883 = vmul.f32 %v3844, %v3852
      %v3884 = vmul.f32 %v3845, %v3852
      %v3885 = vmul.f32 %v3846, %v3852
      %v3886 = vld [vmem:[%s4] sm:$0x1]
      %v3888 = vlaneseq
      %v3889 = vshrl.u32 %v3888, 7
      %v3890 = vsub.s32 0, %v3889
      %v3891 = vrot.slane %v3886, %v3890
      %v3893 = vadd.f32 %v3854, %v3891
      %v3894 = vadd.f32 %v3855, %v3891
      %v3895 = vadd.f32 %v3856, %v3891
      %v3896 = vadd.f32 %v3857, %v3891
      %v3897 = vadd.f32 %v3858, %v3891
      %v3898 = vadd.f32 %v3859, %v3891
      %v3899 = vadd.f32 %v3860, %v3891
      %v3900 = vadd.f32 %v3861, %v3891
      %v3901 = vadd.f32 %v3862, %v3891
      %v3902 = vadd.f32 %v3863, %v3891
      %v3903 = vadd.f32 %v3864, %v3891
      %v3904 = vadd.f32 %v3865, %v3891
      %v3905 = vadd.f32 %v3866, %v3891
      %v3906 = vadd.f32 %v3867, %v3891
      %v3907 = vadd.f32 %v3868, %v3891
      %v3908 = vadd.f32 %v3869, %v3891
      %v3909 = vadd.f32 %v3870, %v3891
      %v3910 = vadd.f32 %v3871, %v3891
      %v3911 = vadd.f32 %v3872, %v3891
      %v3912 = vadd.f32 %v3873, %v3891
      %v3913 = vadd.f32 %v3874, %v3891
      %v3914 = vadd.f32 %v3875, %v3891
      %v3915 = vadd.f32 %v3876, %v3891
      %v3916 = vadd.f32 %v3877, %v3891
      %v3917 = vadd.f32 %v3878, %v3891
      %v3918 = vadd.f32 %v3879, %v3891
      %v3919 = vadd.f32 %v3880, %v3891
      %v3920 = vadd.f32 %v3881, %v3891
      %v3921 = vadd.f32 %v3882, %v3891
      %v3922 = vadd.f32 %v3883, %v3891
      %v3923 = vadd.f32 %v3884, %v3891
      %v3924 = vadd.f32 %v3885, %v3891
      %v3925 = vmax.f32 %v3893, 0.0
      %v3926 = vmax.f32 %v3894, 0.0
      %v3927 = vmax.f32 %v3895, 0.0
      %v3928 = vmax.f32 %v3896, 0.0
      %v3929 = vmax.f32 %v3897, 0.0
      %v3930 = vmax.f32 %v3898, 0.0
      %v3931 = vmax.f32 %v3899, 0.0
      %v3932 = vmax.f32 %v3900, 0.0
      %v3933 = vmax.f32 %v3901, 0.0
      %v3934 = vmax.f32 %v3902, 0.0
      %v3935 = vmax.f32 %v3903, 0.0
      %v3936 = vmax.f32 %v3904, 0.0
      %v3937 = vmax.f32 %v3905, 0.0
      %v3938 = vmax.f32 %v3906, 0.0
      %v3939 = vmax.f32 %v3907, 0.0
      %v3940 = vmax.f32 %v3908, 0.0
      %v3941 = vmax.f32 %v3909, 0.0
      %v3942 = vmax.f32 %v3910, 0.0
      %v3943 = vmax.f32 %v3911, 0.0
      %v3944 = vmax.f32 %v3912, 0.0
      %v3945 = vmax.f32 %v3913, 0.0
      %v3946 = vmax.f32 %v3914, 0.0
      %v3947 = vmax.f32 %v3915, 0.0
      %v3948 = vmax.f32 %v3916, 0.0
      %v3949 = vmax.f32 %v3917, 0.0
      %v3950 = vmax.f32 %v3918, 0.0
      %v3951 = vmax.f32 %v3919, 0.0
      %v3952 = vmax.f32 %v3920, 0.0
      %v3953 = vmax.f32 %v3921, 0.0
      %v3954 = vmax.f32 %v3922, 0.0
      %v3955 = vmax.f32 %v3923, 0.0
      %v3956 = vmax.f32 %v3924, 0.0
      %3957 = vst.msk [vmem:[%s367 + $0x1] sm:$0xff] %vm311, %v3925
      %3958 = vst.msk [vmem:[%s367 + $0x9] sm:$0xff] %vm311, %v3926
      %3959 = vst.msk [vmem:[%s367 + $0x19] sm:$0xff] %vm311, %v3927
      %3960 = vst.msk [vmem:[%s367 + $0x21] sm:$0xff] %vm311, %v3928
      %3961 = vst.msk [vmem:[%s367 + $0x31] sm:$0xff] %vm311, %v3929
      %3962 = vst.msk [vmem:[%s367 + $0x39] sm:$0xff] %vm311, %v3930
      %3963 = vst.msk [vmem:[%s367 + $0x49] sm:$0xff] %vm311, %v3931
      %3964 = vst.msk [vmem:[%s367 + $0x51] sm:$0xff] %vm311, %v3932
      %3965 = vst.msk [vmem:[%s367 + $0x61] sm:$0xff] %vm311, %v3933
      %3966 = vst.msk [vmem:[%s367 + $0x69] sm:$0xff] %vm311, %v3934
      %3967 = vst.msk [vmem:[%s367 + $0x79] sm:$0xff] %vm311, %v3935
      %3968 = vst.msk [vmem:[%s367 + $0x81] sm:$0xff] %vm311, %v3936
      %3969 = vst.msk [vmem:[%s367 + $0x91] sm:$0xff] %vm311, %v3937
      %3970 = vst.msk [vmem:[%s367 + $0x99] sm:$0xff] %vm311, %v3938
      %3971 = vst.msk [vmem:[%s367 + $0xa9] sm:$0xff] %vm311, %v3939
      %3972 = vst.msk [vmem:[%s367 + $0xb1] sm:$0xff] %vm311, %v3940
      %3973 = vst.msk [vmem:[%s367 + $0xc1] sm:$0xff] %vm311, %v3941
      %3974 = vst.msk [vmem:[%s367 + $0xc9] sm:$0xff] %vm311, %v3942
      %3975 = vst.msk [vmem:[%s367 + $0xd9] sm:$0xff] %vm311, %v3943
      %3976 = vst.msk [vmem:[%s367 + $0xe1] sm:$0xff] %vm311, %v3944
      %3977 = vst.msk [vmem:[%s367 + $0xf1] sm:$0xff] %vm311, %v3945
      %3978 = vst.msk [vmem:[%s367 + $0xf9] sm:$0xff] %vm311, %v3946
      %3979 = vst.msk [vmem:[%s367 + $0x109] sm:$0xff] %vm311, %v3947
      %3980 = vst.msk [vmem:[%s367 + $0x111] sm:$0xff] %vm311, %v3948
      %3981 = vst.msk [vmem:[%s367 + $0x121] sm:$0xff] %vm311, %v3949
      %3982 = vst.msk [vmem:[%s367 + $0x129] sm:$0xff] %vm311, %v3950
      %3983 = vst.msk [vmem:[%s367 + $0x139] sm:$0xff] %vm311, %v3951
      %3984 = vst.msk [vmem:[%s367 + $0x141] sm:$0xff] %vm311, %v3952
      %3985 = vst.msk [vmem:[%s367 + $0x151] sm:$0xff] %vm311, %v3953
      %3986 = vst.msk [vmem:[%s367 + $0x159] sm:$0xff] %vm311, %v3954
      %3987 = vst.msk [vmem:[%s367 + $0x169] sm:$0xff] %vm311, %v3955
      %3988 = vst.msk [vmem:[%s367 + $0x171] sm:$0xff] %vm311, %v3956
      %v3989 = vld [vmem:[#allocation2] sm:$0xff]
      %v3990 = vld [vmem:[#allocation2 + $0x8] sm:$0xff]
      %v3991 = vld [vmem:[#allocation2 + $0x18] sm:$0xff]
      %v3992 = vld [vmem:[#allocation2 + $0x20] sm:$0xff]
      %v3993 = vld [vmem:[#allocation2 + $0x30] sm:$0xff]
      %v3994 = vld [vmem:[#allocation2 + $0x38] sm:$0xff]
      %v3995 = vld [vmem:[#allocation2 + $0x48] sm:$0xff]
      %v3996 = vld [vmem:[#allocation2 + $0x50] sm:$0xff]
      %v3997 = vld [vmem:[#allocation2 + $0x60] sm:$0xff]
      %v3998 = vld [vmem:[#allocation2 + $0x68] sm:$0xff]
      %v3999 = vld [vmem:[#allocation2 + $0x78] sm:$0xff]
      %v4000 = vld [vmem:[#allocation2 + $0x80] sm:$0xff]
      %v4001 = vld [vmem:[#allocation2 + $0x90] sm:$0xff]
      %v4002 = vld [vmem:[#allocation2 + $0x98] sm:$0xff]
      %v4003 = vld [vmem:[#allocation2 + $0xa8] sm:$0xff]
      %v4004 = vld [vmem:[#allocation2 + $0xb0] sm:$0xff]
      %v4005 = vld [vmem:[#allocation2 + $0xc0] sm:$0xff]
      %v4006 = vld [vmem:[#allocation2 + $0xc8] sm:$0xff]
      %v4007 = vld [vmem:[#allocation2 + $0xd8] sm:$0xff]
      %v4008 = vld [vmem:[#allocation2 + $0xe0] sm:$0xff]
      %v4009 = vld [vmem:[#allocation2 + $0xf0] sm:$0xff]
      %v4010 = vld [vmem:[#allocation2 + $0xf8] sm:$0xff]
      %v4011 = vld [vmem:[#allocation2 + $0x108] sm:$0xff]
      %v4012 = vld [vmem:[#allocation2 + $0x110] sm:$0xff]
      %v4013 = vld [vmem:[#allocation2 + $0x120] sm:$0xff]
      %v4014 = vld [vmem:[#allocation2 + $0x128] sm:$0xff]
      %v4015 = vld [vmem:[#allocation2 + $0x138] sm:$0xff]
      %v4016 = vld [vmem:[#allocation2 + $0x140] sm:$0xff]
      %v4017 = vld [vmem:[#allocation2 + $0x150] sm:$0xff]
      %v4018 = vld [vmem:[#allocation2 + $0x158] sm:$0xff]
      %v4019 = vld [vmem:[#allocation2 + $0x168] sm:$0xff]
      %v4020 = vld [vmem:[#allocation2 + $0x170] sm:$0xff]
      %v4021 = vld [vmem:[%s2] sm:$0xf]
      %v4022 = vld [vmem:[#allocation2 + $0x1] sm:$0xff]
      %v4023 = vld [vmem:[#allocation2 + $0x9] sm:$0xff]
      %v4024 = vld [vmem:[#allocation2 + $0x19] sm:$0xff]
      %v4025 = vld [vmem:[#allocation2 + $0x21] sm:$0xff]
      %v4026 = vld [vmem:[#allocation2 + $0x31] sm:$0xff]
      %v4027 = vld [vmem:[#allocation2 + $0x39] sm:$0xff]
      %v4028 = vld [vmem:[#allocation2 + $0x49] sm:$0xff]
      %v4029 = vld [vmem:[#allocation2 + $0x51] sm:$0xff]
      %v4030 = vld [vmem:[#allocation2 + $0x61] sm:$0xff]
      %v4031 = vld [vmem:[#allocation2 + $0x69] sm:$0xff]
      %v4032 = vld [vmem:[#allocation2 + $0x79] sm:$0xff]
      %v4033 = vld [vmem:[#allocation2 + $0x81] sm:$0xff]
      %v4034 = vld [vmem:[#allocation2 + $0x91] sm:$0xff]
      %v4035 = vld [vmem:[#allocation2 + $0x99] sm:$0xff]
      %v4036 = vld [vmem:[#allocation2 + $0xa9] sm:$0xff]
      %v4037 = vld [vmem:[#allocation2 + $0xb1] sm:$0xff]
      %v4038 = vld [vmem:[#allocation2 + $0xc1] sm:$0xff]
      %v4039 = vld [vmem:[#allocation2 + $0xc9] sm:$0xff]
      %v4040 = vld [vmem:[#allocation2 + $0xd9] sm:$0xff]
      %v4041 = vld [vmem:[#allocation2 + $0xe1] sm:$0xff]
      %v4042 = vld [vmem:[#allocation2 + $0xf1] sm:$0xff]
      %v4043 = vld [vmem:[#allocation2 + $0xf9] sm:$0xff]
      %v4044 = vld [vmem:[#allocation2 + $0x109] sm:$0xff]
      %v4045 = vld [vmem:[#allocation2 + $0x111] sm:$0xff]
      %v4046 = vld [vmem:[#allocation2 + $0x121] sm:$0xff]
      %v4047 = vld [vmem:[#allocation2 + $0x129] sm:$0xff]
      %v4048 = vld [vmem:[#allocation2 + $0x139] sm:$0xff]
      %v4049 = vld [vmem:[#allocation2 + $0x141] sm:$0xff]
      %v4050 = vld [vmem:[#allocation2 + $0x151] sm:$0xff]
      %v4051 = vld [vmem:[#allocation2 + $0x159] sm:$0xff]
      %v4052 = vld [vmem:[#allocation2 + $0x169] sm:$0xff]
      %v4053 = vld [vmem:[#allocation2 + $0x171] sm:$0xff]
      %s4054 = scalar_lea.vmem %s2, 4
      %v4055 = vld [vmem:[%s4054] sm:$0xf]
      %v4057 = vsel %vm311, %v4022, 0
      %v4060 = vsel %vm311, %v4023, 0
      %v4063 = vsel %vm311, %v4024, 0
      %v4066 = vsel %vm311, %v4025, 0
      %v4069 = vsel %vm311, %v4026, 0
      %v4072 = vsel %vm311, %v4027, 0
      %v4075 = vsel %vm311, %v4028, 0
      %v4078 = vsel %vm311, %v4029, 0
      %v4081 = vsel %vm311, %v4030, 0
      %v4084 = vsel %vm311, %v4031, 0
      %v4087 = vsel %vm311, %v4032, 0
      %v4090 = vsel %vm311, %v4033, 0
      %v4093 = vsel %vm311, %v4034, 0
      %v4096 = vsel %vm311, %v4035, 0
      %v4099 = vsel %vm311, %v4036, 0
      %v4102 = vsel %vm311, %v4037, 0
      %v4105 = vsel %vm311, %v4038, 0
      %v4108 = vsel %vm311, %v4039, 0
      %v4111 = vsel %vm311, %v4040, 0
      %v4114 = vsel %vm311, %v4041, 0
      %v4117 = vsel %vm311, %v4042, 0
      %v4120 = vsel %vm311, %v4043, 0
      %v4123 = vsel %vm311, %v4044, 0
      %v4126 = vsel %vm311, %v4045, 0
      %v4129 = vsel %vm311, %v4046, 0
      %v4132 = vsel %vm311, %v4047, 0
      %v4135 = vsel %vm311, %v4048, 0
      %v4138 = vsel %vm311, %v4049, 0
      %v4141 = vsel %vm311, %v4050, 0
      %v4144 = vsel %vm311, %v4051, 0
      %v4147 = vsel %vm311, %v4052, 0
      %v4150 = vsel %vm311, %v4053, 0
      %v4153 = vsel %vm563, %v4055, 0
      %4155 = vmatprep.subr.mxu0 0.0
      %4156 = vmatpush1.msra.mxu0 %v4153
      %4157 = vmatprep.subr.mxu0 0.0
      %4158 = vmatpush1.msra.mxu0 0.0
      %4159 = vmatprep.subr.mxu0 0.0
      %4160 = vmatpush1.msra.mxu0 0.0
      %4161 = vmatprep.subr.mxu0 0.0
      %4162 = vmatpush1.msra.mxu0 0.0
      %4163 = vmatprep.subr.mxu0 0.0
      %4164 = vmatpush1.msra.mxu0 0.0
      %4165 = vmatprep.subr.mxu0 0.0
      %4166 = vmatpush1.msra.mxu0 0.0
      %4167 = vmatprep.subr.mxu0 0.0
      %4168 = vmatpush1.msra.mxu0 0.0
      %4169 = vmatprep.subr.mxu0 0.0
      %4170 = vmatpush1.msra.mxu0 0.0
      %4171 = vmatprep.subr.mxu0 0.0
      %4172 = vmatpush1.msra.mxu0 0.0
      %4173 = vmatprep.subr.mxu0 0.0
      %4174 = vmatpush1.msra.mxu0 0.0
      %4175 = vmatprep.subr.mxu0 0.0
      %4176 = vmatpush1.msra.mxu0 0.0
      %4177 = vmatprep.subr.mxu0 0.0
      %4178 = vmatpush1.msra.mxu0 0.0
      %4179 = vmatprep.subr.mxu0 0.0
      %4180 = vmatpush1.msra.mxu0 0.0
      %4181 = vmatprep.subr.mxu0 0.0
      %4182 = vmatpush1.msra.mxu0 0.0
      %4183 = vmatprep.subr.mxu0 0.0
      %4184 = vmatpush1.msra.mxu0 0.0
      %4185 = vmatprep.subr.mxu0 0.0
      %4186 = vmatpush1.msra.mxu0 0.0
      %4187 = vmatprep.subr.mxu0 0.0
      %4188 = vmatpush1.msra.mxu0 0.0
      %4189 = vmatprep.subr.mxu0 0.0
      %4190 = vmatpush1.msra.mxu0 0.0
      %4191 = vmatprep.subr.mxu0 0.0
      %4192 = vmatpush1.msra.mxu0 0.0
      %4193 = vmatprep.subr.mxu0 0.0
      %4194 = vmatpush1.msra.mxu0 0.0
      %4195 = vmatprep.subr.mxu0 0.0
      %4196 = vmatpush1.msra.mxu0 0.0
      %4197 = vmatprep.subr.mxu0 0.0
      %4198 = vmatpush1.msra.mxu0 0.0
      %4199 = vmatprep.subr.mxu0 0.0
      %4200 = vmatpush1.msra.mxu0 0.0
      %4201 = vmatprep.subr.mxu0 0.0
      %4202 = vmatpush1.msra.mxu0 0.0
      %4203 = vmatprep.subr.mxu0 0.0
      %4204 = vmatpush1.msra.mxu0 0.0
      %4205 = vmatprep.subr.mxu0 0.0
      %4206 = vmatpush1.msra.mxu0 0.0
      %4207 = vmatprep.subr.mxu0 0.0
      %4208 = vmatpush1.msra.mxu0 0.0
      %4209 = vmatprep.subr.mxu0 0.0
      %4210 = vmatpush1.msra.mxu0 0.0
      %4211 = vmatprep.subr.mxu0 0.0
      %4212 = vmatpush1.msra.mxu0 0.0
      %4213 = vmatprep.subr.mxu0 0.0
      %4214 = vmatpush1.msra.mxu0 0.0
      %4215 = vmatprep.subr.mxu0 0.0
      %4216 = vmatpush1.msra.mxu0 0.0
      %4217 = vmatprep.subr.mxu0 0.0
      %4218 = vmatpush1.msra.mxu0 0.0
      %4219 = vmatprep.mubr.f32.mxu0 0.0
      %4220 = vmatmul.mubr.f32.gmra.mrb[0].mxu0 %v4057
      %v4221 = vpop.f32.mrb[0].mxu0
      %v4222 = vadd.f32 0.0, %v4221
      %v4223 = vpop.f32.mrb[0].mxu0
      %4224 = vmatprep.mubr.f32.mxu0 0.0
      %4225 = vmatmul.mubr.f32.gmra.mrb[0].mxu0 %v4060
      %v4226 = vpop.f32.mrb[0].mxu0
      %v4227 = vadd.f32 0.0, %v4226
      %v4228 = vpop.f32.mrb[0].mxu0
      %4229 = vmatprep.mubr.f32.mxu0 0.0
      %4230 = vmatmul.mubr.f32.gmra.mrb[0].mxu0 %v4063
      %v4231 = vpop.f32.mrb[0].mxu0
      %v4232 = vadd.f32 0.0, %v4231
      %v4233 = vpop.f32.mrb[0].mxu0
      %4234 = vmatprep.mubr.f32.mxu0 0.0
      %4235 = vmatmul.mubr.f32.gmra.mrb[0].mxu0 %v4066
      %v4236 = vpop.f32.mrb[0].mxu0
      %v4237 = vadd.f32 0.0, %v4236
      %v4238 = vpop.f32.mrb[0].mxu0
      %4239 = vmatprep.mubr.f32.mxu0 0.0
      %4240 = vmatmul.mubr.f32.gmra.mrb[0].mxu0 %v4069
      %v4241 = vpop.f32.mrb[0].mxu0
      %v4242 = vadd.f32 0.0, %v4241
      %v4243 = vpop.f32.mrb[0].mxu0
      %4244 = vmatprep.mubr.f32.mxu0 0.0
      %4245 = vmatmul.mubr.f32.gmra.mrb[0].mxu0 %v4072
      %v4246 = vpop.f32.mrb[0].mxu0
      %v4247 = vadd.f32 0.0, %v4246
      %v4248 = vpop.f32.mrb[0].mxu0
      %4249 = vmatprep.mubr.f32.mxu0 0.0
      %4250 = vmatmul.mubr.f32.gmra.mrb[0].mxu0 %v4075
      %v4251 = vpop.f32.mrb[0].mxu0
      %v4252 = vadd.f32 0.0, %v4251
      %v4253 = vpop.f32.mrb[0].mxu0
      %4254 = vmatprep.mubr.f32.mxu0 0.0
      %4255 = vmatmul.mubr.f32.gmra.mrb[0].mxu0 %v4078
      %v4256 = vpop.f32.mrb[0].mxu0
      %v4257 = vadd.f32 0.0, %v4256
      %v4258 = vpop.f32.mrb[0].mxu0
      %4259 = vmatprep.mubr.f32.mxu0 0.0
      %4260 = vmatmul.mubr.f32.gmra.mrb[0].mxu0 %v4081
      %v4261 = vpop.f32.mrb[0].mxu0
      %v4262 = vadd.f32 0.0, %v4261
      %v4263 = vpop.f32.mrb[0].mxu0
      %4264 = vmatprep.mubr.f32.mxu0 0.0
      %4265 = vmatmul.mubr.f32.gmra.mrb[0].mxu0 %v4084
      %v4266 = vpop.f32.mrb[0].mxu0
      %v4267 = vadd.f32 0.0, %v4266
      %v4268 = vpop.f32.mrb[0].mxu0
      %4269 = vmatprep.mubr.f32.mxu0 0.0
      %4270 = vmatmul.mubr.f32.gmra.mrb[0].mxu0 %v4087
      %v4271 = vpop.f32.mrb[0].mxu0
      %v4272 = vadd.f32 0.0, %v4271
      %v4273 = vpop.f32.mrb[0].mxu0
      %4274 = vmatprep.mubr.f32.mxu0 0.0
      %4275 = vmatmul.mubr.f32.gmra.mrb[0].mxu0 %v4090
      %v4276 = vpop.f32.mrb[0].mxu0
      %v4277 = vadd.f32 0.0, %v4276
      %v4278 = vpop.f32.mrb[0].mxu0
      %4279 = vmatprep.mubr.f32.mxu0 0.0
      %4280 = vmatmul.mubr.f32.gmra.mrb[0].mxu0 %v4093
      %v4281 = vpop.f32.mrb[0].mxu0
      %v4282 = vadd.f32 0.0, %v4281
      %v4283 = vpop.f32.mrb[0].mxu0
      %4284 = vmatprep.mubr.f32.mxu0 0.0
      %4285 = vmatmul.mubr.f32.gmra.mrb[0].mxu0 %v4096
      %v4286 = vpop.f32.mrb[0].mxu0
      %v4287 = vadd.f32 0.0, %v4286
      %v4288 = vpop.f32.mrb[0].mxu0
      %4289 = vmatprep.mubr.f32.mxu0 0.0
      %4290 = vmatmul.mubr.f32.gmra.mrb[0].mxu0 %v4099
      %v4291 = vpop.f32.mrb[0].mxu0
      %v4292 = vadd.f32 0.0, %v4291
      %v4293 = vpop.f32.mrb[0].mxu0
      %4294 = vmatprep.mubr.f32.mxu0 0.0
      %4295 = vmatmul.mubr.f32.gmra.mrb[0].mxu0 %v4102
      %v4296 = vpop.f32.mrb[0].mxu0
      %v4297 = vadd.f32 0.0, %v4296
      %v4298 = vpop.f32.mrb[0].mxu0
      %4299 = vmatprep.mubr.f32.mxu0 0.0
      %4300 = vmatmul.mubr.f32.gmra.mrb[0].mxu0 %v4105
      %v4301 = vpop.f32.mrb[0].mxu0
      %v4302 = vadd.f32 0.0, %v4301
      %v4303 = vpop.f32.mrb[0].mxu0
      %4304 = vmatprep.mubr.f32.mxu0 0.0
      %4305 = vmatmul.mubr.f32.gmra.mrb[0].mxu0 %v4108
      %v4306 = vpop.f32.mrb[0].mxu0
      %v4307 = vadd.f32 0.0, %v4306
      %v4308 = vpop.f32.mrb[0].mxu0
      %4309 = vmatprep.mubr.f32.mxu0 0.0
      %4310 = vmatmul.mubr.f32.gmra.mrb[0].mxu0 %v4111
      %v4311 = vpop.f32.mrb[0].mxu0
      %v4312 = vadd.f32 0.0, %v4311
      %v4313 = vpop.f32.mrb[0].mxu0
      %4314 = vmatprep.mubr.f32.mxu0 0.0
      %4315 = vmatmul.mubr.f32.gmra.mrb[0].mxu0 %v4114
      %v4316 = vpop.f32.mrb[0].mxu0
      %v4317 = vadd.f32 0.0, %v4316
      %v4318 = vpop.f32.mrb[0].mxu0
      %4319 = vmatprep.mubr.f32.mxu0 0.0
      %4320 = vmatmul.mubr.f32.gmra.mrb[0].mxu0 %v4117
      %v4321 = vpop.f32.mrb[0].mxu0
      %v4322 = vadd.f32 0.0, %v4321
      %v4323 = vpop.f32.mrb[0].mxu0
      %4324 = vmatprep.mubr.f32.mxu0 0.0
      %4325 = vmatmul.mubr.f32.gmra.mrb[0].mxu0 %v4120
      %v4326 = vpop.f32.mrb[0].mxu0
      %v4327 = vadd.f32 0.0, %v4326
      %v4328 = vpop.f32.mrb[0].mxu0
      %4329 = vmatprep.mubr.f32.mxu0 0.0
      %4330 = vmatmul.mubr.f32.gmra.mrb[0].mxu0 %v4123
      %v4331 = vpop.f32.mrb[0].mxu0
      %v4332 = vadd.f32 0.0, %v4331
      %v4333 = vpop.f32.mrb[0].mxu0
      %4334 = vmatprep.mubr.f32.mxu0 0.0
      %4335 = vmatmul.mubr.f32.gmra.mrb[0].mxu0 %v4126
      %v4336 = vpop.f32.mrb[0].mxu0
      %v4337 = vadd.f32 0.0, %v4336
      %v4338 = vpop.f32.mrb[0].mxu0
      %4339 = vmatprep.mubr.f32.mxu0 0.0
      %4340 = vmatmul.mubr.f32.gmra.mrb[0].mxu0 %v4129
      %v4341 = vpop.f32.mrb[0].mxu0
      %v4342 = vadd.f32 0.0, %v4341
      %v4343 = vpop.f32.mrb[0].mxu0
      %4344 = vmatprep.mubr.f32.mxu0 0.0
      %4345 = vmatmul.mubr.f32.gmra.mrb[0].mxu0 %v4132
      %v4346 = vpop.f32.mrb[0].mxu0
      %v4347 = vadd.f32 0.0, %v4346
      %v4348 = vpop.f32.mrb[0].mxu0
      %4349 = vmatprep.mubr.f32.mxu0 0.0
      %4350 = vmatmul.mubr.f32.gmra.mrb[0].mxu0 %v4135
      %v4351 = vpop.f32.mrb[0].mxu0
      %v4352 = vadd.f32 0.0, %v4351
      %v4353 = vpop.f32.mrb[0].mxu0
      %4354 = vmatprep.mubr.f32.mxu0 0.0
      %4355 = vmatmul.mubr.f32.gmra.mrb[0].mxu0 %v4138
      %v4356 = vpop.f32.mrb[0].mxu0
      %v4357 = vadd.f32 0.0, %v4356
      %v4358 = vpop.f32.mrb[0].mxu0
      %4359 = vmatprep.mubr.f32.mxu0 0.0
      %4360 = vmatmul.mubr.f32.gmra.mrb[0].mxu0 %v4141
      %v4361 = vpop.f32.mrb[0].mxu0
      %v4362 = vadd.f32 0.0, %v4361
      %v4363 = vpop.f32.mrb[0].mxu0
      %4364 = vmatprep.mubr.f32.mxu0 0.0
      %4365 = vmatmul.mubr.f32.gmra.mrb[0].mxu0 %v4144
      %v4366 = vpop.f32.mrb[0].mxu0
      %v4367 = vadd.f32 0.0, %v4366
      %v4368 = vpop.f32.mrb[0].mxu0
      %4369 = vmatprep.mubr.f32.mxu0 0.0
      %4370 = vmatmul.mubr.f32.gmra.mrb[0].mxu0 %v4147
      %v4371 = vpop.f32.mrb[0].mxu0
      %v4372 = vadd.f32 0.0, %v4371
      %v4373 = vpop.f32.mrb[0].mxu0
      %4374 = vmatprep.mubr.f32.mxu0 0.0
      %4375 = vmatmul.mubr.f32.gmra.mrb[0].mxu0 %v4150
      %v4376 = vpop.f32.mrb[0].mxu0
      %v4377 = vadd.f32 0.0, %v4376
      %v4378 = vpop.f32.mrb[0].mxu0
      %4379 = vdwg.mxu0
      %v4381 = vsel %vm311, %v3989, 0
      %v4384 = vsel %vm311, %v3990, 0
      %v4387 = vsel %vm311, %v3991, 0
      %v4390 = vsel %vm311, %v3992, 0
      %v4393 = vsel %vm311, %v3993, 0
      %v4396 = vsel %vm311, %v3994, 0
      %v4399 = vsel %vm311, %v3995, 0
      %v4402 = vsel %vm311, %v3996, 0
      %v4405 = vsel %vm311, %v3997, 0
      %v4408 = vsel %vm311, %v3998, 0
      %v4411 = vsel %vm311, %v3999, 0
      %v4414 = vsel %vm311, %v4000, 0
      %v4417 = vsel %vm311, %v4001, 0
      %v4420 = vsel %vm311, %v4002, 0
      %v4423 = vsel %vm311, %v4003, 0
      %v4426 = vsel %vm311, %v4004, 0
      %v4429 = vsel %vm311, %v4005, 0
      %v4432 = vsel %vm311, %v4006, 0
      %v4435 = vsel %vm311, %v4007, 0
      %v4438 = vsel %vm311, %v4008, 0
      %v4441 = vsel %vm311, %v4009, 0
      %v4444 = vsel %vm311, %v4010, 0
      %v4447 = vsel %vm311, %v4011, 0
      %v4450 = vsel %vm311, %v4012, 0
      %v4453 = vsel %vm311, %v4013, 0
      %v4456 = vsel %vm311, %v4014, 0
      %v4459 = vsel %vm311, %v4015, 0
      %v4462 = vsel %vm311, %v4016, 0
      %v4465 = vsel %vm311, %v4017, 0
      %v4468 = vsel %vm311, %v4018, 0
      %v4471 = vsel %vm311, %v4019, 0
      %v4474 = vsel %vm311, %v4020, 0
      %v4477 = vsel %vm563, %v4021, 0
      %4479 = vmatprep.subr.mxu0 0.0
      %4480 = vmatpush1.msra.mxu0 %v4477
      %4481 = vmatprep.subr.mxu0 0.0
      %4482 = vmatpush1.msra.mxu0 0.0
      %4483 = vmatprep.subr.mxu0 0.0
      %4484 = vmatpush1.msra.mxu0 0.0
      %4485 = vmatprep.subr.mxu0 0.0
      %4486 = vmatpush1.msra.mxu0 0.0
      %4487 = vmatprep.subr.mxu0 0.0
      %4488 = vmatpush1.msra.mxu0 0.0
      %4489 = vmatprep.subr.mxu0 0.0
      %4490 = vmatpush1.msra.mxu0 0.0
      %4491 = vmatprep.subr.mxu0 0.0
      %4492 = vmatpush1.msra.mxu0 0.0
      %4493 = vmatprep.subr.mxu0 0.0
      %4494 = vmatpush1.msra.mxu0 0.0
      %4495 = vmatprep.subr.mxu0 0.0
      %4496 = vmatpush1.msra.mxu0 0.0
      %4497 = vmatprep.subr.mxu0 0.0
      %4498 = vmatpush1.msra.mxu0 0.0
      %4499 = vmatprep.subr.mxu0 0.0
      %4500 = vmatpush1.msra.mxu0 0.0
      %4501 = vmatprep.subr.mxu0 0.0
      %4502 = vmatpush1.msra.mxu0 0.0
      %4503 = vmatprep.subr.mxu0 0.0
      %4504 = vmatpush1.msra.mxu0 0.0
      %4505 = vmatprep.subr.mxu0 0.0
      %4506 = vmatpush1.msra.mxu0 0.0
      %4507 = vmatprep.subr.mxu0 0.0
      %4508 = vmatpush1.msra.mxu0 0.0
      %4509 = vmatprep.subr.mxu0 0.0
      %4510 = vmatpush1.msra.mxu0 0.0
      %4511 = vmatprep.subr.mxu0 0.0
      %4512 = vmatpush1.msra.mxu0 0.0
      %4513 = vmatprep.subr.mxu0 0.0
      %4514 = vmatpush1.msra.mxu0 0.0
      %4515 = vmatprep.subr.mxu0 0.0
      %4516 = vmatpush1.msra.mxu0 0.0
      %4517 = vmatprep.subr.mxu0 0.0
      %4518 = vmatpush1.msra.mxu0 0.0
      %4519 = vmatprep.subr.mxu0 0.0
      %4520 = vmatpush1.msra.mxu0 0.0
      %4521 = vmatprep.subr.mxu0 0.0
      %4522 = vmatpush1.msra.mxu0 0.0
      %4523 = vmatprep.subr.mxu0 0.0
      %4524 = vmatpush1.msra.mxu0 0.0
      %4525 = vmatprep.subr.mxu0 0.0
      %4526 = vmatpush1.msra.mxu0 0.0
      %4527 = vmatprep.subr.mxu0 0.0
      %4528 = vmatpush1.msra.mxu0 0.0
      %4529 = vmatprep.subr.mxu0 0.0
      %4530 = vmatpush1.msra.mxu0 0.0
      %4531 = vmatprep.subr.mxu0 0.0
      %4532 = vmatpush1.msra.mxu0 0.0
      %4533 = vmatprep.subr.mxu0 0.0
      %4534 = vmatpush1.msra.mxu0 0.0
      %4535 = vmatprep.subr.mxu0 0.0
      %4536 = vmatpush1.msra.mxu0 0.0
      %4537 = vmatprep.subr.mxu0 0.0
      %4538 = vmatpush1.msra.mxu0 0.0
      %4539 = vmatprep.subr.mxu0 0.0
      %4540 = vmatpush1.msra.mxu0 0.0
      %4541 = vmatprep.subr.mxu0 0.0
      %4542 = vmatpush1.msra.mxu0 0.0
      %4543 = vmatprep.mubr.f32.mxu0 0.0
      %4544 = vmatmul.mubr.f32.gmra.mrb[0].mxu0 %v4381
      %v4545 = vpop.f32.mrb[0].mxu0
      %v4546 = vadd.f32 %v4222, %v4545
      %v4547 = vpop.f32.mrb[0].mxu0
      %4548 = vmatprep.mubr.f32.mxu0 0.0
      %4549 = vmatmul.mubr.f32.gmra.mrb[0].mxu0 %v4384
      %v4550 = vpop.f32.mrb[0].mxu0
      %v4551 = vadd.f32 %v4227, %v4550
      %v4552 = vpop.f32.mrb[0].mxu0
      %4553 = vmatprep.mubr.f32.mxu0 0.0
      %4554 = vmatmul.mubr.f32.gmra.mrb[0].mxu0 %v4387
      %v4555 = vpop.f32.mrb[0].mxu0
      %v4556 = vadd.f32 %v4232, %v4555
      %v4557 = vpop.f32.mrb[0].mxu0
      %4558 = vmatprep.mubr.f32.mxu0 0.0
      %4559 = vmatmul.mubr.f32.gmra.mrb[0].mxu0 %v4390
      %v4560 = vpop.f32.mrb[0].mxu0
      %v4561 = vadd.f32 %v4237, %v4560
      %v4562 = vpop.f32.mrb[0].mxu0
      %4563 = vmatprep.mubr.f32.mxu0 0.0
      %4564 = vmatmul.mubr.f32.gmra.mrb[0].mxu0 %v4393
      %v4565 = vpop.f32.mrb[0].mxu0
      %v4566 = vadd.f32 %v4242, %v4565
      %v4567 = vpop.f32.mrb[0].mxu0
      %4568 = vmatprep.mubr.f32.mxu0 0.0
      %4569 = vmatmul.mubr.f32.gmra.mrb[0].mxu0 %v4396
      %v4570 = vpop.f32.mrb[0].mxu0
      %v4571 = vadd.f32 %v4247, %v4570
      %v4572 = vpop.f32.mrb[0].mxu0
      %4573 = vmatprep.mubr.f32.mxu0 0.0
      %4574 = vmatmul.mubr.f32.gmra.mrb[0].mxu0 %v4399
      %v4575 = vpop.f32.mrb[0].mxu0
      %v4576 = vadd.f32 %v4252, %v4575
      %v4577 = vpop.f32.mrb[0].mxu0
      %4578 = vmatprep.mubr.f32.mxu0 0.0
      %4579 = vmatmul.mubr.f32.gmra.mrb[0].mxu0 %v4402
      %v4580 = vpop.f32.mrb[0].mxu0
      %v4581 = vadd.f32 %v4257, %v4580
      %v4582 = vpop.f32.mrb[0].mxu0
      %4583 = vmatprep.mubr.f32.mxu0 0.0
      %4584 = vmatmul.mubr.f32.gmra.mrb[0].mxu0 %v4405
      %v4585 = vpop.f32.mrb[0].mxu0
      %v4586 = vadd.f32 %v4262, %v4585
      %v4587 = vpop.f32.mrb[0].mxu0
      %4588 = vmatprep.mubr.f32.mxu0 0.0
      %4589 = vmatmul.mubr.f32.gmra.mrb[0].mxu0 %v4408
      %v4590 = vpop.f32.mrb[0].mxu0
      %v4591 = vadd.f32 %v4267, %v4590
      %v4592 = vpop.f32.mrb[0].mxu0
      %4593 = vmatprep.mubr.f32.mxu0 0.0
      %4594 = vmatmul.mubr.f32.gmra.mrb[0].mxu0 %v4411
      %v4595 = vpop.f32.mrb[0].mxu0
      %v4596 = vadd.f32 %v4272, %v4595
      %v4597 = vpop.f32.mrb[0].mxu0
      %4598 = vmatprep.mubr.f32.mxu0 0.0
      %4599 = vmatmul.mubr.f32.gmra.mrb[0].mxu0 %v4414
      %v4600 = vpop.f32.mrb[0].mxu0
      %v4601 = vadd.f32 %v4277, %v4600
      %v4602 = vpop.f32.mrb[0].mxu0
      %4603 = vmatprep.mubr.f32.mxu0 0.0
      %4604 = vmatmul.mubr.f32.gmra.mrb[0].mxu0 %v4417
      %v4605 = vpop.f32.mrb[0].mxu0
      %v4606 = vadd.f32 %v4282, %v4605
      %v4607 = vpop.f32.mrb[0].mxu0
      %4608 = vmatprep.mubr.f32.mxu0 0.0
      %4609 = vmatmul.mubr.f32.gmra.mrb[0].mxu0 %v4420
      %v4610 = vpop.f32.mrb[0].mxu0
      %v4611 = vadd.f32 %v4287, %v4610
      %v4612 = vpop.f32.mrb[0].mxu0
      %4613 = vmatprep.mubr.f32.mxu0 0.0
      %4614 = vmatmul.mubr.f32.gmra.mrb[0].mxu0 %v4423
      %v4615 = vpop.f32.mrb[0].mxu0
      %v4616 = vadd.f32 %v4292, %v4615
      %v4617 = vpop.f32.mrb[0].mxu0
      %4618 = vmatprep.mubr.f32.mxu0 0.0
      %4619 = vmatmul.mubr.f32.gmra.mrb[0].mxu0 %v4426
      %v4620 = vpop.f32.mrb[0].mxu0
      %v4621 = vadd.f32 %v4297, %v4620
      %v4622 = vpop.f32.mrb[0].mxu0
      %4623 = vmatprep.mubr.f32.mxu0 0.0
      %4624 = vmatmul.mubr.f32.gmra.mrb[0].mxu0 %v4429
      %v4625 = vpop.f32.mrb[0].mxu0
      %v4626 = vadd.f32 %v4302, %v4625
      %v4627 = vpop.f32.mrb[0].mxu0
      %4628 = vmatprep.mubr.f32.mxu0 0.0
      %4629 = vmatmul.mubr.f32.gmra.mrb[0].mxu0 %v4432
      %v4630 = vpop.f32.mrb[0].mxu0
      %v4631 = vadd.f32 %v4307, %v4630
      %v4632 = vpop.f32.mrb[0].mxu0
      %4633 = vmatprep.mubr.f32.mxu0 0.0
      %4634 = vmatmul.mubr.f32.gmra.mrb[0].mxu0 %v4435
      %v4635 = vpop.f32.mrb[0].mxu0
      %v4636 = vadd.f32 %v4312, %v4635
      %v4637 = vpop.f32.mrb[0].mxu0
      %4638 = vmatprep.mubr.f32.mxu0 0.0
      %4639 = vmatmul.mubr.f32.gmra.mrb[0].mxu0 %v4438
      %v4640 = vpop.f32.mrb[0].mxu0
      %v4641 = vadd.f32 %v4317, %v4640
      %v4642 = vpop.f32.mrb[0].mxu0
      %4643 = vmatprep.mubr.f32.mxu0 0.0
      %4644 = vmatmul.mubr.f32.gmra.mrb[0].mxu0 %v4441
      %v4645 = vpop.f32.mrb[0].mxu0
      %v4646 = vadd.f32 %v4322, %v4645
      %v4647 = vpop.f32.mrb[0].mxu0
      %4648 = vmatprep.mubr.f32.mxu0 0.0
      %4649 = vmatmul.mubr.f32.gmra.mrb[0].mxu0 %v4444
      %v4650 = vpop.f32.mrb[0].mxu0
      %v4651 = vadd.f32 %v4327, %v4650
      %v4652 = vpop.f32.mrb[0].mxu0
      %4653 = vmatprep.mubr.f32.mxu0 0.0
      %4654 = vmatmul.mubr.f32.gmra.mrb[0].mxu0 %v4447
      %v4655 = vpop.f32.mrb[0].mxu0
      %v4656 = vadd.f32 %v4332, %v4655
      %v4657 = vpop.f32.mrb[0].mxu0
      %4658 = vmatprep.mubr.f32.mxu0 0.0
      %4659 = vmatmul.mubr.f32.gmra.mrb[0].mxu0 %v4450
      %v4660 = vpop.f32.mrb[0].mxu0
      %v4661 = vadd.f32 %v4337, %v4660
      %v4662 = vpop.f32.mrb[0].mxu0
      %4663 = vmatprep.mubr.f32.mxu0 0.0
      %4664 = vmatmul.mubr.f32.gmra.mrb[0].mxu0 %v4453
      %v4665 = vpop.f32.mrb[0].mxu0
      %v4666 = vadd.f32 %v4342, %v4665
      %v4667 = vpop.f32.mrb[0].mxu0
      %4668 = vmatprep.mubr.f32.mxu0 0.0
      %4669 = vmatmul.mubr.f32.gmra.mrb[0].mxu0 %v4456
      %v4670 = vpop.f32.mrb[0].mxu0
      %v4671 = vadd.f32 %v4347, %v4670
      %v4672 = vpop.f32.mrb[0].mxu0
      %4673 = vmatprep.mubr.f32.mxu0 0.0
      %4674 = vmatmul.mubr.f32.gmra.mrb[0].mxu0 %v4459
      %v4675 = vpop.f32.mrb[0].mxu0
      %v4676 = vadd.f32 %v4352, %v4675
      %v4677 = vpop.f32.mrb[0].mxu0
      %4678 = vmatprep.mubr.f32.mxu0 0.0
      %4679 = vmatmul.mubr.f32.gmra.mrb[0].mxu0 %v4462
      %v4680 = vpop.f32.mrb[0].mxu0
      %v4681 = vadd.f32 %v4357, %v4680
      %v4682 = vpop.f32.mrb[0].mxu0
      %4683 = vmatprep.mubr.f32.mxu0 0.0
      %4684 = vmatmul.mubr.f32.gmra.mrb[0].mxu0 %v4465
      %v4685 = vpop.f32.mrb[0].mxu0
      %v4686 = vadd.f32 %v4362, %v4685
      %v4687 = vpop.f32.mrb[0].mxu0
      %4688 = vmatprep.mubr.f32.mxu0 0.0
      %4689 = vmatmul.mubr.f32.gmra.mrb[0].mxu0 %v4468
      %v4690 = vpop.f32.mrb[0].mxu0
      %v4691 = vadd.f32 %v4367, %v4690
      %v4692 = vpop.f32.mrb[0].mxu0
      %4693 = vmatprep.mubr.f32.mxu0 0.0
      %4694 = vmatmul.mubr.f32.gmra.mrb[0].mxu0 %v4471
      %v4695 = vpop.f32.mrb[0].mxu0
      %v4696 = vadd.f32 %v4372, %v4695
      %v4697 = vpop.f32.mrb[0].mxu0
      %4698 = vmatprep.mubr.f32.mxu0 0.0
      %4699 = vmatmul.mubr.f32.gmra.mrb[0].mxu0 %v4474
      %v4700 = vpop.f32.mrb[0].mxu0
      %v4701 = vadd.f32 %v4377, %v4700
      %v4702 = vpop.f32.mrb[0].mxu0
      %4703 = vdwg.mxu0
      %v4704 = vld [vmem:[#allocation2 + $0x2] sm:$0xff]
      %v4705 = vld [vmem:[#allocation2 + $0xa] sm:$0xff]
      %v4706 = vld [vmem:[#allocation2 + $0x1a] sm:$0xff]
      %v4707 = vld [vmem:[#allocation2 + $0x22] sm:$0xff]
      %v4708 = vld [vmem:[#allocation2 + $0x32] sm:$0xff]
      %v4709 = vld [vmem:[#allocation2 + $0x3a] sm:$0xff]
      %v4710 = vld [vmem:[#allocation2 + $0x4a] sm:$0xff]
      %v4711 = vld [vmem:[#allocation2 + $0x52] sm:$0xff]
      %v4712 = vld [vmem:[#allocation2 + $0x62] sm:$0xff]
      %v4713 = vld [vmem:[#allocation2 + $0x6a] sm:$0xff]
      %v4714 = vld [vmem:[#allocation2 + $0x7a] sm:$0xff]
      %v4715 = vld [vmem:[#allocation2 + $0x82] sm:$0xff]
      %v4716 = vld [vmem:[#allocation2 + $0x92] sm:$0xff]
      %v4717 = vld [vmem:[#allocation2 + $0x9a] sm:$0xff]
      %v4718 = vld [vmem:[#allocation2 + $0xaa] sm:$0xff]
      %v4719 = vld [vmem:[#allocation2 + $0xb2] sm:$0xff]
      %v4720 = vld [vmem:[#allocation2 + $0xc2] sm:$0xff]
      %v4721 = vld [vmem:[#allocation2 + $0xca] sm:$0xff]
      %v4722 = vld [vmem:[#allocation2 + $0xda] sm:$0xff]
      %v4723 = vld [vmem:[#allocation2 + $0xe2] sm:$0xff]
      %v4724 = vld [vmem:[#allocation2 + $0xf2] sm:$0xff]
      %v4725 = vld [vmem:[#allocation2 + $0xfa] sm:$0xff]
      %v4726 = vld [vmem:[#allocation2 + $0x10a] sm:$0xff]
      %v4727 = vld [vmem:[#allocation2 + $0x112] sm:$0xff]
      %v4728 = vld [vmem:[#allocation2 + $0x122] sm:$0xff]
      %v4729 = vld [vmem:[#allocation2 + $0x12a] sm:$0xff]
      %v4730 = vld [vmem:[#allocation2 + $0x13a] sm:$0xff]
      %v4731 = vld [vmem:[#allocation2 + $0x142] sm:$0xff]
      %v4732 = vld [vmem:[#allocation2 + $0x152] sm:$0xff]
      %v4733 = vld [vmem:[#allocation2 + $0x15a] sm:$0xff]
      %v4734 = vld [vmem:[#allocation2 + $0x16a] sm:$0xff]
      %v4735 = vld [vmem:[#allocation2 + $0x172] sm:$0xff]
      %s4736 = scalar_lea.vmem %s2, 8
      %v4737 = vld [vmem:[%s4736] sm:$0xf]
      %v4739 = vsel %vm311, %v4704, 0
      %v4742 = vsel %vm311, %v4705, 0
      %v4745 = vsel %vm311, %v4706, 0
      %v4748 = vsel %vm311, %v4707, 0
      %v4751 = vsel %vm311, %v4708, 0
      %v4754 = vsel %vm311, %v4709, 0
      %v4757 = vsel %vm311, %v4710, 0
      %v4760 = vsel %vm311, %v4711, 0
      %v4763 = vsel %vm311, %v4712, 0
      %v4766 = vsel %vm311, %v4713, 0
      %v4769 = vsel %vm311, %v4714, 0
      %v4772 = vsel %vm311, %v4715, 0
      %v4775 = vsel %vm311, %v4716, 0
      %v4778 = vsel %vm311, %v4717, 0
      %v4781 = vsel %vm311, %v4718, 0
      %v4784 = vsel %vm311, %v4719, 0
      %v4787 = vsel %vm311, %v4720, 0
      %v4790 = vsel %vm311, %v4721, 0
      %v4793 = vsel %vm311, %v4722, 0
      %v4796 = vsel %vm311, %v4723, 0
      %v4799 = vsel %vm311, %v4724, 0
      %v4802 = vsel %vm311, %v4725, 0
      %v4805 = vsel %vm311, %v4726, 0
      %v4808 = vsel %vm311, %v4727, 0
      %v4811 = vsel %vm311, %v4728, 0
      %v4814 = vsel %vm311, %v4729, 0
      %v4817 = vsel %vm311, %v4730, 0
      %v4820 = vsel %vm311, %v4731, 0
      %v4823 = vsel %vm311, %v4732, 0
      %v4826 = vsel %vm311, %v4733, 0
      %v4829 = vsel %vm311, %v4734, 0
      %v4832 = vsel %vm311, %v4735, 0
      %v4835 = vsel %vm563, %v4737, 0
      %4837 = vmatprep.subr.mxu0 0.0
      %4838 = vmatpush1.msra.mxu0 %v4835
      %4839 = vmatprep.subr.mxu0 0.0
      %4840 = vmatpush1.msra.mxu0 0.0
      %4841 = vmatprep.subr.mxu0 0.0
      %4842 = vmatpush1.msra.mxu0 0.0
      %4843 = vmatprep.subr.mxu0 0.0
      %4844 = vmatpush1.msra.mxu0 0.0
      %4845 = vmatprep.subr.mxu0 0.0
      %4846 = vmatpush1.msra.mxu0 0.0
      %4847 = vmatprep.subr.mxu0 0.0
      %4848 = vmatpush1.msra.mxu0 0.0
      %4849 = vmatprep.subr.mxu0 0.0
      %4850 = vmatpush1.msra.mxu0 0.0
      %4851 = vmatprep.subr.mxu0 0.0
      %4852 = vmatpush1.msra.mxu0 0.0
      %4853 = vmatprep.subr.mxu0 0.0
      %4854 = vmatpush1.msra.mxu0 0.0
      %4855 = vmatprep.subr.mxu0 0.0
      %4856 = vmatpush1.msra.mxu0 0.0
      %4857 = vmatprep.subr.mxu0 0.0
      %4858 = vmatpush1.msra.mxu0 0.0
      %4859 = vmatprep.subr.mxu0 0.0
      %4860 = vmatpush1.msra.mxu0 0.0
      %4861 = vmatprep.subr.mxu0 0.0
      %4862 = vmatpush1.msra.mxu0 0.0
      %4863 = vmatprep.subr.mxu0 0.0
      %4864 = vmatpush1.msra.mxu0 0.0
      %4865 = vmatprep.subr.mxu0 0.0
      %4866 = vmatpush1.msra.mxu0 0.0
      %4867 = vmatprep.subr.mxu0 0.0
      %4868 = vmatpush1.msra.mxu0 0.0
      %4869 = vmatprep.subr.mxu0 0.0
      %4870 = vmatpush1.msra.mxu0 0.0
      %4871 = vmatprep.subr.mxu0 0.0
      %4872 = vmatpush1.msra.mxu0 0.0
      %4873 = vmatprep.subr.mxu0 0.0
      %4874 = vmatpush1.msra.mxu0 0.0
      %4875 = vmatprep.subr.mxu0 0.0
      %4876 = vmatpush1.msra.mxu0 0.0
      %4877 = vmatprep.subr.mxu0 0.0
      %4878 = vmatpush1.msra.mxu0 0.0
      %4879 = vmatprep.subr.mxu0 0.0
      %4880 = vmatpush1.msra.mxu0 0.0
      %4881 = vmatprep.subr.mxu0 0.0
      %4882 = vmatpush1.msra.mxu0 0.0
      %4883 = vmatprep.subr.mxu0 0.0
      %4884 = vmatpush1.msra.mxu0 0.0
      %4885 = vmatprep.subr.mxu0 0.0
      %4886 = vmatpush1.msra.mxu0 0.0
      %4887 = vmatprep.subr.mxu0 0.0
      %4888 = vmatpush1.msra.mxu0 0.0
      %4889 = vmatprep.subr.mxu0 0.0
      %4890 = vmatpush1.msra.mxu0 0.0
      %4891 = vmatprep.subr.mxu0 0.0
      %4892 = vmatpush1.msra.mxu0 0.0
      %4893 = vmatprep.subr.mxu0 0.0
      %4894 = vmatpush1.msra.mxu0 0.0
      %4895 = vmatprep.subr.mxu0 0.0
      %4896 = vmatpush1.msra.mxu0 0.0
      %4897 = vmatprep.subr.mxu0 0.0
      %4898 = vmatpush1.msra.mxu0 0.0
      %4899 = vmatprep.subr.mxu0 0.0
      %4900 = vmatpush1.msra.mxu0 0.0
      %4901 = vmatprep.mubr.f32.mxu0 0.0
      %4902 = vmatmul.mubr.f32.gmra.mrb[0].mxu0 %v4739
      %v4903 = vpop.f32.mrb[0].mxu0
      %v4904 = vadd.f32 0.0, %v4903
      %v4905 = vpop.f32.mrb[0].mxu0
      %4906 = vmatprep.mubr.f32.mxu0 0.0
      %4907 = vmatmul.mubr.f32.gmra.mrb[0].mxu0 %v4742
      %v4908 = vpop.f32.mrb[0].mxu0
      %v4909 = vadd.f32 0.0, %v4908
      %v4910 = vpop.f32.mrb[0].mxu0
      %4911 = vmatprep.mubr.f32.mxu0 0.0
      %4912 = vmatmul.mubr.f32.gmra.mrb[0].mxu0 %v4745
      %v4913 = vpop.f32.mrb[0].mxu0
      %v4914 = vadd.f32 0.0, %v4913
      %v4915 = vpop.f32.mrb[0].mxu0
      %4916 = vmatprep.mubr.f32.mxu0 0.0
      %4917 = vmatmul.mubr.f32.gmra.mrb[0].mxu0 %v4748
      %v4918 = vpop.f32.mrb[0].mxu0
      %v4919 = vadd.f32 0.0, %v4918
      %v4920 = vpop.f32.mrb[0].mxu0
      %4921 = vmatprep.mubr.f32.mxu0 0.0
      %4922 = vmatmul.mubr.f32.gmra.mrb[0].mxu0 %v4751
      %v4923 = vpop.f32.mrb[0].mxu0
      %v4924 = vadd.f32 0.0, %v4923
      %v4925 = vpop.f32.mrb[0].mxu0
      %4926 = vmatprep.mubr.f32.mxu0 0.0
      %4927 = vmatmul.mubr.f32.gmra.mrb[0].mxu0 %v4754
      %v4928 = vpop.f32.mrb[0].mxu0
      %v4929 = vadd.f32 0.0, %v4928
      %v4930 = vpop.f32.mrb[0].mxu0
      %4931 = vmatprep.mubr.f32.mxu0 0.0
      %4932 = vmatmul.mubr.f32.gmra.mrb[0].mxu0 %v4757
      %v4933 = vpop.f32.mrb[0].mxu0
      %v4934 = vadd.f32 0.0, %v4933
      %v4935 = vpop.f32.mrb[0].mxu0
      %4936 = vmatprep.mubr.f32.mxu0 0.0
      %4937 = vmatmul.mubr.f32.gmra.mrb[0].mxu0 %v4760
      %v4938 = vpop.f32.mrb[0].mxu0
      %v4939 = vadd.f32 0.0, %v4938
      %v4940 = vpop.f32.mrb[0].mxu0
      %4941 = vmatprep.mubr.f32.mxu0 0.0
      %4942 = vmatmul.mubr.f32.gmra.mrb[0].mxu0 %v4763
      %v4943 = vpop.f32.mrb[0].mxu0
      %v4944 = vadd.f32 0.0, %v4943
      %v4945 = vpop.f32.mrb[0].mxu0
      %4946 = vmatprep.mubr.f32.mxu0 0.0
      %4947 = vmatmul.mubr.f32.gmra.mrb[0].mxu0 %v4766
      %v4948 = vpop.f32.mrb[0].mxu0
      %v4949 = vadd.f32 0.0, %v4948
      %v4950 = vpop.f32.mrb[0].mxu0
      %4951 = vmatprep.mubr.f32.mxu0 0.0
      %4952 = vmatmul.mubr.f32.gmra.mrb[0].mxu0 %v4769
      %v4953 = vpop.f32.mrb[0].mxu0
      %v4954 = vadd.f32 0.0, %v4953
      %v4955 = vpop.f32.mrb[0].mxu0
      %4956 = vmatprep.mubr.f32.mxu0 0.0
      %4957 = vmatmul.mubr.f32.gmra.mrb[0].mxu0 %v4772
      %v4958 = vpop.f32.mrb[0].mxu0
      %v4959 = vadd.f32 0.0, %v4958
      %v4960 = vpop.f32.mrb[0].mxu0
      %4961 = vmatprep.mubr.f32.mxu0 0.0
      %4962 = vmatmul.mubr.f32.gmra.mrb[0].mxu0 %v4775
      %v4963 = vpop.f32.mrb[0].mxu0
      %v4964 = vadd.f32 0.0, %v4963
      %v4965 = vpop.f32.mrb[0].mxu0
      %4966 = vmatprep.mubr.f32.mxu0 0.0
      %4967 = vmatmul.mubr.f32.gmra.mrb[0].mxu0 %v4778
      %v4968 = vpop.f32.mrb[0].mxu0
      %v4969 = vadd.f32 0.0, %v4968
      %v4970 = vpop.f32.mrb[0].mxu0
      %4971 = vmatprep.mubr.f32.mxu0 0.0
      %4972 = vmatmul.mubr.f32.gmra.mrb[0].mxu0 %v4781
      %v4973 = vpop.f32.mrb[0].mxu0
      %v4974 = vadd.f32 0.0, %v4973
      %v4975 = vpop.f32.mrb[0].mxu0
      %4976 = vmatprep.mubr.f32.mxu0 0.0
      %4977 = vmatmul.mubr.f32.gmra.mrb[0].mxu0 %v4784
      %v4978 = vpop.f32.mrb[0].mxu0
      %v4979 = vadd.f32 0.0, %v4978
      %v4980 = vpop.f32.mrb[0].mxu0
      %4981 = vmatprep.mubr.f32.mxu0 0.0
      %4982 = vmatmul.mubr.f32.gmra.mrb[0].mxu0 %v4787
      %v4983 = vpop.f32.mrb[0].mxu0
      %v4984 = vadd.f32 0.0, %v4983
      %v4985 = vpop.f32.mrb[0].mxu0
      %4986 = vmatprep.mubr.f32.mxu0 0.0
      %4987 = vmatmul.mubr.f32.gmra.mrb[0].mxu0 %v4790
      %v4988 = vpop.f32.mrb[0].mxu0
      %v4989 = vadd.f32 0.0, %v4988
      %v4990 = vpop.f32.mrb[0].mxu0
      %4991 = vmatprep.mubr.f32.mxu0 0.0
      %4992 = vmatmul.mubr.f32.gmra.mrb[0].mxu0 %v4793
      %v4993 = vpop.f32.mrb[0].mxu0
      %v4994 = vadd.f32 0.0, %v4993
      %v4995 = vpop.f32.mrb[0].mxu0
      %4996 = vmatprep.mubr.f32.mxu0 0.0
      %4997 = vmatmul.mubr.f32.gmra.mrb[0].mxu0 %v4796
      %v4998 = vpop.f32.mrb[0].mxu0
      %v4999 = vadd.f32 0.0, %v4998
      %v5000 = vpop.f32.mrb[0].mxu0
      %5001 = vmatprep.mubr.f32.mxu0 0.0
      %5002 = vmatmul.mubr.f32.gmra.mrb[0].mxu0 %v4799
      %v5003 = vpop.f32.mrb[0].mxu0
      %v5004 = vadd.f32 0.0, %v5003
      %v5005 = vpop.f32.mrb[0].mxu0
      %5006 = vmatprep.mubr.f32.mxu0 0.0
      %5007 = vmatmul.mubr.f32.gmra.mrb[0].mxu0 %v4802
      %v5008 = vpop.f32.mrb[0].mxu0
      %v5009 = vadd.f32 0.0, %v5008
      %v5010 = vpop.f32.mrb[0].mxu0
      %5011 = vmatprep.mubr.f32.mxu0 0.0
      %5012 = vmatmul.mubr.f32.gmra.mrb[0].mxu0 %v4805
      %v5013 = vpop.f32.mrb[0].mxu0
      %v5014 = vadd.f32 0.0, %v5013
      %v5015 = vpop.f32.mrb[0].mxu0
      %5016 = vmatprep.mubr.f32.mxu0 0.0
      %5017 = vmatmul.mubr.f32.gmra.mrb[0].mxu0 %v4808
      %v5018 = vpop.f32.mrb[0].mxu0
      %v5019 = vadd.f32 0.0, %v5018
      %v5020 = vpop.f32.mrb[0].mxu0
      %5021 = vmatprep.mubr.f32.mxu0 0.0
      %5022 = vmatmul.mubr.f32.gmra.mrb[0].mxu0 %v4811
      %v5023 = vpop.f32.mrb[0].mxu0
      %v5024 = vadd.f32 0.0, %v5023
      %v5025 = vpop.f32.mrb[0].mxu0
      %5026 = vmatprep.mubr.f32.mxu0 0.0
      %5027 = vmatmul.mubr.f32.gmra.mrb[0].mxu0 %v4814
      %v5028 = vpop.f32.mrb[0].mxu0
      %v5029 = vadd.f32 0.0, %v5028
      %v5030 = vpop.f32.mrb[0].mxu0
      %5031 = vmatprep.mubr.f32.mxu0 0.0
      %5032 = vmatmul.mubr.f32.gmra.mrb[0].mxu0 %v4817
      %v5033 = vpop.f32.mrb[0].mxu0
      %v5034 = vadd.f32 0.0, %v5033
      %v5035 = vpop.f32.mrb[0].mxu0
      %5036 = vmatprep.mubr.f32.mxu0 0.0
      %5037 = vmatmul.mubr.f32.gmra.mrb[0].mxu0 %v4820
      %v5038 = vpop.f32.mrb[0].mxu0
      %v5039 = vadd.f32 0.0, %v5038
      %v5040 = vpop.f32.mrb[0].mxu0
      %5041 = vmatprep.mubr.f32.mxu0 0.0
      %5042 = vmatmul.mubr.f32.gmra.mrb[0].mxu0 %v4823
      %v5043 = vpop.f32.mrb[0].mxu0
      %v5044 = vadd.f32 0.0, %v5043
      %v5045 = vpop.f32.mrb[0].mxu0
      %5046 = vmatprep.mubr.f32.mxu0 0.0
      %5047 = vmatmul.mubr.f32.gmra.mrb[0].mxu0 %v4826
      %v5048 = vpop.f32.mrb[0].mxu0
      %v5049 = vadd.f32 0.0, %v5048
      %v5050 = vpop.f32.mrb[0].mxu0
      %5051 = vmatprep.mubr.f32.mxu0 0.0
      %5052 = vmatmul.mubr.f32.gmra.mrb[0].mxu0 %v4829
      %v5053 = vpop.f32.mrb[0].mxu0
      %v5054 = vadd.f32 0.0, %v5053
      %v5055 = vpop.f32.mrb[0].mxu0
      %5056 = vmatprep.mubr.f32.mxu0 0.0
      %5057 = vmatmul.mubr.f32.gmra.mrb[0].mxu0 %v4832
      %v5058 = vpop.f32.mrb[0].mxu0
      %v5059 = vadd.f32 0.0, %v5058
      %v5060 = vpop.f32.mrb[0].mxu0
      %5061 = vdwg.mxu0
      %v5062 = vadd.f32 %v4546, %v4904
      %v5063 = vadd.f32 %v4551, %v4909
      %v5064 = vadd.f32 %v4556, %v4914
      %v5065 = vadd.f32 %v4561, %v4919
      %v5066 = vadd.f32 %v4566, %v4924
      %v5067 = vadd.f32 %v4571, %v4929
      %v5068 = vadd.f32 %v4576, %v4934
      %v5069 = vadd.f32 %v4581, %v4939
      %v5070 = vadd.f32 %v4586, %v4944
      %v5071 = vadd.f32 %v4591, %v4949
      %v5072 = vadd.f32 %v4596, %v4954
      %v5073 = vadd.f32 %v4601, %v4959
      %v5074 = vadd.f32 %v4606, %v4964
      %v5075 = vadd.f32 %v4611, %v4969
      %v5076 = vadd.f32 %v4616, %v4974
      %v5077 = vadd.f32 %v4621, %v4979
      %v5078 = vadd.f32 %v4626, %v4984
      %v5079 = vadd.f32 %v4631, %v4989
      %v5080 = vadd.f32 %v4636, %v4994
      %v5081 = vadd.f32 %v4641, %v4999
      %v5082 = vadd.f32 %v4646, %v5004
      %v5083 = vadd.f32 %v4651, %v5009
      %v5084 = vadd.f32 %v4656, %v5014
      %v5085 = vadd.f32 %v4661, %v5019
      %v5086 = vadd.f32 %v4666, %v5024
      %v5087 = vadd.f32 %v4671, %v5029
      %v5088 = vadd.f32 %v4676, %v5034
      %v5089 = vadd.f32 %v4681, %v5039
      %v5090 = vadd.f32 %v4686, %v5044
      %v5091 = vadd.f32 %v4691, %v5049
      %v5092 = vadd.f32 %v4696, %v5054
      %v5093 = vadd.f32 %v4701, %v5059
      %v5094 = vld [vmem:[%s367] sm:$0xff]
      %v5095 = vld [vmem:[%s367 + $0x8] sm:$0xff]
      %v5096 = vld [vmem:[%s367 + $0x18] sm:$0xff]
      %v5097 = vld [vmem:[%s367 + $0x20] sm:$0xff]
      %v5098 = vld [vmem:[%s367 + $0x30] sm:$0xff]
      %v5099 = vld [vmem:[%s367 + $0x38] sm:$0xff]
      %v5100 = vld [vmem:[%s367 + $0x48] sm:$0xff]
      %v5101 = vld [vmem:[%s367 + $0x50] sm:$0xff]
      %v5102 = vld [vmem:[%s367 + $0x60] sm:$0xff]
      %v5103 = vld [vmem:[%s367 + $0x68] sm:$0xff]
      %v5104 = vld [vmem:[%s367 + $0x78] sm:$0xff]
      %v5105 = vld [vmem:[%s367 + $0x80] sm:$0xff]
      %v5106 = vld [vmem:[%s367 + $0x90] sm:$0xff]
      %v5107 = vld [vmem:[%s367 + $0x98] sm:$0xff]
      %v5108 = vld [vmem:[%s367 + $0xa8] sm:$0xff]
      %v5109 = vld [vmem:[%s367 + $0xb0] sm:$0xff]
      %v5110 = vld [vmem:[%s367 + $0xc0] sm:$0xff]
      %v5111 = vld [vmem:[%s367 + $0xc8] sm:$0xff]
      %v5112 = vld [vmem:[%s367 + $0xd8] sm:$0xff]
      %v5113 = vld [vmem:[%s367 + $0xe0] sm:$0xff]
      %v5114 = vld [vmem:[%s367 + $0xf0] sm:$0xff]
      %v5115 = vld [vmem:[%s367 + $0xf8] sm:$0xff]
      %v5116 = vld [vmem:[%s367 + $0x108] sm:$0xff]
      %v5117 = vld [vmem:[%s367 + $0x110] sm:$0xff]
      %v5118 = vld [vmem:[%s367 + $0x120] sm:$0xff]
      %v5119 = vld [vmem:[%s367 + $0x128] sm:$0xff]
      %v5120 = vld [vmem:[%s367 + $0x138] sm:$0xff]
      %v5121 = vld [vmem:[%s367 + $0x140] sm:$0xff]
      %v5122 = vld [vmem:[%s367 + $0x150] sm:$0xff]
      %v5123 = vld [vmem:[%s367 + $0x158] sm:$0xff]
      %v5124 = vld [vmem:[%s367 + $0x168] sm:$0xff]
      %v5125 = vld [vmem:[%s367 + $0x170] sm:$0xff]
      %s5126 = scalar_lea.vmem %s2, 12
      %v5127 = vld [vmem:[%s5126] sm:$0xf]
      %v5129 = vsel %vm311, %v5094, 0
      %v5132 = vsel %vm311, %v5095, 0
      %v5135 = vsel %vm311, %v5096, 0
      %v5138 = vsel %vm311, %v5097, 0
      %v5141 = vsel %vm311, %v5098, 0
      %v5144 = vsel %vm311, %v5099, 0
      %v5147 = vsel %vm311, %v5100, 0
      %v5150 = vsel %vm311, %v5101, 0
      %v5153 = vsel %vm311, %v5102, 0
      %v5156 = vsel %vm311, %v5103, 0
      %v5159 = vsel %vm311, %v5104, 0
      %v5162 = vsel %vm311, %v5105, 0
      %v5165 = vsel %vm311, %v5106, 0
      %v5168 = vsel %vm311, %v5107, 0
      %v5171 = vsel %vm311, %v5108, 0
      %v5174 = vsel %vm311, %v5109, 0
      %v5177 = vsel %vm311, %v5110, 0
      %v5180 = vsel %vm311, %v5111, 0
      %v5183 = vsel %vm311, %v5112, 0
      %v5186 = vsel %vm311, %v5113, 0
      %v5189 = vsel %vm311, %v5114, 0
      %v5192 = vsel %vm311, %v5115, 0
      %v5195 = vsel %vm311, %v5116, 0
      %v5198 = vsel %vm311, %v5117, 0
      %v5201 = vsel %vm311, %v5118, 0
      %v5204 = vsel %vm311, %v5119, 0
      %v5207 = vsel %vm311, %v5120, 0
      %v5210 = vsel %vm311, %v5121, 0
      %v5213 = vsel %vm311, %v5122, 0
      %v5216 = vsel %vm311, %v5123, 0
      %v5219 = vsel %vm311, %v5124, 0
      %v5222 = vsel %vm311, %v5125, 0
      %v5225 = vsel %vm563, %v5127, 0
      %5227 = vmatprep.subr.mxu0 0.0
      %5228 = vmatpush1.msra.mxu0 %v5225
      %5229 = vmatprep.subr.mxu0 0.0
      %5230 = vmatpush1.msra.mxu0 0.0
      %5231 = vmatprep.subr.mxu0 0.0
      %5232 = vmatpush1.msra.mxu0 0.0
      %5233 = vmatprep.subr.mxu0 0.0
      %5234 = vmatpush1.msra.mxu0 0.0
      %5235 = vmatprep.subr.mxu0 0.0
      %5236 = vmatpush1.msra.mxu0 0.0
      %5237 = vmatprep.subr.mxu0 0.0
      %5238 = vmatpush1.msra.mxu0 0.0
      %5239 = vmatprep.subr.mxu0 0.0
      %5240 = vmatpush1.msra.mxu0 0.0
      %5241 = vmatprep.subr.mxu0 0.0
      %5242 = vmatpush1.msra.mxu0 0.0
      %5243 = vmatprep.subr.mxu0 0.0
      %5244 = vmatpush1.msra.mxu0 0.0
      %5245 = vmatprep.subr.mxu0 0.0
      %5246 = vmatpush1.msra.mxu0 0.0
      %5247 = vmatprep.subr.mxu0 0.0
      %5248 = vmatpush1.msra.mxu0 0.0
      %5249 = vmatprep.subr.mxu0 0.0
      %5250 = vmatpush1.msra.mxu0 0.0
      %5251 = vmatprep.subr.mxu0 0.0
      %5252 = vmatpush1.msra.mxu0 0.0
      %5253 = vmatprep.subr.mxu0 0.0
      %5254 = vmatpush1.msra.mxu0 0.0
      %5255 = vmatprep.subr.mxu0 0.0
      %5256 = vmatpush1.msra.mxu0 0.0
      %5257 = vmatprep.subr.mxu0 0.0
      %5258 = vmatpush1.msra.mxu0 0.0
      %5259 = vmatprep.subr.mxu0 0.0
      %5260 = vmatpush1.msra.mxu0 0.0
      %5261 = vmatprep.subr.mxu0 0.0
      %5262 = vmatpush1.msra.mxu0 0.0
      %5263 = vmatprep.subr.mxu0 0.0
      %5264 = vmatpush1.msra.mxu0 0.0
      %5265 = vmatprep.subr.mxu0 0.0
      %5266 = vmatpush1.msra.mxu0 0.0
      %5267 = vmatprep.subr.mxu0 0.0
      %5268 = vmatpush1.msra.mxu0 0.0
      %5269 = vmatprep.subr.mxu0 0.0
      %5270 = vmatpush1.msra.mxu0 0.0
      %5271 = vmatprep.subr.mxu0 0.0
      %5272 = vmatpush1.msra.mxu0 0.0
      %5273 = vmatprep.subr.mxu0 0.0
      %5274 = vmatpush1.msra.mxu0 0.0
      %5275 = vmatprep.subr.mxu0 0.0
      %5276 = vmatpush1.msra.mxu0 0.0
      %5277 = vmatprep.subr.mxu0 0.0
      %5278 = vmatpush1.msra.mxu0 0.0
      %5279 = vmatprep.subr.mxu0 0.0
      %5280 = vmatpush1.msra.mxu0 0.0
      %5281 = vmatprep.subr.mxu0 0.0
      %5282 = vmatpush1.msra.mxu0 0.0
      %5283 = vmatprep.subr.mxu0 0.0
      %5284 = vmatpush1.msra.mxu0 0.0
      %5285 = vmatprep.subr.mxu0 0.0
      %5286 = vmatpush1.msra.mxu0 0.0
      %5287 = vmatprep.subr.mxu0 0.0
      %5288 = vmatpush1.msra.mxu0 0.0
      %5289 = vmatprep.subr.mxu0 0.0
      %5290 = vmatpush1.msra.mxu0 0.0
      %5291 = vmatprep.mubr.f32.mxu0 0.0
      %5292 = vmatmul.mubr.f32.gmra.mrb[0].mxu0 %v5129
      %v5293 = vpop.f32.mrb[0].mxu0
      %v5294 = vadd.f32 0.0, %v5293
      %v5295 = vpop.f32.mrb[0].mxu0
      %5296 = vmatprep.mubr.f32.mxu0 0.0
      %5297 = vmatmul.mubr.f32.gmra.mrb[0].mxu0 %v5132
      %v5298 = vpop.f32.mrb[0].mxu0
      %v5299 = vadd.f32 0.0, %v5298
      %v5300 = vpop.f32.mrb[0].mxu0
      %5301 = vmatprep.mubr.f32.mxu0 0.0
      %5302 = vmatmul.mubr.f32.gmra.mrb[0].mxu0 %v5135
      %v5303 = vpop.f32.mrb[0].mxu0
      %v5304 = vadd.f32 0.0, %v5303
      %v5305 = vpop.f32.mrb[0].mxu0
      %5306 = vmatprep.mubr.f32.mxu0 0.0
      %5307 = vmatmul.mubr.f32.gmra.mrb[0].mxu0 %v5138
      %v5308 = vpop.f32.mrb[0].mxu0
      %v5309 = vadd.f32 0.0, %v5308
      %v5310 = vpop.f32.mrb[0].mxu0
      %5311 = vmatprep.mubr.f32.mxu0 0.0
      %5312 = vmatmul.mubr.f32.gmra.mrb[0].mxu0 %v5141
      %v5313 = vpop.f32.mrb[0].mxu0
      %v5314 = vadd.f32 0.0, %v5313
      %v5315 = vpop.f32.mrb[0].mxu0
      %5316 = vmatprep.mubr.f32.mxu0 0.0
      %5317 = vmatmul.mubr.f32.gmra.mrb[0].mxu0 %v5144
      %v5318 = vpop.f32.mrb[0].mxu0
      %v5319 = vadd.f32 0.0, %v5318
      %v5320 = vpop.f32.mrb[0].mxu0
      %5321 = vmatprep.mubr.f32.mxu0 0.0
      %5322 = vmatmul.mubr.f32.gmra.mrb[0].mxu0 %v5147
      %v5323 = vpop.f32.mrb[0].mxu0
      %v5324 = vadd.f32 0.0, %v5323
      %v5325 = vpop.f32.mrb[0].mxu0
      %5326 = vmatprep.mubr.f32.mxu0 0.0
      %5327 = vmatmul.mubr.f32.gmra.mrb[0].mxu0 %v5150
      %v5328 = vpop.f32.mrb[0].mxu0
      %v5329 = vadd.f32 0.0, %v5328
      %v5330 = vpop.f32.mrb[0].mxu0
      %5331 = vmatprep.mubr.f32.mxu0 0.0
      %5332 = vmatmul.mubr.f32.gmra.mrb[0].mxu0 %v5153
      %v5333 = vpop.f32.mrb[0].mxu0
      %v5334 = vadd.f32 0.0, %v5333
      %v5335 = vpop.f32.mrb[0].mxu0
      %5336 = vmatprep.mubr.f32.mxu0 0.0
      %5337 = vmatmul.mubr.f32.gmra.mrb[0].mxu0 %v5156
      %v5338 = vpop.f32.mrb[0].mxu0
      %v5339 = vadd.f32 0.0, %v5338
      %v5340 = vpop.f32.mrb[0].mxu0
      %5341 = vmatprep.mubr.f32.mxu0 0.0
      %5342 = vmatmul.mubr.f32.gmra.mrb[0].mxu0 %v5159
      %v5343 = vpop.f32.mrb[0].mxu0
      %v5344 = vadd.f32 0.0, %v5343
      %v5345 = vpop.f32.mrb[0].mxu0
      %5346 = vmatprep.mubr.f32.mxu0 0.0
      %5347 = vmatmul.mubr.f32.gmra.mrb[0].mxu0 %v5162
      %v5348 = vpop.f32.mrb[0].mxu0
      %v5349 = vadd.f32 0.0, %v5348
      %v5350 = vpop.f32.mrb[0].mxu0
      %5351 = vmatprep.mubr.f32.mxu0 0.0
      %5352 = vmatmul.mubr.f32.gmra.mrb[0].mxu0 %v5165
      %v5353 = vpop.f32.mrb[0].mxu0
      %v5354 = vadd.f32 0.0, %v5353
      %v5355 = vpop.f32.mrb[0].mxu0
      %5356 = vmatprep.mubr.f32.mxu0 0.0
      %5357 = vmatmul.mubr.f32.gmra.mrb[0].mxu0 %v5168
      %v5358 = vpop.f32.mrb[0].mxu0
      %v5359 = vadd.f32 0.0, %v5358
      %v5360 = vpop.f32.mrb[0].mxu0
      %5361 = vmatprep.mubr.f32.mxu0 0.0
      %5362 = vmatmul.mubr.f32.gmra.mrb[0].mxu0 %v5171
      %v5363 = vpop.f32.mrb[0].mxu0
      %v5364 = vadd.f32 0.0, %v5363
      %v5365 = vpop.f32.mrb[0].mxu0
      %5366 = vmatprep.mubr.f32.mxu0 0.0
      %5367 = vmatmul.mubr.f32.gmra.mrb[0].mxu0 %v5174
      %v5368 = vpop.f32.mrb[0].mxu0
      %v5369 = vadd.f32 0.0, %v5368
      %v5370 = vpop.f32.mrb[0].mxu0
      %5371 = vmatprep.mubr.f32.mxu0 0.0
      %5372 = vmatmul.mubr.f32.gmra.mrb[0].mxu0 %v5177
      %v5373 = vpop.f32.mrb[0].mxu0
      %v5374 = vadd.f32 0.0, %v5373
      %v5375 = vpop.f32.mrb[0].mxu0
      %5376 = vmatprep.mubr.f32.mxu0 0.0
      %5377 = vmatmul.mubr.f32.gmra.mrb[0].mxu0 %v5180
      %v5378 = vpop.f32.mrb[0].mxu0
      %v5379 = vadd.f32 0.0, %v5378
      %v5380 = vpop.f32.mrb[0].mxu0
      %5381 = vmatprep.mubr.f32.mxu0 0.0
      %5382 = vmatmul.mubr.f32.gmra.mrb[0].mxu0 %v5183
      %v5383 = vpop.f32.mrb[0].mxu0
      %v5384 = vadd.f32 0.0, %v5383
      %v5385 = vpop.f32.mrb[0].mxu0
      %5386 = vmatprep.mubr.f32.mxu0 0.0
      %5387 = vmatmul.mubr.f32.gmra.mrb[0].mxu0 %v5186
      %v5388 = vpop.f32.mrb[0].mxu0
      %v5389 = vadd.f32 0.0, %v5388
      %v5390 = vpop.f32.mrb[0].mxu0
      %5391 = vmatprep.mubr.f32.mxu0 0.0
      %5392 = vmatmul.mubr.f32.gmra.mrb[0].mxu0 %v5189
      %v5393 = vpop.f32.mrb[0].mxu0
      %v5394 = vadd.f32 0.0, %v5393
      %v5395 = vpop.f32.mrb[0].mxu0
      %5396 = vmatprep.mubr.f32.mxu0 0.0
      %5397 = vmatmul.mubr.f32.gmra.mrb[0].mxu0 %v5192
      %v5398 = vpop.f32.mrb[0].mxu0
      %v5399 = vadd.f32 0.0, %v5398
      %v5400 = vpop.f32.mrb[0].mxu0
      %5401 = vmatprep.mubr.f32.mxu0 0.0
      %5402 = vmatmul.mubr.f32.gmra.mrb[0].mxu0 %v5195
      %v5403 = vpop.f32.mrb[0].mxu0
      %v5404 = vadd.f32 0.0, %v5403
      %v5405 = vpop.f32.mrb[0].mxu0
      %5406 = vmatprep.mubr.f32.mxu0 0.0
      %5407 = vmatmul.mubr.f32.gmra.mrb[0].mxu0 %v5198
      %v5408 = vpop.f32.mrb[0].mxu0
      %v5409 = vadd.f32 0.0, %v5408
      %v5410 = vpop.f32.mrb[0].mxu0
      %5411 = vmatprep.mubr.f32.mxu0 0.0
      %5412 = vmatmul.mubr.f32.gmra.mrb[0].mxu0 %v5201
      %v5413 = vpop.f32.mrb[0].mxu0
      %v5414 = vadd.f32 0.0, %v5413
      %v5415 = vpop.f32.mrb[0].mxu0
      %5416 = vmatprep.mubr.f32.mxu0 0.0
      %5417 = vmatmul.mubr.f32.gmra.mrb[0].mxu0 %v5204
      %v5418 = vpop.f32.mrb[0].mxu0
      %v5419 = vadd.f32 0.0, %v5418
      %v5420 = vpop.f32.mrb[0].mxu0
      %5421 = vmatprep.mubr.f32.mxu0 0.0
      %5422 = vmatmul.mubr.f32.gmra.mrb[0].mxu0 %v5207
      %v5423 = vpop.f32.mrb[0].mxu0
      %v5424 = vadd.f32 0.0, %v5423
      %v5425 = vpop.f32.mrb[0].mxu0
      %5426 = vmatprep.mubr.f32.mxu0 0.0
      %5427 = vmatmul.mubr.f32.gmra.mrb[0].mxu0 %v5210
      %v5428 = vpop.f32.mrb[0].mxu0
      %v5429 = vadd.f32 0.0, %v5428
      %v5430 = vpop.f32.mrb[0].mxu0
      %5431 = vmatprep.mubr.f32.mxu0 0.0
      %5432 = vmatmul.mubr.f32.gmra.mrb[0].mxu0 %v5213
      %v5433 = vpop.f32.mrb[0].mxu0
      %v5434 = vadd.f32 0.0, %v5433
      %v5435 = vpop.f32.mrb[0].mxu0
      %5436 = vmatprep.mubr.f32.mxu0 0.0
      %5437 = vmatmul.mubr.f32.gmra.mrb[0].mxu0 %v5216
      %v5438 = vpop.f32.mrb[0].mxu0
      %v5439 = vadd.f32 0.0, %v5438
      %v5440 = vpop.f32.mrb[0].mxu0
      %5441 = vmatprep.mubr.f32.mxu0 0.0
      %5442 = vmatmul.mubr.f32.gmra.mrb[0].mxu0 %v5219
      %v5443 = vpop.f32.mrb[0].mxu0
      %v5444 = vadd.f32 0.0, %v5443
      %v5445 = vpop.f32.mrb[0].mxu0
      %5446 = vmatprep.mubr.f32.mxu0 0.0
      %5447 = vmatmul.mubr.f32.gmra.mrb[0].mxu0 %v5222
      %v5448 = vpop.f32.mrb[0].mxu0
      %v5449 = vadd.f32 0.0, %v5448
      %v5450 = vpop.f32.mrb[0].mxu0
      %5451 = vdwg.mxu0
      %v5452 = vadd.f32 %v5062, %v5294
      %v5453 = vadd.f32 %v5063, %v5299
      %v5454 = vadd.f32 %v5064, %v5304
      %v5455 = vadd.f32 %v5065, %v5309
      %v5456 = vadd.f32 %v5066, %v5314
      %v5457 = vadd.f32 %v5067, %v5319
      %v5458 = vadd.f32 %v5068, %v5324
      %v5459 = vadd.f32 %v5069, %v5329
      %v5460 = vadd.f32 %v5070, %v5334
      %v5461 = vadd.f32 %v5071, %v5339
      %v5462 = vadd.f32 %v5072, %v5344
      %v5463 = vadd.f32 %v5073, %v5349
      %v5464 = vadd.f32 %v5074, %v5354
      %v5465 = vadd.f32 %v5075, %v5359
      %v5466 = vadd.f32 %v5076, %v5364
      %v5467 = vadd.f32 %v5077, %v5369
      %v5468 = vadd.f32 %v5078, %v5374
      %v5469 = vadd.f32 %v5079, %v5379
      %v5470 = vadd.f32 %v5080, %v5384
      %v5471 = vadd.f32 %v5081, %v5389
      %v5472 = vadd.f32 %v5082, %v5394
      %v5473 = vadd.f32 %v5083, %v5399
      %v5474 = vadd.f32 %v5084, %v5404
      %v5475 = vadd.f32 %v5085, %v5409
      %v5476 = vadd.f32 %v5086, %v5414
      %v5477 = vadd.f32 %v5087, %v5419
      %v5478 = vadd.f32 %v5088, %v5424
      %v5479 = vadd.f32 %v5089, %v5429
      %v5480 = vadd.f32 %v5090, %v5434
      %v5481 = vadd.f32 %v5091, %v5439
      %v5482 = vadd.f32 %v5092, %v5444
      %v5483 = vadd.f32 %v5093, %v5449
      %v5484 = vld [vmem:[%s367 + $0x1] sm:$0xff]
      %v5485 = vld [vmem:[%s367 + $0x9] sm:$0xff]
      %v5486 = vld [vmem:[%s367 + $0x19] sm:$0xff]
      %v5487 = vld [vmem:[%s367 + $0x21] sm:$0xff]
      %v5488 = vld [vmem:[%s367 + $0x31] sm:$0xff]
      %v5489 = vld [vmem:[%s367 + $0x39] sm:$0xff]
      %v5490 = vld [vmem:[%s367 + $0x49] sm:$0xff]
      %v5491 = vld [vmem:[%s367 + $0x51] sm:$0xff]
      %v5492 = vld [vmem:[%s367 + $0x61] sm:$0xff]
      %v5493 = vld [vmem:[%s367 + $0x69] sm:$0xff]
      %v5494 = vld [vmem:[%s367 + $0x79] sm:$0xff]
      %v5495 = vld [vmem:[%s367 + $0x81] sm:$0xff]
      %v5496 = vld [vmem:[%s367 + $0x91] sm:$0xff]
      %v5497 = vld [vmem:[%s367 + $0x99] sm:$0xff]
      %v5498 = vld [vmem:[%s367 + $0xa9] sm:$0xff]
      %v5499 = vld [vmem:[%s367 + $0xb1] sm:$0xff]
      %v5500 = vld [vmem:[%s367 + $0xc1] sm:$0xff]
      %v5501 = vld [vmem:[%s367 + $0xc9] sm:$0xff]
      %v5502 = vld [vmem:[%s367 + $0xd9] sm:$0xff]
      %v5503 = vld [vmem:[%s367 + $0xe1] sm:$0xff]
      %v5504 = vld [vmem:[%s367 + $0xf1] sm:$0xff]
      %v5505 = vld [vmem:[%s367 + $0xf9] sm:$0xff]
      %v5506 = vld [vmem:[%s367 + $0x109] sm:$0xff]
      %v5507 = vld [vmem:[%s367 + $0x111] sm:$0xff]
      %v5508 = vld [vmem:[%s367 + $0x121] sm:$0xff]
      %v5509 = vld [vmem:[%s367 + $0x129] sm:$0xff]
      %v5510 = vld [vmem:[%s367 + $0x139] sm:$0xff]
      %v5511 = vld [vmem:[%s367 + $0x141] sm:$0xff]
      %v5512 = vld [vmem:[%s367 + $0x151] sm:$0xff]
      %v5513 = vld [vmem:[%s367 + $0x159] sm:$0xff]
      %v5514 = vld [vmem:[%s367 + $0x169] sm:$0xff]
      %v5515 = vld [vmem:[%s367 + $0x171] sm:$0xff]
      %s5516 = scalar_lea.vmem %s2, 16
      %v5517 = vld [vmem:[%s5516] sm:$0xf]
      %v5519 = vsel %vm311, %v5484, 0
      %v5522 = vsel %vm311, %v5485, 0
      %v5525 = vsel %vm311, %v5486, 0
      %v5528 = vsel %vm311, %v5487, 0
      %v5531 = vsel %vm311, %v5488, 0
      %v5534 = vsel %vm311, %v5489, 0
      %v5537 = vsel %vm311, %v5490, 0
      %v5540 = vsel %vm311, %v5491, 0
      %v5543 = vsel %vm311, %v5492, 0
      %v5546 = vsel %vm311, %v5493, 0
      %v5549 = vsel %vm311, %v5494, 0
      %v5552 = vsel %vm311, %v5495, 0
      %v5555 = vsel %vm311, %v5496, 0
      %v5558 = vsel %vm311, %v5497, 0
      %v5561 = vsel %vm311, %v5498, 0
      %v5564 = vsel %vm311, %v5499, 0
      %v5567 = vsel %vm311, %v5500, 0
      %v5570 = vsel %vm311, %v5501, 0
      %v5573 = vsel %vm311, %v5502, 0
      %v5576 = vsel %vm311, %v5503, 0
      %v5579 = vsel %vm311, %v5504, 0
      %v5582 = vsel %vm311, %v5505, 0
      %v5585 = vsel %vm311, %v5506, 0
      %v5588 = vsel %vm311, %v5507, 0
      %v5591 = vsel %vm311, %v5508, 0
      %v5594 = vsel %vm311, %v5509, 0
      %v5597 = vsel %vm311, %v5510, 0
      %v5600 = vsel %vm311, %v5511, 0
      %v5603 = vsel %vm311, %v5512, 0
      %v5606 = vsel %vm311, %v5513, 0
      %v5609 = vsel %vm311, %v5514, 0
      %v5612 = vsel %vm311, %v5515, 0
      %v5615 = vsel %vm563, %v5517, 0
      %5617 = vmatprep.subr.mxu0 0.0
      %5618 = vmatpush1.msra.mxu0 %v5615
      %5619 = vmatprep.subr.mxu0 0.0
      %5620 = vmatpush1.msra.mxu0 0.0
      %5621 = vmatprep.subr.mxu0 0.0
      %5622 = vmatpush1.msra.mxu0 0.0
      %5623 = vmatprep.subr.mxu0 0.0
      %5624 = vmatpush1.msra.mxu0 0.0
      %5625 = vmatprep.subr.mxu0 0.0
      %5626 = vmatpush1.msra.mxu0 0.0
      %5627 = vmatprep.subr.mxu0 0.0
      %5628 = vmatpush1.msra.mxu0 0.0
      %5629 = vmatprep.subr.mxu0 0.0
      %5630 = vmatpush1.msra.mxu0 0.0
      %5631 = vmatprep.subr.mxu0 0.0
      %5632 = vmatpush1.msra.mxu0 0.0
      %5633 = vmatprep.subr.mxu0 0.0
      %5634 = vmatpush1.msra.mxu0 0.0
      %5635 = vmatprep.subr.mxu0 0.0
      %5636 = vmatpush1.msra.mxu0 0.0
      %5637 = vmatprep.subr.mxu0 0.0
      %5638 = vmatpush1.msra.mxu0 0.0
      %5639 = vmatprep.subr.mxu0 0.0
      %5640 = vmatpush1.msra.mxu0 0.0
      %5641 = vmatprep.subr.mxu0 0.0
      %5642 = vmatpush1.msra.mxu0 0.0
      %5643 = vmatprep.subr.mxu0 0.0
      %5644 = vmatpush1.msra.mxu0 0.0
      %5645 = vmatprep.subr.mxu0 0.0
      %5646 = vmatpush1.msra.mxu0 0.0
      %5647 = vmatprep.subr.mxu0 0.0
      %5648 = vmatpush1.msra.mxu0 0.0
      %5649 = vmatprep.subr.mxu0 0.0
      %5650 = vmatpush1.msra.mxu0 0.0
      %5651 = vmatprep.subr.mxu0 0.0
      %5652 = vmatpush1.msra.mxu0 0.0
      %5653 = vmatprep.subr.mxu0 0.0
      %5654 = vmatpush1.msra.mxu0 0.0
      %5655 = vmatprep.subr.mxu0 0.0
      %5656 = vmatpush1.msra.mxu0 0.0
      %5657 = vmatprep.subr.mxu0 0.0
      %5658 = vmatpush1.msra.mxu0 0.0
      %5659 = vmatprep.subr.mxu0 0.0
      %5660 = vmatpush1.msra.mxu0 0.0
      %5661 = vmatprep.subr.mxu0 0.0
      %5662 = vmatpush1.msra.mxu0 0.0
      %5663 = vmatprep.subr.mxu0 0.0
      %5664 = vmatpush1.msra.mxu0 0.0
      %5665 = vmatprep.subr.mxu0 0.0
      %5666 = vmatpush1.msra.mxu0 0.0
      %5667 = vmatprep.subr.mxu0 0.0
      %5668 = vmatpush1.msra.mxu0 0.0
      %5669 = vmatprep.subr.mxu0 0.0
      %5670 = vmatpush1.msra.mxu0 0.0
      %5671 = vmatprep.subr.mxu0 0.0
      %5672 = vmatpush1.msra.mxu0 0.0
      %5673 = vmatprep.subr.mxu0 0.0
      %5674 = vmatpush1.msra.mxu0 0.0
      %5675 = vmatprep.subr.mxu0 0.0
      %5676 = vmatpush1.msra.mxu0 0.0
      %5677 = vmatprep.subr.mxu0 0.0
      %5678 = vmatpush1.msra.mxu0 0.0
      %5679 = vmatprep.subr.mxu0 0.0
      %5680 = vmatpush1.msra.mxu0 0.0
      %5681 = vmatprep.mubr.f32.mxu0 0.0
      %5682 = vmatmul.mubr.f32.gmra.mrb[0].mxu0 %v5519
      %v5683 = vpop.f32.mrb[0].mxu0
      %v5684 = vadd.f32 0.0, %v5683
      %v5685 = vpop.f32.mrb[0].mxu0
      %5686 = vmatprep.mubr.f32.mxu0 0.0
      %5687 = vmatmul.mubr.f32.gmra.mrb[0].mxu0 %v5522
      %v5688 = vpop.f32.mrb[0].mxu0
      %v5689 = vadd.f32 0.0, %v5688
      %v5690 = vpop.f32.mrb[0].mxu0
      %5691 = vmatprep.mubr.f32.mxu0 0.0
      %5692 = vmatmul.mubr.f32.gmra.mrb[0].mxu0 %v5525
      %v5693 = vpop.f32.mrb[0].mxu0
      %v5694 = vadd.f32 0.0, %v5693
      %v5695 = vpop.f32.mrb[0].mxu0
      %5696 = vmatprep.mubr.f32.mxu0 0.0
      %5697 = vmatmul.mubr.f32.gmra.mrb[0].mxu0 %v5528
      %v5698 = vpop.f32.mrb[0].mxu0
      %v5699 = vadd.f32 0.0, %v5698
      %v5700 = vpop.f32.mrb[0].mxu0
      %5701 = vmatprep.mubr.f32.mxu0 0.0
      %5702 = vmatmul.mubr.f32.gmra.mrb[0].mxu0 %v5531
      %v5703 = vpop.f32.mrb[0].mxu0
      %v5704 = vadd.f32 0.0, %v5703
      %v5705 = vpop.f32.mrb[0].mxu0
      %5706 = vmatprep.mubr.f32.mxu0 0.0
      %5707 = vmatmul.mubr.f32.gmra.mrb[0].mxu0 %v5534
      %v5708 = vpop.f32.mrb[0].mxu0
      %v5709 = vadd.f32 0.0, %v5708
      %v5710 = vpop.f32.mrb[0].mxu0
      %5711 = vmatprep.mubr.f32.mxu0 0.0
      %5712 = vmatmul.mubr.f32.gmra.mrb[0].mxu0 %v5537
      %v5713 = vpop.f32.mrb[0].mxu0
      %v5714 = vadd.f32 0.0, %v5713
      %v5715 = vpop.f32.mrb[0].mxu0
      %5716 = vmatprep.mubr.f32.mxu0 0.0
      %5717 = vmatmul.mubr.f32.gmra.mrb[0].mxu0 %v5540
      %v5718 = vpop.f32.mrb[0].mxu0
      %v5719 = vadd.f32 0.0, %v5718
      %v5720 = vpop.f32.mrb[0].mxu0
      %5721 = vmatprep.mubr.f32.mxu0 0.0
      %5722 = vmatmul.mubr.f32.gmra.mrb[0].mxu0 %v5543
      %v5723 = vpop.f32.mrb[0].mxu0
      %v5724 = vadd.f32 0.0, %v5723
      %v5725 = vpop.f32.mrb[0].mxu0
      %5726 = vmatprep.mubr.f32.mxu0 0.0
      %5727 = vmatmul.mubr.f32.gmra.mrb[0].mxu0 %v5546
      %v5728 = vpop.f32.mrb[0].mxu0
      %v5729 = vadd.f32 0.0, %v5728
      %v5730 = vpop.f32.mrb[0].mxu0
      %5731 = vmatprep.mubr.f32.mxu0 0.0
      %5732 = vmatmul.mubr.f32.gmra.mrb[0].mxu0 %v5549
      %v5733 = vpop.f32.mrb[0].mxu0
      %v5734 = vadd.f32 0.0, %v5733
      %v5735 = vpop.f32.mrb[0].mxu0
      %5736 = vmatprep.mubr.f32.mxu0 0.0
      %5737 = vmatmul.mubr.f32.gmra.mrb[0].mxu0 %v5552
      %v5738 = vpop.f32.mrb[0].mxu0
      %v5739 = vadd.f32 0.0, %v5738
      %v5740 = vpop.f32.mrb[0].mxu0
      %5741 = vmatprep.mubr.f32.mxu0 0.0
      %5742 = vmatmul.mubr.f32.gmra.mrb[0].mxu0 %v5555
      %v5743 = vpop.f32.mrb[0].mxu0
      %v5744 = vadd.f32 0.0, %v5743
      %v5745 = vpop.f32.mrb[0].mxu0
      %5746 = vmatprep.mubr.f32.mxu0 0.0
      %5747 = vmatmul.mubr.f32.gmra.mrb[0].mxu0 %v5558
      %v5748 = vpop.f32.mrb[0].mxu0
      %v5749 = vadd.f32 0.0, %v5748
      %v5750 = vpop.f32.mrb[0].mxu0
      %5751 = vmatprep.mubr.f32.mxu0 0.0
      %5752 = vmatmul.mubr.f32.gmra.mrb[0].mxu0 %v5561
      %v5753 = vpop.f32.mrb[0].mxu0
      %v5754 = vadd.f32 0.0, %v5753
      %v5755 = vpop.f32.mrb[0].mxu0
      %5756 = vmatprep.mubr.f32.mxu0 0.0
      %5757 = vmatmul.mubr.f32.gmra.mrb[0].mxu0 %v5564
      %v5758 = vpop.f32.mrb[0].mxu0
      %v5759 = vadd.f32 0.0, %v5758
      %v5760 = vpop.f32.mrb[0].mxu0
      %5761 = vmatprep.mubr.f32.mxu0 0.0
      %5762 = vmatmul.mubr.f32.gmra.mrb[0].mxu0 %v5567
      %v5763 = vpop.f32.mrb[0].mxu0
      %v5764 = vadd.f32 0.0, %v5763
      %v5765 = vpop.f32.mrb[0].mxu0
      %5766 = vmatprep.mubr.f32.mxu0 0.0
      %5767 = vmatmul.mubr.f32.gmra.mrb[0].mxu0 %v5570
      %v5768 = vpop.f32.mrb[0].mxu0
      %v5769 = vadd.f32 0.0, %v5768
      %v5770 = vpop.f32.mrb[0].mxu0
      %5771 = vmatprep.mubr.f32.mxu0 0.0
      %5772 = vmatmul.mubr.f32.gmra.mrb[0].mxu0 %v5573
      %v5773 = vpop.f32.mrb[0].mxu0
      %v5774 = vadd.f32 0.0, %v5773
      %v5775 = vpop.f32.mrb[0].mxu0
      %5776 = vmatprep.mubr.f32.mxu0 0.0
      %5777 = vmatmul.mubr.f32.gmra.mrb[0].mxu0 %v5576
      %v5778 = vpop.f32.mrb[0].mxu0
      %v5779 = vadd.f32 0.0, %v5778
      %v5780 = vpop.f32.mrb[0].mxu0
      %5781 = vmatprep.mubr.f32.mxu0 0.0
      %5782 = vmatmul.mubr.f32.gmra.mrb[0].mxu0 %v5579
      %v5783 = vpop.f32.mrb[0].mxu0
      %v5784 = vadd.f32 0.0, %v5783
      %v5785 = vpop.f32.mrb[0].mxu0
      %5786 = vmatprep.mubr.f32.mxu0 0.0
      %5787 = vmatmul.mubr.f32.gmra.mrb[0].mxu0 %v5582
      %v5788 = vpop.f32.mrb[0].mxu0
      %v5789 = vadd.f32 0.0, %v5788
      %v5790 = vpop.f32.mrb[0].mxu0
      %5791 = vmatprep.mubr.f32.mxu0 0.0
      %5792 = vmatmul.mubr.f32.gmra.mrb[0].mxu0 %v5585
      %v5793 = vpop.f32.mrb[0].mxu0
      %v5794 = vadd.f32 0.0, %v5793
      %v5795 = vpop.f32.mrb[0].mxu0
      %5796 = vmatprep.mubr.f32.mxu0 0.0
      %5797 = vmatmul.mubr.f32.gmra.mrb[0].mxu0 %v5588
      %v5798 = vpop.f32.mrb[0].mxu0
      %v5799 = vadd.f32 0.0, %v5798
      %v5800 = vpop.f32.mrb[0].mxu0
      %5801 = vmatprep.mubr.f32.mxu0 0.0
      %5802 = vmatmul.mubr.f32.gmra.mrb[0].mxu0 %v5591
      %v5803 = vpop.f32.mrb[0].mxu0
      %v5804 = vadd.f32 0.0, %v5803
      %v5805 = vpop.f32.mrb[0].mxu0
      %5806 = vmatprep.mubr.f32.mxu0 0.0
      %5807 = vmatmul.mubr.f32.gmra.mrb[0].mxu0 %v5594
      %v5808 = vpop.f32.mrb[0].mxu0
      %v5809 = vadd.f32 0.0, %v5808
      %v5810 = vpop.f32.mrb[0].mxu0
      %5811 = vmatprep.mubr.f32.mxu0 0.0
      %5812 = vmatmul.mubr.f32.gmra.mrb[0].mxu0 %v5597
      %v5813 = vpop.f32.mrb[0].mxu0
      %v5814 = vadd.f32 0.0, %v5813
      %v5815 = vpop.f32.mrb[0].mxu0
      %5816 = vmatprep.mubr.f32.mxu0 0.0
      %5817 = vmatmul.mubr.f32.gmra.mrb[0].mxu0 %v5600
      %v5818 = vpop.f32.mrb[0].mxu0
      %v5819 = vadd.f32 0.0, %v5818
      %v5820 = vpop.f32.mrb[0].mxu0
      %5821 = vmatprep.mubr.f32.mxu0 0.0
      %5822 = vmatmul.mubr.f32.gmra.mrb[0].mxu0 %v5603
      %v5823 = vpop.f32.mrb[0].mxu0
      %v5824 = vadd.f32 0.0, %v5823
      %v5825 = vpop.f32.mrb[0].mxu0
      %5826 = vmatprep.mubr.f32.mxu0 0.0
      %5827 = vmatmul.mubr.f32.gmra.mrb[0].mxu0 %v5606
      %v5828 = vpop.f32.mrb[0].mxu0
      %v5829 = vadd.f32 0.0, %v5828
      %v5830 = vpop.f32.mrb[0].mxu0
      %5831 = vmatprep.mubr.f32.mxu0 0.0
      %5832 = vmatmul.mubr.f32.gmra.mrb[0].mxu0 %v5609
      %v5833 = vpop.f32.mrb[0].mxu0
      %v5834 = vadd.f32 0.0, %v5833
      %v5835 = vpop.f32.mrb[0].mxu0
      %5836 = vmatprep.mubr.f32.mxu0 0.0
      %5837 = vmatmul.mubr.f32.gmra.mrb[0].mxu0 %v5612
      %v5838 = vpop.f32.mrb[0].mxu0
      %v5839 = vadd.f32 0.0, %v5838
      %v5840 = vpop.f32.mrb[0].mxu0
      %5841 = vdwg.mxu0
      %v5842 = vadd.f32 %v5452, %v5684
      %v5843 = vadd.f32 %v5453, %v5689
      %v5844 = vadd.f32 %v5454, %v5694
      %v5845 = vadd.f32 %v5455, %v5699
      %v5846 = vadd.f32 %v5456, %v5704
      %v5847 = vadd.f32 %v5457, %v5709
      %v5848 = vadd.f32 %v5458, %v5714
      %v5849 = vadd.f32 %v5459, %v5719
      %v5850 = vadd.f32 %v5460, %v5724
      %v5851 = vadd.f32 %v5461, %v5729
      %v5852 = vadd.f32 %v5462, %v5734
      %v5853 = vadd.f32 %v5463, %v5739
      %v5854 = vadd.f32 %v5464, %v5744
      %v5855 = vadd.f32 %v5465, %v5749
      %v5856 = vadd.f32 %v5466, %v5754
      %v5857 = vadd.f32 %v5467, %v5759
      %v5858 = vadd.f32 %v5468, %v5764
      %v5859 = vadd.f32 %v5469, %v5769
      %v5860 = vadd.f32 %v5470, %v5774
      %v5861 = vadd.f32 %v5471, %v5779
      %v5862 = vadd.f32 %v5472, %v5784
      %v5863 = vadd.f32 %v5473, %v5789
      %v5864 = vadd.f32 %v5474, %v5794
      %v5865 = vadd.f32 %v5475, %v5799
      %v5866 = vadd.f32 %v5476, %v5804
      %v5867 = vadd.f32 %v5477, %v5809
      %v5868 = vadd.f32 %v5478, %v5814
      %v5869 = vadd.f32 %v5479, %v5819
      %v5870 = vadd.f32 %v5480, %v5824
      %v5871 = vadd.f32 %v5481, %v5829
      %v5872 = vadd.f32 %v5482, %v5834
      %v5873 = vadd.f32 %v5483, %v5839
      %v5874 = vld [vmem:[%s367 + $0x2] sm:$0xff]
      %v5875 = vld [vmem:[%s367 + $0xa] sm:$0xff]
      %v5876 = vld [vmem:[%s367 + $0x1a] sm:$0xff]
      %v5877 = vld [vmem:[%s367 + $0x22] sm:$0xff]
      %v5878 = vld [vmem:[%s367 + $0x32] sm:$0xff]
      %v5879 = vld [vmem:[%s367 + $0x3a] sm:$0xff]
      %v5880 = vld [vmem:[%s367 + $0x4a] sm:$0xff]
      %v5881 = vld [vmem:[%s367 + $0x52] sm:$0xff]
      %v5882 = vld [vmem:[%s367 + $0x62] sm:$0xff]
      %v5883 = vld [vmem:[%s367 + $0x6a] sm:$0xff]
      %v5884 = vld [vmem:[%s367 + $0x7a] sm:$0xff]
      %v5885 = vld [vmem:[%s367 + $0x82] sm:$0xff]
      %v5886 = vld [vmem:[%s367 + $0x92] sm:$0xff]
      %v5887 = vld [vmem:[%s367 + $0x9a] sm:$0xff]
      %v5888 = vld [vmem:[%s367 + $0xaa] sm:$0xff]
      %v5889 = vld [vmem:[%s367 + $0xb2] sm:$0xff]
      %v5890 = vld [vmem:[%s367 + $0xc2] sm:$0xff]
      %v5891 = vld [vmem:[%s367 + $0xca] sm:$0xff]
      %v5892 = vld [vmem:[%s367 + $0xda] sm:$0xff]
      %v5893 = vld [vmem:[%s367 + $0xe2] sm:$0xff]
      %v5894 = vld [vmem:[%s367 + $0xf2] sm:$0xff]
      %v5895 = vld [vmem:[%s367 + $0xfa] sm:$0xff]
      %v5896 = vld [vmem:[%s367 + $0x10a] sm:$0xff]
      %v5897 = vld [vmem:[%s367 + $0x112] sm:$0xff]
      %v5898 = vld [vmem:[%s367 + $0x122] sm:$0xff]
      %v5899 = vld [vmem:[%s367 + $0x12a] sm:$0xff]
      %v5900 = vld [vmem:[%s367 + $0x13a] sm:$0xff]
      %v5901 = vld [vmem:[%s367 + $0x142] sm:$0xff]
      %v5902 = vld [vmem:[%s367 + $0x152] sm:$0xff]
      %v5903 = vld [vmem:[%s367 + $0x15a] sm:$0xff]
      %v5904 = vld [vmem:[%s367 + $0x16a] sm:$0xff]
      %v5905 = vld [vmem:[%s367 + $0x172] sm:$0xff]
      %s5906 = scalar_lea.vmem %s2, 20
      %v5907 = vld [vmem:[%s5906] sm:$0xf]
      %v5909 = vsel %vm311, %v5874, 0
      %v5912 = vsel %vm311, %v5875, 0
      %v5915 = vsel %vm311, %v5876, 0
      %v5918 = vsel %vm311, %v5877, 0
      %v5921 = vsel %vm311, %v5878, 0
      %v5924 = vsel %vm311, %v5879, 0
      %v5927 = vsel %vm311, %v5880, 0
      %v5930 = vsel %vm311, %v5881, 0
      %v5933 = vsel %vm311, %v5882, 0
      %v5936 = vsel %vm311, %v5883, 0
      %v5939 = vsel %vm311, %v5884, 0
      %v5942 = vsel %vm311, %v5885, 0
      %v5945 = vsel %vm311, %v5886, 0
      %v5948 = vsel %vm311, %v5887, 0
      %v5951 = vsel %vm311, %v5888, 0
      %v5954 = vsel %vm311, %v5889, 0
      %v5957 = vsel %vm311, %v5890, 0
      %v5960 = vsel %vm311, %v5891, 0
      %v5963 = vsel %vm311, %v5892, 0
      %v5966 = vsel %vm311, %v5893, 0
      %v5969 = vsel %vm311, %v5894, 0
      %v5972 = vsel %vm311, %v5895, 0
      %v5975 = vsel %vm311, %v5896, 0
      %v5978 = vsel %vm311, %v5897, 0
      %v5981 = vsel %vm311, %v5898, 0
      %v5984 = vsel %vm311, %v5899, 0
      %v5987 = vsel %vm311, %v5900, 0
      %v5990 = vsel %vm311, %v5901, 0
      %v5993 = vsel %vm311, %v5902, 0
      %v5996 = vsel %vm311, %v5903, 0
      %v5999 = vsel %vm311, %v5904, 0
      %v6002 = vsel %vm311, %v5905, 0
      %v6005 = vsel %vm563, %v5907, 0
      %6007 = vmatprep.subr.mxu0 0.0
      %6008 = vmatpush1.msra.mxu0 %v6005
      %6009 = vmatprep.subr.mxu0 0.0
      %6010 = vmatpush1.msra.mxu0 0.0
      %6011 = vmatprep.subr.mxu0 0.0
      %6012 = vmatpush1.msra.mxu0 0.0
      %6013 = vmatprep.subr.mxu0 0.0
      %6014 = vmatpush1.msra.mxu0 0.0
      %6015 = vmatprep.subr.mxu0 0.0
      %6016 = vmatpush1.msra.mxu0 0.0
      %6017 = vmatprep.subr.mxu0 0.0
      %6018 = vmatpush1.msra.mxu0 0.0
      %6019 = vmatprep.subr.mxu0 0.0
      %6020 = vmatpush1.msra.mxu0 0.0
      %6021 = vmatprep.subr.mxu0 0.0
      %6022 = vmatpush1.msra.mxu0 0.0
      %6023 = vmatprep.subr.mxu0 0.0
      %6024 = vmatpush1.msra.mxu0 0.0
      %6025 = vmatprep.subr.mxu0 0.0
      %6026 = vmatpush1.msra.mxu0 0.0
      %6027 = vmatprep.subr.mxu0 0.0
      %6028 = vmatpush1.msra.mxu0 0.0
      %6029 = vmatprep.subr.mxu0 0.0
      %6030 = vmatpush1.msra.mxu0 0.0
      %6031 = vmatprep.subr.mxu0 0.0
      %6032 = vmatpush1.msra.mxu0 0.0
      %6033 = vmatprep.subr.mxu0 0.0
      %6034 = vmatpush1.msra.mxu0 0.0
      %6035 = vmatprep.subr.mxu0 0.0
      %6036 = vmatpush1.msra.mxu0 0.0
      %6037 = vmatprep.subr.mxu0 0.0
      %6038 = vmatpush1.msra.mxu0 0.0
      %6039 = vmatprep.subr.mxu0 0.0
      %6040 = vmatpush1.msra.mxu0 0.0
      %6041 = vmatprep.subr.mxu0 0.0
      %6042 = vmatpush1.msra.mxu0 0.0
      %6043 = vmatprep.subr.mxu0 0.0
      %6044 = vmatpush1.msra.mxu0 0.0
      %6045 = vmatprep.subr.mxu0 0.0
      %6046 = vmatpush1.msra.mxu0 0.0
      %6047 = vmatprep.subr.mxu0 0.0
      %6048 = vmatpush1.msra.mxu0 0.0
      %6049 = vmatprep.subr.mxu0 0.0
      %6050 = vmatpush1.msra.mxu0 0.0
      %6051 = vmatprep.subr.mxu0 0.0
      %6052 = vmatpush1.msra.mxu0 0.0
      %6053 = vmatprep.subr.mxu0 0.0
      %6054 = vmatpush1.msra.mxu0 0.0
      %6055 = vmatprep.subr.mxu0 0.0
      %6056 = vmatpush1.msra.mxu0 0.0
      %6057 = vmatprep.subr.mxu0 0.0
      %6058 = vmatpush1.msra.mxu0 0.0
      %6059 = vmatprep.subr.mxu0 0.0
      %6060 = vmatpush1.msra.mxu0 0.0
      %6061 = vmatprep.subr.mxu0 0.0
      %6062 = vmatpush1.msra.mxu0 0.0
      %6063 = vmatprep.subr.mxu0 0.0
      %6064 = vmatpush1.msra.mxu0 0.0
      %6065 = vmatprep.subr.mxu0 0.0
      %6066 = vmatpush1.msra.mxu0 0.0
      %6067 = vmatprep.subr.mxu0 0.0
      %6068 = vmatpush1.msra.mxu0 0.0
      %6069 = vmatprep.subr.mxu0 0.0
      %6070 = vmatpush1.msra.mxu0 0.0
      %6071 = vmatprep.mubr.f32.mxu0 0.0
      %6072 = vmatmul.mubr.f32.gmra.mrb[0].mxu0 %v5909
      %v6073 = vpop.f32.mrb[0].mxu0
      %v6074 = vadd.f32 0.0, %v6073
      %v6075 = vpop.f32.mrb[0].mxu0
      %6076 = vmatprep.mubr.f32.mxu0 0.0
      %6077 = vmatmul.mubr.f32.gmra.mrb[0].mxu0 %v5912
      %v6078 = vpop.f32.mrb[0].mxu0
      %v6079 = vadd.f32 0.0, %v6078
      %v6080 = vpop.f32.mrb[0].mxu0
      %6081 = vmatprep.mubr.f32.mxu0 0.0
      %6082 = vmatmul.mubr.f32.gmra.mrb[0].mxu0 %v5915
      %v6083 = vpop.f32.mrb[0].mxu0
      %v6084 = vadd.f32 0.0, %v6083
      %v6085 = vpop.f32.mrb[0].mxu0
      %6086 = vmatprep.mubr.f32.mxu0 0.0
      %6087 = vmatmul.mubr.f32.gmra.mrb[0].mxu0 %v5918
      %v6088 = vpop.f32.mrb[0].mxu0
      %v6089 = vadd.f32 0.0, %v6088
      %v6090 = vpop.f32.mrb[0].mxu0
      %6091 = vmatprep.mubr.f32.mxu0 0.0
      %6092 = vmatmul.mubr.f32.gmra.mrb[0].mxu0 %v5921
      %v6093 = vpop.f32.mrb[0].mxu0
      %v6094 = vadd.f32 0.0, %v6093
      %v6095 = vpop.f32.mrb[0].mxu0
      %6096 = vmatprep.mubr.f32.mxu0 0.0
      %6097 = vmatmul.mubr.f32.gmra.mrb[0].mxu0 %v5924
      %v6098 = vpop.f32.mrb[0].mxu0
      %v6099 = vadd.f32 0.0, %v6098
      %v6100 = vpop.f32.mrb[0].mxu0
      %6101 = vmatprep.mubr.f32.mxu0 0.0
      %6102 = vmatmul.mubr.f32.gmra.mrb[0].mxu0 %v5927
      %v6103 = vpop.f32.mrb[0].mxu0
      %v6104 = vadd.f32 0.0, %v6103
      %v6105 = vpop.f32.mrb[0].mxu0
      %6106 = vmatprep.mubr.f32.mxu0 0.0
      %6107 = vmatmul.mubr.f32.gmra.mrb[0].mxu0 %v5930
      %v6108 = vpop.f32.mrb[0].mxu0
      %v6109 = vadd.f32 0.0, %v6108
      %v6110 = vpop.f32.mrb[0].mxu0
      %6111 = vmatprep.mubr.f32.mxu0 0.0
      %6112 = vmatmul.mubr.f32.gmra.mrb[0].mxu0 %v5933
      %v6113 = vpop.f32.mrb[0].mxu0
      %v6114 = vadd.f32 0.0, %v6113
      %v6115 = vpop.f32.mrb[0].mxu0
      %6116 = vmatprep.mubr.f32.mxu0 0.0
      %6117 = vmatmul.mubr.f32.gmra.mrb[0].mxu0 %v5936
      %v6118 = vpop.f32.mrb[0].mxu0
      %v6119 = vadd.f32 0.0, %v6118
      %v6120 = vpop.f32.mrb[0].mxu0
      %6121 = vmatprep.mubr.f32.mxu0 0.0
      %6122 = vmatmul.mubr.f32.gmra.mrb[0].mxu0 %v5939
      %v6123 = vpop.f32.mrb[0].mxu0
      %v6124 = vadd.f32 0.0, %v6123
      %v6125 = vpop.f32.mrb[0].mxu0
      %6126 = vmatprep.mubr.f32.mxu0 0.0
      %6127 = vmatmul.mubr.f32.gmra.mrb[0].mxu0 %v5942
      %v6128 = vpop.f32.mrb[0].mxu0
      %v6129 = vadd.f32 0.0, %v6128
      %v6130 = vpop.f32.mrb[0].mxu0
      %6131 = vmatprep.mubr.f32.mxu0 0.0
      %6132 = vmatmul.mubr.f32.gmra.mrb[0].mxu0 %v5945
      %v6133 = vpop.f32.mrb[0].mxu0
      %v6134 = vadd.f32 0.0, %v6133
      %v6135 = vpop.f32.mrb[0].mxu0
      %6136 = vmatprep.mubr.f32.mxu0 0.0
      %6137 = vmatmul.mubr.f32.gmra.mrb[0].mxu0 %v5948
      %v6138 = vpop.f32.mrb[0].mxu0
      %v6139 = vadd.f32 0.0, %v6138
      %v6140 = vpop.f32.mrb[0].mxu0
      %6141 = vmatprep.mubr.f32.mxu0 0.0
      %6142 = vmatmul.mubr.f32.gmra.mrb[0].mxu0 %v5951
      %v6143 = vpop.f32.mrb[0].mxu0
      %v6144 = vadd.f32 0.0, %v6143
      %v6145 = vpop.f32.mrb[0].mxu0
      %6146 = vmatprep.mubr.f32.mxu0 0.0
      %6147 = vmatmul.mubr.f32.gmra.mrb[0].mxu0 %v5954
      %v6148 = vpop.f32.mrb[0].mxu0
      %v6149 = vadd.f32 0.0, %v6148
      %v6150 = vpop.f32.mrb[0].mxu0
      %6151 = vmatprep.mubr.f32.mxu0 0.0
      %6152 = vmatmul.mubr.f32.gmra.mrb[0].mxu0 %v5957
      %v6153 = vpop.f32.mrb[0].mxu0
      %v6154 = vadd.f32 0.0, %v6153
      %v6155 = vpop.f32.mrb[0].mxu0
      %6156 = vmatprep.mubr.f32.mxu0 0.0
      %6157 = vmatmul.mubr.f32.gmra.mrb[0].mxu0 %v5960
      %v6158 = vpop.f32.mrb[0].mxu0
      %v6159 = vadd.f32 0.0, %v6158
      %v6160 = vpop.f32.mrb[0].mxu0
      %6161 = vmatprep.mubr.f32.mxu0 0.0
      %6162 = vmatmul.mubr.f32.gmra.mrb[0].mxu0 %v5963
      %v6163 = vpop.f32.mrb[0].mxu0
      %v6164 = vadd.f32 0.0, %v6163
      %v6165 = vpop.f32.mrb[0].mxu0
      %6166 = vmatprep.mubr.f32.mxu0 0.0
      %6167 = vmatmul.mubr.f32.gmra.mrb[0].mxu0 %v5966
      %v6168 = vpop.f32.mrb[0].mxu0
      %v6169 = vadd.f32 0.0, %v6168
      %v6170 = vpop.f32.mrb[0].mxu0
      %6171 = vmatprep.mubr.f32.mxu0 0.0
      %6172 = vmatmul.mubr.f32.gmra.mrb[0].mxu0 %v5969
      %v6173 = vpop.f32.mrb[0].mxu0
      %v6174 = vadd.f32 0.0, %v6173
      %v6175 = vpop.f32.mrb[0].mxu0
      %6176 = vmatprep.mubr.f32.mxu0 0.0
      %6177 = vmatmul.mubr.f32.gmra.mrb[0].mxu0 %v5972
      %v6178 = vpop.f32.mrb[0].mxu0
      %v6179 = vadd.f32 0.0, %v6178
      %v6180 = vpop.f32.mrb[0].mxu0
      %6181 = vmatprep.mubr.f32.mxu0 0.0
      %6182 = vmatmul.mubr.f32.gmra.mrb[0].mxu0 %v5975
      %v6183 = vpop.f32.mrb[0].mxu0
      %v6184 = vadd.f32 0.0, %v6183
      %v6185 = vpop.f32.mrb[0].mxu0
      %6186 = vmatprep.mubr.f32.mxu0 0.0
      %6187 = vmatmul.mubr.f32.gmra.mrb[0].mxu0 %v5978
      %v6188 = vpop.f32.mrb[0].mxu0
      %v6189 = vadd.f32 0.0, %v6188
      %v6190 = vpop.f32.mrb[0].mxu0
      %6191 = vmatprep.mubr.f32.mxu0 0.0
      %6192 = vmatmul.mubr.f32.gmra.mrb[0].mxu0 %v5981
      %v6193 = vpop.f32.mrb[0].mxu0
      %v6194 = vadd.f32 0.0, %v6193
      %v6195 = vpop.f32.mrb[0].mxu0
      %6196 = vmatprep.mubr.f32.mxu0 0.0
      %6197 = vmatmul.mubr.f32.gmra.mrb[0].mxu0 %v5984
      %v6198 = vpop.f32.mrb[0].mxu0
      %v6199 = vadd.f32 0.0, %v6198
      %v6200 = vpop.f32.mrb[0].mxu0
      %6201 = vmatprep.mubr.f32.mxu0 0.0
      %6202 = vmatmul.mubr.f32.gmra.mrb[0].mxu0 %v5987
      %v6203 = vpop.f32.mrb[0].mxu0
      %v6204 = vadd.f32 0.0, %v6203
      %v6205 = vpop.f32.mrb[0].mxu0
      %6206 = vmatprep.mubr.f32.mxu0 0.0
      %6207 = vmatmul.mubr.f32.gmra.mrb[0].mxu0 %v5990
      %v6208 = vpop.f32.mrb[0].mxu0
      %v6209 = vadd.f32 0.0, %v6208
      %v6210 = vpop.f32.mrb[0].mxu0
      %6211 = vmatprep.mubr.f32.mxu0 0.0
      %6212 = vmatmul.mubr.f32.gmra.mrb[0].mxu0 %v5993
      %v6213 = vpop.f32.mrb[0].mxu0
      %v6214 = vadd.f32 0.0, %v6213
      %v6215 = vpop.f32.mrb[0].mxu0
      %6216 = vmatprep.mubr.f32.mxu0 0.0
      %6217 = vmatmul.mubr.f32.gmra.mrb[0].mxu0 %v5996
      %v6218 = vpop.f32.mrb[0].mxu0
      %v6219 = vadd.f32 0.0, %v6218
      %v6220 = vpop.f32.mrb[0].mxu0
      %6221 = vmatprep.mubr.f32.mxu0 0.0
      %6222 = vmatmul.mubr.f32.gmra.mrb[0].mxu0 %v5999
      %v6223 = vpop.f32.mrb[0].mxu0
      %v6224 = vadd.f32 0.0, %v6223
      %v6225 = vpop.f32.mrb[0].mxu0
      %6226 = vmatprep.mubr.f32.mxu0 0.0
      %6227 = vmatmul.mubr.f32.gmra.mrb[0].mxu0 %v6002
      %v6228 = vpop.f32.mrb[0].mxu0
      %v6229 = vadd.f32 0.0, %v6228
      %v6230 = vpop.f32.mrb[0].mxu0
      %6231 = vdwg.mxu0
      %v6232 = vadd.f32 %v5842, %v6074
      %v6233 = vadd.f32 %v5843, %v6079
      %v6234 = vadd.f32 %v5844, %v6084
      %v6235 = vadd.f32 %v5845, %v6089
      %v6236 = vadd.f32 %v5846, %v6094
      %v6237 = vadd.f32 %v5847, %v6099
      %v6238 = vadd.f32 %v5848, %v6104
      %v6239 = vadd.f32 %v5849, %v6109
      %v6240 = vadd.f32 %v5850, %v6114
      %v6241 = vadd.f32 %v5851, %v6119
      %v6242 = vadd.f32 %v5852, %v6124
      %v6243 = vadd.f32 %v5853, %v6129
      %v6244 = vadd.f32 %v5854, %v6134
      %v6245 = vadd.f32 %v5855, %v6139
      %v6246 = vadd.f32 %v5856, %v6144
      %v6247 = vadd.f32 %v5857, %v6149
      %v6248 = vadd.f32 %v5858, %v6154
      %v6249 = vadd.f32 %v5859, %v6159
      %v6250 = vadd.f32 %v5860, %v6164
      %v6251 = vadd.f32 %v5861, %v6169
      %v6252 = vadd.f32 %v5862, %v6174
      %v6253 = vadd.f32 %v5863, %v6179
      %v6254 = vadd.f32 %v5864, %v6184
      %v6255 = vadd.f32 %v5865, %v6189
      %v6256 = vadd.f32 %v5866, %v6194
      %v6257 = vadd.f32 %v5867, %v6199
      %v6258 = vadd.f32 %v5868, %v6204
      %v6259 = vadd.f32 %v5869, %v6209
      %v6260 = vadd.f32 %v5870, %v6214
      %v6261 = vadd.f32 %v5871, %v6219
      %v6262 = vadd.f32 %v5872, %v6224
      %v6263 = vadd.f32 %v5873, %v6229
      %v6264 = vld [vmem:[%s2676] sm:$0xff]
      %v6265 = vld [vmem:[%s2676 + $0x8] sm:$0xff]
      %v6266 = vld [vmem:[%s2676 + $0x18] sm:$0xff]
      %v6267 = vld [vmem:[%s2676 + $0x20] sm:$0xff]
      %v6268 = vld [vmem:[%s2676 + $0x30] sm:$0xff]
      %v6269 = vld [vmem:[%s2676 + $0x38] sm:$0xff]
      %v6270 = vld [vmem:[%s2676 + $0x48] sm:$0xff]
      %v6271 = vld [vmem:[%s2676 + $0x50] sm:$0xff]
      %v6272 = vld [vmem:[%s2676 + $0x60] sm:$0xff]
      %v6273 = vld [vmem:[%s2676 + $0x68] sm:$0xff]
      %v6274 = vld [vmem:[%s2676 + $0x78] sm:$0xff]
      %v6275 = vld [vmem:[%s2676 + $0x80] sm:$0xff]
      %v6276 = vld [vmem:[%s2676 + $0x90] sm:$0xff]
      %v6277 = vld [vmem:[%s2676 + $0x98] sm:$0xff]
      %v6278 = vld [vmem:[%s2676 + $0xa8] sm:$0xff]
      %v6279 = vld [vmem:[%s2676 + $0xb0] sm:$0xff]
      %v6280 = vld [vmem:[%s2676 + $0xc0] sm:$0xff]
      %v6281 = vld [vmem:[%s2676 + $0xc8] sm:$0xff]
      %v6282 = vld [vmem:[%s2676 + $0xd8] sm:$0xff]
      %v6283 = vld [vmem:[%s2676 + $0xe0] sm:$0xff]
      %v6284 = vld [vmem:[%s2676 + $0xf0] sm:$0xff]
      %v6285 = vld [vmem:[%s2676 + $0xf8] sm:$0xff]
      %v6286 = vld [vmem:[%s2676 + $0x108] sm:$0xff]
      %v6287 = vld [vmem:[%s2676 + $0x110] sm:$0xff]
      %v6288 = vld [vmem:[%s2676 + $0x120] sm:$0xff]
      %v6289 = vld [vmem:[%s2676 + $0x128] sm:$0xff]
      %v6290 = vld [vmem:[%s2676 + $0x138] sm:$0xff]
      %v6291 = vld [vmem:[%s2676 + $0x140] sm:$0xff]
      %v6292 = vld [vmem:[%s2676 + $0x150] sm:$0xff]
      %v6293 = vld [vmem:[%s2676 + $0x158] sm:$0xff]
      %v6294 = vld [vmem:[%s2676 + $0x168] sm:$0xff]
      %v6295 = vld [vmem:[%s2676 + $0x170] sm:$0xff]
      %s6296 = scalar_lea.vmem %s2, 24
      %v6297 = vld [vmem:[%s6296] sm:$0xf]
      %v6299 = vsel %vm311, %v6264, 0
      %v6302 = vsel %vm311, %v6265, 0
      %v6305 = vsel %vm311, %v6266, 0
      %v6308 = vsel %vm311, %v6267, 0
      %v6311 = vsel %vm311, %v6268, 0
      %v6314 = vsel %vm311, %v6269, 0
      %v6317 = vsel %vm311, %v6270, 0
      %v6320 = vsel %vm311, %v6271, 0
      %v6323 = vsel %vm311, %v6272, 0
      %v6326 = vsel %vm311, %v6273, 0
      %v6329 = vsel %vm311, %v6274, 0
      %v6332 = vsel %vm311, %v6275, 0
      %v6335 = vsel %vm311, %v6276, 0
      %v6338 = vsel %vm311, %v6277, 0
      %v6341 = vsel %vm311, %v6278, 0
      %v6344 = vsel %vm311, %v6279, 0
      %v6347 = vsel %vm311, %v6280, 0
      %v6350 = vsel %vm311, %v6281, 0
      %v6353 = vsel %vm311, %v6282, 0
      %v6356 = vsel %vm311, %v6283, 0
      %v6359 = vsel %vm311, %v6284, 0
      %v6362 = vsel %vm311, %v6285, 0
      %v6365 = vsel %vm311, %v6286, 0
      %v6368 = vsel %vm311, %v6287, 0
      %v6371 = vsel %vm311, %v6288, 0
      %v6374 = vsel %vm311, %v6289, 0
      %v6377 = vsel %vm311, %v6290, 0
      %v6380 = vsel %vm311, %v6291, 0
      %v6383 = vsel %vm311, %v6292, 0
      %v6386 = vsel %vm311, %v6293, 0
      %v6389 = vsel %vm311, %v6294, 0
      %v6392 = vsel %vm311, %v6295, 0
      %v6395 = vsel %vm563, %v6297, 0
      %6397 = vmatprep.subr.mxu0 0.0
      %6398 = vmatpush1.msra.mxu0 %v6395
      %6399 = vmatprep.subr.mxu0 0.0
      %6400 = vmatpush1.msra.mxu0 0.0
      %6401 = vmatprep.subr.mxu0 0.0
      %6402 = vmatpush1.msra.mxu0 0.0
      %6403 = vmatprep.subr.mxu0 0.0
      %6404 = vmatpush1.msra.mxu0 0.0
      %6405 = vmatprep.subr.mxu0 0.0
      %6406 = vmatpush1.msra.mxu0 0.0
      %6407 = vmatprep.subr.mxu0 0.0
      %6408 = vmatpush1.msra.mxu0 0.0
      %6409 = vmatprep.subr.mxu0 0.0
      %6410 = vmatpush1.msra.mxu0 0.0
      %6411 = vmatprep.subr.mxu0 0.0
      %6412 = vmatpush1.msra.mxu0 0.0
      %6413 = vmatprep.subr.mxu0 0.0
      %6414 = vmatpush1.msra.mxu0 0.0
      %6415 = vmatprep.subr.mxu0 0.0
      %6416 = vmatpush1.msra.mxu0 0.0
      %6417 = vmatprep.subr.mxu0 0.0
      %6418 = vmatpush1.msra.mxu0 0.0
      %6419 = vmatprep.subr.mxu0 0.0
      %6420 = vmatpush1.msra.mxu0 0.0
      %6421 = vmatprep.subr.mxu0 0.0
      %6422 = vmatpush1.msra.mxu0 0.0
      %6423 = vmatprep.subr.mxu0 0.0
      %6424 = vmatpush1.msra.mxu0 0.0
      %6425 = vmatprep.subr.mxu0 0.0
      %6426 = vmatpush1.msra.mxu0 0.0
      %6427 = vmatprep.subr.mxu0 0.0
      %6428 = vmatpush1.msra.mxu0 0.0
      %6429 = vmatprep.subr.mxu0 0.0
      %6430 = vmatpush1.msra.mxu0 0.0
      %6431 = vmatprep.subr.mxu0 0.0
      %6432 = vmatpush1.msra.mxu0 0.0
      %6433 = vmatprep.subr.mxu0 0.0
      %6434 = vmatpush1.msra.mxu0 0.0
      %6435 = vmatprep.subr.mxu0 0.0
      %6436 = vmatpush1.msra.mxu0 0.0
      %6437 = vmatprep.subr.mxu0 0.0
      %6438 = vmatpush1.msra.mxu0 0.0
      %6439 = vmatprep.subr.mxu0 0.0
      %6440 = vmatpush1.msra.mxu0 0.0
      %6441 = vmatprep.subr.mxu0 0.0
      %6442 = vmatpush1.msra.mxu0 0.0
      %6443 = vmatprep.subr.mxu0 0.0
      %6444 = vmatpush1.msra.mxu0 0.0
      %6445 = vmatprep.subr.mxu0 0.0
      %6446 = vmatpush1.msra.mxu0 0.0
      %6447 = vmatprep.subr.mxu0 0.0
      %6448 = vmatpush1.msra.mxu0 0.0
      %6449 = vmatprep.subr.mxu0 0.0
      %6450 = vmatpush1.msra.mxu0 0.0
      %6451 = vmatprep.subr.mxu0 0.0
      %6452 = vmatpush1.msra.mxu0 0.0
      %6453 = vmatprep.subr.mxu0 0.0
      %6454 = vmatpush1.msra.mxu0 0.0
      %6455 = vmatprep.subr.mxu0 0.0
      %6456 = vmatpush1.msra.mxu0 0.0
      %6457 = vmatprep.subr.mxu0 0.0
      %6458 = vmatpush1.msra.mxu0 0.0
      %6459 = vmatprep.subr.mxu0 0.0
      %6460 = vmatpush1.msra.mxu0 0.0
      %6461 = vmatprep.mubr.f32.mxu0 0.0
      %6462 = vmatmul.mubr.f32.gmra.mrb[0].mxu0 %v6299
      %v6463 = vpop.f32.mrb[0].mxu0
      %v6464 = vadd.f32 0.0, %v6463
      %v6465 = vpop.f32.mrb[0].mxu0
      %6466 = vmatprep.mubr.f32.mxu0 0.0
      %6467 = vmatmul.mubr.f32.gmra.mrb[0].mxu0 %v6302
      %v6468 = vpop.f32.mrb[0].mxu0
      %v6469 = vadd.f32 0.0, %v6468
      %v6470 = vpop.f32.mrb[0].mxu0
      %6471 = vmatprep.mubr.f32.mxu0 0.0
      %6472 = vmatmul.mubr.f32.gmra.mrb[0].mxu0 %v6305
      %v6473 = vpop.f32.mrb[0].mxu0
      %v6474 = vadd.f32 0.0, %v6473
      %v6475 = vpop.f32.mrb[0].mxu0
      %6476 = vmatprep.mubr.f32.mxu0 0.0
      %6477 = vmatmul.mubr.f32.gmra.mrb[0].mxu0 %v6308
      %v6478 = vpop.f32.mrb[0].mxu0
      %v6479 = vadd.f32 0.0, %v6478
      %v6480 = vpop.f32.mrb[0].mxu0
      %6481 = vmatprep.mubr.f32.mxu0 0.0
      %6482 = vmatmul.mubr.f32.gmra.mrb[0].mxu0 %v6311
      %v6483 = vpop.f32.mrb[0].mxu0
      %v6484 = vadd.f32 0.0, %v6483
      %v6485 = vpop.f32.mrb[0].mxu0
      %6486 = vmatprep.mubr.f32.mxu0 0.0
      %6487 = vmatmul.mubr.f32.gmra.mrb[0].mxu0 %v6314
      %v6488 = vpop.f32.mrb[0].mxu0
      %v6489 = vadd.f32 0.0, %v6488
      %v6490 = vpop.f32.mrb[0].mxu0
      %6491 = vmatprep.mubr.f32.mxu0 0.0
      %6492 = vmatmul.mubr.f32.gmra.mrb[0].mxu0 %v6317
      %v6493 = vpop.f32.mrb[0].mxu0
      %v6494 = vadd.f32 0.0, %v6493
      %v6495 = vpop.f32.mrb[0].mxu0
      %6496 = vmatprep.mubr.f32.mxu0 0.0
      %6497 = vmatmul.mubr.f32.gmra.mrb[0].mxu0 %v6320
      %v6498 = vpop.f32.mrb[0].mxu0
      %v6499 = vadd.f32 0.0, %v6498
      %v6500 = vpop.f32.mrb[0].mxu0
      %6501 = vmatprep.mubr.f32.mxu0 0.0
      %6502 = vmatmul.mubr.f32.gmra.mrb[0].mxu0 %v6323
      %v6503 = vpop.f32.mrb[0].mxu0
      %v6504 = vadd.f32 0.0, %v6503
      %v6505 = vpop.f32.mrb[0].mxu0
      %6506 = vmatprep.mubr.f32.mxu0 0.0
      %6507 = vmatmul.mubr.f32.gmra.mrb[0].mxu0 %v6326
      %v6508 = vpop.f32.mrb[0].mxu0
      %v6509 = vadd.f32 0.0, %v6508
      %v6510 = vpop.f32.mrb[0].mxu0
      %6511 = vmatprep.mubr.f32.mxu0 0.0
      %6512 = vmatmul.mubr.f32.gmra.mrb[0].mxu0 %v6329
      %v6513 = vpop.f32.mrb[0].mxu0
      %v6514 = vadd.f32 0.0, %v6513
      %v6515 = vpop.f32.mrb[0].mxu0
      %6516 = vmatprep.mubr.f32.mxu0 0.0
      %6517 = vmatmul.mubr.f32.gmra.mrb[0].mxu0 %v6332
      %v6518 = vpop.f32.mrb[0].mxu0
      %v6519 = vadd.f32 0.0, %v6518
      %v6520 = vpop.f32.mrb[0].mxu0
      %6521 = vmatprep.mubr.f32.mxu0 0.0
      %6522 = vmatmul.mubr.f32.gmra.mrb[0].mxu0 %v6335
      %v6523 = vpop.f32.mrb[0].mxu0
      %v6524 = vadd.f32 0.0, %v6523
      %v6525 = vpop.f32.mrb[0].mxu0
      %6526 = vmatprep.mubr.f32.mxu0 0.0
      %6527 = vmatmul.mubr.f32.gmra.mrb[0].mxu0 %v6338
      %v6528 = vpop.f32.mrb[0].mxu0
      %v6529 = vadd.f32 0.0, %v6528
      %v6530 = vpop.f32.mrb[0].mxu0
      %6531 = vmatprep.mubr.f32.mxu0 0.0
      %6532 = vmatmul.mubr.f32.gmra.mrb[0].mxu0 %v6341
      %v6533 = vpop.f32.mrb[0].mxu0
      %v6534 = vadd.f32 0.0, %v6533
      %v6535 = vpop.f32.mrb[0].mxu0
      %6536 = vmatprep.mubr.f32.mxu0 0.0
      %6537 = vmatmul.mubr.f32.gmra.mrb[0].mxu0 %v6344
      %v6538 = vpop.f32.mrb[0].mxu0
      %v6539 = vadd.f32 0.0, %v6538
      %v6540 = vpop.f32.mrb[0].mxu0
      %6541 = vmatprep.mubr.f32.mxu0 0.0
      %6542 = vmatmul.mubr.f32.gmra.mrb[0].mxu0 %v6347
      %v6543 = vpop.f32.mrb[0].mxu0
      %v6544 = vadd.f32 0.0, %v6543
      %v6545 = vpop.f32.mrb[0].mxu0
      %6546 = vmatprep.mubr.f32.mxu0 0.0
      %6547 = vmatmul.mubr.f32.gmra.mrb[0].mxu0 %v6350
      %v6548 = vpop.f32.mrb[0].mxu0
      %v6549 = vadd.f32 0.0, %v6548
      %v6550 = vpop.f32.mrb[0].mxu0
      %6551 = vmatprep.mubr.f32.mxu0 0.0
      %6552 = vmatmul.mubr.f32.gmra.mrb[0].mxu0 %v6353
      %v6553 = vpop.f32.mrb[0].mxu0
      %v6554 = vadd.f32 0.0, %v6553
      %v6555 = vpop.f32.mrb[0].mxu0
      %6556 = vmatprep.mubr.f32.mxu0 0.0
      %6557 = vmatmul.mubr.f32.gmra.mrb[0].mxu0 %v6356
      %v6558 = vpop.f32.mrb[0].mxu0
      %v6559 = vadd.f32 0.0, %v6558
      %v6560 = vpop.f32.mrb[0].mxu0
      %6561 = vmatprep.mubr.f32.mxu0 0.0
      %6562 = vmatmul.mubr.f32.gmra.mrb[0].mxu0 %v6359
      %v6563 = vpop.f32.mrb[0].mxu0
      %v6564 = vadd.f32 0.0, %v6563
      %v6565 = vpop.f32.mrb[0].mxu0
      %6566 = vmatprep.mubr.f32.mxu0 0.0
      %6567 = vmatmul.mubr.f32.gmra.mrb[0].mxu0 %v6362
      %v6568 = vpop.f32.mrb[0].mxu0
      %v6569 = vadd.f32 0.0, %v6568
      %v6570 = vpop.f32.mrb[0].mxu0
      %6571 = vmatprep.mubr.f32.mxu0 0.0
      %6572 = vmatmul.mubr.f32.gmra.mrb[0].mxu0 %v6365
      %v6573 = vpop.f32.mrb[0].mxu0
      %v6574 = vadd.f32 0.0, %v6573
      %v6575 = vpop.f32.mrb[0].mxu0
      %6576 = vmatprep.mubr.f32.mxu0 0.0
      %6577 = vmatmul.mubr.f32.gmra.mrb[0].mxu0 %v6368
      %v6578 = vpop.f32.mrb[0].mxu0
      %v6579 = vadd.f32 0.0, %v6578
      %v6580 = vpop.f32.mrb[0].mxu0
      %6581 = vmatprep.mubr.f32.mxu0 0.0
      %6582 = vmatmul.mubr.f32.gmra.mrb[0].mxu0 %v6371
      %v6583 = vpop.f32.mrb[0].mxu0
      %v6584 = vadd.f32 0.0, %v6583
      %v6585 = vpop.f32.mrb[0].mxu0
      %6586 = vmatprep.mubr.f32.mxu0 0.0
      %6587 = vmatmul.mubr.f32.gmra.mrb[0].mxu0 %v6374
      %v6588 = vpop.f32.mrb[0].mxu0
      %v6589 = vadd.f32 0.0, %v6588
      %v6590 = vpop.f32.mrb[0].mxu0
      %6591 = vmatprep.mubr.f32.mxu0 0.0
      %6592 = vmatmul.mubr.f32.gmra.mrb[0].mxu0 %v6377
      %v6593 = vpop.f32.mrb[0].mxu0
      %v6594 = vadd.f32 0.0, %v6593
      %v6595 = vpop.f32.mrb[0].mxu0
      %6596 = vmatprep.mubr.f32.mxu0 0.0
      %6597 = vmatmul.mubr.f32.gmra.mrb[0].mxu0 %v6380
      %v6598 = vpop.f32.mrb[0].mxu0
      %v6599 = vadd.f32 0.0, %v6598
      %v6600 = vpop.f32.mrb[0].mxu0
      %6601 = vmatprep.mubr.f32.mxu0 0.0
      %6602 = vmatmul.mubr.f32.gmra.mrb[0].mxu0 %v6383
      %v6603 = vpop.f32.mrb[0].mxu0
      %v6604 = vadd.f32 0.0, %v6603
      %v6605 = vpop.f32.mrb[0].mxu0
      %6606 = vmatprep.mubr.f32.mxu0 0.0
      %6607 = vmatmul.mubr.f32.gmra.mrb[0].mxu0 %v6386
      %v6608 = vpop.f32.mrb[0].mxu0
      %v6609 = vadd.f32 0.0, %v6608
      %v6610 = vpop.f32.mrb[0].mxu0
      %6611 = vmatprep.mubr.f32.mxu0 0.0
      %6612 = vmatmul.mubr.f32.gmra.mrb[0].mxu0 %v6389
      %v6613 = vpop.f32.mrb[0].mxu0
      %v6614 = vadd.f32 0.0, %v6613
      %v6615 = vpop.f32.mrb[0].mxu0
      %6616 = vmatprep.mubr.f32.mxu0 0.0
      %6617 = vmatmul.mubr.f32.gmra.mrb[0].mxu0 %v6392
      %v6618 = vpop.f32.mrb[0].mxu0
      %v6619 = vadd.f32 0.0, %v6618
      %v6620 = vpop.f32.mrb[0].mxu0
      %6621 = vdwg.mxu0
      %v6622 = vadd.f32 %v6232, %v6464
      %v6623 = vadd.f32 %v6233, %v6469
      %v6624 = vadd.f32 %v6234, %v6474
      %v6625 = vadd.f32 %v6235, %v6479
      %v6626 = vadd.f32 %v6236, %v6484
      %v6627 = vadd.f32 %v6237, %v6489
      %v6628 = vadd.f32 %v6238, %v6494
      %v6629 = vadd.f32 %v6239, %v6499
      %v6630 = vadd.f32 %v6240, %v6504
      %v6631 = vadd.f32 %v6241, %v6509
      %v6632 = vadd.f32 %v6242, %v6514
      %v6633 = vadd.f32 %v6243, %v6519
      %v6634 = vadd.f32 %v6244, %v6524
      %v6635 = vadd.f32 %v6245, %v6529
      %v6636 = vadd.f32 %v6246, %v6534
      %v6637 = vadd.f32 %v6247, %v6539
      %v6638 = vadd.f32 %v6248, %v6544
      %v6639 = vadd.f32 %v6249, %v6549
      %v6640 = vadd.f32 %v6250, %v6554
      %v6641 = vadd.f32 %v6251, %v6559
      %v6642 = vadd.f32 %v6252, %v6564
      %v6643 = vadd.f32 %v6253, %v6569
      %v6644 = vadd.f32 %v6254, %v6574
      %v6645 = vadd.f32 %v6255, %v6579
      %v6646 = vadd.f32 %v6256, %v6584
      %v6647 = vadd.f32 %v6257, %v6589
      %v6648 = vadd.f32 %v6258, %v6594
      %v6649 = vadd.f32 %v6259, %v6599
      %v6650 = vadd.f32 %v6260, %v6604
      %v6651 = vadd.f32 %v6261, %v6609
      %v6652 = vadd.f32 %v6262, %v6614
      %v6653 = vadd.f32 %v6263, %v6619
      %v6654 = vld [vmem:[%s2676 + $0x1] sm:$0xff]
      %v6655 = vld [vmem:[%s2676 + $0x9] sm:$0xff]
      %v6656 = vld [vmem:[%s2676 + $0x19] sm:$0xff]
      %v6657 = vld [vmem:[%s2676 + $0x21] sm:$0xff]
      %v6658 = vld [vmem:[%s2676 + $0x31] sm:$0xff]
      %v6659 = vld [vmem:[%s2676 + $0x39] sm:$0xff]
      %v6660 = vld [vmem:[%s2676 + $0x49] sm:$0xff]
      %v6661 = vld [vmem:[%s2676 + $0x51] sm:$0xff]
      %v6662 = vld [vmem:[%s2676 + $0x61] sm:$0xff]
      %v6663 = vld [vmem:[%s2676 + $0x69] sm:$0xff]
      %v6664 = vld [vmem:[%s2676 + $0x79] sm:$0xff]
      %v6665 = vld [vmem:[%s2676 + $0x81] sm:$0xff]
      %v6666 = vld [vmem:[%s2676 + $0x91] sm:$0xff]
      %v6667 = vld [vmem:[%s2676 + $0x99] sm:$0xff]
      %v6668 = vld [vmem:[%s2676 + $0xa9] sm:$0xff]
      %v6669 = vld [vmem:[%s2676 + $0xb1] sm:$0xff]
      %v6670 = vld [vmem:[%s2676 + $0xc1] sm:$0xff]
      %v6671 = vld [vmem:[%s2676 + $0xc9] sm:$0xff]
      %v6672 = vld [vmem:[%s2676 + $0xd9] sm:$0xff]
      %v6673 = vld [vmem:[%s2676 + $0xe1] sm:$0xff]
      %v6674 = vld [vmem:[%s2676 + $0xf1] sm:$0xff]
      %v6675 = vld [vmem:[%s2676 + $0xf9] sm:$0xff]
      %v6676 = vld [vmem:[%s2676 + $0x109] sm:$0xff]
      %v6677 = vld [vmem:[%s2676 + $0x111] sm:$0xff]
      %v6678 = vld [vmem:[%s2676 + $0x121] sm:$0xff]
      %v6679 = vld [vmem:[%s2676 + $0x129] sm:$0xff]
      %v6680 = vld [vmem:[%s2676 + $0x139] sm:$0xff]
      %v6681 = vld [vmem:[%s2676 + $0x141] sm:$0xff]
      %v6682 = vld [vmem:[%s2676 + $0x151] sm:$0xff]
      %v6683 = vld [vmem:[%s2676 + $0x159] sm:$0xff]
      %v6684 = vld [vmem:[%s2676 + $0x169] sm:$0xff]
      %v6685 = vld [vmem:[%s2676 + $0x171] sm:$0xff]
      %s6686 = scalar_lea.vmem %s2, 28
      %v6687 = vld [vmem:[%s6686] sm:$0xf]
      %v6689 = vsel %vm311, %v6654, 0
      %v6692 = vsel %vm311, %v6655, 0
      %v6695 = vsel %vm311, %v6656, 0
      %v6698 = vsel %vm311, %v6657, 0
      %v6701 = vsel %vm311, %v6658, 0
      %v6704 = vsel %vm311, %v6659, 0
      %v6707 = vsel %vm311, %v6660, 0
      %v6710 = vsel %vm311, %v6661, 0
      %v6713 = vsel %vm311, %v6662, 0
      %v6716 = vsel %vm311, %v6663, 0
      %v6719 = vsel %vm311, %v6664, 0
      %v6722 = vsel %vm311, %v6665, 0
      %v6725 = vsel %vm311, %v6666, 0
      %v6728 = vsel %vm311, %v6667, 0
      %v6731 = vsel %vm311, %v6668, 0
      %v6734 = vsel %vm311, %v6669, 0
      %v6737 = vsel %vm311, %v6670, 0
      %v6740 = vsel %vm311, %v6671, 0
      %v6743 = vsel %vm311, %v6672, 0
      %v6746 = vsel %vm311, %v6673, 0
      %v6749 = vsel %vm311, %v6674, 0
      %v6752 = vsel %vm311, %v6675, 0
      %v6755 = vsel %vm311, %v6676, 0
      %v6758 = vsel %vm311, %v6677, 0
      %v6761 = vsel %vm311, %v6678, 0
      %v6764 = vsel %vm311, %v6679, 0
      %v6767 = vsel %vm311, %v6680, 0
      %v6770 = vsel %vm311, %v6681, 0
      %v6773 = vsel %vm311, %v6682, 0
      %v6776 = vsel %vm311, %v6683, 0
      %v6779 = vsel %vm311, %v6684, 0
      %v6782 = vsel %vm311, %v6685, 0
      %v6785 = vsel %vm563, %v6687, 0
      %6787 = vmatprep.subr.mxu0 0.0
      %6788 = vmatpush1.msra.mxu0 %v6785
      %6789 = vmatprep.subr.mxu0 0.0
      %6790 = vmatpush1.msra.mxu0 0.0
      %6791 = vmatprep.subr.mxu0 0.0
      %6792 = vmatpush1.msra.mxu0 0.0
      %6793 = vmatprep.subr.mxu0 0.0
      %6794 = vmatpush1.msra.mxu0 0.0
      %6795 = vmatprep.subr.mxu0 0.0
      %6796 = vmatpush1.msra.mxu0 0.0
      %6797 = vmatprep.subr.mxu0 0.0
      %6798 = vmatpush1.msra.mxu0 0.0
      %6799 = vmatprep.subr.mxu0 0.0
      %6800 = vmatpush1.msra.mxu0 0.0
      %6801 = vmatprep.subr.mxu0 0.0
      %6802 = vmatpush1.msra.mxu0 0.0
      %6803 = vmatprep.subr.mxu0 0.0
      %6804 = vmatpush1.msra.mxu0 0.0
      %6805 = vmatprep.subr.mxu0 0.0
      %6806 = vmatpush1.msra.mxu0 0.0
      %6807 = vmatprep.subr.mxu0 0.0
      %6808 = vmatpush1.msra.mxu0 0.0
      %6809 = vmatprep.subr.mxu0 0.0
      %6810 = vmatpush1.msra.mxu0 0.0
      %6811 = vmatprep.subr.mxu0 0.0
      %6812 = vmatpush1.msra.mxu0 0.0
      %6813 = vmatprep.subr.mxu0 0.0
      %6814 = vmatpush1.msra.mxu0 0.0
      %6815 = vmatprep.subr.mxu0 0.0
      %6816 = vmatpush1.msra.mxu0 0.0
      %6817 = vmatprep.subr.mxu0 0.0
      %6818 = vmatpush1.msra.mxu0 0.0
      %6819 = vmatprep.subr.mxu0 0.0
      %6820 = vmatpush1.msra.mxu0 0.0
      %6821 = vmatprep.subr.mxu0 0.0
      %6822 = vmatpush1.msra.mxu0 0.0
      %6823 = vmatprep.subr.mxu0 0.0
      %6824 = vmatpush1.msra.mxu0 0.0
      %6825 = vmatprep.subr.mxu0 0.0
      %6826 = vmatpush1.msra.mxu0 0.0
      %6827 = vmatprep.subr.mxu0 0.0
      %6828 = vmatpush1.msra.mxu0 0.0
      %6829 = vmatprep.subr.mxu0 0.0
      %6830 = vmatpush1.msra.mxu0 0.0
      %6831 = vmatprep.subr.mxu0 0.0
      %6832 = vmatpush1.msra.mxu0 0.0
      %6833 = vmatprep.subr.mxu0 0.0
      %6834 = vmatpush1.msra.mxu0 0.0
      %6835 = vmatprep.subr.mxu0 0.0
      %6836 = vmatpush1.msra.mxu0 0.0
      %6837 = vmatprep.subr.mxu0 0.0
      %6838 = vmatpush1.msra.mxu0 0.0
      %6839 = vmatprep.subr.mxu0 0.0
      %6840 = vmatpush1.msra.mxu0 0.0
      %6841 = vmatprep.subr.mxu0 0.0
      %6842 = vmatpush1.msra.mxu0 0.0
      %6843 = vmatprep.subr.mxu0 0.0
      %6844 = vmatpush1.msra.mxu0 0.0
      %6845 = vmatprep.subr.mxu0 0.0
      %6846 = vmatpush1.msra.mxu0 0.0
      %6847 = vmatprep.subr.mxu0 0.0
      %6848 = vmatpush1.msra.mxu0 0.0
      %6849 = vmatprep.subr.mxu0 0.0
      %6850 = vmatpush1.msra.mxu0 0.0
      %6851 = vmatprep.mubr.f32.mxu0 0.0
      %6852 = vmatmul.mubr.f32.gmra.mrb[0].mxu0 %v6689
      %v6853 = vpop.f32.mrb[0].mxu0
      %v6854 = vadd.f32 0.0, %v6853
      %v6855 = vpop.f32.mrb[0].mxu0
      %6856 = vmatprep.mubr.f32.mxu0 0.0
      %6857 = vmatmul.mubr.f32.gmra.mrb[0].mxu0 %v6692
      %v6858 = vpop.f32.mrb[0].mxu0
      %v6859 = vadd.f32 0.0, %v6858
      %v6860 = vpop.f32.mrb[0].mxu0
      %6861 = vmatprep.mubr.f32.mxu0 0.0
      %6862 = vmatmul.mubr.f32.gmra.mrb[0].mxu0 %v6695
      %v6863 = vpop.f32.mrb[0].mxu0
      %v6864 = vadd.f32 0.0, %v6863
      %v6865 = vpop.f32.mrb[0].mxu0
      %6866 = vmatprep.mubr.f32.mxu0 0.0
      %6867 = vmatmul.mubr.f32.gmra.mrb[0].mxu0 %v6698
      %v6868 = vpop.f32.mrb[0].mxu0
      %v6869 = vadd.f32 0.0, %v6868
      %v6870 = vpop.f32.mrb[0].mxu0
      %6871 = vmatprep.mubr.f32.mxu0 0.0
      %6872 = vmatmul.mubr.f32.gmra.mrb[0].mxu0 %v6701
      %v6873 = vpop.f32.mrb[0].mxu0
      %v6874 = vadd.f32 0.0, %v6873
      %v6875 = vpop.f32.mrb[0].mxu0
      %6876 = vmatprep.mubr.f32.mxu0 0.0
      %6877 = vmatmul.mubr.f32.gmra.mrb[0].mxu0 %v6704
      %v6878 = vpop.f32.mrb[0].mxu0
      %v6879 = vadd.f32 0.0, %v6878
      %v6880 = vpop.f32.mrb[0].mxu0
      %6881 = vmatprep.mubr.f32.mxu0 0.0
      %6882 = vmatmul.mubr.f32.gmra.mrb[0].mxu0 %v6707
      %v6883 = vpop.f32.mrb[0].mxu0
      %v6884 = vadd.f32 0.0, %v6883
      %v6885 = vpop.f32.mrb[0].mxu0
      %6886 = vmatprep.mubr.f32.mxu0 0.0
      %6887 = vmatmul.mubr.f32.gmra.mrb[0].mxu0 %v6710
      %v6888 = vpop.f32.mrb[0].mxu0
      %v6889 = vadd.f32 0.0, %v6888
      %v6890 = vpop.f32.mrb[0].mxu0
      %6891 = vmatprep.mubr.f32.mxu0 0.0
      %6892 = vmatmul.mubr.f32.gmra.mrb[0].mxu0 %v6713
      %v6893 = vpop.f32.mrb[0].mxu0
      %v6894 = vadd.f32 0.0, %v6893
      %v6895 = vpop.f32.mrb[0].mxu0
      %6896 = vmatprep.mubr.f32.mxu0 0.0
      %6897 = vmatmul.mubr.f32.gmra.mrb[0].mxu0 %v6716
      %v6898 = vpop.f32.mrb[0].mxu0
      %v6899 = vadd.f32 0.0, %v6898
      %v6900 = vpop.f32.mrb[0].mxu0
      %6901 = vmatprep.mubr.f32.mxu0 0.0
      %6902 = vmatmul.mubr.f32.gmra.mrb[0].mxu0 %v6719
      %v6903 = vpop.f32.mrb[0].mxu0
      %v6904 = vadd.f32 0.0, %v6903
      %v6905 = vpop.f32.mrb[0].mxu0
      %6906 = vmatprep.mubr.f32.mxu0 0.0
      %6907 = vmatmul.mubr.f32.gmra.mrb[0].mxu0 %v6722
      %v6908 = vpop.f32.mrb[0].mxu0
      %v6909 = vadd.f32 0.0, %v6908
      %v6910 = vpop.f32.mrb[0].mxu0
      %6911 = vmatprep.mubr.f32.mxu0 0.0
      %6912 = vmatmul.mubr.f32.gmra.mrb[0].mxu0 %v6725
      %v6913 = vpop.f32.mrb[0].mxu0
      %v6914 = vadd.f32 0.0, %v6913
      %v6915 = vpop.f32.mrb[0].mxu0
      %6916 = vmatprep.mubr.f32.mxu0 0.0
      %6917 = vmatmul.mubr.f32.gmra.mrb[0].mxu0 %v6728
      %v6918 = vpop.f32.mrb[0].mxu0
      %v6919 = vadd.f32 0.0, %v6918
      %v6920 = vpop.f32.mrb[0].mxu0
      %6921 = vmatprep.mubr.f32.mxu0 0.0
      %6922 = vmatmul.mubr.f32.gmra.mrb[0].mxu0 %v6731
      %v6923 = vpop.f32.mrb[0].mxu0
      %v6924 = vadd.f32 0.0, %v6923
      %v6925 = vpop.f32.mrb[0].mxu0
      %6926 = vmatprep.mubr.f32.mxu0 0.0
      %6927 = vmatmul.mubr.f32.gmra.mrb[0].mxu0 %v6734
      %v6928 = vpop.f32.mrb[0].mxu0
      %v6929 = vadd.f32 0.0, %v6928
      %v6930 = vpop.f32.mrb[0].mxu0
      %6931 = vmatprep.mubr.f32.mxu0 0.0
      %6932 = vmatmul.mubr.f32.gmra.mrb[0].mxu0 %v6737
      %v6933 = vpop.f32.mrb[0].mxu0
      %v6934 = vadd.f32 0.0, %v6933
      %v6935 = vpop.f32.mrb[0].mxu0
      %6936 = vmatprep.mubr.f32.mxu0 0.0
      %6937 = vmatmul.mubr.f32.gmra.mrb[0].mxu0 %v6740
      %v6938 = vpop.f32.mrb[0].mxu0
      %v6939 = vadd.f32 0.0, %v6938
      %v6940 = vpop.f32.mrb[0].mxu0
      %6941 = vmatprep.mubr.f32.mxu0 0.0
      %6942 = vmatmul.mubr.f32.gmra.mrb[0].mxu0 %v6743
      %v6943 = vpop.f32.mrb[0].mxu0
      %v6944 = vadd.f32 0.0, %v6943
      %v6945 = vpop.f32.mrb[0].mxu0
      %6946 = vmatprep.mubr.f32.mxu0 0.0
      %6947 = vmatmul.mubr.f32.gmra.mrb[0].mxu0 %v6746
      %v6948 = vpop.f32.mrb[0].mxu0
      %v6949 = vadd.f32 0.0, %v6948
      %v6950 = vpop.f32.mrb[0].mxu0
      %6951 = vmatprep.mubr.f32.mxu0 0.0
      %6952 = vmatmul.mubr.f32.gmra.mrb[0].mxu0 %v6749
      %v6953 = vpop.f32.mrb[0].mxu0
      %v6954 = vadd.f32 0.0, %v6953
      %v6955 = vpop.f32.mrb[0].mxu0
      %6956 = vmatprep.mubr.f32.mxu0 0.0
      %6957 = vmatmul.mubr.f32.gmra.mrb[0].mxu0 %v6752
      %v6958 = vpop.f32.mrb[0].mxu0
      %v6959 = vadd.f32 0.0, %v6958
      %v6960 = vpop.f32.mrb[0].mxu0
      %6961 = vmatprep.mubr.f32.mxu0 0.0
      %6962 = vmatmul.mubr.f32.gmra.mrb[0].mxu0 %v6755
      %v6963 = vpop.f32.mrb[0].mxu0
      %v6964 = vadd.f32 0.0, %v6963
      %v6965 = vpop.f32.mrb[0].mxu0
      %6966 = vmatprep.mubr.f32.mxu0 0.0
      %6967 = vmatmul.mubr.f32.gmra.mrb[0].mxu0 %v6758
      %v6968 = vpop.f32.mrb[0].mxu0
      %v6969 = vadd.f32 0.0, %v6968
      %v6970 = vpop.f32.mrb[0].mxu0
      %6971 = vmatprep.mubr.f32.mxu0 0.0
      %6972 = vmatmul.mubr.f32.gmra.mrb[0].mxu0 %v6761
      %v6973 = vpop.f32.mrb[0].mxu0
      %v6974 = vadd.f32 0.0, %v6973
      %v6975 = vpop.f32.mrb[0].mxu0
      %6976 = vmatprep.mubr.f32.mxu0 0.0
      %6977 = vmatmul.mubr.f32.gmra.mrb[0].mxu0 %v6764
      %v6978 = vpop.f32.mrb[0].mxu0
      %v6979 = vadd.f32 0.0, %v6978
      %v6980 = vpop.f32.mrb[0].mxu0
      %6981 = vmatprep.mubr.f32.mxu0 0.0
      %6982 = vmatmul.mubr.f32.gmra.mrb[0].mxu0 %v6767
      %v6983 = vpop.f32.mrb[0].mxu0
      %v6984 = vadd.f32 0.0, %v6983
      %v6985 = vpop.f32.mrb[0].mxu0
      %6986 = vmatprep.mubr.f32.mxu0 0.0
      %6987 = vmatmul.mubr.f32.gmra.mrb[0].mxu0 %v6770
      %v6988 = vpop.f32.mrb[0].mxu0
      %v6989 = vadd.f32 0.0, %v6988
      %v6990 = vpop.f32.mrb[0].mxu0
      %6991 = vmatprep.mubr.f32.mxu0 0.0
      %6992 = vmatmul.mubr.f32.gmra.mrb[0].mxu0 %v6773
      %v6993 = vpop.f32.mrb[0].mxu0
      %v6994 = vadd.f32 0.0, %v6993
      %v6995 = vpop.f32.mrb[0].mxu0
      %6996 = vmatprep.mubr.f32.mxu0 0.0
      %6997 = vmatmul.mubr.f32.gmra.mrb[0].mxu0 %v6776
      %v6998 = vpop.f32.mrb[0].mxu0
      %v6999 = vadd.f32 0.0, %v6998
      %v7000 = vpop.f32.mrb[0].mxu0
      %7001 = vmatprep.mubr.f32.mxu0 0.0
      %7002 = vmatmul.mubr.f32.gmra.mrb[0].mxu0 %v6779
      %v7003 = vpop.f32.mrb[0].mxu0
      %v7004 = vadd.f32 0.0, %v7003
      %v7005 = vpop.f32.mrb[0].mxu0
      %7006 = vmatprep.mubr.f32.mxu0 0.0
      %7007 = vmatmul.mubr.f32.gmra.mrb[0].mxu0 %v6782
      %v7008 = vpop.f32.mrb[0].mxu0
      %v7009 = vadd.f32 0.0, %v7008
      %v7010 = vpop.f32.mrb[0].mxu0
      %7011 = vdwg.mxu0
      %v7012 = vadd.f32 %v6622, %v6854
      %v7013 = vadd.f32 %v6623, %v6859
      %v7014 = vadd.f32 %v6624, %v6864
      %v7015 = vadd.f32 %v6625, %v6869
      %v7016 = vadd.f32 %v6626, %v6874
      %v7017 = vadd.f32 %v6627, %v6879
      %v7018 = vadd.f32 %v6628, %v6884
      %v7019 = vadd.f32 %v6629, %v6889
      %v7020 = vadd.f32 %v6630, %v6894
      %v7021 = vadd.f32 %v6631, %v6899
      %v7022 = vadd.f32 %v6632, %v6904
      %v7023 = vadd.f32 %v6633, %v6909
      %v7024 = vadd.f32 %v6634, %v6914
      %v7025 = vadd.f32 %v6635, %v6919
      %v7026 = vadd.f32 %v6636, %v6924
      %v7027 = vadd.f32 %v6637, %v6929
      %v7028 = vadd.f32 %v6638, %v6934
      %v7029 = vadd.f32 %v6639, %v6939
      %v7030 = vadd.f32 %v6640, %v6944
      %v7031 = vadd.f32 %v6641, %v6949
      %v7032 = vadd.f32 %v6642, %v6954
      %v7033 = vadd.f32 %v6643, %v6959
      %v7034 = vadd.f32 %v6644, %v6964
      %v7035 = vadd.f32 %v6645, %v6969
      %v7036 = vadd.f32 %v6646, %v6974
      %v7037 = vadd.f32 %v6647, %v6979
      %v7038 = vadd.f32 %v6648, %v6984
      %v7039 = vadd.f32 %v6649, %v6989
      %v7040 = vadd.f32 %v6650, %v6994
      %v7041 = vadd.f32 %v6651, %v6999
      %v7042 = vadd.f32 %v6652, %v7004
      %v7043 = vadd.f32 %v6653, %v7009
      %v7044 = vld [vmem:[%s2676 + $0x2] sm:$0xff]
      %v7045 = vld [vmem:[%s2676 + $0xa] sm:$0xff]
      %v7046 = vld [vmem:[%s2676 + $0x1a] sm:$0xff]
      %v7047 = vld [vmem:[%s2676 + $0x22] sm:$0xff]
      %v7048 = vld [vmem:[%s2676 + $0x32] sm:$0xff]
      %v7049 = vld [vmem:[%s2676 + $0x3a] sm:$0xff]
      %v7050 = vld [vmem:[%s2676 + $0x4a] sm:$0xff]
      %v7051 = vld [vmem:[%s2676 + $0x52] sm:$0xff]
      %v7052 = vld [vmem:[%s2676 + $0x62] sm:$0xff]
      %v7053 = vld [vmem:[%s2676 + $0x6a] sm:$0xff]
      %v7054 = vld [vmem:[%s2676 + $0x7a] sm:$0xff]
      %v7055 = vld [vmem:[%s2676 + $0x82] sm:$0xff]
      %v7056 = vld [vmem:[%s2676 + $0x92] sm:$0xff]
      %v7057 = vld [vmem:[%s2676 + $0x9a] sm:$0xff]
      %v7058 = vld [vmem:[%s2676 + $0xaa] sm:$0xff]
      %v7059 = vld [vmem:[%s2676 + $0xb2] sm:$0xff]
      %v7060 = vld [vmem:[%s2676 + $0xc2] sm:$0xff]
      %v7061 = vld [vmem:[%s2676 + $0xca] sm:$0xff]
      %v7062 = vld [vmem:[%s2676 + $0xda] sm:$0xff]
      %v7063 = vld [vmem:[%s2676 + $0xe2] sm:$0xff]
      %v7064 = vld [vmem:[%s2676 + $0xf2] sm:$0xff]
      %v7065 = vld [vmem:[%s2676 + $0xfa] sm:$0xff]
      %v7066 = vld [vmem:[%s2676 + $0x10a] sm:$0xff]
      %v7067 = vld [vmem:[%s2676 + $0x112] sm:$0xff]
      %v7068 = vld [vmem:[%s2676 + $0x122] sm:$0xff]
      %v7069 = vld [vmem:[%s2676 + $0x12a] sm:$0xff]
      %v7070 = vld [vmem:[%s2676 + $0x13a] sm:$0xff]
      %v7071 = vld [vmem:[%s2676 + $0x142] sm:$0xff]
      %v7072 = vld [vmem:[%s2676 + $0x152] sm:$0xff]
      %v7073 = vld [vmem:[%s2676 + $0x15a] sm:$0xff]
      %v7074 = vld [vmem:[%s2676 + $0x16a] sm:$0xff]
      %v7075 = vld [vmem:[%s2676 + $0x172] sm:$0xff]
      %s7076 = scalar_lea.vmem %s2, 32
      %v7077 = vld [vmem:[%s7076] sm:$0xf]
      %v7079 = vsel %vm311, %v7044, 0
      %v7082 = vsel %vm311, %v7045, 0
      %v7085 = vsel %vm311, %v7046, 0
      %v7088 = vsel %vm311, %v7047, 0
      %v7091 = vsel %vm311, %v7048, 0
      %v7094 = vsel %vm311, %v7049, 0
      %v7097 = vsel %vm311, %v7050, 0
      %v7100 = vsel %vm311, %v7051, 0
      %v7103 = vsel %vm311, %v7052, 0
      %v7106 = vsel %vm311, %v7053, 0
      %v7109 = vsel %vm311, %v7054, 0
      %v7112 = vsel %vm311, %v7055, 0
      %v7115 = vsel %vm311, %v7056, 0
      %v7118 = vsel %vm311, %v7057, 0
      %v7121 = vsel %vm311, %v7058, 0
      %v7124 = vsel %vm311, %v7059, 0
      %v7127 = vsel %vm311, %v7060, 0
      %v7130 = vsel %vm311, %v7061, 0
      %v7133 = vsel %vm311, %v7062, 0
      %v7136 = vsel %vm311, %v7063, 0
      %v7139 = vsel %vm311, %v7064, 0
      %v7142 = vsel %vm311, %v7065, 0
      %v7145 = vsel %vm311, %v7066, 0
      %v7148 = vsel %vm311, %v7067, 0
      %v7151 = vsel %vm311, %v7068, 0
      %v7154 = vsel %vm311, %v7069, 0
      %v7157 = vsel %vm311, %v7070, 0
      %v7160 = vsel %vm311, %v7071, 0
      %v7163 = vsel %vm311, %v7072, 0
      %v7166 = vsel %vm311, %v7073, 0
      %v7169 = vsel %vm311, %v7074, 0
      %v7172 = vsel %vm311, %v7075, 0
      %v7175 = vsel %vm563, %v7077, 0
      %7177 = vmatprep.subr.mxu0 0.0
      %7178 = vmatpush1.msra.mxu0 %v7175
      %7179 = vmatprep.subr.mxu0 0.0
      %7180 = vmatpush1.msra.mxu0 0.0
      %7181 = vmatprep.subr.mxu0 0.0
      %7182 = vmatpush1.msra.mxu0 0.0
      %7183 = vmatprep.subr.mxu0 0.0
      %7184 = vmatpush1.msra.mxu0 0.0
      %7185 = vmatprep.subr.mxu0 0.0
      %7186 = vmatpush1.msra.mxu0 0.0
      %7187 = vmatprep.subr.mxu0 0.0
      %7188 = vmatpush1.msra.mxu0 0.0
      %7189 = vmatprep.subr.mxu0 0.0
      %7190 = vmatpush1.msra.mxu0 0.0
      %7191 = vmatprep.subr.mxu0 0.0
      %7192 = vmatpush1.msra.mxu0 0.0
      %7193 = vmatprep.subr.mxu0 0.0
      %7194 = vmatpush1.msra.mxu0 0.0
      %7195 = vmatprep.subr.mxu0 0.0
      %7196 = vmatpush1.msra.mxu0 0.0
      %7197 = vmatprep.subr.mxu0 0.0
      %7198 = vmatpush1.msra.mxu0 0.0
      %7199 = vmatprep.subr.mxu0 0.0
      %7200 = vmatpush1.msra.mxu0 0.0
      %7201 = vmatprep.subr.mxu0 0.0
      %7202 = vmatpush1.msra.mxu0 0.0
      %7203 = vmatprep.subr.mxu0 0.0
      %7204 = vmatpush1.msra.mxu0 0.0
      %7205 = vmatprep.subr.mxu0 0.0
      %7206 = vmatpush1.msra.mxu0 0.0
      %7207 = vmatprep.subr.mxu0 0.0
      %7208 = vmatpush1.msra.mxu0 0.0
      %7209 = vmatprep.subr.mxu0 0.0
      %7210 = vmatpush1.msra.mxu0 0.0
      %7211 = vmatprep.subr.mxu0 0.0
      %7212 = vmatpush1.msra.mxu0 0.0
      %7213 = vmatprep.subr.mxu0 0.0
      %7214 = vmatpush1.msra.mxu0 0.0
      %7215 = vmatprep.subr.mxu0 0.0
      %7216 = vmatpush1.msra.mxu0 0.0
      %7217 = vmatprep.subr.mxu0 0.0
      %7218 = vmatpush1.msra.mxu0 0.0
      %7219 = vmatprep.subr.mxu0 0.0
      %7220 = vmatpush1.msra.mxu0 0.0
      %7221 = vmatprep.subr.mxu0 0.0
      %7222 = vmatpush1.msra.mxu0 0.0
      %7223 = vmatprep.subr.mxu0 0.0
      %7224 = vmatpush1.msra.mxu0 0.0
      %7225 = vmatprep.subr.mxu0 0.0
      %7226 = vmatpush1.msra.mxu0 0.0
      %7227 = vmatprep.subr.mxu0 0.0
      %7228 = vmatpush1.msra.mxu0 0.0
      %7229 = vmatprep.subr.mxu0 0.0
      %7230 = vmatpush1.msra.mxu0 0.0
      %7231 = vmatprep.subr.mxu0 0.0
      %7232 = vmatpush1.msra.mxu0 0.0
      %7233 = vmatprep.subr.mxu0 0.0
      %7234 = vmatpush1.msra.mxu0 0.0
      %7235 = vmatprep.subr.mxu0 0.0
      %7236 = vmatpush1.msra.mxu0 0.0
      %7237 = vmatprep.subr.mxu0 0.0
      %7238 = vmatpush1.msra.mxu0 0.0
      %7239 = vmatprep.subr.mxu0 0.0
      %7240 = vmatpush1.msra.mxu0 0.0
      %7241 = vmatprep.mubr.f32.mxu0 0.0
      %7242 = vmatmul.mubr.f32.gmra.mrb[0].mxu0 %v7079
      %v7243 = vpop.f32.mrb[0].mxu0
      %v7244 = vadd.f32 0.0, %v7243
      %v7245 = vpop.f32.mrb[0].mxu0
      %7246 = vmatprep.mubr.f32.mxu0 0.0
      %7247 = vmatmul.mubr.f32.gmra.mrb[0].mxu0 %v7082
      %v7248 = vpop.f32.mrb[0].mxu0
      %v7249 = vadd.f32 0.0, %v7248
      %v7250 = vpop.f32.mrb[0].mxu0
      %7251 = vmatprep.mubr.f32.mxu0 0.0
      %7252 = vmatmul.mubr.f32.gmra.mrb[0].mxu0 %v7085
      %v7253 = vpop.f32.mrb[0].mxu0
      %v7254 = vadd.f32 0.0, %v7253
      %v7255 = vpop.f32.mrb[0].mxu0
      %7256 = vmatprep.mubr.f32.mxu0 0.0
      %7257 = vmatmul.mubr.f32.gmra.mrb[0].mxu0 %v7088
      %v7258 = vpop.f32.mrb[0].mxu0
      %v7259 = vadd.f32 0.0, %v7258
      %v7260 = vpop.f32.mrb[0].mxu0
      %7261 = vmatprep.mubr.f32.mxu0 0.0
      %7262 = vmatmul.mubr.f32.gmra.mrb[0].mxu0 %v7091
      %v7263 = vpop.f32.mrb[0].mxu0
      %v7264 = vadd.f32 0.0, %v7263
      %v7265 = vpop.f32.mrb[0].mxu0
      %7266 = vmatprep.mubr.f32.mxu0 0.0
      %7267 = vmatmul.mubr.f32.gmra.mrb[0].mxu0 %v7094
      %v7268 = vpop.f32.mrb[0].mxu0
      %v7269 = vadd.f32 0.0, %v7268
      %v7270 = vpop.f32.mrb[0].mxu0
      %7271 = vmatprep.mubr.f32.mxu0 0.0
      %7272 = vmatmul.mubr.f32.gmra.mrb[0].mxu0 %v7097
      %v7273 = vpop.f32.mrb[0].mxu0
      %v7274 = vadd.f32 0.0, %v7273
      %v7275 = vpop.f32.mrb[0].mxu0
      %7276 = vmatprep.mubr.f32.mxu0 0.0
      %7277 = vmatmul.mubr.f32.gmra.mrb[0].mxu0 %v7100
      %v7278 = vpop.f32.mrb[0].mxu0
      %v7279 = vadd.f32 0.0, %v7278
      %v7280 = vpop.f32.mrb[0].mxu0
      %7281 = vmatprep.mubr.f32.mxu0 0.0
      %7282 = vmatmul.mubr.f32.gmra.mrb[0].mxu0 %v7103
      %v7283 = vpop.f32.mrb[0].mxu0
      %v7284 = vadd.f32 0.0, %v7283
      %v7285 = vpop.f32.mrb[0].mxu0
      %7286 = vmatprep.mubr.f32.mxu0 0.0
      %7287 = vmatmul.mubr.f32.gmra.mrb[0].mxu0 %v7106
      %v7288 = vpop.f32.mrb[0].mxu0
      %v7289 = vadd.f32 0.0, %v7288
      %v7290 = vpop.f32.mrb[0].mxu0
      %7291 = vmatprep.mubr.f32.mxu0 0.0
      %7292 = vmatmul.mubr.f32.gmra.mrb[0].mxu0 %v7109
      %v7293 = vpop.f32.mrb[0].mxu0
      %v7294 = vadd.f32 0.0, %v7293
      %v7295 = vpop.f32.mrb[0].mxu0
      %7296 = vmatprep.mubr.f32.mxu0 0.0
      %7297 = vmatmul.mubr.f32.gmra.mrb[0].mxu0 %v7112
      %v7298 = vpop.f32.mrb[0].mxu0
      %v7299 = vadd.f32 0.0, %v7298
      %v7300 = vpop.f32.mrb[0].mxu0
      %7301 = vmatprep.mubr.f32.mxu0 0.0
      %7302 = vmatmul.mubr.f32.gmra.mrb[0].mxu0 %v7115
      %v7303 = vpop.f32.mrb[0].mxu0
      %v7304 = vadd.f32 0.0, %v7303
      %v7305 = vpop.f32.mrb[0].mxu0
      %7306 = vmatprep.mubr.f32.mxu0 0.0
      %7307 = vmatmul.mubr.f32.gmra.mrb[0].mxu0 %v7118
      %v7308 = vpop.f32.mrb[0].mxu0
      %v7309 = vadd.f32 0.0, %v7308
      %v7310 = vpop.f32.mrb[0].mxu0
      %7311 = vmatprep.mubr.f32.mxu0 0.0
      %7312 = vmatmul.mubr.f32.gmra.mrb[0].mxu0 %v7121
      %v7313 = vpop.f32.mrb[0].mxu0
      %v7314 = vadd.f32 0.0, %v7313
      %v7315 = vpop.f32.mrb[0].mxu0
      %7316 = vmatprep.mubr.f32.mxu0 0.0
      %7317 = vmatmul.mubr.f32.gmra.mrb[0].mxu0 %v7124
      %v7318 = vpop.f32.mrb[0].mxu0
      %v7319 = vadd.f32 0.0, %v7318
      %v7320 = vpop.f32.mrb[0].mxu0
      %7321 = vmatprep.mubr.f32.mxu0 0.0
      %7322 = vmatmul.mubr.f32.gmra.mrb[0].mxu0 %v7127
      %v7323 = vpop.f32.mrb[0].mxu0
      %v7324 = vadd.f32 0.0, %v7323
      %v7325 = vpop.f32.mrb[0].mxu0
      %7326 = vmatprep.mubr.f32.mxu0 0.0
      %7327 = vmatmul.mubr.f32.gmra.mrb[0].mxu0 %v7130
      %v7328 = vpop.f32.mrb[0].mxu0
      %v7329 = vadd.f32 0.0, %v7328
      %v7330 = vpop.f32.mrb[0].mxu0
      %7331 = vmatprep.mubr.f32.mxu0 0.0
      %7332 = vmatmul.mubr.f32.gmra.mrb[0].mxu0 %v7133
      %v7333 = vpop.f32.mrb[0].mxu0
      %v7334 = vadd.f32 0.0, %v7333
      %v7335 = vpop.f32.mrb[0].mxu0
      %7336 = vmatprep.mubr.f32.mxu0 0.0
      %7337 = vmatmul.mubr.f32.gmra.mrb[0].mxu0 %v7136
      %v7338 = vpop.f32.mrb[0].mxu0
      %v7339 = vadd.f32 0.0, %v7338
      %v7340 = vpop.f32.mrb[0].mxu0
      %7341 = vmatprep.mubr.f32.mxu0 0.0
      %7342 = vmatmul.mubr.f32.gmra.mrb[0].mxu0 %v7139
      %v7343 = vpop.f32.mrb[0].mxu0
      %v7344 = vadd.f32 0.0, %v7343
      %v7345 = vpop.f32.mrb[0].mxu0
      %7346 = vmatprep.mubr.f32.mxu0 0.0
      %7347 = vmatmul.mubr.f32.gmra.mrb[0].mxu0 %v7142
      %v7348 = vpop.f32.mrb[0].mxu0
      %v7349 = vadd.f32 0.0, %v7348
      %v7350 = vpop.f32.mrb[0].mxu0
      %7351 = vmatprep.mubr.f32.mxu0 0.0
      %7352 = vmatmul.mubr.f32.gmra.mrb[0].mxu0 %v7145
      %v7353 = vpop.f32.mrb[0].mxu0
      %v7354 = vadd.f32 0.0, %v7353
      %v7355 = vpop.f32.mrb[0].mxu0
      %7356 = vmatprep.mubr.f32.mxu0 0.0
      %7357 = vmatmul.mubr.f32.gmra.mrb[0].mxu0 %v7148
      %v7358 = vpop.f32.mrb[0].mxu0
      %v7359 = vadd.f32 0.0, %v7358
      %v7360 = vpop.f32.mrb[0].mxu0
      %7361 = vmatprep.mubr.f32.mxu0 0.0
      %7362 = vmatmul.mubr.f32.gmra.mrb[0].mxu0 %v7151
      %v7363 = vpop.f32.mrb[0].mxu0
      %v7364 = vadd.f32 0.0, %v7363
      %v7365 = vpop.f32.mrb[0].mxu0
      %7366 = vmatprep.mubr.f32.mxu0 0.0
      %7367 = vmatmul.mubr.f32.gmra.mrb[0].mxu0 %v7154
      %v7368 = vpop.f32.mrb[0].mxu0
      %v7369 = vadd.f32 0.0, %v7368
      %v7370 = vpop.f32.mrb[0].mxu0
      %7371 = vmatprep.mubr.f32.mxu0 0.0
      %7372 = vmatmul.mubr.f32.gmra.mrb[0].mxu0 %v7157
      %v7373 = vpop.f32.mrb[0].mxu0
      %v7374 = vadd.f32 0.0, %v7373
      %v7375 = vpop.f32.mrb[0].mxu0
      %7376 = vmatprep.mubr.f32.mxu0 0.0
      %7377 = vmatmul.mubr.f32.gmra.mrb[0].mxu0 %v7160
      %v7378 = vpop.f32.mrb[0].mxu0
      %v7379 = vadd.f32 0.0, %v7378
      %v7380 = vpop.f32.mrb[0].mxu0
      %7381 = vmatprep.mubr.f32.mxu0 0.0
      %7382 = vmatmul.mubr.f32.gmra.mrb[0].mxu0 %v7163
      %v7383 = vpop.f32.mrb[0].mxu0
      %v7384 = vadd.f32 0.0, %v7383
      %v7385 = vpop.f32.mrb[0].mxu0
      %7386 = vmatprep.mubr.f32.mxu0 0.0
      %7387 = vmatmul.mubr.f32.gmra.mrb[0].mxu0 %v7166
      %v7388 = vpop.f32.mrb[0].mxu0
      %v7389 = vadd.f32 0.0, %v7388
      %v7390 = vpop.f32.mrb[0].mxu0
      %7391 = vmatprep.mubr.f32.mxu0 0.0
      %7392 = vmatmul.mubr.f32.gmra.mrb[0].mxu0 %v7169
      %v7393 = vpop.f32.mrb[0].mxu0
      %v7394 = vadd.f32 0.0, %v7393
      %v7395 = vpop.f32.mrb[0].mxu0
      %7396 = vmatprep.mubr.f32.mxu0 0.0
      %7397 = vmatmul.mubr.f32.gmra.mrb[0].mxu0 %v7172
      %v7398 = vpop.f32.mrb[0].mxu0
      %v7399 = vadd.f32 0.0, %v7398
      %v7400 = vpop.f32.mrb[0].mxu0
      %7401 = vdwg.mxu0
      %v7402 = vadd.f32 %v7012, %v7244
      %v7403 = vadd.f32 %v7013, %v7249
      %v7404 = vadd.f32 %v7014, %v7254
      %v7405 = vadd.f32 %v7015, %v7259
      %v7406 = vadd.f32 %v7016, %v7264
      %v7407 = vadd.f32 %v7017, %v7269
      %v7408 = vadd.f32 %v7018, %v7274
      %v7409 = vadd.f32 %v7019, %v7279
      %v7410 = vadd.f32 %v7020, %v7284
      %v7411 = vadd.f32 %v7021, %v7289
      %v7412 = vadd.f32 %v7022, %v7294
      %v7413 = vadd.f32 %v7023, %v7299
      %v7414 = vadd.f32 %v7024, %v7304
      %v7415 = vadd.f32 %v7025, %v7309
      %v7416 = vadd.f32 %v7026, %v7314
      %v7417 = vadd.f32 %v7027, %v7319
      %v7418 = vadd.f32 %v7028, %v7324
      %v7419 = vadd.f32 %v7029, %v7329
      %v7420 = vadd.f32 %v7030, %v7334
      %v7421 = vadd.f32 %v7031, %v7339
      %v7422 = vadd.f32 %v7032, %v7344
      %v7423 = vadd.f32 %v7033, %v7349
      %v7424 = vadd.f32 %v7034, %v7354
      %v7425 = vadd.f32 %v7035, %v7359
      %v7426 = vadd.f32 %v7036, %v7364
      %v7427 = vadd.f32 %v7037, %v7369
      %v7428 = vadd.f32 %v7038, %v7374
      %v7429 = vadd.f32 %v7039, %v7379
      %v7430 = vadd.f32 %v7040, %v7384
      %v7431 = vadd.f32 %v7041, %v7389
      %v7432 = vadd.f32 %v7042, %v7394
      %v7433 = vadd.f32 %v7043, %v7399
      %v7434 = vld [vmem:[%s5] sm:$0x1]
      %v7436 = vlaneseq
      %v7437 = vshrl.u32 %v7436, 7
      %v7438 = vsub.s32 0, %v7437
      %v7439 = vrot.slane %v7434, %v7438
      %v7441 = vmul.f32 %v7402, %v7439
      %v7442 = vmul.f32 %v7403, %v7439
      %v7443 = vmul.f32 %v7404, %v7439
      %v7444 = vmul.f32 %v7405, %v7439
      %v7445 = vmul.f32 %v7406, %v7439
      %v7446 = vmul.f32 %v7407, %v7439
      %v7447 = vmul.f32 %v7408, %v7439
      %v7448 = vmul.f32 %v7409, %v7439
      %v7449 = vmul.f32 %v7410, %v7439
      %v7450 = vmul.f32 %v7411, %v7439
      %v7451 = vmul.f32 %v7412, %v7439
      %v7452 = vmul.f32 %v7413, %v7439
      %v7453 = vmul.f32 %v7414, %v7439
      %v7454 = vmul.f32 %v7415, %v7439
      %v7455 = vmul.f32 %v7416, %v7439
      %v7456 = vmul.f32 %v7417, %v7439
      %v7457 = vmul.f32 %v7418, %v7439
      %v7458 = vmul.f32 %v7419, %v7439
      %v7459 = vmul.f32 %v7420, %v7439
      %v7460 = vmul.f32 %v7421, %v7439
      %v7461 = vmul.f32 %v7422, %v7439
      %v7462 = vmul.f32 %v7423, %v7439
      %v7463 = vmul.f32 %v7424, %v7439
      %v7464 = vmul.f32 %v7425, %v7439
      %v7465 = vmul.f32 %v7426, %v7439
      %v7466 = vmul.f32 %v7427, %v7439
      %v7467 = vmul.f32 %v7428, %v7439
      %v7468 = vmul.f32 %v7429, %v7439
      %v7469 = vmul.f32 %v7430, %v7439
      %v7470 = vmul.f32 %v7431, %v7439
      %v7471 = vmul.f32 %v7432, %v7439
      %v7472 = vmul.f32 %v7433, %v7439
      %v7473 = vld [vmem:[%s6] sm:$0x1]
      %v7475 = vlaneseq
      %v7476 = vshrl.u32 %v7475, 7
      %v7477 = vsub.s32 0, %v7476
      %v7478 = vrot.slane %v7473, %v7477
      %v7480 = vadd.f32 %v7441, %v7478
      %v7481 = vadd.f32 %v7442, %v7478
      %v7482 = vadd.f32 %v7443, %v7478
      %v7483 = vadd.f32 %v7444, %v7478
      %v7484 = vadd.f32 %v7445, %v7478
      %v7485 = vadd.f32 %v7446, %v7478
      %v7486 = vadd.f32 %v7447, %v7478
      %v7487 = vadd.f32 %v7448, %v7478
      %v7488 = vadd.f32 %v7449, %v7478
      %v7489 = vadd.f32 %v7450, %v7478
      %v7490 = vadd.f32 %v7451, %v7478
      %v7491 = vadd.f32 %v7452, %v7478
      %v7492 = vadd.f32 %v7453, %v7478
      %v7493 = vadd.f32 %v7454, %v7478
      %v7494 = vadd.f32 %v7455, %v7478
      %v7495 = vadd.f32 %v7456, %v7478
      %v7496 = vadd.f32 %v7457, %v7478
      %v7497 = vadd.f32 %v7458, %v7478
      %v7498 = vadd.f32 %v7459, %v7478
      %v7499 = vadd.f32 %v7460, %v7478
      %v7500 = vadd.f32 %v7461, %v7478
      %v7501 = vadd.f32 %v7462, %v7478
      %v7502 = vadd.f32 %v7463, %v7478
      %v7503 = vadd.f32 %v7464, %v7478
      %v7504 = vadd.f32 %v7465, %v7478
      %v7505 = vadd.f32 %v7466, %v7478
      %v7506 = vadd.f32 %v7467, %v7478
      %v7507 = vadd.f32 %v7468, %v7478
      %v7508 = vadd.f32 %v7469, %v7478
      %v7509 = vadd.f32 %v7470, %v7478
      %v7510 = vadd.f32 %v7471, %v7478
      %v7511 = vadd.f32 %v7472, %v7478
      %v7512 = vadd.f32 %v7480, %v279
      %v7513 = vadd.f32 %v7481, %v280
      %v7514 = vadd.f32 %v7482, %v281
      %v7515 = vadd.f32 %v7483, %v282
      %v7516 = vadd.f32 %v7484, %v283
      %v7517 = vadd.f32 %v7485, %v284
      %v7518 = vadd.f32 %v7486, %v285
      %v7519 = vadd.f32 %v7487, %v286
      %v7520 = vadd.f32 %v7488, %v287
      %v7521 = vadd.f32 %v7489, %v288
      %v7522 = vadd.f32 %v7490, %v289
      %v7523 = vadd.f32 %v7491, %v290
      %v7524 = vadd.f32 %v7492, %v291
      %v7525 = vadd.f32 %v7493, %v292
      %v7526 = vadd.f32 %v7494, %v293
      %v7527 = vadd.f32 %v7495, %v294
      %v7528 = vadd.f32 %v7496, %v295
      %v7529 = vadd.f32 %v7497, %v296
      %v7530 = vadd.f32 %v7498, %v297
      %v7531 = vadd.f32 %v7499, %v298
      %v7532 = vadd.f32 %v7500, %v299
      %v7533 = vadd.f32 %v7501, %v300
      %v7534 = vadd.f32 %v7502, %v301
      %v7535 = vadd.f32 %v7503, %v302
      %v7536 = vadd.f32 %v7504, %v303
      %v7537 = vadd.f32 %v7505, %v304
      %v7538 = vadd.f32 %v7506, %v305
      %v7539 = vadd.f32 %v7507, %v306
      %v7540 = vadd.f32 %v7508, %v307
      %v7541 = vadd.f32 %v7509, %v308
      %v7542 = vadd.f32 %v7510, %v309
      %v7543 = vadd.f32 %v7511, %v310
      %v7544 = vmax.f32 %v7512, 0.0
      %v7545 = vmax.f32 %v7513, 0.0
      %v7546 = vmax.f32 %v7514, 0.0
      %v7547 = vmax.f32 %v7515, 0.0
      %v7548 = vmax.f32 %v7516, 0.0
      %v7549 = vmax.f32 %v7517, 0.0
      %v7550 = vmax.f32 %v7518, 0.0
      %v7551 = vmax.f32 %v7519, 0.0
      %v7552 = vmax.f32 %v7520, 0.0
      %v7553 = vmax.f32 %v7521, 0.0
      %v7554 = vmax.f32 %v7522, 0.0
      %v7555 = vmax.f32 %v7523, 0.0
      %v7556 = vmax.f32 %v7524, 0.0
      %v7557 = vmax.f32 %v7525, 0.0
      %v7558 = vmax.f32 %v7526, 0.0
      %v7559 = vmax.f32 %v7527, 0.0
      %v7560 = vmax.f32 %v7528, 0.0
      %v7561 = vmax.f32 %v7529, 0.0
      %v7562 = vmax.f32 %v7530, 0.0
      %v7563 = vmax.f32 %v7531, 0.0
      %v7564 = vmax.f32 %v7532, 0.0
      %v7565 = vmax.f32 %v7533, 0.0
      %v7566 = vmax.f32 %v7534, 0.0
      %v7567 = vmax.f32 %v7535, 0.0
      %v7568 = vmax.f32 %v7536, 0.0
      %v7569 = vmax.f32 %v7537, 0.0
      %v7570 = vmax.f32 %v7538, 0.0
      %v7571 = vmax.f32 %v7539, 0.0
      %v7572 = vmax.f32 %v7540, 0.0
      %v7573 = vmax.f32 %v7541, 0.0
      %v7574 = vmax.f32 %v7542, 0.0
      %v7575 = vmax.f32 %v7543, 0.0
      %7576 = vst.msk [vmem:[%s278] sm:$0xff] %vm311, %v7544
      %7577 = vst.msk [vmem:[%s278 + $0x8] sm:$0xff] %vm311, %v7545
      %7578 = vst.msk [vmem:[%s278 + $0x10] sm:$0xff] %vm311, %v7546
      %7579 = vst.msk [vmem:[%s278 + $0x18] sm:$0xff] %vm311, %v7547
      %7580 = vst.msk [vmem:[%s278 + $0x20] sm:$0xff] %vm311, %v7548
      %7581 = vst.msk [vmem:[%s278 + $0x28] sm:$0xff] %vm311, %v7549
      %7582 = vst.msk [vmem:[%s278 + $0x30] sm:$0xff] %vm311, %v7550
      %7583 = vst.msk [vmem:[%s278 + $0x38] sm:$0xff] %vm311, %v7551
      %7584 = vst.msk [vmem:[%s278 + $0x40] sm:$0xff] %vm311, %v7552
      %7585 = vst.msk [vmem:[%s278 + $0x48] sm:$0xff] %vm311, %v7553
      %7586 = vst.msk [vmem:[%s278 + $0x50] sm:$0xff] %vm311, %v7554
      %7587 = vst.msk [vmem:[%s278 + $0x58] sm:$0xff] %vm311, %v7555
      %7588 = vst.msk [vmem:[%s278 + $0x60] sm:$0xff] %vm311, %v7556
      %7589 = vst.msk [vmem:[%s278 + $0x68] sm:$0xff] %vm311, %v7557
      %7590 = vst.msk [vmem:[%s278 + $0x70] sm:$0xff] %vm311, %v7558
      %7591 = vst.msk [vmem:[%s278 + $0x78] sm:$0xff] %vm311, %v7559
      %7592 = vst.msk [vmem:[%s278 + $0x80] sm:$0xff] %vm311, %v7560
      %7593 = vst.msk [vmem:[%s278 + $0x88] sm:$0xff] %vm311, %v7561
      %7594 = vst.msk [vmem:[%s278 + $0x90] sm:$0xff] %vm311, %v7562
      %7595 = vst.msk [vmem:[%s278 + $0x98] sm:$0xff] %vm311, %v7563
      %7596 = vst.msk [vmem:[%s278 + $0xa0] sm:$0xff] %vm311, %v7564
      %7597 = vst.msk [vmem:[%s278 + $0xa8] sm:$0xff] %vm311, %v7565
      %7598 = vst.msk [vmem:[%s278 + $0xb0] sm:$0xff] %vm311, %v7566
      %7599 = vst.msk [vmem:[%s278 + $0xb8] sm:$0xff] %vm311, %v7567
      %7600 = vst.msk [vmem:[%s278 + $0xc0] sm:$0xff] %vm311, %v7568
      %7601 = vst.msk [vmem:[%s278 + $0xc8] sm:$0xff] %vm311, %v7569
      %7602 = vst.msk [vmem:[%s278 + $0xd0] sm:$0xff] %vm311, %v7570
      %7603 = vst.msk [vmem:[%s278 + $0xd8] sm:$0xff] %vm311, %v7571
      %7604 = vst.msk [vmem:[%s278 + $0xe0] sm:$0xff] %vm311, %v7572
      %7605 = vst.msk [vmem:[%s278 + $0xe8] sm:$0xff] %vm311, %v7573
      %7606 = vst.msk [vmem:[%s278 + $0xf0] sm:$0xff] %vm311, %v7574
      %7607 = vst.msk [vmem:[%s278 + $0xf8] sm:$0xff] %vm311, %v7575
      %p7608 = scmp.lt.s32.totalorder %s18, 1
      %s7609 = scalar_select %p7608, %s18, 1
      %s7610 = smul.addr %s7609, 32
      %s7611 = smul.addr %s7610, 8
      %s7612 = scalar_lea.vmem %s7, %s7611
      // Predicated region
      $region49: #{tpu_custom_call.1} parent=47 // pred_check
        %p7613 = pneg %p188
      $region50: #{tpu_custom_call.1} parent=47 // pred_check_branch
        %7615 = sbr.rel (%p7613) target = $region52
      $region51: #{tpu_custom_call.1} parent=47 // pred_region
        _
      $region52: #{tpu_custom_call.1} parent=47 // pred_fallthru
        _
    $region48: #{tpu_custom_call.1} parent=5 // pred_fallthru
      _
    %p7616 = scmp.le.s32.totalorder 2, %s13
    // Predicated region
    $region53: #{tpu_custom_call.1} parent=5 // pred_check
      %p7617 = pneg %p7616
    $region54: #{tpu_custom_call.1} parent=5 // pred_check_branch
      %7619 = sbr.rel (%p7617) target = $region56
    $region55: #{tpu_custom_call.1} parent=5 // pred_region
      %s7620 = ssub.s32 %s13, 2
      // Predicated region
      $region57: #{tpu_custom_call.1} parent=55 // pred_check
        %p7621 = pneg %p194
      $region58: #{tpu_custom_call.1} parent=55 // pred_check_branch
        %7623 = sbr.rel (%p7621) target = $region60
      $region59: #{tpu_custom_call.1} parent=55 // pred_region
        %p7624 = scmp.lt.s32.totalorder %s19, 1
        %s7625 = scalar_select %p7624, %s19, 1
        %s7626 = smul.addr %s7625, 32
        %s7627 = smul.addr %s7626, 8
        %s7628 = scalar_lea.vmem %s7, %s7627
      $region60: #{tpu_custom_call.1} parent=55 // pred_fallthru
        _
    $region56: #{tpu_custom_call.1} parent=5 // pred_fallthru
      _
  $region6: #{tpu_custom_call.1} parent=0 // loop_footer
    %s17 = sadd.s32 1, %s13
  $region7: #{tpu_custom_call.1} parent=0 // loop_footer_branch
    %12 = sbr.rel target = $region3
  $region8: #{tpu_custom_call.1} parent=0 // loop_exit
    _

</llo_original>
